<compile_context>
chip_gen: v7x
topology: tpu7x:2x2x1
jax: 0.10.0
libtpu: 0.0.40
codegen_flags: <defaults>
</compile_context>

<pallas_src>
import functools

import jax
import jax.numpy as jnp
from jax.experimental import pallas as pl
from jax.experimental.pallas import tpu as pltpu


# ----------------------------------------------------------------------- small helpers

def _round_up(x, m):
    return (x + m - 1) // m * m


def _pad_axis(a, axis, target):
    if a.shape[axis] == target:
        return a
    widths = [(0, 0)] * a.ndim
    widths[axis] = (0, target - a.shape[axis])
    return jnp.pad(a, widths)


# ----------------------------------------------------------------------- Pallas kernels

def _conv3x3_kernel(x_ref, w_ref, sc_ref, sh_ref, y_ref, ssum_ref, ssq_ref,
                    xpad_ref, *, apply_input_bn_relu):
    """One (cout-tile, batch) grid step of a direct 3x3 conv (stride 1, pad 1, no bias).

    x_ref    : (1, H, W, Cin) bf16     input slab (NOT spatially padded in HBM)
    w_ref    : (9, Cin, tile_n) bf16   weights, tap index = kh*3 + kw
    sc_ref   : (1, Cin) f32            previous-layer BN scale (used iff apply_input_bn_relu)
    sh_ref   : (1, Cin) f32            previous-layer BN shift
    y_ref    : (1, H, W, tile_n) bf16  conv output
    ssum_ref : (1, 1, tile_n) f32      per-(batch, channel) sum of y      } BN batch stats,
    ssq_ref  : (1, 1, tile_n) f32      per-(batch, channel) sum of y^2    } computed in f32
    xpad_ref : (H+2, W+2, Cin) bf16    VMEM halo slab (scratch)
    """
    H, W = y_ref.shape[1], y_ref.shape[2]
    cin = x_ref.shape[-1]
    tile_n = y_ref.shape[-1]

    xi = x_ref[0]                                               # (H, W, Cin)
    if apply_input_bn_relu:
        # Fused previous-layer BatchNorm affine + ReLU, interior only: the halo below stays
        # zero, matching the reference's zero padding (ReLU(shift) != 0 must not leak in).
        xi = jnp.maximum(xi.astype(jnp.float32) * sc_ref[...] + sh_ref[...], 0.0)

    # Zero halo built in VMEM -- no HBM pad pass.
    xpad_ref[...] = jnp.zeros_like(xpad_ref)
    xpad_ref[1:H + 1, 1:W + 1, :] = xi.astype(xpad_ref.dtype)

    if cin % 128 == 0:
        # Lane-aligned in-VMEM im2col: one (H*W, 9*Cin) patch buffer, single MXU matmul.
        pieces = [xpad_ref[kh:kh + H, kw:kw + W, :].reshape(H * W, cin)
                  for kh in range(3) for kw in range(3)]
        patches = jnp.concatenate(pieces, axis=1)               # (H*W, 9*Cin) bf16
        acc = jnp.dot(patches, w_ref[...].reshape(9 * cin, tile_n),
                      preferred_element_type=jnp.float32)
    else:
        # Small / unaligned Cin (the raw network input): 9 accumulated dots in registers.
        acc = jnp.zeros((H * W, tile_n), jnp.float32)
        for kh in range(3):
            for kw in range(3):
                patch = xpad_ref[kh:kh + H, kw:kw + W, :].reshape(H * W, cin)
                acc = acc + jnp.dot(patch, w_ref[kh * 3 + kw],
                                    preferred_element_type=jnp.float32)

    y_ref[...] = acc.reshape(y_ref.shape).astype(y_ref.dtype)   # bf16 store (half HBM traffic)
    # BN batch statistics fused into the conv epilogue: two plain stores, no concat.
    ssum_ref[0] = jnp.sum(acc, axis=0, keepdims=True)
    ssq_ref[0] = jnp.sum(acc * acc, axis=0, keepdims=True)


def _scale_shift_relu_kernel(x_ref, sc_ref, sh_ref, o_ref):
    """Folded BatchNorm affine + ReLU: o = max(x * scale + shift, 0)."""
    o_ref[...] = jnp.maximum(
        x_ref[...].astype(jnp.float32) * sc_ref[...] + sh_ref[...], 0.0
    ).astype(o_ref.dtype)


# ----------------------------------------------------------------------- wrappers

def conv3x3_bn_stats(x, w, *, in_scale=None, in_shift=None, out_dtype=jnp.bfloat16):
    """3x3 conv (stride 1, pad 1, no bias), optionally fusing the previous layer's
    BatchNorm affine + ReLU into the input load, with fused BN batch statistics.

    x : (B, H, W, Cin)        activations (any float dtype; MXU operands are bf16)
    w : (3, 3, wcin, Cout)    weights, wcin <= Cin (extra input channels are zero)
    in_scale, in_shift : (Cin,) f32 or None -- if given, computes conv(relu(x*scale+shift))
        without materializing the normalized activation in HBM.

    Returns (y, ssum, ssq) with Cp = round_up(Cout, 128) (lane-dense; channels >= Cout are 0):
        y    : (B, H, W, Cp) out_dtype
        ssum : (Cp,) f32  per-channel sum   of y over (B, H, W)
        ssq  : (Cp,) f32  per-channel sum of y^2 over (B, H, W)
    """
    B, H, W, Cin = x.shape
    Cout = w.shape[-1]
    Cp = _round_up(Cout, 128)
    # 256-wide N tiles fill the 256x256 MXU on v6e/v7x for deep layers; 128 is ideal on v5e
    # and is what the small test layers use anyway.
    tile_n = 256 if Cp % 256 == 0 else 128
    n_tiles = Cp // tile_n

    # Lane-dense bf16 weight slab laid out as (tap, cin, cout), tap = kh*3 + kw.
    w_p = _pad_axis(_pad_axis(w, 2, Cin), 3, Cp).astype(jnp.bfloat16).reshape(9, Cin, Cp)

    fuse = in_scale is not None
    sc = (in_scale if fuse else jnp.ones((Cin,), jnp.float32))
    sh = (in_shift if fuse else jnp.zeros((Cin,), jnp.float32))
    sc = sc.reshape(1, Cin).astype(jnp.float32)
    sh = sh.reshape(1, Cin).astype(jnp.float32)

    kernel = functools.partial(_conv3x3_kernel, apply_input_bn_relu=fuse)

    y, ssum, ssq = pl.pallas_call(
        kernel,
        out_shape=(
            jax.ShapeDtypeStruct((B, H, W, Cp), out_dtype),
            jax.ShapeDtypeStruct((B, 1, Cp), jnp.float32),
            jax.ShapeDtypeStruct((B, 1, Cp), jnp.float32),
        ),
        grid_spec=pltpu.PrefetchScalarGridSpec(
            num_scalar_prefetch=0,
            # Batch innermost and a batch-independent weight index_map: the weight slab stays
            # VMEM-resident across the batch axis (no re-DMA per grid step).
            grid=(n_tiles, B),
            in_specs=[
                pl.BlockSpec((1, H, W, Cin), lambda n, b: (b, 0, 0, 0)),
                pl.BlockSpec((9, Cin, tile_n), lambda n, b: (0, 0, n)),
                pl.BlockSpec((1, Cin), lambda n, b: (0, 0)),
                pl.BlockSpec((1, Cin), lambda n, b: (0, 0)),
            ],
            out_specs=(
                pl.BlockSpec((1, H, W, tile_n), lambda n, b: (b, 0, 0, n)),
                pl.BlockSpec((1, 1, tile_n), lambda n, b: (b, 0, n)),
                pl.BlockSpec((1, 1, tile_n), lambda n, b: (b, 0, n)),
            ),
            scratch_shapes=[pltpu.VMEM((H + 2, W + 2, Cin), jnp.bfloat16)],
        ),
        compiler_params=pltpu.CompilerParams(
            dimension_semantics=("parallel", "parallel")),
    )(x.astype(jnp.bfloat16), w_p, sc, sh)

    return y, jnp.sum(ssum, axis=(0, 1)), jnp.sum(ssq, axis=(0, 1))


def _bn_fold(ssum, ssq, gamma, beta, n_px, eps):
    """Fold training-mode BatchNorm (batch mean, biased variance) into per-channel scale/shift.

    Note: var = E[x^2] - mean^2 from f32 sums; fine at these scales (see review notes)."""
    Cp = ssum.shape[0]
    mean = ssum / n_px
    var = jnp.maximum(ssq / n_px - mean * mean, 0.0)
    inv = jax.lax.rsqrt(var + eps)
    scale = _pad_axis(gamma, 0, Cp) * inv               # padded channels: gamma=0 -> scale=0
    shift = _pad_axis(beta, 0, Cp) - mean * scale       # padded channels: shift=0 -> stay zero
    return scale.astype(jnp.float32), shift.astype(jnp.float32)


def scale_shift_relu(x2d, scale, shift, *, out_dtype=jnp.float32):
    """Row-tiled, pipelined elementwise max(x*scale + shift, 0) over a (rows, C) slab."""
    rows, C = x2d.shape
    tile_r = None
    for t in (1024, 512, 256, 128, 64, 32, 16, 8):      # 1024 keeps v7x near the HBM roofline
        if rows % t == 0:
            tile_r = t
            break
    if tile_r is None:
        # Never emit a single giant block for odd row counts: pad to a modest tile.
        # TODO(synk): mask the ragged last tile instead of padding.
        tile_r = min(256, _round_up(rows, 8))
        x2d = _pad_axis(x2d, 0, _round_up(rows, tile_r))
    rows_p = x2d.shape[0]

    out = pl.pallas_call(
        _scale_shift_relu_kernel,
        out_shape=jax.ShapeDtypeStruct((rows_p, C), out_dtype),
        grid=(rows_p // tile_r,),
        in_specs=[
            pl.BlockSpec((tile_r, C), lambda i: (i, 0)),
            pl.BlockSpec((1, C), lambda i: (0, 0)),
            pl.BlockSpec((1, C), lambda i: (0, 0)),
        ],
        out_specs=pl.BlockSpec((tile_r, C), lambda i: (i, 0)),
        compiler_params=pltpu.CompilerParams(dimension_semantics=("parallel",)),
    )(x2d, scale.reshape(1, C), shift.reshape(1, C))
    return out[:rows]


def double_conv_forward(x_nchw, params, *, eps=1e-5):
    """DoubleConv forward (batch_norm=True path). NCHW in / NCHW out, matches PyTorch layout."""
    B, _, H, W = x_nchw.shape
    Cout = params["w2"].shape[-1]
    n_px = B * H * W

    x = jnp.transpose(x_nchw, (0, 2, 3, 1))                          # NCHW -> NHWC

    # conv1 -> bf16 activation + BN1 batch stats (no standalone BN1 pass).
    y1, s1, q1 = conv3x3_bn_stats(x, params["w1"])
    scale1, shift1 = _bn_fold(s1, q1, params["g1"], params["b1"], n_px, eps)

    # conv2 with BN1 + ReLU fused into its input load -> bf16 activation + BN2 batch stats.
    y2, s2, q2 = conv3x3_bn_stats(y1, params["w2"], in_scale=scale1, in_shift=shift1)
    scale2, shift2 = _bn_fold(s2, q2, params["g2"], params["b2"], n_px, eps)

    # BN2 + ReLU2: single elementwise pass, then drop lane padding and go back to NCHW f32.
    Cp = y2.shape[-1]
    out = scale_shift_relu(y2.reshape(n_px, Cp), scale2, shift2, out_dtype=jnp.float32)
    out = out.reshape(B, H, W, Cp)[..., :Cout]
    return jnp.transpose(out, (0, 3, 1, 2))


# ----------------------------------------------------------------------- pure-JAX reference

def _reference_double_conv(x_nchw, params, eps=1e-5):
    x = jnp.transpose(x_nchw, (0, 2, 3, 1))

    def block(h, w, g, b):
        y = jax.lax.conv_general_dilated(
            h, w, window_strides=(1, 1), padding=((1, 1), (1, 1)),
            dimension_numbers=("NHWC", "HWIO", "NHWC"))
        mean = jnp.mean(y, axis=(0, 1, 2))
        var = jnp.mean((y - mean) ** 2, axis=(0, 1, 2))
        yn = (y - mean) * jax.lax.rsqrt(var + eps) * g + b
        return jnp.maximum(yn, 0.0)

    h = block(x, params["w1"], params["g1"], params["b1"])
    h = block(h, params["w2"], params["g2"], params["b2"])
    return jnp.transpose(h, (0, 3, 1, 2))


# ----------------------------------------------------------------------- main

if __name__ == "__main__":
    B, Cin, H, W = 2, 4, 16, 16
    Cout = 32

    key = jax.random.PRNGKey(0)
    kx, k1, k2 = jax.random.split(key, 3)
    x = jax.random.normal(kx, (B, Cin, H, W), jnp.float32)
    params = {
        "w1": jax.random.normal(k1, (3, 3, Cin, Cout), jnp.float32) / jnp.sqrt(9.0 * Cin),
        "g1": jnp.ones((Cout,), jnp.float32),
        "b1": jnp.zeros((Cout,), jnp.float32),
        "w2": jax.random.normal(k2, (3, 3, Cout, Cout), jnp.float32) / jnp.sqrt(9.0 * Cout),
        "g2": jnp.ones((Cout,), jnp.float32),
        "b2": jnp.zeros((Cout,), jnp.float32),
    }

    fwd = jax.jit(double_conv_forward)
    out = fwd(x, params)
    jax.block_until_ready(out)

    assert out.shape == (B, Cout, H, W), out.shape
    assert bool(jnp.all(jnp.isfinite(out)))

    # MXU operands and intermediates are bf16, reference is full f32: elementwise tolerance is
    # kept loose for the tail, with an additional tight aggregate check on the mean error.
    ref = _reference_double_conv(x, params)
    assert bool(jnp.allclose(out, ref, rtol=1e-1, atol=1e-1)), \
        float(jnp.max(jnp.abs(out - ref)))
    assert float(jnp.mean(jnp.abs(out - ref))) < 2e-2

    print("KERNEL_OK")
</pallas_src>

<mosaic_0001>
module attributes {stable_mosaic.version = 11 : i64} {
  func.func @_conv3x3_kernel(%arg0: i32, %arg1: i32, %arg2: memref<1x16x16x4xbf16, #tpu.memory_space<vmem>>, %arg3: memref<9x4x128xbf16, #tpu.memory_space<vmem>>, %arg4: memref<1x4xf32, #tpu.memory_space<vmem>>, %arg5: memref<1x4xf32, #tpu.memory_space<vmem>>, %arg6: memref<1x16x16x128xbf16, #tpu.memory_space<vmem>>, %arg7: memref<1x1x128xf32, #tpu.memory_space<vmem>>, %arg8: memref<1x1x128xf32, #tpu.memory_space<vmem>>, %arg9: memref<18x18x4xbf16, #tpu.memory_space<vmem>>) attributes {dimension_semantics = [#tpu.dimension_semantics<parallel>, #tpu.dimension_semantics<parallel>], iteration_bounds = array<i64: 1, 2>, scalar_prefetch = 0 : i64, scratch_operands = 1 : i64, tpu.core_type = #tpu.core_type<tc>, window_params = [{transform_indices = @transform_0, window_bounds = array<i64: 1, 16, 16, 4>}, {transform_indices = @transform_1, window_bounds = array<i64: 9, 4, 128>}, {pipeline_mode = #tpu.pipeline_mode<synchronous>, transform_indices = @transform_2, window_bounds = array<i64: 1, 4>}, {pipeline_mode = #tpu.pipeline_mode<synchronous>, transform_indices = @transform_3, window_bounds = array<i64: 1, 4>}, {transform_indices = @transform_4, window_bounds = array<i64: 1, 16, 16, 128>}, {transform_indices = @transform_5, window_bounds = array<i64: 1, 1, 128>}, {transform_indices = @transform_6, window_bounds = array<i64: 1, 1, 128>}]} {
    %c0 = arith.constant 0 : index
    %c0_0 = arith.constant 0 : index
    %c0_1 = arith.constant 0 : index
    %c0_2 = arith.constant 0 : index
    %0 = vector.load %arg2[%c0, %c0_0, %c0_1, %c0_2] : memref<1x16x16x4xbf16, #tpu.memory_space<vmem>>, vector<1x16x16x4xbf16>
    %1 = vector.shape_cast %0 : vector<1x16x16x4xbf16> to vector<16x16x4xbf16>
    %cst = arith.constant 0.000000e+00 : bf16
    %2 = vector.broadcast %cst : bf16 to vector<18x18x4xbf16>
    %c0_3 = arith.constant 0 : index
    %c0_4 = arith.constant 0 : index
    %c0_5 = arith.constant 0 : index
    %3 = vector.load %arg9[%c0_3, %c0_4, %c0_5] : memref<18x18x4xbf16, #tpu.memory_space<vmem>>, vector<18x18x4xbf16>
    tpu.vector_store %arg9[%c0_3, %c0_4, %c0_5], %2 {strides = array<i32>} : memref<18x18x4xbf16, #tpu.memory_space<vmem>>, vector<18x18x4xbf16>,
    %c1 = arith.constant 1 : index
    %c1_6 = arith.constant 1 : index
    %c0_7 = arith.constant 0 : index
    %4 = vector.load %arg9[%c1, %c1_6, %c0_7] : memref<18x18x4xbf16, #tpu.memory_space<vmem>>, vector<16x16x4xbf16>
    tpu.vector_store %arg9[%c1, %c1_6, %c0_7], %1 {strides = array<i32>} : memref<18x18x4xbf16, #tpu.memory_space<vmem>>, vector<16x16x4xbf16>,
    %cst_8 = arith.constant 0.000000e+00 : f32
    %5 = vector.broadcast %cst_8 : f32 to vector<256x128xf32>
    %c0_9 = arith.constant 0 : index
    %c0_10 = arith.constant 0 : index
    %c0_11 = arith.constant 0 : index
    %6 = vector.load %arg9[%c0_9, %c0_10, %c0_11] : memref<18x18x4xbf16, #tpu.memory_space<vmem>>, vector<16x16x4xbf16>
    %7 = vector.shape_cast %6 : vector<16x16x4xbf16> to vector<256x4xbf16>
    %c0_12 = arith.constant 0 : index
    %c0_13 = arith.constant 0 : index
    %c0_14 = arith.constant 0 : index
    %8 = vector.load %arg3[%c0_12, %c0_13, %c0_14] : memref<9x4x128xbf16, #tpu.memory_space<vmem>>, vector<1x4x128xbf16>
    %9 = vector.shape_cast %8 : vector<1x4x128xbf16> to vector<4x128xbf16>
    %cst_15 = arith.constant dense<0.000000e+00> : vector<256x128xf32>
    %10 = tpu.matmul %7, %9, %cst_15 {dimension_numbers = #tpu.dot_dimension_numbers<[1], [0], [0], [1], [0, 0, 1, 1], [], []>} : vector<256x4xbf16>, vector<4x128xbf16>, vector<256x128xf32> -> vector<256x128xf32>
    %11 = arith.addf %5, %10 : vector<256x128xf32>
    %c0_16 = arith.constant 0 : index
    %c1_17 = arith.constant 1 : index
    %c0_18 = arith.constant 0 : index
    %12 = vector.load %arg9[%c0_16, %c1_17, %c0_18] : memref<18x18x4xbf16, #tpu.memory_space<vmem>>, vector<16x16x4xbf16>
    %13 = vector.shape_cast %12 : vector<16x16x4xbf16> to vector<256x4xbf16>
    %c1_19 = arith.constant 1 : index
    %c0_20 = arith.constant 0 : index
    %c0_21 = arith.constant 0 : index
    %14 = vector.load %arg3[%c1_19, %c0_20, %c0_21] : memref<9x4x128xbf16, #tpu.memory_space<vmem>>, vector<1x4x128xbf16>
    %15 = vector.shape_cast %14 : vector<1x4x128xbf16> to vector<4x128xbf16>
    %cst_22 = arith.constant dense<0.000000e+00> : vector<256x128xf32>
    %16 = tpu.matmul %13, %15, %cst_22 {dimension_numbers = #tpu.dot_dimension_numbers<[1], [0], [0], [1], [0, 0, 1, 1], [], []>} : vector<256x4xbf16>, vector<4x128xbf16>, vector<256x128xf32> -> vector<256x128xf32>
    %17 = arith.addf %11, %16 : vector<256x128xf32>
    %c0_23 = arith.constant 0 : index
    %c2 = arith.constant 2 : index
    %c0_24 = arith.constant 0 : index
    %18 = vector.load %arg9[%c0_23, %c2, %c0_24] : memref<18x18x4xbf16, #tpu.memory_space<vmem>>, vector<16x16x4xbf16>
    %19 = vector.shape_cast %18 : vector<16x16x4xbf16> to vector<256x4xbf16>
    %c2_25 = arith.constant 2 : index
    %c0_26 = arith.constant 0 : index
    %c0_27 = arith.constant 0 : index
    %20 = vector.load %arg3[%c2_25, %c0_26, %c0_27] : memref<9x4x128xbf16, #tpu.memory_space<vmem>>, vector<1x4x128xbf16>
    %21 = vector.shape_cast %20 : vector<1x4x128xbf16> to vector<4x128xbf16>
    %cst_28 = arith.constant dense<0.000000e+00> : vector<256x128xf32>
    %22 = tpu.matmul %19, %21, %cst_28 {dimension_numbers = #tpu.dot_dimension_numbers<[1], [0], [0], [1], [0, 0, 1, 1], [], []>} : vector<256x4xbf16>, vector<4x128xbf16>, vector<256x128xf32> -> vector<256x128xf32>
    %23 = arith.addf %17, %22 : vector<256x128xf32>
    %c1_29 = arith.constant 1 : index
    %c0_30 = arith.constant 0 : index
    %c0_31 = arith.constant 0 : index
    %24 = vector.load %arg9[%c1_29, %c0_30, %c0_31] : memref<18x18x4xbf16, #tpu.memory_space<vmem>>, vector<16x16x4xbf16>
    %25 = vector.shape_cast %24 : vector<16x16x4xbf16> to vector<256x4xbf16>
    %c3 = arith.constant 3 : index
    %c0_32 = arith.constant 0 : index
    %c0_33 = arith.constant 0 : index
    %26 = vector.load %arg3[%c3, %c0_32, %c0_33] : memref<9x4x128xbf16, #tpu.memory_space<vmem>>, vector<1x4x128xbf16>
    %27 = vector.shape_cast %26 : vector<1x4x128xbf16> to vector<4x128xbf16>
    %cst_34 = arith.constant dense<0.000000e+00> : vector<256x128xf32>
    %28 = tpu.matmul %25, %27, %cst_34 {dimension_numbers = #tpu.dot_dimension_numbers<[1], [0], [0], [1], [0, 0, 1, 1], [], []>} : vector<256x4xbf16>, vector<4x128xbf16>, vector<256x128xf32> -> vector<256x128xf32>
    %29 = arith.addf %23, %28 : vector<256x128xf32>
    %c1_35 = arith.constant 1 : index
    %c1_36 = arith.constant 1 : index
    %c0_37 = arith.constant 0 : index
    %30 = vector.load %arg9[%c1_35, %c1_36, %c0_37] : memref<18x18x4xbf16, #tpu.memory_space<vmem>>, vector<16x16x4xbf16>
    %31 = vector.shape_cast %30 : vector<16x16x4xbf16> to vector<256x4xbf16>
    %c4 = arith.constant 4 : index
    %c0_38 = arith.constant 0 : index
    %c0_39 = arith.constant 0 : index
    %32 = vector.load %arg3[%c4, %c0_38, %c0_39] : memref<9x4x128xbf16, #tpu.memory_space<vmem>>, vector<1x4x128xbf16>
    %33 = vector.shape_cast %32 : vector<1x4x128xbf16> to vector<4x128xbf16>
    %cst_40 = arith.constant dense<0.000000e+00> : vector<256x128xf32>
    %34 = tpu.matmul %31, %33, %cst_40 {dimension_numbers = #tpu.dot_dimension_numbers<[1], [0], [0], [1], [0, 0, 1, 1], [], []>} : vector<256x4xbf16>, vector<4x128xbf16>, vector<256x128xf32> -> vector<256x128xf32>
    %35 = arith.addf %29, %34 : vector<256x128xf32>
    %c1_41 = arith.constant 1 : index
    %c2_42 = arith.constant 2 : index
    %c0_43 = arith.constant 0 : index
    %36 = vector.load %arg9[%c1_41, %c2_42, %c0_43] : memref<18x18x4xbf16, #tpu.memory_space<vmem>>, vector<16x16x4xbf16>
    %37 = vector.shape_cast %36 : vector<16x16x4xbf16> to vector<256x4xbf16>
    %c5 = arith.constant 5 : index
    %c0_44 = arith.constant 0 : index
    %c0_45 = arith.constant 0 : index
    %38 = vector.load %arg3[%c5, %c0_44, %c0_45] : memref<9x4x128xbf16, #tpu.memory_space<vmem>>, vector<1x4x128xbf16>
    %39 = vector.shape_cast %38 : vector<1x4x128xbf16> to vector<4x128xbf16>
    %cst_46 = arith.constant dense<0.000000e+00> : vector<256x128xf32>
    %40 = tpu.matmul %37, %39, %cst_46 {dimension_numbers = #tpu.dot_dimension_numbers<[1], [0], [0], [1], [0, 0, 1, 1], [], []>} : vector<256x4xbf16>, vector<4x128xbf16>, vector<256x128xf32> -> vector<256x128xf32>
    %41 = arith.addf %35, %40 : vector<256x128xf32>
    %c2_47 = arith.constant 2 : index
    %c0_48 = arith.constant 0 : index
    %c0_49 = arith.constant 0 : index
    %42 = vector.load %arg9[%c2_47, %c0_48, %c0_49] : memref<18x18x4xbf16, #tpu.memory_space<vmem>>, vector<16x16x4xbf16>
    %43 = vector.shape_cast %42 : vector<16x16x4xbf16> to vector<256x4xbf16>
    %c6 = arith.constant 6 : index
    %c0_50 = arith.constant 0 : index
    %c0_51 = arith.constant 0 : index
    %44 = vector.load %arg3[%c6, %c0_50, %c0_51] : memref<9x4x128xbf16, #tpu.memory_space<vmem>>, vector<1x4x128xbf16>
    %45 = vector.shape_cast %44 : vector<1x4x128xbf16> to vector<4x128xbf16>
    %cst_52 = arith.constant dense<0.000000e+00> : vector<256x128xf32>
    %46 = tpu.matmul %43, %45, %cst_52 {dimension_numbers = #tpu.dot_dimension_numbers<[1], [0], [0], [1], [0, 0, 1, 1], [], []>} : vector<256x4xbf16>, vector<4x128xbf16>, vector<256x128xf32> -> vector<256x128xf32>
    %47 = arith.addf %41, %46 : vector<256x128xf32>
    %c2_53 = arith.constant 2 : index
    %c1_54 = arith.constant 1 : index
    %c0_55 = arith.constant 0 : index
    %48 = vector.load %arg9[%c2_53, %c1_54, %c0_55] : memref<18x18x4xbf16, #tpu.memory_space<vmem>>, vector<16x16x4xbf16>
    %49 = vector.shape_cast %48 : vector<16x16x4xbf16> to vector<256x4xbf16>
    %c7 = arith.constant 7 : index
    %c0_56 = arith.constant 0 : index
    %c0_57 = arith.constant 0 : index
    %50 = vector.load %arg3[%c7, %c0_56, %c0_57] : memref<9x4x128xbf16, #tpu.memory_space<vmem>>, vector<1x4x128xbf16>
    %51 = vector.shape_cast %50 : vector<1x4x128xbf16> to vector<4x128xbf16>
    %cst_58 = arith.constant dense<0.000000e+00> : vector<256x128xf32>
    %52 = tpu.matmul %49, %51, %cst_58 {dimension_numbers = #tpu.dot_dimension_numbers<[1], [0], [0], [1], [0, 0, 1, 1], [], []>} : vector<256x4xbf16>, vector<4x128xbf16>, vector<256x128xf32> -> vector<256x128xf32>
    %53 = arith.addf %47, %52 : vector<256x128xf32>
    %c2_59 = arith.constant 2 : index
    %c2_60 = arith.constant 2 : index
    %c0_61 = arith.constant 0 : index
    %54 = vector.load %arg9[%c2_59, %c2_60, %c0_61] : memref<18x18x4xbf16, #tpu.memory_space<vmem>>, vector<16x16x4xbf16>
    %55 = vector.shape_cast %54 : vector<16x16x4xbf16> to vector<256x4xbf16>
    %c8 = arith.constant 8 : index
    %c0_62 = arith.constant 0 : index
    %c0_63 = arith.constant 0 : index
    %56 = vector.load %arg3[%c8, %c0_62, %c0_63] : memref<9x4x128xbf16, #tpu.memory_space<vmem>>, vector<1x4x128xbf16>
    %57 = vector.shape_cast %56 : vector<1x4x128xbf16> to vector<4x128xbf16>
    %cst_64 = arith.constant dense<0.000000e+00> : vector<256x128xf32>
    %58 = tpu.matmul %55, %57, %cst_64 {dimension_numbers = #tpu.dot_dimension_numbers<[1], [0], [0], [1], [0, 0, 1, 1], [], []>} : vector<256x4xbf16>, vector<4x128xbf16>, vector<256x128xf32> -> vector<256x128xf32>
    %59 = arith.addf %53, %58 : vector<256x128xf32>
    %60 = vector.shape_cast %59 : vector<256x128xf32> to vector<1x16x16x128xf32>
    %61 = arith.truncf %60 : vector<1x16x16x128xf32> to vector<1x16x16x128xbf16>
    %c0_65 = arith.constant 0 : index
    %c0_66 = arith.constant 0 : index
    %c0_67 = arith.constant 0 : index
    %c0_68 = arith.constant 0 : index
    %62 = vector.load %arg6[%c0_65, %c0_66, %c0_67, %c0_68] : memref<1x16x16x128xbf16, #tpu.memory_space<vmem>>, vector<1x16x16x128xbf16>
    tpu.vector_store %arg6[%c0_65, %c0_66, %c0_67, %c0_68], %61 {strides = array<i32>} : memref<1x16x16x128xbf16, #tpu.memory_space<vmem>>, vector<1x16x16x128xbf16>,
    %cst_69 = arith.constant dense<0.000000e+00> : vector<128xf32>
    %63 = vector.multi_reduction <add>, %59, %cst_69 [0] : vector<256x128xf32> to vector<128xf32>
    %64 = vector.shape_cast %63 : vector<128xf32> to vector<1x128xf32>
    %c0_70 = arith.constant 0 : index
    %c0_71 = arith.constant 0 : index
    %c0_72 = arith.constant 0 : index
    %65 = vector.load %arg7[%c0_70, %c0_71, %c0_72] : memref<1x1x128xf32, #tpu.memory_space<vmem>>, vector<1x1x128xf32>
    %66 = vector.shape_cast %65 : vector<1x1x128xf32> to vector<1x128xf32>
    %67 = vector.shape_cast %64 : vector<1x128xf32> to vector<1x1x128xf32>
    tpu.vector_store %arg7[%c0_70, %c0_71, %c0_72], %67 {strides = array<i32>} : memref<1x1x128xf32, #tpu.memory_space<vmem>>, vector<1x1x128xf32>,
    %68 = arith.mulf %59, %59 : vector<256x128xf32>
    %cst_73 = arith.constant dense<0.000000e+00> : vector<128xf32>
    %69 = vector.multi_reduction <add>, %68, %cst_73 [0] : vector<256x128xf32> to vector<128xf32>
    %70 = vector.shape_cast %69 : vector<128xf32> to vector<1x128xf32>
    %c0_74 = arith.constant 0 : index
    %c0_75 = arith.constant 0 : index
    %c0_76 = arith.constant 0 : index
    %71 = vector.load %arg8[%c0_74, %c0_75, %c0_76] : memref<1x1x128xf32, #tpu.memory_space<vmem>>, vector<1x1x128xf32>
    %72 = vector.shape_cast %71 : vector<1x1x128xf32> to vector<1x128xf32>
    %73 = vector.shape_cast %70 : vector<1x128xf32> to vector<1x1x128xf32>
    tpu.vector_store %arg8[%c0_74, %c0_75, %c0_76], %73 {strides = array<i32>} : memref<1x1x128xf32, #tpu.memory_space<vmem>>, vector<1x1x128xf32>,
    return
  }
  func.func @transform_0(%arg0: i32, %arg1: i32) -> (i32, i32, i32, i32) {
    %c0_i32 = arith.constant 0 : i32
    %c0_i32_0 = arith.constant 0 : i32
    %c0_i32_1 = arith.constant 0 : i32
    %c0_i32_2 = arith.constant 0 : i32
    return %arg1, %c0_i32, %c0_i32_0, %c0_i32_1 : i32, i32, i32, i32
  }
  func.func @transform_1(%arg0: i32, %arg1: i32) -> (i32, i32, i32) {
    %c0_i32 = arith.constant 0 : i32
    %c0_i32_0 = arith.constant 0 : i32
    %c0_i32_1 = arith.constant 0 : i32
    return %c0_i32, %c0_i32_0, %arg0 : i32, i32, i32
  }
  func.func @transform_2(%arg0: i32, %arg1: i32) -> (i32, i32) {
    %c0_i32 = arith.constant 0 : i32
    %c0_i32_0 = arith.constant 0 : i32
    %c0_i32_1 = arith.constant 0 : i32
    return %c0_i32, %c0_i32_0 : i32, i32
  }
  func.func @transform_3(%arg0: i32, %arg1: i32) -> (i32, i32) {
    %c0_i32 = arith.constant 0 : i32
    %c0_i32_0 = arith.constant 0 : i32
    %c0_i32_1 = arith.constant 0 : i32
    return %c0_i32, %c0_i32_0 : i32, i32
  }
  func.func @transform_4(%arg0: i32, %arg1: i32) -> (i32, i32, i32, i32) {
    %c0_i32 = arith.constant 0 : i32
    %c0_i32_0 = arith.constant 0 : i32
    %c0_i32_1 = arith.constant 0 : i32
    return %arg1, %c0_i32, %c0_i32_0, %arg0 : i32, i32, i32, i32
  }
  func.func @transform_5(%arg0: i32, %arg1: i32) -> (i32, i32, i32) {
    %c0_i32 = arith.constant 0 : i32
    %c0_i32_0 = arith.constant 0 : i32
    return %arg1, %c0_i32, %arg0 : i32, i32, i32
  }
  func.func @transform_6(%arg0: i32, %arg1: i32) -> (i32, i32, i32) {
    %c0_i32 = arith.constant 0 : i32
    %c0_i32_0 = arith.constant 0 : i32
    return %arg1, %c0_i32, %arg0 : i32, i32, i32
  }
}

module attributes {stable_mosaic.version = 11 : i64} {
  func.func @_conv3x3_kernel(%arg0: i32, %arg1: i32, %arg2: memref<1x16x16x128xbf16, #tpu.memory_space<vmem>>, %arg3: memref<9x128x128xbf16, #tpu.memory_space<vmem>>, %arg4: memref<1x128xf32, #tpu.memory_space<vmem>>, %arg5: memref<1x128xf32, #tpu.memory_space<vmem>>, %arg6: memref<1x16x16x128xbf16, #tpu.memory_space<vmem>>, %arg7: memref<1x1x128xf32, #tpu.memory_space<vmem>>, %arg8: memref<1x1x128xf32, #tpu.memory_space<vmem>>, %arg9: memref<18x18x128xbf16, #tpu.memory_space<vmem>>) attributes {dimension_semantics = [#tpu.dimension_semantics<parallel>, #tpu.dimension_semantics<parallel>], iteration_bounds = array<i64: 1, 2>, scalar_prefetch = 0 : i64, scratch_operands = 1 : i64, tpu.core_type = #tpu.core_type<tc>, window_params = [{transform_indices = @transform_0, window_bounds = array<i64: 1, 16, 16, 128>}, {transform_indices = @transform_1, window_bounds = array<i64: 9, 128, 128>}, {pipeline_mode = #tpu.pipeline_mode<synchronous>, transform_indices = @transform_2, window_bounds = array<i64: 1, 128>}, {pipeline_mode = #tpu.pipeline_mode<synchronous>, transform_indices = @transform_3, window_bounds = array<i64: 1, 128>}, {transform_indices = @transform_4, window_bounds = array<i64: 1, 16, 16, 128>}, {transform_indices = @transform_5, window_bounds = array<i64: 1, 1, 128>}, {transform_indices = @transform_6, window_bounds = array<i64: 1, 1, 128>}]} {
    %c0 = arith.constant 0 : index
    %c0_0 = arith.constant 0 : index
    %c0_1 = arith.constant 0 : index
    %c0_2 = arith.constant 0 : index
    %0 = vector.load %arg2[%c0, %c0_0, %c0_1, %c0_2] : memref<1x16x16x128xbf16, #tpu.memory_space<vmem>>, vector<1x16x16x128xbf16>
    %1 = vector.shape_cast %0 : vector<1x16x16x128xbf16> to vector<16x16x128xbf16>
    %2 = arith.extf %1 : vector<16x16x128xbf16> to vector<16x16x128xf32>
    %c0_3 = arith.constant 0 : index
    %c0_4 = arith.constant 0 : index
    %3 = vector.load %arg4[%c0_3, %c0_4] : memref<1x128xf32, #tpu.memory_space<vmem>>, vector<1x128xf32>
    %4 = vector.shape_cast %3 : vector<1x128xf32> to vector<1x1x128xf32>
    %5 = vector.broadcast %4 : vector<1x1x128xf32> to vector<16x16x128xf32>
    %6 = arith.mulf %2, %5 : vector<16x16x128xf32>
    %c0_5 = arith.constant 0 : index
    %c0_6 = arith.constant 0 : index
    %7 = vector.load %arg5[%c0_5, %c0_6] : memref<1x128xf32, #tpu.memory_space<vmem>>, vector<1x128xf32>
    %8 = vector.shape_cast %7 : vector<1x128xf32> to vector<1x1x128xf32>
    %9 = vector.broadcast %8 : vector<1x1x128xf32> to vector<16x16x128xf32>
    %10 = arith.addf %6, %9 : vector<16x16x128xf32>
    %cst = arith.constant 0.000000e+00 : f32
    %11 = vector.broadcast %cst : f32 to vector<16x16x128xf32>
    %12 = arith.maximumf %10, %11 : vector<16x16x128xf32>
    %cst_7 = arith.constant 0.000000e+00 : bf16
    %13 = vector.broadcast %cst_7 : bf16 to vector<18x18x128xbf16>
    %c0_8 = arith.constant 0 : index
    %c0_9 = arith.constant 0 : index
    %c0_10 = arith.constant 0 : index
    %14 = vector.load %arg9[%c0_8, %c0_9, %c0_10] : memref<18x18x128xbf16, #tpu.memory_space<vmem>>, vector<18x18x128xbf16>
    tpu.vector_store %arg9[%c0_8, %c0_9, %c0_10], %13 {strides = array<i32>} : memref<18x18x128xbf16, #tpu.memory_space<vmem>>, vector<18x18x128xbf16>,
    %15 = arith.truncf %12 : vector<16x16x128xf32> to vector<16x16x128xbf16>
    %c1 = arith.constant 1 : index
    %c1_11 = arith.constant 1 : index
    %c0_12 = arith.constant 0 : index
    %16 = vector.load %arg9[%c1, %c1_11, %c0_12] : memref<18x18x128xbf16, #tpu.memory_space<vmem>>, vector<16x16x128xbf16>
    tpu.vector_store %arg9[%c1, %c1_11, %c0_12], %15 {strides = array<i32>} : memref<18x18x128xbf16, #tpu.memory_space<vmem>>, vector<16x16x128xbf16>,
    %c0_13 = arith.constant 0 : index
    %c0_14 = arith.constant 0 : index
    %c0_15 = arith.constant 0 : index
    %17 = vector.load %arg9[%c0_13, %c0_14, %c0_15] : memref<18x18x128xbf16, #tpu.memory_space<vmem>>, vector<16x16x128xbf16>
    %18 = vector.shape_cast %17 : vector<16x16x128xbf16> to vector<256x128xbf16>
    %c0_16 = arith.constant 0 : index
    %c1_17 = arith.constant 1 : index
    %c0_18 = arith.constant 0 : index
    %19 = vector.load %arg9[%c0_16, %c1_17, %c0_18] : memref<18x18x128xbf16, #tpu.memory_space<vmem>>, vector<16x16x128xbf16>
    %20 = vector.shape_cast %19 : vector<16x16x128xbf16> to vector<256x128xbf16>
    %c0_19 = arith.constant 0 : index
    %c2 = arith.constant 2 : index
    %c0_20 = arith.constant 0 : index
    %21 = vector.load %arg9[%c0_19, %c2, %c0_20] : memref<18x18x128xbf16, #tpu.memory_space<vmem>>, vector<16x16x128xbf16>
    %22 = vector.shape_cast %21 : vector<16x16x128xbf16> to vector<256x128xbf16>
    %c1_21 = arith.constant 1 : index
    %c0_22 = arith.constant 0 : index
    %c0_23 = arith.constant 0 : index
    %23 = vector.load %arg9[%c1_21, %c0_22, %c0_23] : memref<18x18x128xbf16, #tpu.memory_space<vmem>>, vector<16x16x128xbf16>
    %24 = vector.shape_cast %23 : vector<16x16x128xbf16> to vector<256x128xbf16>
    %c1_24 = arith.constant 1 : index
    %c1_25 = arith.constant 1 : index
    %c0_26 = arith.constant 0 : index
    %25 = vector.load %arg9[%c1_24, %c1_25, %c0_26] : memref<18x18x128xbf16, #tpu.memory_space<vmem>>, vector<16x16x128xbf16>
    %26 = vector.shape_cast %25 : vector<16x16x128xbf16> to vector<256x128xbf16>
    %c1_27 = arith.constant 1 : index
    %c2_28 = arith.constant 2 : index
    %c0_29 = arith.constant 0 : index
    %27 = vector.load %arg9[%c1_27, %c2_28, %c0_29] : memref<18x18x128xbf16, #tpu.memory_space<vmem>>, vector<16x16x128xbf16>
    %28 = vector.shape_cast %27 : vector<16x16x128xbf16> to vector<256x128xbf16>
    %c2_30 = arith.constant 2 : index
    %c0_31 = arith.constant 0 : index
    %c0_32 = arith.constant 0 : index
    %29 = vector.load %arg9[%c2_30, %c0_31, %c0_32] : memref<18x18x128xbf16, #tpu.memory_space<vmem>>, vector<16x16x128xbf16>
    %30 = vector.shape_cast %29 : vector<16x16x128xbf16> to vector<256x128xbf16>
    %c2_33 = arith.constant 2 : index
    %c1_34 = arith.constant 1 : index
    %c0_35 = arith.constant 0 : index
    %31 = vector.load %arg9[%c2_33, %c1_34, %c0_35] : memref<18x18x128xbf16, #tpu.memory_space<vmem>>, vector<16x16x128xbf16>
    %32 = vector.shape_cast %31 : vector<16x16x128xbf16> to vector<256x128xbf16>
    %c2_36 = arith.constant 2 : index
    %c2_37 = arith.constant 2 : index
    %c0_38 = arith.constant 0 : index
    %33 = vector.load %arg9[%c2_36, %c2_37, %c0_38] : memref<18x18x128xbf16, #tpu.memory_space<vmem>>, vector<16x16x128xbf16>
    %34 = vector.shape_cast %33 : vector<16x16x128xbf16> to vector<256x128xbf16>
    %35 = tpu.concatenate %18, %20, %22, %24, %26, %28, %30, %32, %34 in 1 : vector<256x128xbf16>, vector<256x128xbf16>, vector<256x128xbf16>, vector<256x128xbf16>, vector<256x128xbf16>, vector<256x128xbf16>, vector<256x128xbf16>, vector<256x128xbf16>, vector<256x128xbf16> -> vector<256x1152xbf16>
    %c0_39 = arith.constant 0 : index
    %c0_40 = arith.constant 0 : index
    %c0_41 = arith.constant 0 : index
    %36 = vector.load %arg3[%c0_39, %c0_40, %c0_41] : memref<9x128x128xbf16, #tpu.memory_space<vmem>>, vector<9x128x128xbf16>
    %37 = vector.shape_cast %36 : vector<9x128x128xbf16> to vector<1152x128xbf16>
    %cst_42 = arith.constant dense<0.000000e+00> : vector<256x128xf32>
    %38 = tpu.matmul %35, %37, %cst_42 {dimension_numbers = #tpu.dot_dimension_numbers<[1], [0], [0], [1], [0, 0, 1, 1], [], []>} : vector<256x1152xbf16>, vector<1152x128xbf16>, vector<256x128xf32> -> vector<256x128xf32>
    %39 = vector.shape_cast %38 : vector<256x128xf32> to vector<1x16x16x128xf32>
    %40 = arith.truncf %39 : vector<1x16x16x128xf32> to vector<1x16x16x128xbf16>
    %c0_43 = arith.constant 0 : index
    %c0_44 = arith.constant 0 : index
    %c0_45 = arith.constant 0 : index
    %c0_46 = arith.constant 0 : index
    %41 = vector.load %arg6[%c0_43, %c0_44, %c0_45, %c0_46] : memref<1x16x16x128xbf16, #tpu.memory_space<vmem>>, vector<1x16x16x128xbf16>
    tpu.vector_store %arg6[%c0_43, %c0_44, %c0_45, %c0_46], %40 {strides = array<i32>} : memref<1x16x16x128xbf16, #tpu.memory_space<vmem>>, vector<1x16x16x128xbf16>,
    %cst_47 = arith.constant dense<0.000000e+00> : vector<128xf32>
    %42 = vector.multi_reduction <add>, %38, %cst_47 [0] : vector<256x128xf32> to vector<128xf32>
    %43 = vector.shape_cast %42 : vector<128xf32> to vector<1x128xf32>
    %c0_48 = arith.constant 0 : index
    %c0_49 = arith.constant 0 : index
    %c0_50 = arith.constant 0 : index
    %44 = vector.load %arg7[%c0_48, %c0_49, %c0_50] : memref<1x1x128xf32, #tpu.memory_space<vmem>>, vector<1x1x128xf32>
    %45 = vector.shape_cast %44 : vector<1x1x128xf32> to vector<1x128xf32>
    %46 = vector.shape_cast %43 : vector<1x128xf32> to vector<1x1x128xf32>
    tpu.vector_store %arg7[%c0_48, %c0_49, %c0_50], %46 {strides = array<i32>} : memref<1x1x128xf32, #tpu.memory_space<vmem>>, vector<1x1x128xf32>,
    %47 = arith.mulf %38, %38 : vector<256x128xf32>
    %cst_51 = arith.constant dense<0.000000e+00> : vector<128xf32>
    %48 = vector.multi_reduction <add>, %47, %cst_51 [0] : vector<256x128xf32> to vector<128xf32>
    %49 = vector.shape_cast %48 : vector<128xf32> to vector<1x128xf32>
    %c0_52 = arith.constant 0 : index
    %c0_53 = arith.constant 0 : index
    %c0_54 = arith.constant 0 : index
    %50 = vector.load %arg8[%c0_52, %c0_53, %c0_54] : memref<1x1x128xf32, #tpu.memory_space<vmem>>, vector<1x1x128xf32>
    %51 = vector.shape_cast %50 : vector<1x1x128xf32> to vector<1x128xf32>
    %52 = vector.shape_cast %49 : vector<1x128xf32> to vector<1x1x128xf32>
    tpu.vector_store %arg8[%c0_52, %c0_53, %c0_54], %52 {strides = array<i32>} : memref<1x1x128xf32, #tpu.memory_space<vmem>>, vector<1x1x128xf32>,
    return
  }
  func.func @transform_0(%arg0: i32, %arg1: i32) -> (i32, i32, i32, i32) {
    %c0_i32 = arith.constant 0 : i32
    %c0_i32_0 = arith.constant 0 : i32
    %c0_i32_1 = arith.constant 0 : i32
    %c0_i32_2 = arith.constant 0 : i32
    return %arg1, %c0_i32, %c0_i32_0, %c0_i32_1 : i32, i32, i32, i32
  }
  func.func @transform_1(%arg0: i32, %arg1: i32) -> (i32, i32, i32) {
    %c0_i32 = arith.constant 0 : i32
    %c0_i32_0 = arith.constant 0 : i32
    %c0_i32_1 = arith.constant 0 : i32
    return %c0_i32, %c0_i32_0, %arg0 : i32, i32, i32
  }
  func.func @transform_2(%arg0: i32, %arg1: i32) -> (i32, i32) {
    %c0_i32 = arith.constant 0 : i32
    %c0_i32_0 = arith.constant 0 : i32
    %c0_i32_1 = arith.constant 0 : i32
    return %c0_i32, %c0_i32_0 : i32, i32
  }
  func.func @transform_3(%arg0: i32, %arg1: i32) -> (i32, i32) {
    %c0_i32 = arith.constant 0 : i32
    %c0_i32_0 = arith.constant 0 : i32
    %c0_i32_1 = arith.constant 0 : i32
    return %c0_i32, %c0_i32_0 : i32, i32
  }
  func.func @transform_4(%arg0: i32, %arg1: i32) -> (i32, i32, i32, i32) {
    %c0_i32 = arith.constant 0 : i32
    %c0_i32_0 = arith.constant 0 : i32
    %c0_i32_1 = arith.constant 0 : i32
    return %arg1, %c0_i32, %c0_i32_0, %arg0 : i32, i32, i32, i32
  }
  func.func @transform_5(%arg0: i32, %arg1: i32) -> (i32, i32, i32) {
    %c0_i32 = arith.constant 0 : i32
    %c0_i32_0 = arith.constant 0 : i32
    return %arg1, %c0_i32, %arg0 : i32, i32, i32
  }
  func.func @transform_6(%arg0: i32, %arg1: i32) -> (i32, i32, i32) {
    %c0_i32 = arith.constant 0 : i32
    %c0_i32_0 = arith.constant 0 : i32
    return %arg1, %c0_i32, %arg0 : i32, i32, i32
  }
}

module attributes {stable_mosaic.version = 11 : i64} {
  func.func @_scale_shift_relu_kernel(%arg0: i32, %arg1: memref<512x128xbf16, #tpu.memory_space<vmem>>, %arg2: memref<1x128xf32, #tpu.memory_space<vmem>>, %arg3: memref<1x128xf32, #tpu.memory_space<vmem>>, %arg4: memref<512x128xf32, #tpu.memory_space<vmem>>) attributes {dimension_semantics = [#tpu.dimension_semantics<parallel>], iteration_bounds = array<i64: 1>, scalar_prefetch = 0 : i64, scratch_operands = 0 : i64, tpu.core_type = #tpu.core_type<tc>, window_params = [{transform_indices = @transform_0, window_bounds = array<i64: 512, 128>}, {pipeline_mode = #tpu.pipeline_mode<synchronous>, transform_indices = @transform_1, window_bounds = array<i64: 1, 128>}, {pipeline_mode = #tpu.pipeline_mode<synchronous>, transform_indices = @transform_2, window_bounds = array<i64: 1, 128>}, {transform_indices = @transform_3, window_bounds = array<i64: 512, 128>}]} {
    %c0 = arith.constant 0 : index
    %c0_0 = arith.constant 0 : index
    %0 = vector.load %arg1[%c0, %c0_0] : memref<512x128xbf16, #tpu.memory_space<vmem>>, vector<512x128xbf16>
    %1 = arith.extf %0 : vector<512x128xbf16> to vector<512x128xf32>
    %c0_1 = arith.constant 0 : index
    %c0_2 = arith.constant 0 : index
    %2 = vector.load %arg2[%c0_1, %c0_2] : memref<1x128xf32, #tpu.memory_space<vmem>>, vector<1x128xf32>
    %3 = vector.broadcast %2 : vector<1x128xf32> to vector<512x128xf32>
    %4 = arith.mulf %1, %3 : vector<512x128xf32>
    %c0_3 = arith.constant 0 : index
    %c0_4 = arith.constant 0 : index
    %5 = vector.load %arg3[%c0_3, %c0_4] : memref<1x128xf32, #tpu.memory_space<vmem>>, vector<1x128xf32>
    %6 = vector.broadcast %5 : vector<1x128xf32> to vector<512x128xf32>
    %7 = arith.addf %4, %6 : vector<512x128xf32>
    %cst = arith.constant 0.000000e+00 : f32
    %8 = vector.broadcast %cst : f32 to vector<512x128xf32>
    %9 = arith.maximumf %7, %8 : vector<512x128xf32>
    %c0_5 = arith.constant 0 : index
    %c0_6 = arith.constant 0 : index
    %10 = vector.load %arg4[%c0_5, %c0_6] : memref<512x128xf32, #tpu.memory_space<vmem>>, vector<512x128xf32>
    tpu.vector_store %arg4[%c0_5, %c0_6], %9 {strides = array<i32>} : memref<512x128xf32, #tpu.memory_space<vmem>>, vector<512x128xf32>,
    return
  }
  func.func @transform_0(%arg0: i32) -> (i32, i32) {
    %c0_i32 = arith.constant 0 : i32
    %c0_i32_0 = arith.constant 0 : i32
    return %arg0, %c0_i32 : i32, i32
  }
  func.func @transform_1(%arg0: i32) -> (i32, i32) {
    %c0_i32 = arith.constant 0 : i32
    %c0_i32_0 = arith.constant 0 : i32
    %c0_i32_1 = arith.constant 0 : i32
    return %c0_i32, %c0_i32_0 : i32, i32
  }
  func.func @transform_2(%arg0: i32) -> (i32, i32) {
    %c0_i32 = arith.constant 0 : i32
    %c0_i32_0 = arith.constant 0 : i32
    %c0_i32_1 = arith.constant 0 : i32
    return %c0_i32, %c0_i32_0 : i32, i32
  }
  func.func @transform_3(%arg0: i32) -> (i32, i32) {
    %c0_i32 = arith.constant 0 : i32
    %c0_i32_0 = arith.constant 0 : i32
    return %arg0, %c0_i32 : i32, i32
  }
}

</mosaic_0001>

<llo_original>
// kernel: double_conv_forward.5
$region0: #{double_conv_forward.5}
  #allocation0 [shape = 'u32[]', space=smem, size = 0x4, offset = 0x4, fixed_abs, tag = 'smem constant byte address 0x4 - core index']
  #allocation1 [shape = 'u32[144,128]{1,0:T(1,128)}', space=vmem, size = 0x12000, scoped, tag = 'internal scratch']
  %s0 = inlined_call_operand.vmem [shape: bf16[512,128], index: 0, kind: input, shape index: {}]
  %s1 = inlined_call_operand.vmem [shape: f32[1,128], index: 1, kind: input, shape index: {}]
  %s2 = inlined_call_operand.vmem [shape: f32[1,128], index: 2, kind: input, shape index: {}]
  %s3 = inlined_call_operand.vmem [shape: f32[512,128], index: 3, kind: output, shape index: {}]
  %s4 = sld [smem:[#allocation0]]
  $region22: #{double_conv_forward.5} parent=0
    _
  %s6 = ssub.s32 1, %s4
  %s7 = scalar_select 0, %s6, %s4
  // Predicated region
  $region2: #{double_conv_forward.5} parent=0 // pred_check
    _
  $region3: #{double_conv_forward.5} parent=0 // pred_check_branch
    %9 = sbr.rel (0) target = $region5
  $region4: #{double_conv_forward.5} parent=0 // pred_region
    _
  $region5: #{double_conv_forward.5} parent=0 // pred_fallthru
    _
  // Predicated region
  $region6: #{double_conv_forward.5} parent=0 // pred_check
    _
  $region7: #{double_conv_forward.5} parent=0 // pred_check_branch
    %11 = sbr.rel (0) target = $region9
  $region8: #{double_conv_forward.5} parent=0 // pred_region
    _
  $region9: #{double_conv_forward.5} parent=0 // pred_fallthru
    _
  // Predicated region
  $region10: #{double_conv_forward.5} parent=0 // pred_check
    _
  $region11: #{double_conv_forward.5} parent=0 // pred_check_branch
    %13 = sbr.rel (0) target = $region13
  $region12: #{double_conv_forward.5} parent=0 // pred_region
    _
  $region13: #{double_conv_forward.5} parent=0 // pred_fallthru
    _
  %v14 = vld [vmem:[%s0] sm:$0xf]
  %v15 = vld [vmem:[%s0 + $0x4] sm:$0xf]
  %v16 = vld [vmem:[%s0 + $0x8] sm:$0xf]
  %v17 = vld [vmem:[%s0 + $0xc] sm:$0xf]
  %v18 = vld [vmem:[%s0 + $0x10] sm:$0xf]
  %v19 = vld [vmem:[%s0 + $0x14] sm:$0xf]
  %v20 = vld [vmem:[%s0 + $0x18] sm:$0xf]
  %v21 = vld [vmem:[%s0 + $0x1c] sm:$0xf]
  %v22 = vld [vmem:[%s0 + $0x20] sm:$0xf]
  %v23 = vld [vmem:[%s0 + $0x24] sm:$0xf]
  %v24 = vld [vmem:[%s0 + $0x28] sm:$0xf]
  %v25 = vld [vmem:[%s0 + $0x2c] sm:$0xf]
  %v26 = vld [vmem:[%s0 + $0x30] sm:$0xf]
  %v27 = vld [vmem:[%s0 + $0x34] sm:$0xf]
  %v28 = vld [vmem:[%s0 + $0x38] sm:$0xf]
  %v29 = vld [vmem:[%s0 + $0x3c] sm:$0xf]
  %v30 = vld [vmem:[%s0 + $0x40] sm:$0xf]
  %v31 = vld [vmem:[%s0 + $0x44] sm:$0xf]
  %v32 = vld [vmem:[%s0 + $0x48] sm:$0xf]
  %v33 = vld [vmem:[%s0 + $0x4c] sm:$0xf]
  %v34 = vld [vmem:[%s0 + $0x50] sm:$0xf]
  %v35 = vld [vmem:[%s0 + $0x54] sm:$0xf]
  %v36 = vld [vmem:[%s0 + $0x58] sm:$0xf]
  %v37 = vld [vmem:[%s0 + $0x5c] sm:$0xf]
  %v38 = vld [vmem:[%s0 + $0x60] sm:$0xf]
  %v39 = vld [vmem:[%s0 + $0x64] sm:$0xf]
  %v40 = vld [vmem:[%s0 + $0x68] sm:$0xf]
  %v41 = vld [vmem:[%s0 + $0x6c] sm:$0xf]
  %v42 = vld [vmem:[%s0 + $0x70] sm:$0xf]
  %v43 = vld [vmem:[%s0 + $0x74] sm:$0xf]
  %v44 = vld [vmem:[%s0 + $0x78] sm:$0xf]
  %v45 = vld [vmem:[%s0 + $0x7c] sm:$0xf]
  %v46 = vld [vmem:[%s0 + $0x80] sm:$0xf]
  %v47 = vld [vmem:[%s0 + $0x84] sm:$0xf]
  %v48 = vld [vmem:[%s0 + $0x88] sm:$0xf]
  %v49 = vld [vmem:[%s0 + $0x8c] sm:$0xf]
  %v50 = vld [vmem:[%s0 + $0x90] sm:$0xf]
  %v51 = vld [vmem:[%s0 + $0x94] sm:$0xf]
  %v52 = vld [vmem:[%s0 + $0x98] sm:$0xf]
  %v53 = vld [vmem:[%s0 + $0x9c] sm:$0xf]
  %v54 = vld [vmem:[%s0 + $0xa0] sm:$0xf]
  %v55 = vld [vmem:[%s0 + $0xa4] sm:$0xf]
  %v56 = vld [vmem:[%s0 + $0xa8] sm:$0xf]
  %v57 = vld [vmem:[%s0 + $0xac] sm:$0xf]
  %v58 = vld [vmem:[%s0 + $0xb0] sm:$0xf]
  %v59 = vld [vmem:[%s0 + $0xb4] sm:$0xf]
  %v60 = vld [vmem:[%s0 + $0xb8] sm:$0xf]
  %v61 = vld [vmem:[%s0 + $0xbc] sm:$0xf]
  %v62 = vld [vmem:[%s0 + $0xc0] sm:$0xf]
  %v63 = vld [vmem:[%s0 + $0xc4] sm:$0xf]
  %v64 = vld [vmem:[%s0 + $0xc8] sm:$0xf]
  %v65 = vld [vmem:[%s0 + $0xcc] sm:$0xf]
  %v66 = vld [vmem:[%s0 + $0xd0] sm:$0xf]
  %v67 = vld [vmem:[%s0 + $0xd4] sm:$0xf]
  %v68 = vld [vmem:[%s0 + $0xd8] sm:$0xf]
  %v69 = vld [vmem:[%s0 + $0xdc] sm:$0xf]
  %v70 = vld [vmem:[%s0 + $0xe0] sm:$0xf]
  %v71 = vld [vmem:[%s0 + $0xe4] sm:$0xf]
  %v72 = vld [vmem:[%s0 + $0xe8] sm:$0xf]
  %v73 = vld [vmem:[%s0 + $0xec] sm:$0xf]
  %v74 = vld [vmem:[%s0 + $0xf0] sm:$0xf]
  %v75 = vld [vmem:[%s0 + $0xf4] sm:$0xf]
  %v76 = vld [vmem:[%s0 + $0xf8] sm:$0xf]
  %v77 = vld [vmem:[%s0 + $0xfc] sm:$0xf]
  %v78 = vunpack.c.l.bf16 %v14
  %v79 = vunpack.c.l.bf16 %v15
  %v80 = vunpack.c.l.bf16 %v16
  %v81 = vunpack.c.l.bf16 %v17
  %v82 = vunpack.c.l.bf16 %v18
  %v83 = vunpack.c.l.bf16 %v19
  %v84 = vunpack.c.l.bf16 %v20
  %v85 = vunpack.c.l.bf16 %v21
  %v86 = vunpack.c.l.bf16 %v22
  %v87 = vunpack.c.l.bf16 %v23
  %v88 = vunpack.c.l.bf16 %v24
  %v89 = vunpack.c.l.bf16 %v25
  %v90 = vunpack.c.l.bf16 %v26
  %v91 = vunpack.c.l.bf16 %v27
  %v92 = vunpack.c.l.bf16 %v28
  %v93 = vunpack.c.l.bf16 %v29
  %v94 = vunpack.c.l.bf16 %v30
  %v95 = vunpack.c.l.bf16 %v31
  %v96 = vunpack.c.l.bf16 %v32
  %v97 = vunpack.c.l.bf16 %v33
  %v98 = vunpack.c.l.bf16 %v34
  %v99 = vunpack.c.l.bf16 %v35
  %v100 = vunpack.c.l.bf16 %v36
  %v101 = vunpack.c.l.bf16 %v37
  %v102 = vunpack.c.l.bf16 %v38
  %v103 = vunpack.c.l.bf16 %v39
  %v104 = vunpack.c.l.bf16 %v40
  %v105 = vunpack.c.l.bf16 %v41
  %v106 = vunpack.c.l.bf16 %v42
  %v107 = vunpack.c.l.bf16 %v43
  %v108 = vunpack.c.l.bf16 %v44
  %v109 = vunpack.c.l.bf16 %v45
  %v110 = vunpack.c.l.bf16 %v46
  %v111 = vunpack.c.l.bf16 %v47
  %v112 = vunpack.c.l.bf16 %v48
  %v113 = vunpack.c.l.bf16 %v49
  %v114 = vunpack.c.l.bf16 %v50
  %v115 = vunpack.c.l.bf16 %v51
  %v116 = vunpack.c.l.bf16 %v52
  %v117 = vunpack.c.l.bf16 %v53
  %v118 = vunpack.c.l.bf16 %v54
  %v119 = vunpack.c.l.bf16 %v55
  %v120 = vunpack.c.l.bf16 %v56
  %v121 = vunpack.c.l.bf16 %v57
  %v122 = vunpack.c.l.bf16 %v58
  %v123 = vunpack.c.l.bf16 %v59
  %v124 = vunpack.c.l.bf16 %v60
  %v125 = vunpack.c.l.bf16 %v61
  %v126 = vunpack.c.l.bf16 %v62
  %v127 = vunpack.c.l.bf16 %v63
  %v128 = vunpack.c.l.bf16 %v64
  %v129 = vunpack.c.l.bf16 %v65
  %v130 = vunpack.c.l.bf16 %v66
  %v131 = vunpack.c.l.bf16 %v67
  %v132 = vunpack.c.l.bf16 %v68
  %v133 = vunpack.c.l.bf16 %v69
  %v134 = vunpack.c.l.bf16 %v70
  %v135 = vunpack.c.l.bf16 %v71
  %v136 = vunpack.c.l.bf16 %v72
  %v137 = vunpack.c.l.bf16 %v73
  %v138 = vunpack.c.l.bf16 %v74
  %v139 = vunpack.c.l.bf16 %v75
  %v140 = vunpack.c.l.bf16 %v76
  %v141 = vunpack.c.l.bf16 %v77
  %v142 = vld [vmem:[%s1] sm:$0x1]
  %v144 = vlaneseq
  %v145 = vshrl.u32 %v144, 7
  %v146 = vsub.s32 0, %v145
  %v147 = vrot.slane %v142, %v146
  %v149 = vmul.f32 %v78, %v147
  %v150 = vmul.f32 %v79, %v147
  %v151 = vmul.f32 %v80, %v147
  %v152 = vmul.f32 %v81, %v147
  %v153 = vmul.f32 %v82, %v147
  %v154 = vmul.f32 %v83, %v147
  %v155 = vmul.f32 %v84, %v147
  %v156 = vmul.f32 %v85, %v147
  %v157 = vmul.f32 %v86, %v147
  %v158 = vmul.f32 %v87, %v147
  %v159 = vmul.f32 %v88, %v147
  %v160 = vmul.f32 %v89, %v147
  %v161 = vmul.f32 %v90, %v147
  %v162 = vmul.f32 %v91, %v147
  %v163 = vmul.f32 %v92, %v147
  %v164 = vmul.f32 %v93, %v147
  %v165 = vmul.f32 %v94, %v147
  %v166 = vmul.f32 %v95, %v147
  %v167 = vmul.f32 %v96, %v147
  %v168 = vmul.f32 %v97, %v147
  %v169 = vmul.f32 %v98, %v147
  %v170 = vmul.f32 %v99, %v147
  %v171 = vmul.f32 %v100, %v147
  %v172 = vmul.f32 %v101, %v147
  %v173 = vmul.f32 %v102, %v147
  %v174 = vmul.f32 %v103, %v147
  %v175 = vmul.f32 %v104, %v147
  %v176 = vmul.f32 %v105, %v147
  %v177 = vmul.f32 %v106, %v147
  %v178 = vmul.f32 %v107, %v147
  %v179 = vmul.f32 %v108, %v147
  %v180 = vmul.f32 %v109, %v147
  %v181 = vmul.f32 %v110, %v147
  %v182 = vmul.f32 %v111, %v147
  %v183 = vmul.f32 %v112, %v147
  %v184 = vmul.f32 %v113, %v147
  %v185 = vmul.f32 %v114, %v147
  %v186 = vmul.f32 %v115, %v147
  %v187 = vmul.f32 %v116, %v147
  %v188 = vmul.f32 %v117, %v147
  %v189 = vmul.f32 %v118, %v147
  %v190 = vmul.f32 %v119, %v147
  %v191 = vmul.f32 %v120, %v147
  %v192 = vmul.f32 %v121, %v147
  %v193 = vmul.f32 %v122, %v147
  %v194 = vmul.f32 %v123, %v147
  %v195 = vmul.f32 %v124, %v147
  %v196 = vmul.f32 %v125, %v147
  %v197 = vmul.f32 %v126, %v147
  %v198 = vmul.f32 %v127, %v147
  %v199 = vmul.f32 %v128, %v147
  %v200 = vmul.f32 %v129, %v147
  %v201 = vmul.f32 %v130, %v147
  %v202 = vmul.f32 %v131, %v147
  %v203 = vmul.f32 %v132, %v147
  %v204 = vmul.f32 %v133, %v147
  %v205 = vmul.f32 %v134, %v147
  %v206 = vmul.f32 %v135, %v147
  %v207 = vmul.f32 %v136, %v147
  %v208 = vmul.f32 %v137, %v147
  %v209 = vmul.f32 %v138, %v147
  %v210 = vmul.f32 %v139, %v147
  %v211 = vmul.f32 %v140, %v147
  %v212 = vmul.f32 %v141, %v147
  %v213 = vld [vmem:[%s2] sm:$0x1]
  %v215 = vlaneseq
  %v216 = vshrl.u32 %v215, 7
  %v217 = vsub.s32 0, %v216
  %v218 = vrot.slane %v213, %v217
  %v220 = vadd.f32 %v149, %v218
  %v221 = vadd.f32 %v150, %v218
  %v222 = vadd.f32 %v151, %v218
  %v223 = vadd.f32 %v152, %v218
  %v224 = vadd.f32 %v153, %v218
  %v225 = vadd.f32 %v154, %v218
  %v226 = vadd.f32 %v155, %v218
  %v227 = vadd.f32 %v156, %v218
  %v228 = vadd.f32 %v157, %v218
  %v229 = vadd.f32 %v158, %v218
  %v230 = vadd.f32 %v159, %v218
  %v231 = vadd.f32 %v160, %v218
  %v232 = vadd.f32 %v161, %v218
  %v233 = vadd.f32 %v162, %v218
  %v234 = vadd.f32 %v163, %v218
  %v235 = vadd.f32 %v164, %v218
  %v236 = vadd.f32 %v165, %v218
  %v237 = vadd.f32 %v166, %v218
  %v238 = vadd.f32 %v167, %v218
  %v239 = vadd.f32 %v168, %v218
  %v240 = vadd.f32 %v169, %v218
  %v241 = vadd.f32 %v170, %v218
  %v242 = vadd.f32 %v171, %v218
  %v243 = vadd.f32 %v172, %v218
  %v244 = vadd.f32 %v173, %v218
  %v245 = vadd.f32 %v174, %v218
  %v246 = vadd.f32 %v175, %v218
  %v247 = vadd.f32 %v176, %v218
  %v248 = vadd.f32 %v177, %v218
  %v249 = vadd.f32 %v178, %v218
  %v250 = vadd.f32 %v179, %v218
  %v251 = vadd.f32 %v180, %v218
  %v252 = vadd.f32 %v181, %v218
  %v253 = vadd.f32 %v182, %v218
  %v254 = vadd.f32 %v183, %v218
  %v255 = vadd.f32 %v184, %v218
  %v256 = vadd.f32 %v185, %v218
  %v257 = vadd.f32 %v186, %v218
  %v258 = vadd.f32 %v187, %v218
  %v259 = vadd.f32 %v188, %v218
  %v260 = vadd.f32 %v189, %v218
  %v261 = vadd.f32 %v190, %v218
  %v262 = vadd.f32 %v191, %v218
  %v263 = vadd.f32 %v192, %v218
  %v264 = vadd.f32 %v193, %v218
  %v265 = vadd.f32 %v194, %v218
  %v266 = vadd.f32 %v195, %v218
  %v267 = vadd.f32 %v196, %v218
  %v268 = vadd.f32 %v197, %v218
  %v269 = vadd.f32 %v198, %v218
  %v270 = vadd.f32 %v199, %v218
  %v271 = vadd.f32 %v200, %v218
  %v272 = vadd.f32 %v201, %v218
  %v273 = vadd.f32 %v202, %v218
  %v274 = vadd.f32 %v203, %v218
  %v275 = vadd.f32 %v204, %v218
  %v276 = vadd.f32 %v205, %v218
  %v277 = vadd.f32 %v206, %v218
  %v278 = vadd.f32 %v207, %v218
  %v279 = vadd.f32 %v208, %v218
  %v280 = vadd.f32 %v209, %v218
  %v281 = vadd.f32 %v210, %v218
  %v282 = vadd.f32 %v211, %v218
  %v283 = vadd.f32 %v212, %v218
  %v284 = vmax.f32 %v220, 0.0
  %v285 = vmax.f32 %v221, 0.0
  %v286 = vmax.f32 %v222, 0.0
  %v287 = vmax.f32 %v223, 0.0
  %v288 = vmax.f32 %v224, 0.0
  %v289 = vmax.f32 %v225, 0.0
  %v290 = vmax.f32 %v226, 0.0
  %v291 = vmax.f32 %v227, 0.0
  %v292 = vmax.f32 %v228, 0.0
  %v293 = vmax.f32 %v229, 0.0
  %v294 = vmax.f32 %v230, 0.0
  %v295 = vmax.f32 %v231, 0.0
  %v296 = vmax.f32 %v232, 0.0
  %v297 = vmax.f32 %v233, 0.0
  %v298 = vmax.f32 %v234, 0.0
  %v299 = vmax.f32 %v235, 0.0
  %v300 = vmax.f32 %v236, 0.0
  %v301 = vmax.f32 %v237, 0.0
  %v302 = vmax.f32 %v238, 0.0
  %v303 = vmax.f32 %v239, 0.0
  %v304 = vmax.f32 %v240, 0.0
  %v305 = vmax.f32 %v241, 0.0
  %v306 = vmax.f32 %v242, 0.0
  %v307 = vmax.f32 %v243, 0.0
  %v308 = vmax.f32 %v244, 0.0
  %v309 = vmax.f32 %v245, 0.0
  %v310 = vmax.f32 %v246, 0.0
  %v311 = vmax.f32 %v247, 0.0
  %v312 = vmax.f32 %v248, 0.0
  %v313 = vmax.f32 %v249, 0.0
  %v314 = vmax.f32 %v250, 0.0
  %v315 = vmax.f32 %v251, 0.0
  %v316 = vmax.f32 %v252, 0.0
  %v317 = vmax.f32 %v253, 0.0
  %v318 = vmax.f32 %v254, 0.0
  %v319 = vmax.f32 %v255, 0.0
  %v320 = vmax.f32 %v256, 0.0
  %v321 = vmax.f32 %v257, 0.0
  %v322 = vmax.f32 %v258, 0.0
  %v323 = vmax.f32 %v259, 0.0
  %v324 = vmax.f32 %v260, 0.0
  %v325 = vmax.f32 %v261, 0.0
  %v326 = vmax.f32 %v262, 0.0
  %v327 = vmax.f32 %v263, 0.0
  %v328 = vmax.f32 %v264, 0.0
  %v329 = vmax.f32 %v265, 0.0
  %v330 = vmax.f32 %v266, 0.0
  %v331 = vmax.f32 %v267, 0.0
  %v332 = vmax.f32 %v268, 0.0
  %v333 = vmax.f32 %v269, 0.0
  %v334 = vmax.f32 %v270, 0.0
  %v335 = vmax.f32 %v271, 0.0
  %v336 = vmax.f32 %v272, 0.0
  %v337 = vmax.f32 %v273, 0.0
  %v338 = vmax.f32 %v274, 0.0
  %v339 = vmax.f32 %v275, 0.0
  %v340 = vmax.f32 %v276, 0.0
  %v341 = vmax.f32 %v277, 0.0
  %v342 = vmax.f32 %v278, 0.0
  %v343 = vmax.f32 %v279, 0.0
  %v344 = vmax.f32 %v280, 0.0
  %v345 = vmax.f32 %v281, 0.0
  %v346 = vmax.f32 %v282, 0.0
  %v347 = vmax.f32 %v283, 0.0
  %348 = vst [vmem:[%s3] sm:$0xff] %v284
  %349 = vst [vmem:[%s3 + $0x8] sm:$0xff] %v285
  %350 = vst [vmem:[%s3 + $0x10] sm:$0xff] %v286
  %351 = vst [vmem:[%s3 + $0x18] sm:$0xff] %v287
  %352 = vst [vmem:[%s3 + $0x20] sm:$0xff] %v288
  %353 = vst [vmem:[%s3 + $0x28] sm:$0xff] %v289
  %354 = vst [vmem:[%s3 + $0x30] sm:$0xff] %v290
  %355 = vst [vmem:[%s3 + $0x38] sm:$0xff] %v291
  %356 = vst [vmem:[%s3 + $0x40] sm:$0xff] %v292
  %357 = vst [vmem:[%s3 + $0x48] sm:$0xff] %v293
  %358 = vst [vmem:[%s3 + $0x50] sm:$0xff] %v294
  %359 = vst [vmem:[%s3 + $0x58] sm:$0xff] %v295
  %360 = vst [vmem:[%s3 + $0x60] sm:$0xff] %v296
  %361 = vst [vmem:[%s3 + $0x68] sm:$0xff] %v297
  %362 = vst [vmem:[%s3 + $0x70] sm:$0xff] %v298
  %363 = vst [vmem:[%s3 + $0x78] sm:$0xff] %v299
  %364 = vst [vmem:[%s3 + $0x80] sm:$0xff] %v300
  %365 = vst [vmem:[%s3 + $0x88] sm:$0xff] %v301
  %366 = vst [vmem:[%s3 + $0x90] sm:$0xff] %v302
  %367 = vst [vmem:[%s3 + $0x98] sm:$0xff] %v303
  %368 = vst [vmem:[%s3 + $0xa0] sm:$0xff] %v304
  %369 = vst [vmem:[%s3 + $0xa8] sm:$0xff] %v305
  %370 = vst [vmem:[%s3 + $0xb0] sm:$0xff] %v306
  %371 = vst [vmem:[%s3 + $0xb8] sm:$0xff] %v307
  %372 = vst [vmem:[%s3 + $0xc0] sm:$0xff] %v308
  %373 = vst [vmem:[%s3 + $0xc8] sm:$0xff] %v309
  %374 = vst [vmem:[%s3 + $0xd0] sm:$0xff] %v310
  %375 = vst [vmem:[%s3 + $0xd8] sm:$0xff] %v311
  %376 = vst [vmem:[%s3 + $0xe0] sm:$0xff] %v312
  %377 = vst [vmem:[%s3 + $0xe8] sm:$0xff] %v313
  %378 = vst [vmem:[%s3 + $0xf0] sm:$0xff] %v314
  %379 = vst [vmem:[%s3 + $0xf8] sm:$0xff] %v315
  %380 = vst [vmem:[%s3 + $0x100] sm:$0xff] %v316
  %381 = vst [vmem:[%s3 + $0x108] sm:$0xff] %v317
  %382 = vst [vmem:[%s3 + $0x110] sm:$0xff] %v318
  %383 = vst [vmem:[%s3 + $0x118] sm:$0xff] %v319
  %384 = vst [vmem:[%s3 + $0x120] sm:$0xff] %v320
  %385 = vst [vmem:[%s3 + $0x128] sm:$0xff] %v321
  %386 = vst [vmem:[%s3 + $0x130] sm:$0xff] %v322
  %387 = vst [vmem:[%s3 + $0x138] sm:$0xff] %v323
  %388 = vst [vmem:[%s3 + $0x140] sm:$0xff] %v324
  %389 = vst [vmem:[%s3 + $0x148] sm:$0xff] %v325
  %390 = vst [vmem:[%s3 + $0x150] sm:$0xff] %v326
  %391 = vst [vmem:[%s3 + $0x158] sm:$0xff] %v327
  %392 = vst [vmem:[%s3 + $0x160] sm:$0xff] %v328
  %393 = vst [vmem:[%s3 + $0x168] sm:$0xff] %v329
  %394 = vst [vmem:[%s3 + $0x170] sm:$0xff] %v330
  %395 = vst [vmem:[%s3 + $0x178] sm:$0xff] %v331
  %396 = vst [vmem:[%s3 + $0x180] sm:$0xff] %v332
  %397 = vst [vmem:[%s3 + $0x188] sm:$0xff] %v333
  %398 = vst [vmem:[%s3 + $0x190] sm:$0xff] %v334
  %399 = vst [vmem:[%s3 + $0x198] sm:$0xff] %v335
  %400 = vst [vmem:[%s3 + $0x1a0] sm:$0xff] %v336
  %401 = vst [vmem:[%s3 + $0x1a8] sm:$0xff] %v337
  %402 = vst [vmem:[%s3 + $0x1b0] sm:$0xff] %v338
  %403 = vst [vmem:[%s3 + $0x1b8] sm:$0xff] %v339
  %404 = vst [vmem:[%s3 + $0x1c0] sm:$0xff] %v340
  %405 = vst [vmem:[%s3 + $0x1c8] sm:$0xff] %v341
  %406 = vst [vmem:[%s3 + $0x1d0] sm:$0xff] %v342
  %407 = vst [vmem:[%s3 + $0x1d8] sm:$0xff] %v343
  %408 = vst [vmem:[%s3 + $0x1e0] sm:$0xff] %v344
  %409 = vst [vmem:[%s3 + $0x1e8] sm:$0xff] %v345
  %410 = vst [vmem:[%s3 + $0x1f0] sm:$0xff] %v346
  %411 = vst [vmem:[%s3 + $0x1f8] sm:$0xff] %v347
  // Predicated region
  $region14: #{double_conv_forward.5} parent=0 // pred_check
    _
  $region15: #{double_conv_forward.5} parent=0 // pred_check_branch
    %413 = sbr.rel (0) target = $region17
  $region16: #{double_conv_forward.5} parent=0 // pred_region
    _
  $region17: #{double_conv_forward.5} parent=0 // pred_fallthru
    _
  // Predicated region
  $region18: #{double_conv_forward.5} parent=0 // pred_check
    _
  $region19: #{double_conv_forward.5} parent=0 // pred_check_branch
    %415 = sbr.rel (0) target = $region21
  $region20: #{double_conv_forward.5} parent=0 // pred_region
    _
  $region21: #{double_conv_forward.5} parent=0 // pred_fallthru
    _

// kernel: double_conv_forward.4
$region0: #{double_conv_forward.4}
  #allocation0 [shape = 'u32[]', space=smem, size = 0x4, offset = 0x4, fixed_abs, tag = 'smem constant byte address 0x4 - core index']
  #allocation1 [shape = 'u32[144,128]{1,0:T(1,128)}', space=vmem, size = 0x12000, scoped, tag = 'internal scratch']
  #allocation2 [shape = 'bf16[18,18,128]{2,1,0:T(8,128)(2,1)}', space=vmem, size = 0x1b000, scoped, tag = 'scratch operand']
  %s0 = inlined_call_operand.vmem [shape: bf16[2,16,16,128], index: 0, kind: input, shape index: {}]
  %s1 = inlined_call_operand.vmem [shape: bf16[9,128,128], index: 1, kind: input, shape index: {}]
  %s2 = inlined_call_operand.vmem [shape: f32[1,128], index: 2, kind: input, shape index: {}]
  %s3 = inlined_call_operand.vmem [shape: f32[1,128], index: 3, kind: input, shape index: {}]
  %s4 = inlined_call_operand.vmem [shape: bf16[2,16,16,128], index: 4, kind: output, shape index: {0}]
  %s5 = inlined_call_operand.vmem [shape: f32[2,1,128], index: 5, kind: output, shape index: {1}]
  %s6 = inlined_call_operand.vmem [shape: f32[2,1,128], index: 6, kind: output, shape index: {2}]
  %7 = xla_tuple %s4, %s5, %s6
  %s8 = sld [smem:[#allocation0]]
  $region65: #{double_conv_forward.4} parent=0
    _
  %s10 = ssub.s32 1, %s8
  %s11 = scalar_select 0, %s10, %s8
  loop: start=0, step=1, limit=4
  $region2: #{double_conv_forward.4} parent=0 // loop_pre_header
    _
  $region3: #{double_conv_forward.4} parent=0 // loop_header
    %s13 = sphi 0, %s17
    %p14 = scmp.ge.s32.totalorder %s13, 4
    %s20 = sphi 0, %s32
    %s21 = sphi 0, %s28
    %s22 = sphi 0, %s20
    %s23 = sphi 0, %s21
    %s24 = sphi 0, %s22
    %s25 = sphi 0, %s23
    %s35 = sphi 0, %s37
    %s38 = sphi 0, %s35
    %s39 = sphi 0, %s38
    %s55 = sphi 0, %s39
    %s61 = sphi 0, %s63
    %s64 = sphi 0, %s61
    %s65 = sphi 0, %s64
    %s81 = sphi 0, %s65
    %s85 = sphi 0, %s85
    %s87 = sphi 0, %s85
    %s88 = sphi 0, %s87
    %s102 = sphi 0, %s88
    %s106 = sphi 0, %s106
    %s108 = sphi 0, %s106
    %s109 = sphi 0, %s108
    %s123 = sphi 0, %s109
    %s131 = sphi 0, %s133
    %s134 = sphi 0, %s131
    %s135 = sphi 0, %s134
    %s151 = sphi 0, %s135
    %s159 = sphi 0, %s161
    %s162 = sphi 0, %s159
    %s163 = sphi 0, %s162
    %s179 = sphi 0, %s163
    %s187 = sphi 0, %s189
    %s190 = sphi 0, %s187
    %s191 = sphi 0, %s190
    %s207 = sphi 0, %s191
  $region4: #{double_conv_forward.4} parent=0 // loop_header_branch
    %16 = sbr.rel (%p14) target = $region8
  $region5: #{double_conv_forward.4} parent=0 // loop_body
    %s18 = ssub.s32 %s13, 1
    %s19 = ssub.s32 %s13, 2
    %s26 = sadd.s32 1, %s21
    %p27 = scmp.ge.s32.totalorder %s26, 2
    %s28 = scalar_select %p27, 0, %s26
    %s29 = sadd.s32 1, %s20
    %s30 = scalar_select %p27, %s29, %s20
    %p31 = scmp.ge.s32.totalorder %s30, 1
    %s32 = scalar_select %p31, 0, %s30
    %s33 = ssub.s32 %s21, %s28
    %p34 = scmp.eq.s32.totalorder %s33, 0
    %s36 = sadd.s32 %s35, 1
    %s37 = scalar_select %p34, %s35, %s36
    %p40 = pneg %p34
    %p41 = scmp.eq.s32.totalorder %s13, 1
    %p42 = por %p40, %p41
    %p43 = scmp.ne.s32.totalorder %s35, %s38
    %p44 = scmp.eq.s32.totalorder %s13, 0
    %p45 = por %p43, %p44
    %p46 = scmp.ne.s32.totalorder %s35, %s38
    %p47 = scmp.eq.s32.totalorder %s18, 1
    %p48 = por %p46, %p47
    %p49 = scmp.ne.s32.totalorder %s38, %s39
    %p50 = scmp.eq.s32.totalorder %s18, 0
    %p51 = por %p49, %p50
    %p52 = scmp.ne.s32.totalorder %s38, %s39
    %p53 = scmp.eq.s32.totalorder %s19, 1
    %p54 = por %p52, %p53
    %p56 = scmp.ne.s32.totalorder %s39, %s55
    %p57 = scmp.eq.s32.totalorder %s19, 0
    %p58 = por %p56, %p57
    %s59 = ssub.s32 %s20, %s32
    %p60 = scmp.eq.s32.totalorder %s59, 0
    %s62 = sadd.s32 %s61, 1
    %s63 = scalar_select %p60, %s61, %s62
    %p66 = pneg %p60
    %p67 = scmp.eq.s32.totalorder %s13, 1
    %p68 = por %p66, %p67
    %p69 = scmp.ne.s32.totalorder %s61, %s64
    %p70 = scmp.eq.s32.totalorder %s13, 0
    %p71 = por %p69, %p70
    %p72 = scmp.ne.s32.totalorder %s61, %s64
    %p73 = scmp.eq.s32.totalorder %s18, 1
    %p74 = por %p72, %p73
    %p75 = scmp.ne.s32.totalorder %s64, %s65
    %p76 = scmp.eq.s32.totalorder %s18, 0
    %p77 = por %p75, %p76
    %p78 = scmp.ne.s32.totalorder %s64, %s65
    %p79 = scmp.eq.s32.totalorder %s19, 1
    %p80 = por %p78, %p79
    %p82 = scmp.ne.s32.totalorder %s65, %s81
    %p83 = scmp.eq.s32.totalorder %s19, 0
    %p84 = por %p82, %p83
    %s86 = sadd.s32 %s85, 1
    %p89 = scmp.eq.s32.totalorder %s13, 1
    %p90 = scmp.ne.s32.totalorder %s85, %s87
    %p91 = scmp.eq.s32.totalorder %s13, 0
    %p92 = por %p90, %p91
    %p93 = scmp.ne.s32.totalorder %s85, %s87
    %p94 = scmp.eq.s32.totalorder %s18, 1
    %p95 = por %p93, %p94
    %p96 = scmp.ne.s32.totalorder %s87, %s88
    %p97 = scmp.eq.s32.totalorder %s18, 0
    %p98 = por %p96, %p97
    %p99 = scmp.ne.s32.totalorder %s87, %s88
    %p100 = scmp.eq.s32.totalorder %s19, 1
    %p101 = por %p99, %p100
    %p103 = scmp.ne.s32.totalorder %s88, %s102
    %p104 = scmp.eq.s32.totalorder %s19, 0
    %p105 = por %p103, %p104
    %s107 = sadd.s32 %s106, 1
    %p110 = scmp.eq.s32.totalorder %s13, 1
    %p111 = scmp.ne.s32.totalorder %s106, %s108
    %p112 = scmp.eq.s32.totalorder %s13, 0
    %p113 = por %p111, %p112
    %p114 = scmp.ne.s32.totalorder %s106, %s108
    %p115 = scmp.eq.s32.totalorder %s18, 1
    %p116 = por %p114, %p115
    %p117 = scmp.ne.s32.totalorder %s108, %s109
    %p118 = scmp.eq.s32.totalorder %s18, 0
    %p119 = por %p117, %p118
    %p120 = scmp.ne.s32.totalorder %s108, %s109
    %p121 = scmp.eq.s32.totalorder %s19, 1
    %p122 = por %p120, %p121
    %p124 = scmp.ne.s32.totalorder %s109, %s123
    %p125 = scmp.eq.s32.totalorder %s19, 0
    %p126 = por %p124, %p125
    %s127 = ssub.s32 %s21, %s28
    %s128 = ssub.s32 %s20, %s32
    %s129 = sor.u32 %s127, %s128
    %p130 = scmp.eq.s32.totalorder %s129, 0
    %s132 = sadd.s32 %s131, 1
    %s133 = scalar_select %p130, %s131, %s132
    %p136 = pneg %p130
    %p137 = scmp.eq.s32.totalorder %s13, 1
    %p138 = por %p136, %p137
    %p139 = scmp.ne.s32.totalorder %s131, %s134
    %p140 = scmp.eq.s32.totalorder %s13, 0
    %p141 = por %p139, %p140
    %p142 = scmp.ne.s32.totalorder %s131, %s134
    %p143 = scmp.eq.s32.totalorder %s18, 1
    %p144 = por %p142, %p143
    %p145 = scmp.ne.s32.totalorder %s134, %s135
    %p146 = scmp.eq.s32.totalorder %s18, 0
    %p147 = por %p145, %p146
    %p148 = scmp.ne.s32.totalorder %s134, %s135
    %p149 = scmp.eq.s32.totalorder %s19, 1
    %p150 = por %p148, %p149
    %p152 = scmp.ne.s32.totalorder %s135, %s151
    %p153 = scmp.eq.s32.totalorder %s19, 0
    %p154 = por %p152, %p153
    %s155 = ssub.s32 %s21, %s28
    %s156 = ssub.s32 %s20, %s32
    %s157 = sor.u32 %s155, %s156
    %p158 = scmp.eq.s32.totalorder %s157, 0
    %s160 = sadd.s32 %s159, 1
    %s161 = scalar_select %p158, %s159, %s160
    %p164 = pneg %p158
    %p165 = scmp.eq.s32.totalorder %s13, 1
    %p166 = por %p164, %p165
    %p167 = scmp.ne.s32.totalorder %s159, %s162
    %p168 = scmp.eq.s32.totalorder %s13, 0
    %p169 = por %p167, %p168
    %p170 = scmp.ne.s32.totalorder %s159, %s162
    %p171 = scmp.eq.s32.totalorder %s18, 1
    %p172 = por %p170, %p171
    %p173 = scmp.ne.s32.totalorder %s162, %s163
    %p174 = scmp.eq.s32.totalorder %s18, 0
    %p175 = por %p173, %p174
    %p176 = scmp.ne.s32.totalorder %s162, %s163
    %p177 = scmp.eq.s32.totalorder %s19, 1
    %p178 = por %p176, %p177
    %p180 = scmp.ne.s32.totalorder %s163, %s179
    %p181 = scmp.eq.s32.totalorder %s19, 0
    %p182 = por %p180, %p181
    %s183 = ssub.s32 %s21, %s28
    %s184 = ssub.s32 %s20, %s32
    %s185 = sor.u32 %s183, %s184
    %p186 = scmp.eq.s32.totalorder %s185, 0
    %s188 = sadd.s32 %s187, 1
    %s189 = scalar_select %p186, %s187, %s188
    %p192 = pneg %p186
    %p193 = scmp.eq.s32.totalorder %s13, 1
    %p194 = por %p192, %p193
    %p195 = scmp.ne.s32.totalorder %s187, %s190
    %p196 = scmp.eq.s32.totalorder %s13, 0
    %p197 = por %p195, %p196
    %p198 = scmp.ne.s32.totalorder %s187, %s190
    %p199 = scmp.eq.s32.totalorder %s18, 1
    %p200 = por %p198, %p199
    %p201 = scmp.ne.s32.totalorder %s190, %s191
    %p202 = scmp.eq.s32.totalorder %s18, 0
    %p203 = por %p201, %p202
    %p204 = scmp.ne.s32.totalorder %s190, %s191
    %p205 = scmp.eq.s32.totalorder %s19, 1
    %p206 = por %p204, %p205
    %p208 = scmp.ne.s32.totalorder %s191, %s207
    %p209 = scmp.eq.s32.totalorder %s19, 0
    %p210 = por %p208, %p209
    %p211 = scmp.le.s32.totalorder 1, %s13
    %p212 = scmp.lt.s32.totalorder %s13, 3
    %p213 = pnand %p211, %p212
    %p214 = pneg %p213
    // Predicated region
    $region9: #{double_conv_forward.4} parent=5 // pred_check
      _
    $region10: #{double_conv_forward.4} parent=5 // pred_check_branch
      %216 = sbr.rel (%p213) target = $region12
    $region11: #{double_conv_forward.4} parent=5 // pred_region
      %s217 = ssub.s32 %s13, 1
      // Predicated region
      $region13: #{double_conv_forward.4} parent=11 // pred_check
        %p218 = pneg %p77
      $region14: #{double_conv_forward.4} parent=11 // pred_check_branch
        %220 = sbr.rel (%p218) target = $region16
      $region15: #{double_conv_forward.4} parent=11 // pred_region
        %p221 = scmp.lt.s32.totalorder %s22, 0
        %s222 = scalar_select %p221, %s22, 0
        %s223 = smul.addr %s222, 4
        %s224 = scalar_lea.vmem %s1, %s223
      $region16: #{double_conv_forward.4} parent=11 // pred_fallthru
        _
      // Predicated region
      $region17: #{double_conv_forward.4} parent=11 // pred_check
        %p225 = pneg %p98
      $region18: #{double_conv_forward.4} parent=11 // pred_check_branch
        %227 = sbr.rel (%p225) target = $region20
      $region19: #{double_conv_forward.4} parent=11 // pred_region
        _
      $region20: #{double_conv_forward.4} parent=11 // pred_fallthru
        _
      // Predicated region
      $region21: #{double_conv_forward.4} parent=11 // pred_check
        %p228 = pneg %p119
      $region22: #{double_conv_forward.4} parent=11 // pred_check_branch
        %230 = sbr.rel (%p228) target = $region24
      $region23: #{double_conv_forward.4} parent=11 // pred_region
        _
      $region24: #{double_conv_forward.4} parent=11 // pred_fallthru
        _
    $region12: #{double_conv_forward.4} parent=5 // pred_fallthru
      _
    %p231 = scmp.lt.s32.totalorder %s13, 2
    // Predicated region
    $region25: #{double_conv_forward.4} parent=5 // pred_check
      %p232 = pneg %p231
    $region26: #{double_conv_forward.4} parent=5 // pred_check_branch
      %234 = sbr.rel (%p232) target = $region28
    $region27: #{double_conv_forward.4} parent=5 // pred_region
      // Predicated region
      $region29: #{double_conv_forward.4} parent=27 // pred_check
        %p235 = pneg %p45
      $region30: #{double_conv_forward.4} parent=27 // pred_check_branch
        %237 = sbr.rel (%p235) target = $region32
      $region31: #{double_conv_forward.4} parent=27 // pred_region
        %p238 = scmp.lt.s32.totalorder %s21, 1
        %s239 = scalar_select %p238, %s21, 1
        %s240 = smul.addr %s239, 32
        %s241 = smul.addr %s240, 4
        %s242 = scalar_lea.vmem %s0, %s241
      $region32: #{double_conv_forward.4} parent=27 // pred_fallthru
        _
    $region28: #{double_conv_forward.4} parent=5 // pred_fallthru
      _
    %p243 = scmp.le.s32.totalorder 1, %s13
    %p244 = scmp.lt.s32.totalorder %s13, 3
    %p245 = pnand %p243, %p244
    %p246 = pneg %p245
    // Predicated region
    $region33: #{double_conv_forward.4} parent=5 // pred_check
      _
    $region34: #{double_conv_forward.4} parent=5 // pred_check_branch
      %248 = sbr.rel (%p245) target = $region36
    $region35: #{double_conv_forward.4} parent=5 // pred_region
      %s249 = ssub.s32 %s13, 1
      %p250 = scmp.lt.s32.totalorder %s23, 1
      %s251 = scalar_select %p250, %s23, 1
      %s252 = smul.addr %s251, 32
      %s253 = smul.addr %s252, 4
      %s254 = scalar_lea.vmem %s0, %s253
      %p255 = pneg %p51
      %p256 = pneg %p48
      %p257 = scmp.lt.s32.totalorder %s22, 0
      %s258 = scalar_select %p257, %s22, 0
      %s259 = smul.addr %s258, 4
      %s260 = scalar_lea.vmem %s1, %s259
      %p261 = pneg %p77
      %p262 = pneg %p74
      %p263 = pneg %p98
      %p264 = pneg %p95
      %p265 = pneg %p119
      %p266 = pneg %p116
      %p267 = pneg %p147
      %p268 = pneg %p144
      %p269 = scmp.lt.s32.totalorder %s23, 1
      %s270 = scalar_select %p269, %s23, 1
      %p271 = scmp.lt.s32.totalorder %s22, 0
      %s272 = scalar_select %p271, %s22, 0
      %s273 = smul.addr %s270, 32
      %s274 = sadd.s32 %s272, %s273
      %s275 = smul.addr %s274, 4
      %s276 = scalar_lea.vmem %s4, %s275
      %p277 = pneg %p175
      %p278 = pneg %p172
      %p279 = scmp.lt.s32.totalorder %s23, 1
      %s280 = scalar_select %p279, %s23, 1
      %p281 = scmp.lt.s32.totalorder %s22, 0
      %s282 = scalar_select %p281, %s22, 0
      %s283 = sadd.s32 %s282, %s280
      %s284 = scalar_lea.vmem %s5, %s283
      %p285 = pneg %p203
      %p286 = pneg %p200
      %p287 = scmp.lt.s32.totalorder %s23, 1
      %s288 = scalar_select %p287, %s23, 1
      %p289 = scmp.lt.s32.totalorder %s22, 0
      %s290 = scalar_select %p289, %s22, 0
      %s291 = sadd.s32 %s290, %s288
      %s292 = scalar_lea.vmem %s6, %s291
      %p293 = scmp.lt.s32.totalorder %s23, 1
      %s294 = scalar_select %p293, %s23, 1
      %s295 = smul.addr %s294, 32
      %s296 = smul.addr %s295, 4
      %s297 = scalar_lea.vmem %s0, %s296
      %p298 = scmp.lt.s32.totalorder %s22, 0
      %s299 = scalar_select %p298, %s22, 0
      %s300 = smul.addr %s299, 4
      %s301 = scalar_lea.vmem %s1, %s300
      %p302 = scmp.lt.s32.totalorder %s23, 1
      %s303 = scalar_select %p302, %s23, 1
      %p304 = scmp.lt.s32.totalorder %s22, 0
      %s305 = scalar_select %p304, %s22, 0
      %s306 = smul.addr %s303, 32
      %s307 = sadd.s32 %s305, %s306
      %s308 = smul.addr %s307, 4
      %s309 = scalar_lea.vmem %s4, %s308
      %p310 = scmp.lt.s32.totalorder %s23, 1
      %s311 = scalar_select %p310, %s23, 1
      %p312 = scmp.lt.s32.totalorder %s22, 0
      %s313 = scalar_select %p312, %s22, 0
      %s314 = sadd.s32 %s313, %s311
      %s315 = scalar_lea.vmem %s5, %s314
      %p316 = scmp.lt.s32.totalorder %s23, 1
      %s317 = scalar_select %p316, %s23, 1
      %p318 = scmp.lt.s32.totalorder %s22, 0
      %s319 = scalar_select %p318, %s22, 0
      %s320 = sadd.s32 %s319, %s317
      %s321 = scalar_lea.vmem %s6, %s320
      %v323 = vld [vmem:[%s297] sm:$0xf]
      %v324 = vld [vmem:[%s297 + $0x4] sm:$0xf]
      %v325 = vld [vmem:[%s297 + $0x8] sm:$0xf]
      %v326 = vld [vmem:[%s297 + $0xc] sm:$0xf]
      %v327 = vld [vmem:[%s297 + $0x10] sm:$0xf]
      %v328 = vld [vmem:[%s297 + $0x14] sm:$0xf]
      %v329 = vld [vmem:[%s297 + $0x18] sm:$0xf]
      %v330 = vld [vmem:[%s297 + $0x1c] sm:$0xf]
      %v331 = vld [vmem:[%s297 + $0x20] sm:$0xf]
      %v332 = vld [vmem:[%s297 + $0x24] sm:$0xf]
      %v333 = vld [vmem:[%s297 + $0x28] sm:$0xf]
      %v334 = vld [vmem:[%s297 + $0x2c] sm:$0xf]
      %v335 = vld [vmem:[%s297 + $0x30] sm:$0xf]
      %v336 = vld [vmem:[%s297 + $0x34] sm:$0xf]
      %v337 = vld [vmem:[%s297 + $0x38] sm:$0xf]
      %v338 = vld [vmem:[%s297 + $0x3c] sm:$0xf]
      %v339 = vld [vmem:[%s297 + $0x40] sm:$0xf]
      %v340 = vld [vmem:[%s297 + $0x44] sm:$0xf]
      %v341 = vld [vmem:[%s297 + $0x48] sm:$0xf]
      %v342 = vld [vmem:[%s297 + $0x4c] sm:$0xf]
      %v343 = vld [vmem:[%s297 + $0x50] sm:$0xf]
      %v344 = vld [vmem:[%s297 + $0x54] sm:$0xf]
      %v345 = vld [vmem:[%s297 + $0x58] sm:$0xf]
      %v346 = vld [vmem:[%s297 + $0x5c] sm:$0xf]
      %v347 = vld [vmem:[%s297 + $0x60] sm:$0xf]
      %v348 = vld [vmem:[%s297 + $0x64] sm:$0xf]
      %v349 = vld [vmem:[%s297 + $0x68] sm:$0xf]
      %v350 = vld [vmem:[%s297 + $0x6c] sm:$0xf]
      %v351 = vld [vmem:[%s297 + $0x70] sm:$0xf]
      %v352 = vld [vmem:[%s297 + $0x74] sm:$0xf]
      %v353 = vld [vmem:[%s297 + $0x78] sm:$0xf]
      %v354 = vld [vmem:[%s297 + $0x7c] sm:$0xf]
      %v355 = vunpack.c.l.bf16 %v323
      %v356 = vunpack.c.l.bf16 %v324
      %v357 = vunpack.c.l.bf16 %v325
      %v358 = vunpack.c.l.bf16 %v326
      %v359 = vunpack.c.l.bf16 %v327
      %v360 = vunpack.c.l.bf16 %v328
      %v361 = vunpack.c.l.bf16 %v329
      %v362 = vunpack.c.l.bf16 %v330
      %v363 = vunpack.c.l.bf16 %v331
      %v364 = vunpack.c.l.bf16 %v332
      %v365 = vunpack.c.l.bf16 %v333
      %v366 = vunpack.c.l.bf16 %v334
      %v367 = vunpack.c.l.bf16 %v335
      %v368 = vunpack.c.l.bf16 %v336
      %v369 = vunpack.c.l.bf16 %v337
      %v370 = vunpack.c.l.bf16 %v338
      %v371 = vunpack.c.l.bf16 %v339
      %v372 = vunpack.c.l.bf16 %v340
      %v373 = vunpack.c.l.bf16 %v341
      %v374 = vunpack.c.l.bf16 %v342
      %v375 = vunpack.c.l.bf16 %v343
      %v376 = vunpack.c.l.bf16 %v344
      %v377 = vunpack.c.l.bf16 %v345
      %v378 = vunpack.c.l.bf16 %v346
      %v379 = vunpack.c.l.bf16 %v347
      %v380 = vunpack.c.l.bf16 %v348
      %v381 = vunpack.c.l.bf16 %v349
      %v382 = vunpack.c.l.bf16 %v350
      %v383 = vunpack.c.l.bf16 %v351
      %v384 = vunpack.c.l.bf16 %v352
      %v385 = vunpack.c.l.bf16 %v353
      %v386 = vunpack.c.l.bf16 %v354
      %v387 = vld [vmem:[%s2] sm:$0x1]
      %v389 = vlaneseq
      %v390 = vshrl.u32 %v389, 7
      %v391 = vsub.s32 0, %v390
      %v392 = vrot.slane %v387, %v391
      %v394 = vmul.f32 %v355, %v392
      %v395 = vmul.f32 %v356, %v392
      %v396 = vmul.f32 %v357, %v392
      %v397 = vmul.f32 %v358, %v392
      %v398 = vmul.f32 %v359, %v392
      %v399 = vmul.f32 %v360, %v392
      %v400 = vmul.f32 %v361, %v392
      %v401 = vmul.f32 %v362, %v392
      %v402 = vmul.f32 %v363, %v392
      %v403 = vmul.f32 %v364, %v392
      %v404 = vmul.f32 %v365, %v392
      %v405 = vmul.f32 %v366, %v392
      %v406 = vmul.f32 %v367, %v392
      %v407 = vmul.f32 %v368, %v392
      %v408 = vmul.f32 %v369, %v392
      %v409 = vmul.f32 %v370, %v392
      %v410 = vmul.f32 %v371, %v392
      %v411 = vmul.f32 %v372, %v392
      %v412 = vmul.f32 %v373, %v392
      %v413 = vmul.f32 %v374, %v392
      %v414 = vmul.f32 %v375, %v392
      %v415 = vmul.f32 %v376, %v392
      %v416 = vmul.f32 %v377, %v392
      %v417 = vmul.f32 %v378, %v392
      %v418 = vmul.f32 %v379, %v392
      %v419 = vmul.f32 %v380, %v392
      %v420 = vmul.f32 %v381, %v392
      %v421 = vmul.f32 %v382, %v392
      %v422 = vmul.f32 %v383, %v392
      %v423 = vmul.f32 %v384, %v392
      %v424 = vmul.f32 %v385, %v392
      %v425 = vmul.f32 %v386, %v392
      %v426 = vld [vmem:[%s3] sm:$0x1]
      %v428 = vlaneseq
      %v429 = vshrl.u32 %v428, 7
      %v430 = vsub.s32 0, %v429
      %v431 = vrot.slane %v426, %v430
      %v433 = vadd.f32 %v394, %v431
      %v434 = vadd.f32 %v395, %v431
      %v435 = vadd.f32 %v396, %v431
      %v436 = vadd.f32 %v397, %v431
      %v437 = vadd.f32 %v398, %v431
      %v438 = vadd.f32 %v399, %v431
      %v439 = vadd.f32 %v400, %v431
      %v440 = vadd.f32 %v401, %v431
      %v441 = vadd.f32 %v402, %v431
      %v442 = vadd.f32 %v403, %v431
      %v443 = vadd.f32 %v404, %v431
      %v444 = vadd.f32 %v405, %v431
      %v445 = vadd.f32 %v406, %v431
      %v446 = vadd.f32 %v407, %v431
      %v447 = vadd.f32 %v408, %v431
      %v448 = vadd.f32 %v409, %v431
      %v449 = vadd.f32 %v410, %v431
      %v450 = vadd.f32 %v411, %v431
      %v451 = vadd.f32 %v412, %v431
      %v452 = vadd.f32 %v413, %v431
      %v453 = vadd.f32 %v414, %v431
      %v454 = vadd.f32 %v415, %v431
      %v455 = vadd.f32 %v416, %v431
      %v456 = vadd.f32 %v417, %v431
      %v457 = vadd.f32 %v418, %v431
      %v458 = vadd.f32 %v419, %v431
      %v459 = vadd.f32 %v420, %v431
      %v460 = vadd.f32 %v421, %v431
      %v461 = vadd.f32 %v422, %v431
      %v462 = vadd.f32 %v423, %v431
      %v463 = vadd.f32 %v424, %v431
      %v464 = vadd.f32 %v425, %v431
      %v465 = vmax.f32 %v433, 0.0
      %v466 = vmax.f32 %v434, 0.0
      %v467 = vmax.f32 %v435, 0.0
      %v468 = vmax.f32 %v436, 0.0
      %v469 = vmax.f32 %v437, 0.0
      %v470 = vmax.f32 %v438, 0.0
      %v471 = vmax.f32 %v439, 0.0
      %v472 = vmax.f32 %v440, 0.0
      %v473 = vmax.f32 %v441, 0.0
      %v474 = vmax.f32 %v442, 0.0
      %v475 = vmax.f32 %v443, 0.0
      %v476 = vmax.f32 %v444, 0.0
      %v477 = vmax.f32 %v445, 0.0
      %v478 = vmax.f32 %v446, 0.0
      %v479 = vmax.f32 %v447, 0.0
      %v480 = vmax.f32 %v448, 0.0
      %v481 = vmax.f32 %v449, 0.0
      %v482 = vmax.f32 %v450, 0.0
      %v483 = vmax.f32 %v451, 0.0
      %v484 = vmax.f32 %v452, 0.0
      %v485 = vmax.f32 %v453, 0.0
      %v486 = vmax.f32 %v454, 0.0
      %v487 = vmax.f32 %v455, 0.0
      %v488 = vmax.f32 %v456, 0.0
      %v489 = vmax.f32 %v457, 0.0
      %v490 = vmax.f32 %v458, 0.0
      %v491 = vmax.f32 %v459, 0.0
      %v492 = vmax.f32 %v460, 0.0
      %v493 = vmax.f32 %v461, 0.0
      %v494 = vmax.f32 %v462, 0.0
      %v495 = vmax.f32 %v463, 0.0
      %v496 = vmax.f32 %v464, 0.0
      %497 = vst [vmem:[#allocation2] sm:$0xf] 0
      %498 = vst [vmem:[#allocation2 + $0x4] sm:$0xf] 0
      %499 = vst [vmem:[#allocation2 + $0x8] sm:$0x1] 0
      %500 = vst [vmem:[#allocation2 + $0xc] sm:$0xf] 0
      %501 = vst [vmem:[#allocation2 + $0x10] sm:$0xf] 0
      %502 = vst [vmem:[#allocation2 + $0x14] sm:$0x1] 0
      %503 = vst [vmem:[#allocation2 + $0x18] sm:$0xf] 0
      %504 = vst [vmem:[#allocation2 + $0x1c] sm:$0xf] 0
      %505 = vst [vmem:[#allocation2 + $0x20] sm:$0x1] 0
      %506 = vst [vmem:[#allocation2 + $0x24] sm:$0xf] 0
      %507 = vst [vmem:[#allocation2 + $0x28] sm:$0xf] 0
      %508 = vst [vmem:[#allocation2 + $0x2c] sm:$0x1] 0
      %509 = vst [vmem:[#allocation2 + $0x30] sm:$0xf] 0
      %510 = vst [vmem:[#allocation2 + $0x34] sm:$0xf] 0
      %511 = vst [vmem:[#allocation2 + $0x38] sm:$0x1] 0
      %512 = vst [vmem:[#allocation2 + $0x3c] sm:$0xf] 0
      %513 = vst [vmem:[#allocation2 + $0x40] sm:$0xf] 0
      %514 = vst [vmem:[#allocation2 + $0x44] sm:$0x1] 0
      %515 = vst [vmem:[#allocation2 + $0x48] sm:$0xf] 0
      %516 = vst [vmem:[#allocation2 + $0x4c] sm:$0xf] 0
      %517 = vst [vmem:[#allocation2 + $0x50] sm:$0x1] 0
      %518 = vst [vmem:[#allocation2 + $0x54] sm:$0xf] 0
      %519 = vst [vmem:[#allocation2 + $0x58] sm:$0xf] 0
      %520 = vst [vmem:[#allocation2 + $0x5c] sm:$0x1] 0
      %521 = vst [vmem:[#allocation2 + $0x60] sm:$0xf] 0
      %522 = vst [vmem:[#allocation2 + $0x64] sm:$0xf] 0
      %523 = vst [vmem:[#allocation2 + $0x68] sm:$0x1] 0
      %524 = vst [vmem:[#allocation2 + $0x6c] sm:$0xf] 0
      %525 = vst [vmem:[#allocation2 + $0x70] sm:$0xf] 0
      %526 = vst [vmem:[#allocation2 + $0x74] sm:$0x1] 0
      %527 = vst [vmem:[#allocation2 + $0x78] sm:$0xf] 0
      %528 = vst [vmem:[#allocation2 + $0x7c] sm:$0xf] 0
      %529 = vst [vmem:[#allocation2 + $0x80] sm:$0x1] 0
      %530 = vst [vmem:[#allocation2 + $0x84] sm:$0xf] 0
      %531 = vst [vmem:[#allocation2 + $0x88] sm:$0xf] 0
      %532 = vst [vmem:[#allocation2 + $0x8c] sm:$0x1] 0
      %533 = vst [vmem:[#allocation2 + $0x90] sm:$0xf] 0
      %534 = vst [vmem:[#allocation2 + $0x94] sm:$0xf] 0
      %535 = vst [vmem:[#allocation2 + $0x98] sm:$0x1] 0
      %536 = vst [vmem:[#allocation2 + $0x9c] sm:$0xf] 0
      %537 = vst [vmem:[#allocation2 + $0xa0] sm:$0xf] 0
      %538 = vst [vmem:[#allocation2 + $0xa4] sm:$0x1] 0
      %539 = vst [vmem:[#allocation2 + $0xa8] sm:$0xf] 0
      %540 = vst [vmem:[#allocation2 + $0xac] sm:$0xf] 0
      %541 = vst [vmem:[#allocation2 + $0xb0] sm:$0x1] 0
      %542 = vst [vmem:[#allocation2 + $0xb4] sm:$0xf] 0
      %543 = vst [vmem:[#allocation2 + $0xb8] sm:$0xf] 0
      %544 = vst [vmem:[#allocation2 + $0xbc] sm:$0x1] 0
      %545 = vst [vmem:[#allocation2 + $0xc0] sm:$0xf] 0
      %546 = vst [vmem:[#allocation2 + $0xc4] sm:$0xf] 0
      %547 = vst [vmem:[#allocation2 + $0xc8] sm:$0x1] 0
      %548 = vst [vmem:[#allocation2 + $0xcc] sm:$0xf] 0
      %549 = vst [vmem:[#allocation2 + $0xd0] sm:$0xf] 0
      %550 = vst [vmem:[#allocation2 + $0xd4] sm:$0x1] 0
      %v551 = vpack.c.bf16 %v466, %v465
      %v552 = vpack.c.bf16 %v468, %v467
      %v553 = vpack.c.bf16 %v470, %v469
      %v554 = vpack.c.bf16 %v472, %v471
      %v555 = vpack.c.bf16 %v474, %v473
      %v556 = vpack.c.bf16 %v476, %v475
      %v557 = vpack.c.bf16 %v478, %v477
      %v558 = vpack.c.bf16 %v480, %v479
      %v559 = vpack.c.bf16 %v482, %v481
      %v560 = vpack.c.bf16 %v484, %v483
      %v561 = vpack.c.bf16 %v486, %v485
      %v562 = vpack.c.bf16 %v488, %v487
      %v563 = vpack.c.bf16 %v490, %v489
      %v564 = vpack.c.bf16 %v492, %v491
      %v565 = vpack.c.bf16 %v494, %v493
      %v566 = vpack.c.bf16 %v496, %v495
      %v583 = vunpack.c.l.b16 %v551
      %v584 = vunpack.c.h.b16 %v551
      %v585 = vunpack.c.l.b16 %v552
      %v586 = vunpack.c.h.b16 %v552
      %v587 = vunpack.c.l.b16 %v553
      %v588 = vunpack.c.h.b16 %v553
      %v589 = vunpack.c.l.b16 %v554
      %v590 = vunpack.c.h.b16 %v554
      %v591 = vunpack.c.l.b16 %v555
      %v592 = vunpack.c.h.b16 %v555
      %v593 = vunpack.c.l.b16 %v556
      %v594 = vunpack.c.h.b16 %v556
      %v595 = vunpack.c.l.b16 %v557
      %v596 = vunpack.c.h.b16 %v557
      %v597 = vunpack.c.l.b16 %v558
      %v598 = vunpack.c.h.b16 %v558
      %v599 = vunpack.c.l.b16 %v559
      %v600 = vunpack.c.h.b16 %v559
      %v601 = vunpack.c.l.b16 %v560
      %v602 = vunpack.c.h.b16 %v560
      %v603 = vunpack.c.l.b16 %v561
      %v604 = vunpack.c.h.b16 %v561
      %v605 = vunpack.c.l.b16 %v562
      %v606 = vunpack.c.h.b16 %v562
      %v607 = vunpack.c.l.b16 %v563
      %v608 = vunpack.c.h.b16 %v563
      %v609 = vunpack.c.l.b16 %v564
      %v610 = vunpack.c.h.b16 %v564
      %v611 = vunpack.c.l.b16 %v565
      %v612 = vunpack.c.h.b16 %v565
      %v613 = vunpack.c.l.b16 %v566
      %v614 = vunpack.c.h.b16 %v566
      %v615 = vpack.c.b16 %v583, %v583
      %v616 = vpack.c.b16 %v584, %v584
      %v617 = vpack.c.b16 %v585, %v585
      %v618 = vpack.c.b16 %v586, %v586
      %v619 = vpack.c.b16 %v587, %v587
      %v620 = vpack.c.b16 %v588, %v588
      %v621 = vpack.c.b16 %v589, %v589
      %v622 = vpack.c.b16 %v590, %v590
      %v623 = vpack.c.b16 %v591, %v591
      %v624 = vpack.c.b16 %v592, %v592
      %v625 = vpack.c.b16 %v593, %v593
      %v626 = vpack.c.b16 %v594, %v594
      %v627 = vpack.c.b16 %v595, %v595
      %v628 = vpack.c.b16 %v596, %v596
      %v629 = vpack.c.b16 %v597, %v597
      %v630 = vpack.c.b16 %v598, %v598
      %v631 = vpack.c.b16 %v599, %v599
      %v632 = vpack.c.b16 %v600, %v600
      %v633 = vpack.c.b16 %v601, %v601
      %v634 = vpack.c.b16 %v602, %v602
      %v635 = vpack.c.b16 %v603, %v603
      %v636 = vpack.c.b16 %v604, %v604
      %v637 = vpack.c.b16 %v605, %v605
      %v638 = vpack.c.b16 %v606, %v606
      %v639 = vpack.c.b16 %v607, %v607
      %v640 = vpack.c.b16 %v608, %v608
      %v641 = vpack.c.b16 %v609, %v609
      %v642 = vpack.c.b16 %v610, %v610
      %v643 = vpack.c.b16 %v611, %v611
      %v644 = vpack.c.b16 %v612, %v612
      %v645 = vpack.c.b16 %v613, %v613
      %v646 = vpack.c.b16 %v614, %v614
      %vm647 = vsmask.f32 256
      %vm648 = vsmask.f32 4368
      %vm649 = vmor %vm647, %vm648
      %v651 = vshrl.u32 %v615, 16
      %v653 = vrot.slane %v651, 7
      %v654 = vshll.u32 %v615, 16
      %v656 = vor.u32 %v653, %v654
      %v657 = vrot.slane %v653, 4
      %v659 = vshrl.u32 %v616, 16
      %v661 = vrot.slane %v659, 7
      %v662 = vshll.u32 %v616, 16
      %v664 = vor.u32 %v661, %v662
      %v665 = vsel %vm649, %v657, %v664
      %v666 = vrot.slane %v661, 4
      %v668 = vshrl.u32 %v617, 16
      %v670 = vrot.slane %v668, 7
      %v671 = vshll.u32 %v617, 16
      %v673 = vor.u32 %v670, %v671
      %v674 = vrot.slane %v670, 4
      %v676 = vshrl.u32 %v618, 16
      %v678 = vrot.slane %v676, 7
      %v679 = vshll.u32 %v618, 16
      %v681 = vor.u32 %v678, %v679
      %v682 = vsel %vm649, %v674, %v681
      %v683 = vrot.slane %v678, 4
      %v685 = vshrl.u32 %v619, 16
      %v687 = vrot.slane %v685, 7
      %v688 = vshll.u32 %v619, 16
      %v690 = vor.u32 %v687, %v688
      %v691 = vrot.slane %v687, 4
      %v693 = vshrl.u32 %v620, 16
      %v695 = vrot.slane %v693, 7
      %v696 = vshll.u32 %v620, 16
      %v698 = vor.u32 %v695, %v696
      %v699 = vsel %vm649, %v691, %v698
      %v700 = vrot.slane %v695, 4
      %v702 = vshrl.u32 %v621, 16
      %v704 = vrot.slane %v702, 7
      %v705 = vshll.u32 %v621, 16
      %v707 = vor.u32 %v704, %v705
      %v708 = vrot.slane %v704, 4
      %v710 = vshrl.u32 %v622, 16
      %v712 = vrot.slane %v710, 7
      %v713 = vshll.u32 %v622, 16
      %v715 = vor.u32 %v712, %v713
      %v716 = vsel %vm649, %v708, %v715
      %v717 = vrot.slane %v712, 4
      %v719 = vshrl.u32 %v623, 16
      %v721 = vrot.slane %v719, 7
      %v722 = vshll.u32 %v623, 16
      %v724 = vor.u32 %v721, %v722
      %v725 = vrot.slane %v721, 4
      %v727 = vshrl.u32 %v624, 16
      %v729 = vrot.slane %v727, 7
      %v730 = vshll.u32 %v624, 16
      %v732 = vor.u32 %v729, %v730
      %v733 = vsel %vm649, %v725, %v732
      %v734 = vrot.slane %v729, 4
      %v736 = vshrl.u32 %v625, 16
      %v738 = vrot.slane %v736, 7
      %v739 = vshll.u32 %v625, 16
      %v741 = vor.u32 %v738, %v739
      %v742 = vrot.slane %v738, 4
      %v744 = vshrl.u32 %v626, 16
      %v746 = vrot.slane %v744, 7
      %v747 = vshll.u32 %v626, 16
      %v749 = vor.u32 %v746, %v747
      %v750 = vsel %vm649, %v742, %v749
      %v751 = vrot.slane %v746, 4
      %v753 = vshrl.u32 %v627, 16
      %v755 = vrot.slane %v753, 7
      %v756 = vshll.u32 %v627, 16
      %v758 = vor.u32 %v755, %v756
      %v759 = vrot.slane %v755, 4
      %v761 = vshrl.u32 %v628, 16
      %v763 = vrot.slane %v761, 7
      %v764 = vshll.u32 %v628, 16
      %v766 = vor.u32 %v763, %v764
      %v767 = vsel %vm649, %v759, %v766
      %v768 = vrot.slane %v763, 4
      %v770 = vshrl.u32 %v629, 16
      %v772 = vrot.slane %v770, 7
      %v773 = vshll.u32 %v629, 16
      %v775 = vor.u32 %v772, %v773
      %v776 = vrot.slane %v772, 4
      %v778 = vshrl.u32 %v630, 16
      %v780 = vrot.slane %v778, 7
      %v781 = vshll.u32 %v630, 16
      %v783 = vor.u32 %v780, %v781
      %v784 = vsel %vm649, %v776, %v783
      %v785 = vrot.slane %v780, 4
      %v787 = vshrl.u32 %v631, 16
      %v789 = vrot.slane %v787, 7
      %v790 = vshll.u32 %v631, 16
      %v792 = vor.u32 %v789, %v790
      %v793 = vrot.slane %v789, 4
      %v795 = vshrl.u32 %v632, 16
      %v797 = vrot.slane %v795, 7
      %v798 = vshll.u32 %v632, 16
      %v800 = vor.u32 %v797, %v798
      %v801 = vsel %vm649, %v793, %v800
      %v802 = vrot.slane %v797, 4
      %v804 = vshrl.u32 %v633, 16
      %v806 = vrot.slane %v804, 7
      %v807 = vshll.u32 %v633, 16
      %v809 = vor.u32 %v806, %v807
      %v810 = vrot.slane %v806, 4
      %v812 = vshrl.u32 %v634, 16
      %v814 = vrot.slane %v812, 7
      %v815 = vshll.u32 %v634, 16
      %v817 = vor.u32 %v814, %v815
      %v818 = vsel %vm649, %v810, %v817
      %v819 = vrot.slane %v814, 4
      %v821 = vshrl.u32 %v635, 16
      %v823 = vrot.slane %v821, 7
      %v824 = vshll.u32 %v635, 16
      %v826 = vor.u32 %v823, %v824
      %v827 = vrot.slane %v823, 4
      %v829 = vshrl.u32 %v636, 16
      %v831 = vrot.slane %v829, 7
      %v832 = vshll.u32 %v636, 16
      %v834 = vor.u32 %v831, %v832
      %v835 = vsel %vm649, %v827, %v834
      %v836 = vrot.slane %v831, 4
      %v838 = vshrl.u32 %v637, 16
      %v840 = vrot.slane %v838, 7
      %v841 = vshll.u32 %v637, 16
      %v843 = vor.u32 %v840, %v841
      %v844 = vrot.slane %v840, 4
      %v846 = vshrl.u32 %v638, 16
      %v848 = vrot.slane %v846, 7
      %v849 = vshll.u32 %v638, 16
      %v851 = vor.u32 %v848, %v849
      %v852 = vsel %vm649, %v844, %v851
      %v853 = vrot.slane %v848, 4
      %v855 = vshrl.u32 %v639, 16
      %v857 = vrot.slane %v855, 7
      %v858 = vshll.u32 %v639, 16
      %v860 = vor.u32 %v857, %v858
      %v861 = vrot.slane %v857, 4
      %v863 = vshrl.u32 %v640, 16
      %v865 = vrot.slane %v863, 7
      %v866 = vshll.u32 %v640, 16
      %v868 = vor.u32 %v865, %v866
      %v869 = vsel %vm649, %v861, %v868
      %v870 = vrot.slane %v865, 4
      %v872 = vshrl.u32 %v641, 16
      %v874 = vrot.slane %v872, 7
      %v875 = vshll.u32 %v641, 16
      %v877 = vor.u32 %v874, %v875
      %v878 = vrot.slane %v874, 4
      %v880 = vshrl.u32 %v642, 16
      %v882 = vrot.slane %v880, 7
      %v883 = vshll.u32 %v642, 16
      %v885 = vor.u32 %v882, %v883
      %v886 = vsel %vm649, %v878, %v885
      %v887 = vrot.slane %v882, 4
      %v889 = vshrl.u32 %v643, 16
      %v891 = vrot.slane %v889, 7
      %v892 = vshll.u32 %v643, 16
      %v894 = vor.u32 %v891, %v892
      %v895 = vrot.slane %v891, 4
      %v897 = vshrl.u32 %v644, 16
      %v899 = vrot.slane %v897, 7
      %v900 = vshll.u32 %v644, 16
      %v902 = vor.u32 %v899, %v900
      %v903 = vsel %vm649, %v895, %v902
      %v904 = vrot.slane %v899, 4
      %v906 = vshrl.u32 %v645, 16
      %v908 = vrot.slane %v906, 7
      %v909 = vshll.u32 %v645, 16
      %v911 = vor.u32 %v908, %v909
      %v912 = vrot.slane %v908, 4
      %v914 = vshrl.u32 %v646, 16
      %v916 = vrot.slane %v914, 7
      %v917 = vshll.u32 %v646, 16
      %v919 = vor.u32 %v916, %v917
      %v920 = vsel %vm649, %v912, %v919
      %v921 = vrot.slane %v916, 4
      %s970 = scalar_lea.vmem [#allocation2], 12
      %vm971 = vcmask 1043456
      %vm972 = vsmask.f32 7938
      %vm973 = vmand %vm971, %vm972
      %v974 = vld [vmem:[%s970] sm:$0xf]
      %v975 = vsel %vm973, %v656, %v974
      %976 = vst [vmem:[%s970] sm:$0xf] %v975
      %977 = vst [vmem:[%s970 + $0x4] sm:$0xf] %v665
      %vm978 = vcmask 1040384
      %vm979 = vmand %vm978, %vm647
      %v980 = vld [vmem:[%s970 + $0x8] sm:$0x1]
      %v981 = vsel %vm979, %v666, %v980
      %982 = vst [vmem:[%s970 + $0x8] sm:$0x1] %v981
      %v983 = vld [vmem:[%s970 + $0xc] sm:$0xf]
      %v984 = vsel %vm973, %v673, %v983
      %985 = vst [vmem:[%s970 + $0xc] sm:$0xf] %v984
      %986 = vst [vmem:[%s970 + $0x10] sm:$0xf] %v682
      %v987 = vld [vmem:[%s970 + $0x14] sm:$0x1]
      %v988 = vsel %vm979, %v683, %v987
      %989 = vst [vmem:[%s970 + $0x14] sm:$0x1] %v988
      %v990 = vld [vmem:[%s970 + $0x18] sm:$0xf]
      %v991 = vsel %vm973, %v690, %v990
      %992 = vst [vmem:[%s970 + $0x18] sm:$0xf] %v991
      %993 = vst [vmem:[%s970 + $0x1c] sm:$0xf] %v699
      %v994 = vld [vmem:[%s970 + $0x20] sm:$0x1]
      %v995 = vsel %vm979, %v700, %v994
      %996 = vst [vmem:[%s970 + $0x20] sm:$0x1] %v995
      %v997 = vld [vmem:[%s970 + $0x24] sm:$0xf]
      %v998 = vsel %vm973, %v707, %v997
      %999 = vst [vmem:[%s970 + $0x24] sm:$0xf] %v998
      %1000 = vst [vmem:[%s970 + $0x28] sm:$0xf] %v716
      %v1001 = vld [vmem:[%s970 + $0x2c] sm:$0x1]
      %v1002 = vsel %vm979, %v717, %v1001
      %1003 = vst [vmem:[%s970 + $0x2c] sm:$0x1] %v1002
      %v1004 = vld [vmem:[%s970 + $0x30] sm:$0xf]
      %v1005 = vsel %vm973, %v724, %v1004
      %1006 = vst [vmem:[%s970 + $0x30] sm:$0xf] %v1005
      %1007 = vst [vmem:[%s970 + $0x34] sm:$0xf] %v733
      %v1008 = vld [vmem:[%s970 + $0x38] sm:$0x1]
      %v1009 = vsel %vm979, %v734, %v1008
      %1010 = vst [vmem:[%s970 + $0x38] sm:$0x1] %v1009
      %v1011 = vld [vmem:[%s970 + $0x3c] sm:$0xf]
      %v1012 = vsel %vm973, %v741, %v1011
      %1013 = vst [vmem:[%s970 + $0x3c] sm:$0xf] %v1012
      %1014 = vst [vmem:[%s970 + $0x40] sm:$0xf] %v750
      %v1015 = vld [vmem:[%s970 + $0x44] sm:$0x1]
      %v1016 = vsel %vm979, %v751, %v1015
      %1017 = vst [vmem:[%s970 + $0x44] sm:$0x1] %v1016
      %v1018 = vld [vmem:[%s970 + $0x48] sm:$0xf]
      %v1019 = vsel %vm973, %v758, %v1018
      %1020 = vst [vmem:[%s970 + $0x48] sm:$0xf] %v1019
      %1021 = vst [vmem:[%s970 + $0x4c] sm:$0xf] %v767
      %v1022 = vld [vmem:[%s970 + $0x50] sm:$0x1]
      %v1023 = vsel %vm979, %v768, %v1022
      %1024 = vst [vmem:[%s970 + $0x50] sm:$0x1] %v1023
      %v1025 = vld [vmem:[%s970 + $0x54] sm:$0xf]
      %v1026 = vsel %vm973, %v775, %v1025
      %1027 = vst [vmem:[%s970 + $0x54] sm:$0xf] %v1026
      %1028 = vst [vmem:[%s970 + $0x58] sm:$0xf] %v784
      %v1029 = vld [vmem:[%s970 + $0x5c] sm:$0x1]
      %v1030 = vsel %vm979, %v785, %v1029
      %1031 = vst [vmem:[%s970 + $0x5c] sm:$0x1] %v1030
      %v1032 = vld [vmem:[%s970 + $0x60] sm:$0xf]
      %v1033 = vsel %vm973, %v792, %v1032
      %1034 = vst [vmem:[%s970 + $0x60] sm:$0xf] %v1033
      %1035 = vst [vmem:[%s970 + $0x64] sm:$0xf] %v801
      %v1036 = vld [vmem:[%s970 + $0x68] sm:$0x1]
      %v1037 = vsel %vm979, %v802, %v1036
      %1038 = vst [vmem:[%s970 + $0x68] sm:$0x1] %v1037
      %v1039 = vld [vmem:[%s970 + $0x6c] sm:$0xf]
      %v1040 = vsel %vm973, %v809, %v1039
      %1041 = vst [vmem:[%s970 + $0x6c] sm:$0xf] %v1040
      %1042 = vst [vmem:[%s970 + $0x70] sm:$0xf] %v818
      %v1043 = vld [vmem:[%s970 + $0x74] sm:$0x1]
      %v1044 = vsel %vm979, %v819, %v1043
      %1045 = vst [vmem:[%s970 + $0x74] sm:$0x1] %v1044
      %v1046 = vld [vmem:[%s970 + $0x78] sm:$0xf]
      %v1047 = vsel %vm973, %v826, %v1046
      %1048 = vst [vmem:[%s970 + $0x78] sm:$0xf] %v1047
      %1049 = vst [vmem:[%s970 + $0x7c] sm:$0xf] %v835
      %v1050 = vld [vmem:[%s970 + $0x80] sm:$0x1]
      %v1051 = vsel %vm979, %v836, %v1050
      %1052 = vst [vmem:[%s970 + $0x80] sm:$0x1] %v1051
      %v1053 = vld [vmem:[%s970 + $0x84] sm:$0xf]
      %v1054 = vsel %vm973, %v843, %v1053
      %1055 = vst [vmem:[%s970 + $0x84] sm:$0xf] %v1054
      %1056 = vst [vmem:[%s970 + $0x88] sm:$0xf] %v852
      %v1057 = vld [vmem:[%s970 + $0x8c] sm:$0x1]
      %v1058 = vsel %vm979, %v853, %v1057
      %1059 = vst [vmem:[%s970 + $0x8c] sm:$0x1] %v1058
      %v1060 = vld [vmem:[%s970 + $0x90] sm:$0xf]
      %v1061 = vsel %vm973, %v860, %v1060
      %1062 = vst [vmem:[%s970 + $0x90] sm:$0xf] %v1061
      %1063 = vst [vmem:[%s970 + $0x94] sm:$0xf] %v869
      %v1064 = vld [vmem:[%s970 + $0x98] sm:$0x1]
      %v1065 = vsel %vm979, %v870, %v1064
      %1066 = vst [vmem:[%s970 + $0x98] sm:$0x1] %v1065
      %v1067 = vld [vmem:[%s970 + $0x9c] sm:$0xf]
      %v1068 = vsel %vm973, %v877, %v1067
      %1069 = vst [vmem:[%s970 + $0x9c] sm:$0xf] %v1068
      %1070 = vst [vmem:[%s970 + $0xa0] sm:$0xf] %v886
      %v1071 = vld [vmem:[%s970 + $0xa4] sm:$0x1]
      %v1072 = vsel %vm979, %v887, %v1071
      %1073 = vst [vmem:[%s970 + $0xa4] sm:$0x1] %v1072
      %v1074 = vld [vmem:[%s970 + $0xa8] sm:$0xf]
      %v1075 = vsel %vm973, %v894, %v1074
      %1076 = vst [vmem:[%s970 + $0xa8] sm:$0xf] %v1075
      %1077 = vst [vmem:[%s970 + $0xac] sm:$0xf] %v903
      %v1078 = vld [vmem:[%s970 + $0xb0] sm:$0x1]
      %v1079 = vsel %vm979, %v904, %v1078
      %1080 = vst [vmem:[%s970 + $0xb0] sm:$0x1] %v1079
      %v1081 = vld [vmem:[%s970 + $0xb4] sm:$0xf]
      %v1082 = vsel %vm973, %v911, %v1081
      %1083 = vst [vmem:[%s970 + $0xb4] sm:$0xf] %v1082
      %1084 = vst [vmem:[%s970 + $0xb8] sm:$0xf] %v920
      %v1085 = vld [vmem:[%s970 + $0xbc] sm:$0x1]
      %v1086 = vsel %vm979, %v921, %v1085
      %1087 = vst [vmem:[%s970 + $0xbc] sm:$0x1] %v1086
      %v1088 = vld [vmem:[#allocation2] sm:$0xf]
      %v1089 = vld [vmem:[#allocation2 + $0x4] sm:$0xf]
      %v1090 = vld [vmem:[#allocation2 + $0xc] sm:$0xf]
      %v1091 = vld [vmem:[#allocation2 + $0x10] sm:$0xf]
      %v1092 = vld [vmem:[#allocation2 + $0x18] sm:$0xf]
      %v1093 = vld [vmem:[#allocation2 + $0x1c] sm:$0xf]
      %v1094 = vld [vmem:[#allocation2 + $0x24] sm:$0xf]
      %v1095 = vld [vmem:[#allocation2 + $0x28] sm:$0xf]
      %v1096 = vld [vmem:[#allocation2 + $0x30] sm:$0xf]
      %v1097 = vld [vmem:[#allocation2 + $0x34] sm:$0xf]
      %v1098 = vld [vmem:[#allocation2 + $0x3c] sm:$0xf]
      %v1099 = vld [vmem:[#allocation2 + $0x40] sm:$0xf]
      %v1100 = vld [vmem:[#allocation2 + $0x48] sm:$0xf]
      %v1101 = vld [vmem:[#allocation2 + $0x4c] sm:$0xf]
      %v1102 = vld [vmem:[#allocation2 + $0x54] sm:$0xf]
      %v1103 = vld [vmem:[#allocation2 + $0x58] sm:$0xf]
      %v1104 = vld [vmem:[#allocation2 + $0x60] sm:$0xf]
      %v1105 = vld [vmem:[#allocation2 + $0x64] sm:$0xf]
      %v1106 = vld [vmem:[#allocation2 + $0x6c] sm:$0xf]
      %v1107 = vld [vmem:[#allocation2 + $0x70] sm:$0xf]
      %v1108 = vld [vmem:[#allocation2 + $0x78] sm:$0xf]
      %v1109 = vld [vmem:[#allocation2 + $0x7c] sm:$0xf]
      %v1110 = vld [vmem:[#allocation2 + $0x84] sm:$0xf]
      %v1111 = vld [vmem:[#allocation2 + $0x88] sm:$0xf]
      %v1112 = vld [vmem:[#allocation2 + $0x90] sm:$0xf]
      %v1113 = vld [vmem:[#allocation2 + $0x94] sm:$0xf]
      %v1114 = vld [vmem:[#allocation2 + $0x9c] sm:$0xf]
      %v1115 = vld [vmem:[#allocation2 + $0xa0] sm:$0xf]
      %v1116 = vld [vmem:[#allocation2 + $0xa8] sm:$0xf]
      %v1117 = vld [vmem:[#allocation2 + $0xac] sm:$0xf]
      %v1118 = vld [vmem:[#allocation2 + $0xb4] sm:$0xf]
      %v1119 = vld [vmem:[#allocation2 + $0xb8] sm:$0xf]
      %v1120 = vld [vmem:[#allocation2 + $0x8] sm:$0x1]
      %v1121 = vld [vmem:[#allocation2 + $0x14] sm:$0x1]
      %v1122 = vld [vmem:[#allocation2 + $0x20] sm:$0x1]
      %v1123 = vld [vmem:[#allocation2 + $0x2c] sm:$0x1]
      %v1124 = vld [vmem:[#allocation2 + $0x38] sm:$0x1]
      %v1125 = vld [vmem:[#allocation2 + $0x44] sm:$0x1]
      %v1126 = vld [vmem:[#allocation2 + $0x50] sm:$0x1]
      %v1127 = vld [vmem:[#allocation2 + $0x5c] sm:$0x1]
      %v1128 = vld [vmem:[#allocation2 + $0x68] sm:$0x1]
      %v1129 = vld [vmem:[#allocation2 + $0x74] sm:$0x1]
      %v1130 = vld [vmem:[#allocation2 + $0x80] sm:$0x1]
      %v1131 = vld [vmem:[#allocation2 + $0x8c] sm:$0x1]
      %v1132 = vld [vmem:[#allocation2 + $0x98] sm:$0x1]
      %v1133 = vld [vmem:[#allocation2 + $0xa4] sm:$0x1]
      %v1134 = vld [vmem:[#allocation2 + $0xb0] sm:$0x1]
      %v1135 = vld [vmem:[#allocation2 + $0xbc] sm:$0x1]
      %vm1136 = vsmask.f32 3328
      %vm1137 = vsmask.f32 7440
      %vm1138 = vmor %vm1136, %vm1137
      %v1140 = vshrl.u32 %v1088, 16
      %v1142 = vrot.slane %v1140, 4
      %v1143 = vshll.u32 %v1088, 16
      %v1145 = vrot.slane %v1143, 5
      %v1146 = vor.u32 %v1142, %v1145
      %v1147 = vrot.slane %v1146, 4
      %v1149 = vshll.u32 %v1089, 16
      %v1151 = vrot.slane %v1149, 5
      %v1152 = vsel %vm1138, %v1147, %v1151
      %v1153 = vshrl.u32 %v1089, 16
      %v1155 = vrot.slane %v1153, 4
      %v1156 = vor.u32 %v1155, %v1151
      %v1157 = vrot.slane %v1156, 4
      %v1159 = vshll.u32 %v1120, 16
      %v1161 = vrot.slane %v1159, 5
      %v1162 = vsel %vm1138, %v1157, %v1161
      %v1164 = vshrl.u32 %v1090, 16
      %v1166 = vrot.slane %v1164, 4
      %v1167 = vshll.u32 %v1090, 16
      %v1169 = vrot.slane %v1167, 5
      %v1170 = vor.u32 %v1166, %v1169
      %v1171 = vrot.slane %v1170, 4
      %v1173 = vshll.u32 %v1091, 16
      %v1175 = vrot.slane %v1173, 5
      %v1176 = vsel %vm1138, %v1171, %v1175
      %v1177 = vshrl.u32 %v1091, 16
      %v1179 = vrot.slane %v1177, 4
      %v1180 = vor.u32 %v1179, %v1175
      %v1181 = vrot.slane %v1180, 4
      %v1183 = vshll.u32 %v1121, 16
      %v1185 = vrot.slane %v1183, 5
      %v1186 = vsel %vm1138, %v1181, %v1185
      %v1188 = vshrl.u32 %v1092, 16
      %v1190 = vrot.slane %v1188, 4
      %v1191 = vshll.u32 %v1092, 16
      %v1193 = vrot.slane %v1191, 5
      %v1194 = vor.u32 %v1190, %v1193
      %v1195 = vrot.slane %v1194, 4
      %v1197 = vshll.u32 %v1093, 16
      %v1199 = vrot.slane %v1197, 5
      %v1200 = vsel %vm1138, %v1195, %v1199
      %v1201 = vshrl.u32 %v1093, 16
      %v1203 = vrot.slane %v1201, 4
      %v1204 = vor.u32 %v1203, %v1199
      %v1205 = vrot.slane %v1204, 4
      %v1207 = vshll.u32 %v1122, 16
      %v1209 = vrot.slane %v1207, 5
      %v1210 = vsel %vm1138, %v1205, %v1209
      %v1212 = vshrl.u32 %v1094, 16
      %v1214 = vrot.slane %v1212, 4
      %v1215 = vshll.u32 %v1094, 16
      %v1217 = vrot.slane %v1215, 5
      %v1218 = vor.u32 %v1214, %v1217
      %v1219 = vrot.slane %v1218, 4
      %v1221 = vshll.u32 %v1095, 16
      %v1223 = vrot.slane %v1221, 5
      %v1224 = vsel %vm1138, %v1219, %v1223
      %v1225 = vshrl.u32 %v1095, 16
      %v1227 = vrot.slane %v1225, 4
      %v1228 = vor.u32 %v1227, %v1223
      %v1229 = vrot.slane %v1228, 4
      %v1231 = vshll.u32 %v1123, 16
      %v1233 = vrot.slane %v1231, 5
      %v1234 = vsel %vm1138, %v1229, %v1233
      %v1236 = vshrl.u32 %v1096, 16
      %v1238 = vrot.slane %v1236, 4
      %v1239 = vshll.u32 %v1096, 16
      %v1241 = vrot.slane %v1239, 5
      %v1242 = vor.u32 %v1238, %v1241
      %v1243 = vrot.slane %v1242, 4
      %v1245 = vshll.u32 %v1097, 16
      %v1247 = vrot.slane %v1245, 5
      %v1248 = vsel %vm1138, %v1243, %v1247
      %v1249 = vshrl.u32 %v1097, 16
      %v1251 = vrot.slane %v1249, 4
      %v1252 = vor.u32 %v1251, %v1247
      %v1253 = vrot.slane %v1252, 4
      %v1255 = vshll.u32 %v1124, 16
      %v1257 = vrot.slane %v1255, 5
      %v1258 = vsel %vm1138, %v1253, %v1257
      %v1260 = vshrl.u32 %v1098, 16
      %v1262 = vrot.slane %v1260, 4
      %v1263 = vshll.u32 %v1098, 16
      %v1265 = vrot.slane %v1263, 5
      %v1266 = vor.u32 %v1262, %v1265
      %v1267 = vrot.slane %v1266, 4
      %v1269 = vshll.u32 %v1099, 16
      %v1271 = vrot.slane %v1269, 5
      %v1272 = vsel %vm1138, %v1267, %v1271
      %v1273 = vshrl.u32 %v1099, 16
      %v1275 = vrot.slane %v1273, 4
      %v1276 = vor.u32 %v1275, %v1271
      %v1277 = vrot.slane %v1276, 4
      %v1279 = vshll.u32 %v1125, 16
      %v1281 = vrot.slane %v1279, 5
      %v1282 = vsel %vm1138, %v1277, %v1281
      %v1284 = vshrl.u32 %v1100, 16
      %v1286 = vrot.slane %v1284, 4
      %v1287 = vshll.u32 %v1100, 16
      %v1289 = vrot.slane %v1287, 5
      %v1290 = vor.u32 %v1286, %v1289
      %v1291 = vrot.slane %v1290, 4
      %v1293 = vshll.u32 %v1101, 16
      %v1295 = vrot.slane %v1293, 5
      %v1296 = vsel %vm1138, %v1291, %v1295
      %v1297 = vshrl.u32 %v1101, 16
      %v1299 = vrot.slane %v1297, 4
      %v1300 = vor.u32 %v1299, %v1295
      %v1301 = vrot.slane %v1300, 4
      %v1303 = vshll.u32 %v1126, 16
      %v1305 = vrot.slane %v1303, 5
      %v1306 = vsel %vm1138, %v1301, %v1305
      %v1308 = vshrl.u32 %v1102, 16
      %v1310 = vrot.slane %v1308, 4
      %v1311 = vshll.u32 %v1102, 16
      %v1313 = vrot.slane %v1311, 5
      %v1314 = vor.u32 %v1310, %v1313
      %v1315 = vrot.slane %v1314, 4
      %v1317 = vshll.u32 %v1103, 16
      %v1319 = vrot.slane %v1317, 5
      %v1320 = vsel %vm1138, %v1315, %v1319
      %v1321 = vshrl.u32 %v1103, 16
      %v1323 = vrot.slane %v1321, 4
      %v1324 = vor.u32 %v1323, %v1319
      %v1325 = vrot.slane %v1324, 4
      %v1327 = vshll.u32 %v1127, 16
      %v1329 = vrot.slane %v1327, 5
      %v1330 = vsel %vm1138, %v1325, %v1329
      %v1332 = vshrl.u32 %v1104, 16
      %v1334 = vrot.slane %v1332, 4
      %v1335 = vshll.u32 %v1104, 16
      %v1337 = vrot.slane %v1335, 5
      %v1338 = vor.u32 %v1334, %v1337
      %v1339 = vrot.slane %v1338, 4
      %v1341 = vshll.u32 %v1105, 16
      %v1343 = vrot.slane %v1341, 5
      %v1344 = vsel %vm1138, %v1339, %v1343
      %v1345 = vshrl.u32 %v1105, 16
      %v1347 = vrot.slane %v1345, 4
      %v1348 = vor.u32 %v1347, %v1343
      %v1349 = vrot.slane %v1348, 4
      %v1351 = vshll.u32 %v1128, 16
      %v1353 = vrot.slane %v1351, 5
      %v1354 = vsel %vm1138, %v1349, %v1353
      %v1356 = vshrl.u32 %v1106, 16
      %v1358 = vrot.slane %v1356, 4
      %v1359 = vshll.u32 %v1106, 16
      %v1361 = vrot.slane %v1359, 5
      %v1362 = vor.u32 %v1358, %v1361
      %v1363 = vrot.slane %v1362, 4
      %v1365 = vshll.u32 %v1107, 16
      %v1367 = vrot.slane %v1365, 5
      %v1368 = vsel %vm1138, %v1363, %v1367
      %v1369 = vshrl.u32 %v1107, 16
      %v1371 = vrot.slane %v1369, 4
      %v1372 = vor.u32 %v1371, %v1367
      %v1373 = vrot.slane %v1372, 4
      %v1375 = vshll.u32 %v1129, 16
      %v1377 = vrot.slane %v1375, 5
      %v1378 = vsel %vm1138, %v1373, %v1377
      %v1380 = vshrl.u32 %v1108, 16
      %v1382 = vrot.slane %v1380, 4
      %v1383 = vshll.u32 %v1108, 16
      %v1385 = vrot.slane %v1383, 5
      %v1386 = vor.u32 %v1382, %v1385
      %v1387 = vrot.slane %v1386, 4
      %v1389 = vshll.u32 %v1109, 16
      %v1391 = vrot.slane %v1389, 5
      %v1392 = vsel %vm1138, %v1387, %v1391
      %v1393 = vshrl.u32 %v1109, 16
      %v1395 = vrot.slane %v1393, 4
      %v1396 = vor.u32 %v1395, %v1391
      %v1397 = vrot.slane %v1396, 4
      %v1399 = vshll.u32 %v1130, 16
      %v1401 = vrot.slane %v1399, 5
      %v1402 = vsel %vm1138, %v1397, %v1401
      %v1404 = vshrl.u32 %v1110, 16
      %v1406 = vrot.slane %v1404, 4
      %v1407 = vshll.u32 %v1110, 16
      %v1409 = vrot.slane %v1407, 5
      %v1410 = vor.u32 %v1406, %v1409
      %v1411 = vrot.slane %v1410, 4
      %v1413 = vshll.u32 %v1111, 16
      %v1415 = vrot.slane %v1413, 5
      %v1416 = vsel %vm1138, %v1411, %v1415
      %v1417 = vshrl.u32 %v1111, 16
      %v1419 = vrot.slane %v1417, 4
      %v1420 = vor.u32 %v1419, %v1415
      %v1421 = vrot.slane %v1420, 4
      %v1423 = vshll.u32 %v1131, 16
      %v1425 = vrot.slane %v1423, 5
      %v1426 = vsel %vm1138, %v1421, %v1425
      %v1428 = vshrl.u32 %v1112, 16
      %v1430 = vrot.slane %v1428, 4
      %v1431 = vshll.u32 %v1112, 16
      %v1433 = vrot.slane %v1431, 5
      %v1434 = vor.u32 %v1430, %v1433
      %v1435 = vrot.slane %v1434, 4
      %v1437 = vshll.u32 %v1113, 16
      %v1439 = vrot.slane %v1437, 5
      %v1440 = vsel %vm1138, %v1435, %v1439
      %v1441 = vshrl.u32 %v1113, 16
      %v1443 = vrot.slane %v1441, 4
      %v1444 = vor.u32 %v1443, %v1439
      %v1445 = vrot.slane %v1444, 4
      %v1447 = vshll.u32 %v1132, 16
      %v1449 = vrot.slane %v1447, 5
      %v1450 = vsel %vm1138, %v1445, %v1449
      %v1452 = vshrl.u32 %v1114, 16
      %v1454 = vrot.slane %v1452, 4
      %v1455 = vshll.u32 %v1114, 16
      %v1457 = vrot.slane %v1455, 5
      %v1458 = vor.u32 %v1454, %v1457
      %v1459 = vrot.slane %v1458, 4
      %v1461 = vshll.u32 %v1115, 16
      %v1463 = vrot.slane %v1461, 5
      %v1464 = vsel %vm1138, %v1459, %v1463
      %v1465 = vshrl.u32 %v1115, 16
      %v1467 = vrot.slane %v1465, 4
      %v1468 = vor.u32 %v1467, %v1463
      %v1469 = vrot.slane %v1468, 4
      %v1471 = vshll.u32 %v1133, 16
      %v1473 = vrot.slane %v1471, 5
      %v1474 = vsel %vm1138, %v1469, %v1473
      %v1476 = vshrl.u32 %v1116, 16
      %v1478 = vrot.slane %v1476, 4
      %v1479 = vshll.u32 %v1116, 16
      %v1481 = vrot.slane %v1479, 5
      %v1482 = vor.u32 %v1478, %v1481
      %v1483 = vrot.slane %v1482, 4
      %v1485 = vshll.u32 %v1117, 16
      %v1487 = vrot.slane %v1485, 5
      %v1488 = vsel %vm1138, %v1483, %v1487
      %v1489 = vshrl.u32 %v1117, 16
      %v1491 = vrot.slane %v1489, 4
      %v1492 = vor.u32 %v1491, %v1487
      %v1493 = vrot.slane %v1492, 4
      %v1495 = vshll.u32 %v1134, 16
      %v1497 = vrot.slane %v1495, 5
      %v1498 = vsel %vm1138, %v1493, %v1497
      %v1500 = vshrl.u32 %v1118, 16
      %v1502 = vrot.slane %v1500, 4
      %v1503 = vshll.u32 %v1118, 16
      %v1505 = vrot.slane %v1503, 5
      %v1506 = vor.u32 %v1502, %v1505
      %v1507 = vrot.slane %v1506, 4
      %v1509 = vshll.u32 %v1119, 16
      %v1511 = vrot.slane %v1509, 5
      %v1512 = vsel %vm1138, %v1507, %v1511
      %v1513 = vshrl.u32 %v1119, 16
      %v1515 = vrot.slane %v1513, 4
      %v1516 = vor.u32 %v1515, %v1511
      %v1517 = vrot.slane %v1516, 4
      %v1519 = vshll.u32 %v1135, 16
      %v1521 = vrot.slane %v1519, 5
      %v1522 = vsel %vm1138, %v1517, %v1521
      %v1523 = vld [vmem:[#allocation2] sm:$0xe]
      %v1524 = vld [vmem:[#allocation2 + $0xc] sm:$0xe]
      %v1525 = vld [vmem:[#allocation2 + $0x18] sm:$0xe]
      %v1526 = vld [vmem:[#allocation2 + $0x24] sm:$0xe]
      %v1527 = vld [vmem:[#allocation2 + $0x30] sm:$0xe]
      %v1528 = vld [vmem:[#allocation2 + $0x3c] sm:$0xe]
      %v1529 = vld [vmem:[#allocation2 + $0x48] sm:$0xe]
      %v1530 = vld [vmem:[#allocation2 + $0x54] sm:$0xe]
      %v1531 = vld [vmem:[#allocation2 + $0x60] sm:$0xe]
      %v1532 = vld [vmem:[#allocation2 + $0x6c] sm:$0xe]
      %v1533 = vld [vmem:[#allocation2 + $0x78] sm:$0xe]
      %v1534 = vld [vmem:[#allocation2 + $0x84] sm:$0xe]
      %v1535 = vld [vmem:[#allocation2 + $0x90] sm:$0xe]
      %v1536 = vld [vmem:[#allocation2 + $0x9c] sm:$0xe]
      %v1537 = vld [vmem:[#allocation2 + $0xa8] sm:$0xe]
      %v1538 = vld [vmem:[#allocation2 + $0xb4] sm:$0xe]
      %vm1587 = vcmask 1042432
      %vm1588 = vcmask 1046532
      %vm1589 = vmor %vm1587, %vm1588
      %v1590 = vrot.slane %v1523, 5
      %v1591 = vrot.slane %v1590, 4
      %v1592 = vrot.slane %v1089, 5
      %v1593 = vsel %vm1589, %v1591, %v1592
      %v1594 = vrot.slane %v1592, 4
      %v1595 = vrot.slane %v1120, 5
      %v1596 = vsel %vm1589, %v1594, %v1595
      %v1597 = vrot.slane %v1524, 5
      %v1598 = vrot.slane %v1597, 4
      %v1599 = vrot.slane %v1091, 5
      %v1600 = vsel %vm1589, %v1598, %v1599
      %v1601 = vrot.slane %v1599, 4
      %v1602 = vrot.slane %v1121, 5
      %v1603 = vsel %vm1589, %v1601, %v1602
      %v1604 = vrot.slane %v1525, 5
      %v1605 = vrot.slane %v1604, 4
      %v1606 = vrot.slane %v1093, 5
      %v1607 = vsel %vm1589, %v1605, %v1606
      %v1608 = vrot.slane %v1606, 4
      %v1609 = vrot.slane %v1122, 5
      %v1610 = vsel %vm1589, %v1608, %v1609
      %v1611 = vrot.slane %v1526, 5
      %v1612 = vrot.slane %v1611, 4
      %v1613 = vrot.slane %v1095, 5
      %v1614 = vsel %vm1589, %v1612, %v1613
      %v1615 = vrot.slane %v1613, 4
      %v1616 = vrot.slane %v1123, 5
      %v1617 = vsel %vm1589, %v1615, %v1616
      %v1618 = vrot.slane %v1527, 5
      %v1619 = vrot.slane %v1618, 4
      %v1620 = vrot.slane %v1097, 5
      %v1621 = vsel %vm1589, %v1619, %v1620
      %v1622 = vrot.slane %v1620, 4
      %v1623 = vrot.slane %v1124, 5
      %v1624 = vsel %vm1589, %v1622, %v1623
      %v1625 = vrot.slane %v1528, 5
      %v1626 = vrot.slane %v1625, 4
      %v1627 = vrot.slane %v1099, 5
      %v1628 = vsel %vm1589, %v1626, %v1627
      %v1629 = vrot.slane %v1627, 4
      %v1630 = vrot.slane %v1125, 5
      %v1631 = vsel %vm1589, %v1629, %v1630
      %v1632 = vrot.slane %v1529, 5
      %v1633 = vrot.slane %v1632, 4
      %v1634 = vrot.slane %v1101, 5
      %v1635 = vsel %vm1589, %v1633, %v1634
      %v1636 = vrot.slane %v1634, 4
      %v1637 = vrot.slane %v1126, 5
      %v1638 = vsel %vm1589, %v1636, %v1637
      %v1639 = vrot.slane %v1530, 5
      %v1640 = vrot.slane %v1639, 4
      %v1641 = vrot.slane %v1103, 5
      %v1642 = vsel %vm1589, %v1640, %v1641
      %v1643 = vrot.slane %v1641, 4
      %v1644 = vrot.slane %v1127, 5
      %v1645 = vsel %vm1589, %v1643, %v1644
      %v1646 = vrot.slane %v1531, 5
      %v1647 = vrot.slane %v1646, 4
      %v1648 = vrot.slane %v1105, 5
      %v1649 = vsel %vm1589, %v1647, %v1648
      %v1650 = vrot.slane %v1648, 4
      %v1651 = vrot.slane %v1128, 5
      %v1652 = vsel %vm1589, %v1650, %v1651
      %v1653 = vrot.slane %v1532, 5
      %v1654 = vrot.slane %v1653, 4
      %v1655 = vrot.slane %v1107, 5
      %v1656 = vsel %vm1589, %v1654, %v1655
      %v1657 = vrot.slane %v1655, 4
      %v1658 = vrot.slane %v1129, 5
      %v1659 = vsel %vm1589, %v1657, %v1658
      %v1660 = vrot.slane %v1533, 5
      %v1661 = vrot.slane %v1660, 4
      %v1662 = vrot.slane %v1109, 5
      %v1663 = vsel %vm1589, %v1661, %v1662
      %v1664 = vrot.slane %v1662, 4
      %v1665 = vrot.slane %v1130, 5
      %v1666 = vsel %vm1589, %v1664, %v1665
      %v1667 = vrot.slane %v1534, 5
      %v1668 = vrot.slane %v1667, 4
      %v1669 = vrot.slane %v1111, 5
      %v1670 = vsel %vm1589, %v1668, %v1669
      %v1671 = vrot.slane %v1669, 4
      %v1672 = vrot.slane %v1131, 5
      %v1673 = vsel %vm1589, %v1671, %v1672
      %v1674 = vrot.slane %v1535, 5
      %v1675 = vrot.slane %v1674, 4
      %v1676 = vrot.slane %v1113, 5
      %v1677 = vsel %vm1589, %v1675, %v1676
      %v1678 = vrot.slane %v1676, 4
      %v1679 = vrot.slane %v1132, 5
      %v1680 = vsel %vm1589, %v1678, %v1679
      %v1681 = vrot.slane %v1536, 5
      %v1682 = vrot.slane %v1681, 4
      %v1683 = vrot.slane %v1115, 5
      %v1684 = vsel %vm1589, %v1682, %v1683
      %v1685 = vrot.slane %v1683, 4
      %v1686 = vrot.slane %v1133, 5
      %v1687 = vsel %vm1589, %v1685, %v1686
      %v1688 = vrot.slane %v1537, 5
      %v1689 = vrot.slane %v1688, 4
      %v1690 = vrot.slane %v1117, 5
      %v1691 = vsel %vm1589, %v1689, %v1690
      %v1692 = vrot.slane %v1690, 4
      %v1693 = vrot.slane %v1134, 5
      %v1694 = vsel %vm1589, %v1692, %v1693
      %v1695 = vrot.slane %v1538, 5
      %v1696 = vrot.slane %v1695, 4
      %v1697 = vrot.slane %v1119, 5
      %v1698 = vsel %vm1589, %v1696, %v1697
      %v1699 = vrot.slane %v1697, 4
      %v1700 = vrot.slane %v1135, 5
      %v1701 = vsel %vm1589, %v1699, %v1700
      %v1702 = vld [vmem:[%s970] sm:$0xf]
      %v1703 = vld [vmem:[%s970 + $0x4] sm:$0xf]
      %v1704 = vld [vmem:[%s970 + $0xc] sm:$0xf]
      %v1705 = vld [vmem:[%s970 + $0x10] sm:$0xf]
      %v1706 = vld [vmem:[%s970 + $0x18] sm:$0xf]
      %v1707 = vld [vmem:[%s970 + $0x1c] sm:$0xf]
      %v1708 = vld [vmem:[%s970 + $0x24] sm:$0xf]
      %v1709 = vld [vmem:[%s970 + $0x28] sm:$0xf]
      %v1710 = vld [vmem:[%s970 + $0x30] sm:$0xf]
      %v1711 = vld [vmem:[%s970 + $0x34] sm:$0xf]
      %v1712 = vld [vmem:[%s970 + $0x3c] sm:$0xf]
      %v1713 = vld [vmem:[%s970 + $0x40] sm:$0xf]
      %v1714 = vld [vmem:[%s970 + $0x48] sm:$0xf]
      %v1715 = vld [vmem:[%s970 + $0x4c] sm:$0xf]
      %v1716 = vld [vmem:[%s970 + $0x54] sm:$0xf]
      %v1717 = vld [vmem:[%s970 + $0x58] sm:$0xf]
      %v1718 = vld [vmem:[%s970 + $0x60] sm:$0xf]
      %v1719 = vld [vmem:[%s970 + $0x64] sm:$0xf]
      %v1720 = vld [vmem:[%s970 + $0x6c] sm:$0xf]
      %v1721 = vld [vmem:[%s970 + $0x70] sm:$0xf]
      %v1722 = vld [vmem:[%s970 + $0x78] sm:$0xf]
      %v1723 = vld [vmem:[%s970 + $0x7c] sm:$0xf]
      %v1724 = vld [vmem:[%s970 + $0x84] sm:$0xf]
      %v1725 = vld [vmem:[%s970 + $0x88] sm:$0xf]
      %v1726 = vld [vmem:[%s970 + $0x90] sm:$0xf]
      %v1727 = vld [vmem:[%s970 + $0x94] sm:$0xf]
      %v1728 = vld [vmem:[%s970 + $0x9c] sm:$0xf]
      %v1729 = vld [vmem:[%s970 + $0xa0] sm:$0xf]
      %v1730 = vld [vmem:[%s970 + $0xa8] sm:$0xf]
      %v1731 = vld [vmem:[%s970 + $0xac] sm:$0xf]
      %v1732 = vld [vmem:[%s970 + $0xb4] sm:$0xf]
      %v1733 = vld [vmem:[%s970 + $0xb8] sm:$0xf]
      %v1734 = vld [vmem:[%s970 + $0x8] sm:$0x1]
      %v1735 = vld [vmem:[%s970 + $0x14] sm:$0x1]
      %v1736 = vld [vmem:[%s970 + $0x20] sm:$0x1]
      %v1737 = vld [vmem:[%s970 + $0x2c] sm:$0x1]
      %v1738 = vld [vmem:[%s970 + $0x38] sm:$0x1]
      %v1739 = vld [vmem:[%s970 + $0x44] sm:$0x1]
      %v1740 = vld [vmem:[%s970 + $0x50] sm:$0x1]
      %v1741 = vld [vmem:[%s970 + $0x5c] sm:$0x1]
      %v1742 = vld [vmem:[%s970 + $0x68] sm:$0x1]
      %v1743 = vld [vmem:[%s970 + $0x74] sm:$0x1]
      %v1744 = vld [vmem:[%s970 + $0x80] sm:$0x1]
      %v1745 = vld [vmem:[%s970 + $0x8c] sm:$0x1]
      %v1746 = vld [vmem:[%s970 + $0x98] sm:$0x1]
      %v1747 = vld [vmem:[%s970 + $0xa4] sm:$0x1]
      %v1748 = vld [vmem:[%s970 + $0xb0] sm:$0x1]
      %v1749 = vld [vmem:[%s970 + $0xbc] sm:$0x1]
      %v1751 = vshrl.u32 %v1702, 16
      %v1753 = vrot.slane %v1751, 4
      %v1754 = vshll.u32 %v1702, 16
      %v1756 = vrot.slane %v1754, 5
      %v1757 = vor.u32 %v1753, %v1756
      %v1758 = vrot.slane %v1757, 4
      %v1760 = vshll.u32 %v1703, 16
      %v1762 = vrot.slane %v1760, 5
      %v1763 = vsel %vm1138, %v1758, %v1762
      %v1764 = vshrl.u32 %v1703, 16
      %v1766 = vrot.slane %v1764, 4
      %v1767 = vor.u32 %v1766, %v1762
      %v1768 = vrot.slane %v1767, 4
      %v1770 = vshll.u32 %v1734, 16
      %v1772 = vrot.slane %v1770, 5
      %v1773 = vsel %vm1138, %v1768, %v1772
      %v1775 = vshrl.u32 %v1704, 16
      %v1777 = vrot.slane %v1775, 4
      %v1778 = vshll.u32 %v1704, 16
      %v1780 = vrot.slane %v1778, 5
      %v1781 = vor.u32 %v1777, %v1780
      %v1782 = vrot.slane %v1781, 4
      %v1784 = vshll.u32 %v1705, 16
      %v1786 = vrot.slane %v1784, 5
      %v1787 = vsel %vm1138, %v1782, %v1786
      %v1788 = vshrl.u32 %v1705, 16
      %v1790 = vrot.slane %v1788, 4
      %v1791 = vor.u32 %v1790, %v1786
      %v1792 = vrot.slane %v1791, 4
      %v1794 = vshll.u32 %v1735, 16
      %v1796 = vrot.slane %v1794, 5
      %v1797 = vsel %vm1138, %v1792, %v1796
      %v1799 = vshrl.u32 %v1706, 16
      %v1801 = vrot.slane %v1799, 4
      %v1802 = vshll.u32 %v1706, 16
      %v1804 = vrot.slane %v1802, 5
      %v1805 = vor.u32 %v1801, %v1804
      %v1806 = vrot.slane %v1805, 4
      %v1808 = vshll.u32 %v1707, 16
      %v1810 = vrot.slane %v1808, 5
      %v1811 = vsel %vm1138, %v1806, %v1810
      %v1812 = vshrl.u32 %v1707, 16
      %v1814 = vrot.slane %v1812, 4
      %v1815 = vor.u32 %v1814, %v1810
      %v1816 = vrot.slane %v1815, 4
      %v1818 = vshll.u32 %v1736, 16
      %v1820 = vrot.slane %v1818, 5
      %v1821 = vsel %vm1138, %v1816, %v1820
      %v1823 = vshrl.u32 %v1708, 16
      %v1825 = vrot.slane %v1823, 4
      %v1826 = vshll.u32 %v1708, 16
      %v1828 = vrot.slane %v1826, 5
      %v1829 = vor.u32 %v1825, %v1828
      %v1830 = vrot.slane %v1829, 4
      %v1832 = vshll.u32 %v1709, 16
      %v1834 = vrot.slane %v1832, 5
      %v1835 = vsel %vm1138, %v1830, %v1834
      %v1836 = vshrl.u32 %v1709, 16
      %v1838 = vrot.slane %v1836, 4
      %v1839 = vor.u32 %v1838, %v1834
      %v1840 = vrot.slane %v1839, 4
      %v1842 = vshll.u32 %v1737, 16
      %v1844 = vrot.slane %v1842, 5
      %v1845 = vsel %vm1138, %v1840, %v1844
      %v1847 = vshrl.u32 %v1710, 16
      %v1849 = vrot.slane %v1847, 4
      %v1850 = vshll.u32 %v1710, 16
      %v1852 = vrot.slane %v1850, 5
      %v1853 = vor.u32 %v1849, %v1852
      %v1854 = vrot.slane %v1853, 4
      %v1856 = vshll.u32 %v1711, 16
      %v1858 = vrot.slane %v1856, 5
      %v1859 = vsel %vm1138, %v1854, %v1858
      %v1860 = vshrl.u32 %v1711, 16
      %v1862 = vrot.slane %v1860, 4
      %v1863 = vor.u32 %v1862, %v1858
      %v1864 = vrot.slane %v1863, 4
      %v1866 = vshll.u32 %v1738, 16
      %v1868 = vrot.slane %v1866, 5
      %v1869 = vsel %vm1138, %v1864, %v1868
      %v1871 = vshrl.u32 %v1712, 16
      %v1873 = vrot.slane %v1871, 4
      %v1874 = vshll.u32 %v1712, 16
      %v1876 = vrot.slane %v1874, 5
      %v1877 = vor.u32 %v1873, %v1876
      %v1878 = vrot.slane %v1877, 4
      %v1880 = vshll.u32 %v1713, 16
      %v1882 = vrot.slane %v1880, 5
      %v1883 = vsel %vm1138, %v1878, %v1882
      %v1884 = vshrl.u32 %v1713, 16
      %v1886 = vrot.slane %v1884, 4
      %v1887 = vor.u32 %v1886, %v1882
      %v1888 = vrot.slane %v1887, 4
      %v1890 = vshll.u32 %v1739, 16
      %v1892 = vrot.slane %v1890, 5
      %v1893 = vsel %vm1138, %v1888, %v1892
      %v1895 = vshrl.u32 %v1714, 16
      %v1897 = vrot.slane %v1895, 4
      %v1898 = vshll.u32 %v1714, 16
      %v1900 = vrot.slane %v1898, 5
      %v1901 = vor.u32 %v1897, %v1900
      %v1902 = vrot.slane %v1901, 4
      %v1904 = vshll.u32 %v1715, 16
      %v1906 = vrot.slane %v1904, 5
      %v1907 = vsel %vm1138, %v1902, %v1906
      %v1908 = vshrl.u32 %v1715, 16
      %v1910 = vrot.slane %v1908, 4
      %v1911 = vor.u32 %v1910, %v1906
      %v1912 = vrot.slane %v1911, 4
      %v1914 = vshll.u32 %v1740, 16
      %v1916 = vrot.slane %v1914, 5
      %v1917 = vsel %vm1138, %v1912, %v1916
      %v1919 = vshrl.u32 %v1716, 16
      %v1921 = vrot.slane %v1919, 4
      %v1922 = vshll.u32 %v1716, 16
      %v1924 = vrot.slane %v1922, 5
      %v1925 = vor.u32 %v1921, %v1924
      %v1926 = vrot.slane %v1925, 4
      %v1928 = vshll.u32 %v1717, 16
      %v1930 = vrot.slane %v1928, 5
      %v1931 = vsel %vm1138, %v1926, %v1930
      %v1932 = vshrl.u32 %v1717, 16
      %v1934 = vrot.slane %v1932, 4
      %v1935 = vor.u32 %v1934, %v1930
      %v1936 = vrot.slane %v1935, 4
      %v1938 = vshll.u32 %v1741, 16
      %v1940 = vrot.slane %v1938, 5
      %v1941 = vsel %vm1138, %v1936, %v1940
      %v1943 = vshrl.u32 %v1718, 16
      %v1945 = vrot.slane %v1943, 4
      %v1946 = vshll.u32 %v1718, 16
      %v1948 = vrot.slane %v1946, 5
      %v1949 = vor.u32 %v1945, %v1948
      %v1950 = vrot.slane %v1949, 4
      %v1952 = vshll.u32 %v1719, 16
      %v1954 = vrot.slane %v1952, 5
      %v1955 = vsel %vm1138, %v1950, %v1954
      %v1956 = vshrl.u32 %v1719, 16
      %v1958 = vrot.slane %v1956, 4
      %v1959 = vor.u32 %v1958, %v1954
      %v1960 = vrot.slane %v1959, 4
      %v1962 = vshll.u32 %v1742, 16
      %v1964 = vrot.slane %v1962, 5
      %v1965 = vsel %vm1138, %v1960, %v1964
      %v1967 = vshrl.u32 %v1720, 16
      %v1969 = vrot.slane %v1967, 4
      %v1970 = vshll.u32 %v1720, 16
      %v1972 = vrot.slane %v1970, 5
      %v1973 = vor.u32 %v1969, %v1972
      %v1974 = vrot.slane %v1973, 4
      %v1976 = vshll.u32 %v1721, 16
      %v1978 = vrot.slane %v1976, 5
      %v1979 = vsel %vm1138, %v1974, %v1978
      %v1980 = vshrl.u32 %v1721, 16
      %v1982 = vrot.slane %v1980, 4
      %v1983 = vor.u32 %v1982, %v1978
      %v1984 = vrot.slane %v1983, 4
      %v1986 = vshll.u32 %v1743, 16
      %v1988 = vrot.slane %v1986, 5
      %v1989 = vsel %vm1138, %v1984, %v1988
      %v1991 = vshrl.u32 %v1722, 16
      %v1993 = vrot.slane %v1991, 4
      %v1994 = vshll.u32 %v1722, 16
      %v1996 = vrot.slane %v1994, 5
      %v1997 = vor.u32 %v1993, %v1996
      %v1998 = vrot.slane %v1997, 4
      %v2000 = vshll.u32 %v1723, 16
      %v2002 = vrot.slane %v2000, 5
      %v2003 = vsel %vm1138, %v1998, %v2002
      %v2004 = vshrl.u32 %v1723, 16
      %v2006 = vrot.slane %v2004, 4
      %v2007 = vor.u32 %v2006, %v2002
      %v2008 = vrot.slane %v2007, 4
      %v2010 = vshll.u32 %v1744, 16
      %v2012 = vrot.slane %v2010, 5
      %v2013 = vsel %vm1138, %v2008, %v2012
      %v2015 = vshrl.u32 %v1724, 16
      %v2017 = vrot.slane %v2015, 4
      %v2018 = vshll.u32 %v1724, 16
      %v2020 = vrot.slane %v2018, 5
      %v2021 = vor.u32 %v2017, %v2020
      %v2022 = vrot.slane %v2021, 4
      %v2024 = vshll.u32 %v1725, 16
      %v2026 = vrot.slane %v2024, 5
      %v2027 = vsel %vm1138, %v2022, %v2026
      %v2028 = vshrl.u32 %v1725, 16
      %v2030 = vrot.slane %v2028, 4
      %v2031 = vor.u32 %v2030, %v2026
      %v2032 = vrot.slane %v2031, 4
      %v2034 = vshll.u32 %v1745, 16
      %v2036 = vrot.slane %v2034, 5
      %v2037 = vsel %vm1138, %v2032, %v2036
      %v2039 = vshrl.u32 %v1726, 16
      %v2041 = vrot.slane %v2039, 4
      %v2042 = vshll.u32 %v1726, 16
      %v2044 = vrot.slane %v2042, 5
      %v2045 = vor.u32 %v2041, %v2044
      %v2046 = vrot.slane %v2045, 4
      %v2048 = vshll.u32 %v1727, 16
      %v2050 = vrot.slane %v2048, 5
      %v2051 = vsel %vm1138, %v2046, %v2050
      %v2052 = vshrl.u32 %v1727, 16
      %v2054 = vrot.slane %v2052, 4
      %v2055 = vor.u32 %v2054, %v2050
      %v2056 = vrot.slane %v2055, 4
      %v2058 = vshll.u32 %v1746, 16
      %v2060 = vrot.slane %v2058, 5
      %v2061 = vsel %vm1138, %v2056, %v2060
      %v2063 = vshrl.u32 %v1728, 16
      %v2065 = vrot.slane %v2063, 4
      %v2066 = vshll.u32 %v1728, 16
      %v2068 = vrot.slane %v2066, 5
      %v2069 = vor.u32 %v2065, %v2068
      %v2070 = vrot.slane %v2069, 4
      %v2072 = vshll.u32 %v1729, 16
      %v2074 = vrot.slane %v2072, 5
      %v2075 = vsel %vm1138, %v2070, %v2074
      %v2076 = vshrl.u32 %v1729, 16
      %v2078 = vrot.slane %v2076, 4
      %v2079 = vor.u32 %v2078, %v2074
      %v2080 = vrot.slane %v2079, 4
      %v2082 = vshll.u32 %v1747, 16
      %v2084 = vrot.slane %v2082, 5
      %v2085 = vsel %vm1138, %v2080, %v2084
      %v2087 = vshrl.u32 %v1730, 16
      %v2089 = vrot.slane %v2087, 4
      %v2090 = vshll.u32 %v1730, 16
      %v2092 = vrot.slane %v2090, 5
      %v2093 = vor.u32 %v2089, %v2092
      %v2094 = vrot.slane %v2093, 4
      %v2096 = vshll.u32 %v1731, 16
      %v2098 = vrot.slane %v2096, 5
      %v2099 = vsel %vm1138, %v2094, %v2098
      %v2100 = vshrl.u32 %v1731, 16
      %v2102 = vrot.slane %v2100, 4
      %v2103 = vor.u32 %v2102, %v2098
      %v2104 = vrot.slane %v2103, 4
      %v2106 = vshll.u32 %v1748, 16
      %v2108 = vrot.slane %v2106, 5
      %v2109 = vsel %vm1138, %v2104, %v2108
      %v2111 = vshrl.u32 %v1732, 16
      %v2113 = vrot.slane %v2111, 4
      %v2114 = vshll.u32 %v1732, 16
      %v2116 = vrot.slane %v2114, 5
      %v2117 = vor.u32 %v2113, %v2116
      %v2118 = vrot.slane %v2117, 4
      %v2120 = vshll.u32 %v1733, 16
      %v2122 = vrot.slane %v2120, 5
      %v2123 = vsel %vm1138, %v2118, %v2122
      %v2124 = vshrl.u32 %v1733, 16
      %v2126 = vrot.slane %v2124, 4
      %v2127 = vor.u32 %v2126, %v2122
      %v2128 = vrot.slane %v2127, 4
      %v2130 = vshll.u32 %v1749, 16
      %v2132 = vrot.slane %v2130, 5
      %v2133 = vsel %vm1138, %v2128, %v2132
      %v2134 = vld [vmem:[%s970] sm:$0xe]
      %v2135 = vld [vmem:[%s970 + $0xc] sm:$0xe]
      %v2136 = vld [vmem:[%s970 + $0x18] sm:$0xe]
      %v2137 = vld [vmem:[%s970 + $0x24] sm:$0xe]
      %v2138 = vld [vmem:[%s970 + $0x30] sm:$0xe]
      %v2139 = vld [vmem:[%s970 + $0x3c] sm:$0xe]
      %v2140 = vld [vmem:[%s970 + $0x48] sm:$0xe]
      %v2141 = vld [vmem:[%s970 + $0x54] sm:$0xe]
      %v2142 = vld [vmem:[%s970 + $0x60] sm:$0xe]
      %v2143 = vld [vmem:[%s970 + $0x6c] sm:$0xe]
      %v2144 = vld [vmem:[%s970 + $0x78] sm:$0xe]
      %v2145 = vld [vmem:[%s970 + $0x84] sm:$0xe]
      %v2146 = vld [vmem:[%s970 + $0x90] sm:$0xe]
      %v2147 = vld [vmem:[%s970 + $0x9c] sm:$0xe]
      %v2148 = vld [vmem:[%s970 + $0xa8] sm:$0xe]
      %v2149 = vld [vmem:[%s970 + $0xb4] sm:$0xe]
      %v2198 = vrot.slane %v2134, 5
      %v2199 = vrot.slane %v2198, 4
      %v2200 = vrot.slane %v1703, 5
      %v2201 = vsel %vm1589, %v2199, %v2200
      %v2202 = vrot.slane %v2200, 4
      %v2203 = vrot.slane %v1734, 5
      %v2204 = vsel %vm1589, %v2202, %v2203
      %v2205 = vrot.slane %v2135, 5
      %v2206 = vrot.slane %v2205, 4
      %v2207 = vrot.slane %v1705, 5
      %v2208 = vsel %vm1589, %v2206, %v2207
      %v2209 = vrot.slane %v2207, 4
      %v2210 = vrot.slane %v1735, 5
      %v2211 = vsel %vm1589, %v2209, %v2210
      %v2212 = vrot.slane %v2136, 5
      %v2213 = vrot.slane %v2212, 4
      %v2214 = vrot.slane %v1707, 5
      %v2215 = vsel %vm1589, %v2213, %v2214
      %v2216 = vrot.slane %v2214, 4
      %v2217 = vrot.slane %v1736, 5
      %v2218 = vsel %vm1589, %v2216, %v2217
      %v2219 = vrot.slane %v2137, 5
      %v2220 = vrot.slane %v2219, 4
      %v2221 = vrot.slane %v1709, 5
      %v2222 = vsel %vm1589, %v2220, %v2221
      %v2223 = vrot.slane %v2221, 4
      %v2224 = vrot.slane %v1737, 5
      %v2225 = vsel %vm1589, %v2223, %v2224
      %v2226 = vrot.slane %v2138, 5
      %v2227 = vrot.slane %v2226, 4
      %v2228 = vrot.slane %v1711, 5
      %v2229 = vsel %vm1589, %v2227, %v2228
      %v2230 = vrot.slane %v2228, 4
      %v2231 = vrot.slane %v1738, 5
      %v2232 = vsel %vm1589, %v2230, %v2231
      %v2233 = vrot.slane %v2139, 5
      %v2234 = vrot.slane %v2233, 4
      %v2235 = vrot.slane %v1713, 5
      %v2236 = vsel %vm1589, %v2234, %v2235
      %v2237 = vrot.slane %v2235, 4
      %v2238 = vrot.slane %v1739, 5
      %v2239 = vsel %vm1589, %v2237, %v2238
      %v2240 = vrot.slane %v2140, 5
      %v2241 = vrot.slane %v2240, 4
      %v2242 = vrot.slane %v1715, 5
      %v2243 = vsel %vm1589, %v2241, %v2242
      %v2244 = vrot.slane %v2242, 4
      %v2245 = vrot.slane %v1740, 5
      %v2246 = vsel %vm1589, %v2244, %v2245
      %v2247 = vrot.slane %v2141, 5
      %v2248 = vrot.slane %v2247, 4
      %v2249 = vrot.slane %v1717, 5
      %v2250 = vsel %vm1589, %v2248, %v2249
      %v2251 = vrot.slane %v2249, 4
      %v2252 = vrot.slane %v1741, 5
      %v2253 = vsel %vm1589, %v2251, %v2252
      %v2254 = vrot.slane %v2142, 5
      %v2255 = vrot.slane %v2254, 4
      %v2256 = vrot.slane %v1719, 5
      %v2257 = vsel %vm1589, %v2255, %v2256
      %v2258 = vrot.slane %v2256, 4
      %v2259 = vrot.slane %v1742, 5
      %v2260 = vsel %vm1589, %v2258, %v2259
      %v2261 = vrot.slane %v2143, 5
      %v2262 = vrot.slane %v2261, 4
      %v2263 = vrot.slane %v1721, 5
      %v2264 = vsel %vm1589, %v2262, %v2263
      %v2265 = vrot.slane %v2263, 4
      %v2266 = vrot.slane %v1743, 5
      %v2267 = vsel %vm1589, %v2265, %v2266
      %v2268 = vrot.slane %v2144, 5
      %v2269 = vrot.slane %v2268, 4
      %v2270 = vrot.slane %v1723, 5
      %v2271 = vsel %vm1589, %v2269, %v2270
      %v2272 = vrot.slane %v2270, 4
      %v2273 = vrot.slane %v1744, 5
      %v2274 = vsel %vm1589, %v2272, %v2273
      %v2275 = vrot.slane %v2145, 5
      %v2276 = vrot.slane %v2275, 4
      %v2277 = vrot.slane %v1725, 5
      %v2278 = vsel %vm1589, %v2276, %v2277
      %v2279 = vrot.slane %v2277, 4
      %v2280 = vrot.slane %v1745, 5
      %v2281 = vsel %vm1589, %v2279, %v2280
      %v2282 = vrot.slane %v2146, 5
      %v2283 = vrot.slane %v2282, 4
      %v2284 = vrot.slane %v1727, 5
      %v2285 = vsel %vm1589, %v2283, %v2284
      %v2286 = vrot.slane %v2284, 4
      %v2287 = vrot.slane %v1746, 5
      %v2288 = vsel %vm1589, %v2286, %v2287
      %v2289 = vrot.slane %v2147, 5
      %v2290 = vrot.slane %v2289, 4
      %v2291 = vrot.slane %v1729, 5
      %v2292 = vsel %vm1589, %v2290, %v2291
      %v2293 = vrot.slane %v2291, 4
      %v2294 = vrot.slane %v1747, 5
      %v2295 = vsel %vm1589, %v2293, %v2294
      %v2296 = vrot.slane %v2148, 5
      %v2297 = vrot.slane %v2296, 4
      %v2298 = vrot.slane %v1731, 5
      %v2299 = vsel %vm1589, %v2297, %v2298
      %v2300 = vrot.slane %v2298, 4
      %v2301 = vrot.slane %v1748, 5
      %v2302 = vsel %vm1589, %v2300, %v2301
      %v2303 = vrot.slane %v2149, 5
      %v2304 = vrot.slane %v2303, 4
      %v2305 = vrot.slane %v1733, 5
      %v2306 = vsel %vm1589, %v2304, %v2305
      %v2307 = vrot.slane %v2305, 4
      %v2308 = vrot.slane %v1749, 5
      %v2309 = vsel %vm1589, %v2307, %v2308
      %s2310 = scalar_lea.vmem [#allocation2], 24
      %v2311 = vld [vmem:[%s2310] sm:$0xf]
      %v2312 = vld [vmem:[%s2310 + $0x4] sm:$0xf]
      %v2313 = vld [vmem:[%s2310 + $0xc] sm:$0xf]
      %v2314 = vld [vmem:[%s2310 + $0x10] sm:$0xf]
      %v2315 = vld [vmem:[%s2310 + $0x18] sm:$0xf]
      %v2316 = vld [vmem:[%s2310 + $0x1c] sm:$0xf]
      %v2317 = vld [vmem:[%s2310 + $0x24] sm:$0xf]
      %v2318 = vld [vmem:[%s2310 + $0x28] sm:$0xf]
      %v2319 = vld [vmem:[%s2310 + $0x30] sm:$0xf]
      %v2320 = vld [vmem:[%s2310 + $0x34] sm:$0xf]
      %v2321 = vld [vmem:[%s2310 + $0x3c] sm:$0xf]
      %v2322 = vld [vmem:[%s2310 + $0x40] sm:$0xf]
      %v2323 = vld [vmem:[%s2310 + $0x48] sm:$0xf]
      %v2324 = vld [vmem:[%s2310 + $0x4c] sm:$0xf]
      %v2325 = vld [vmem:[%s2310 + $0x54] sm:$0xf]
      %v2326 = vld [vmem:[%s2310 + $0x58] sm:$0xf]
      %v2327 = vld [vmem:[%s2310 + $0x60] sm:$0xf]
      %v2328 = vld [vmem:[%s2310 + $0x64] sm:$0xf]
      %v2329 = vld [vmem:[%s2310 + $0x6c] sm:$0xf]
      %v2330 = vld [vmem:[%s2310 + $0x70] sm:$0xf]
      %v2331 = vld [vmem:[%s2310 + $0x78] sm:$0xf]
      %v2332 = vld [vmem:[%s2310 + $0x7c] sm:$0xf]
      %v2333 = vld [vmem:[%s2310 + $0x84] sm:$0xf]
      %v2334 = vld [vmem:[%s2310 + $0x88] sm:$0xf]
      %v2335 = vld [vmem:[%s2310 + $0x90] sm:$0xf]
      %v2336 = vld [vmem:[%s2310 + $0x94] sm:$0xf]
      %v2337 = vld [vmem:[%s2310 + $0x9c] sm:$0xf]
      %v2338 = vld [vmem:[%s2310 + $0xa0] sm:$0xf]
      %v2339 = vld [vmem:[%s2310 + $0xa8] sm:$0xf]
      %v2340 = vld [vmem:[%s2310 + $0xac] sm:$0xf]
      %v2341 = vld [vmem:[%s2310 + $0xb4] sm:$0xf]
      %v2342 = vld [vmem:[%s2310 + $0xb8] sm:$0xf]
      %v2343 = vld [vmem:[%s2310 + $0x8] sm:$0x1]
      %v2344 = vld [vmem:[%s2310 + $0x14] sm:$0x1]
      %v2345 = vld [vmem:[%s2310 + $0x20] sm:$0x1]
      %v2346 = vld [vmem:[%s2310 + $0x2c] sm:$0x1]
      %v2347 = vld [vmem:[%s2310 + $0x38] sm:$0x1]
      %v2348 = vld [vmem:[%s2310 + $0x44] sm:$0x1]
      %v2349 = vld [vmem:[%s2310 + $0x50] sm:$0x1]
      %v2350 = vld [vmem:[%s2310 + $0x5c] sm:$0x1]
      %v2351 = vld [vmem:[%s2310 + $0x68] sm:$0x1]
      %v2352 = vld [vmem:[%s2310 + $0x74] sm:$0x1]
      %v2353 = vld [vmem:[%s2310 + $0x80] sm:$0x1]
      %v2354 = vld [vmem:[%s2310 + $0x8c] sm:$0x1]
      %v2355 = vld [vmem:[%s2310 + $0x98] sm:$0x1]
      %v2356 = vld [vmem:[%s2310 + $0xa4] sm:$0x1]
      %v2357 = vld [vmem:[%s2310 + $0xb0] sm:$0x1]
      %v2358 = vld [vmem:[%s2310 + $0xbc] sm:$0x1]
      %v2360 = vshrl.u32 %v2311, 16
      %v2362 = vrot.slane %v2360, 4
      %v2363 = vshll.u32 %v2311, 16
      %v2365 = vrot.slane %v2363, 5
      %v2366 = vor.u32 %v2362, %v2365
      %v2367 = vrot.slane %v2366, 4
      %v2369 = vshll.u32 %v2312, 16
      %v2371 = vrot.slane %v2369, 5
      %v2372 = vsel %vm1138, %v2367, %v2371
      %v2373 = vshrl.u32 %v2312, 16
      %v2375 = vrot.slane %v2373, 4
      %v2376 = vor.u32 %v2375, %v2371
      %v2377 = vrot.slane %v2376, 4
      %v2379 = vshll.u32 %v2343, 16
      %v2381 = vrot.slane %v2379, 5
      %v2382 = vsel %vm1138, %v2377, %v2381
      %v2384 = vshrl.u32 %v2313, 16
      %v2386 = vrot.slane %v2384, 4
      %v2387 = vshll.u32 %v2313, 16
      %v2389 = vrot.slane %v2387, 5
      %v2390 = vor.u32 %v2386, %v2389
      %v2391 = vrot.slane %v2390, 4
      %v2393 = vshll.u32 %v2314, 16
      %v2395 = vrot.slane %v2393, 5
      %v2396 = vsel %vm1138, %v2391, %v2395
      %v2397 = vshrl.u32 %v2314, 16
      %v2399 = vrot.slane %v2397, 4
      %v2400 = vor.u32 %v2399, %v2395
      %v2401 = vrot.slane %v2400, 4
      %v2403 = vshll.u32 %v2344, 16
      %v2405 = vrot.slane %v2403, 5
      %v2406 = vsel %vm1138, %v2401, %v2405
      %v2408 = vshrl.u32 %v2315, 16
      %v2410 = vrot.slane %v2408, 4
      %v2411 = vshll.u32 %v2315, 16
      %v2413 = vrot.slane %v2411, 5
      %v2414 = vor.u32 %v2410, %v2413
      %v2415 = vrot.slane %v2414, 4
      %v2417 = vshll.u32 %v2316, 16
      %v2419 = vrot.slane %v2417, 5
      %v2420 = vsel %vm1138, %v2415, %v2419
      %v2421 = vshrl.u32 %v2316, 16
      %v2423 = vrot.slane %v2421, 4
      %v2424 = vor.u32 %v2423, %v2419
      %v2425 = vrot.slane %v2424, 4
      %v2427 = vshll.u32 %v2345, 16
      %v2429 = vrot.slane %v2427, 5
      %v2430 = vsel %vm1138, %v2425, %v2429
      %v2432 = vshrl.u32 %v2317, 16
      %v2434 = vrot.slane %v2432, 4
      %v2435 = vshll.u32 %v2317, 16
      %v2437 = vrot.slane %v2435, 5
      %v2438 = vor.u32 %v2434, %v2437
      %v2439 = vrot.slane %v2438, 4
      %v2441 = vshll.u32 %v2318, 16
      %v2443 = vrot.slane %v2441, 5
      %v2444 = vsel %vm1138, %v2439, %v2443
      %v2445 = vshrl.u32 %v2318, 16
      %v2447 = vrot.slane %v2445, 4
      %v2448 = vor.u32 %v2447, %v2443
      %v2449 = vrot.slane %v2448, 4
      %v2451 = vshll.u32 %v2346, 16
      %v2453 = vrot.slane %v2451, 5
      %v2454 = vsel %vm1138, %v2449, %v2453
      %v2456 = vshrl.u32 %v2319, 16
      %v2458 = vrot.slane %v2456, 4
      %v2459 = vshll.u32 %v2319, 16
      %v2461 = vrot.slane %v2459, 5
      %v2462 = vor.u32 %v2458, %v2461
      %v2463 = vrot.slane %v2462, 4
      %v2465 = vshll.u32 %v2320, 16
      %v2467 = vrot.slane %v2465, 5
      %v2468 = vsel %vm1138, %v2463, %v2467
      %v2469 = vshrl.u32 %v2320, 16
      %v2471 = vrot.slane %v2469, 4
      %v2472 = vor.u32 %v2471, %v2467
      %v2473 = vrot.slane %v2472, 4
      %v2475 = vshll.u32 %v2347, 16
      %v2477 = vrot.slane %v2475, 5
      %v2478 = vsel %vm1138, %v2473, %v2477
      %v2480 = vshrl.u32 %v2321, 16
      %v2482 = vrot.slane %v2480, 4
      %v2483 = vshll.u32 %v2321, 16
      %v2485 = vrot.slane %v2483, 5
      %v2486 = vor.u32 %v2482, %v2485
      %v2487 = vrot.slane %v2486, 4
      %v2489 = vshll.u32 %v2322, 16
      %v2491 = vrot.slane %v2489, 5
      %v2492 = vsel %vm1138, %v2487, %v2491
      %v2493 = vshrl.u32 %v2322, 16
      %v2495 = vrot.slane %v2493, 4
      %v2496 = vor.u32 %v2495, %v2491
      %v2497 = vrot.slane %v2496, 4
      %v2499 = vshll.u32 %v2348, 16
      %v2501 = vrot.slane %v2499, 5
      %v2502 = vsel %vm1138, %v2497, %v2501
      %v2504 = vshrl.u32 %v2323, 16
      %v2506 = vrot.slane %v2504, 4
      %v2507 = vshll.u32 %v2323, 16
      %v2509 = vrot.slane %v2507, 5
      %v2510 = vor.u32 %v2506, %v2509
      %v2511 = vrot.slane %v2510, 4
      %v2513 = vshll.u32 %v2324, 16
      %v2515 = vrot.slane %v2513, 5
      %v2516 = vsel %vm1138, %v2511, %v2515
      %v2517 = vshrl.u32 %v2324, 16
      %v2519 = vrot.slane %v2517, 4
      %v2520 = vor.u32 %v2519, %v2515
      %v2521 = vrot.slane %v2520, 4
      %v2523 = vshll.u32 %v2349, 16
      %v2525 = vrot.slane %v2523, 5
      %v2526 = vsel %vm1138, %v2521, %v2525
      %v2528 = vshrl.u32 %v2325, 16
      %v2530 = vrot.slane %v2528, 4
      %v2531 = vshll.u32 %v2325, 16
      %v2533 = vrot.slane %v2531, 5
      %v2534 = vor.u32 %v2530, %v2533
      %v2535 = vrot.slane %v2534, 4
      %v2537 = vshll.u32 %v2326, 16
      %v2539 = vrot.slane %v2537, 5
      %v2540 = vsel %vm1138, %v2535, %v2539
      %v2541 = vshrl.u32 %v2326, 16
      %v2543 = vrot.slane %v2541, 4
      %v2544 = vor.u32 %v2543, %v2539
      %v2545 = vrot.slane %v2544, 4
      %v2547 = vshll.u32 %v2350, 16
      %v2549 = vrot.slane %v2547, 5
      %v2550 = vsel %vm1138, %v2545, %v2549
      %v2552 = vshrl.u32 %v2327, 16
      %v2554 = vrot.slane %v2552, 4
      %v2555 = vshll.u32 %v2327, 16
      %v2557 = vrot.slane %v2555, 5
      %v2558 = vor.u32 %v2554, %v2557
      %v2559 = vrot.slane %v2558, 4
      %v2561 = vshll.u32 %v2328, 16
      %v2563 = vrot.slane %v2561, 5
      %v2564 = vsel %vm1138, %v2559, %v2563
      %v2565 = vshrl.u32 %v2328, 16
      %v2567 = vrot.slane %v2565, 4
      %v2568 = vor.u32 %v2567, %v2563
      %v2569 = vrot.slane %v2568, 4
      %v2571 = vshll.u32 %v2351, 16
      %v2573 = vrot.slane %v2571, 5
      %v2574 = vsel %vm1138, %v2569, %v2573
      %v2576 = vshrl.u32 %v2329, 16
      %v2578 = vrot.slane %v2576, 4
      %v2579 = vshll.u32 %v2329, 16
      %v2581 = vrot.slane %v2579, 5
      %v2582 = vor.u32 %v2578, %v2581
      %v2583 = vrot.slane %v2582, 4
      %v2585 = vshll.u32 %v2330, 16
      %v2587 = vrot.slane %v2585, 5
      %v2588 = vsel %vm1138, %v2583, %v2587
      %v2589 = vshrl.u32 %v2330, 16
      %v2591 = vrot.slane %v2589, 4
      %v2592 = vor.u32 %v2591, %v2587
      %v2593 = vrot.slane %v2592, 4
      %v2595 = vshll.u32 %v2352, 16
      %v2597 = vrot.slane %v2595, 5
      %v2598 = vsel %vm1138, %v2593, %v2597
      %v2600 = vshrl.u32 %v2331, 16
      %v2602 = vrot.slane %v2600, 4
      %v2603 = vshll.u32 %v2331, 16
      %v2605 = vrot.slane %v2603, 5
      %v2606 = vor.u32 %v2602, %v2605
      %v2607 = vrot.slane %v2606, 4
      %v2609 = vshll.u32 %v2332, 16
      %v2611 = vrot.slane %v2609, 5
      %v2612 = vsel %vm1138, %v2607, %v2611
      %v2613 = vshrl.u32 %v2332, 16
      %v2615 = vrot.slane %v2613, 4
      %v2616 = vor.u32 %v2615, %v2611
      %v2617 = vrot.slane %v2616, 4
      %v2619 = vshll.u32 %v2353, 16
      %v2621 = vrot.slane %v2619, 5
      %v2622 = vsel %vm1138, %v2617, %v2621
      %v2624 = vshrl.u32 %v2333, 16
      %v2626 = vrot.slane %v2624, 4
      %v2627 = vshll.u32 %v2333, 16
      %v2629 = vrot.slane %v2627, 5
      %v2630 = vor.u32 %v2626, %v2629
      %v2631 = vrot.slane %v2630, 4
      %v2633 = vshll.u32 %v2334, 16
      %v2635 = vrot.slane %v2633, 5
      %v2636 = vsel %vm1138, %v2631, %v2635
      %v2637 = vshrl.u32 %v2334, 16
      %v2639 = vrot.slane %v2637, 4
      %v2640 = vor.u32 %v2639, %v2635
      %v2641 = vrot.slane %v2640, 4
      %v2643 = vshll.u32 %v2354, 16
      %v2645 = vrot.slane %v2643, 5
      %v2646 = vsel %vm1138, %v2641, %v2645
      %v2648 = vshrl.u32 %v2335, 16
      %v2650 = vrot.slane %v2648, 4
      %v2651 = vshll.u32 %v2335, 16
      %v2653 = vrot.slane %v2651, 5
      %v2654 = vor.u32 %v2650, %v2653
      %v2655 = vrot.slane %v2654, 4
      %v2657 = vshll.u32 %v2336, 16
      %v2659 = vrot.slane %v2657, 5
      %v2660 = vsel %vm1138, %v2655, %v2659
      %v2661 = vshrl.u32 %v2336, 16
      %v2663 = vrot.slane %v2661, 4
      %v2664 = vor.u32 %v2663, %v2659
      %v2665 = vrot.slane %v2664, 4
      %v2667 = vshll.u32 %v2355, 16
      %v2669 = vrot.slane %v2667, 5
      %v2670 = vsel %vm1138, %v2665, %v2669
      %v2672 = vshrl.u32 %v2337, 16
      %v2674 = vrot.slane %v2672, 4
      %v2675 = vshll.u32 %v2337, 16
      %v2677 = vrot.slane %v2675, 5
      %v2678 = vor.u32 %v2674, %v2677
      %v2679 = vrot.slane %v2678, 4
      %v2681 = vshll.u32 %v2338, 16
      %v2683 = vrot.slane %v2681, 5
      %v2684 = vsel %vm1138, %v2679, %v2683
      %v2685 = vshrl.u32 %v2338, 16
      %v2687 = vrot.slane %v2685, 4
      %v2688 = vor.u32 %v2687, %v2683
      %v2689 = vrot.slane %v2688, 4
      %v2691 = vshll.u32 %v2356, 16
      %v2693 = vrot.slane %v2691, 5
      %v2694 = vsel %vm1138, %v2689, %v2693
      %v2696 = vshrl.u32 %v2339, 16
      %v2698 = vrot.slane %v2696, 4
      %v2699 = vshll.u32 %v2339, 16
      %v2701 = vrot.slane %v2699, 5
      %v2702 = vor.u32 %v2698, %v2701
      %v2703 = vrot.slane %v2702, 4
      %v2705 = vshll.u32 %v2340, 16
      %v2707 = vrot.slane %v2705, 5
      %v2708 = vsel %vm1138, %v2703, %v2707
      %v2709 = vshrl.u32 %v2340, 16
      %v2711 = vrot.slane %v2709, 4
      %v2712 = vor.u32 %v2711, %v2707
      %v2713 = vrot.slane %v2712, 4
      %v2715 = vshll.u32 %v2357, 16
      %v2717 = vrot.slane %v2715, 5
      %v2718 = vsel %vm1138, %v2713, %v2717
      %v2720 = vshrl.u32 %v2341, 16
      %v2722 = vrot.slane %v2720, 4
      %v2723 = vshll.u32 %v2341, 16
      %v2725 = vrot.slane %v2723, 5
      %v2726 = vor.u32 %v2722, %v2725
      %v2727 = vrot.slane %v2726, 4
      %v2729 = vshll.u32 %v2342, 16
      %v2731 = vrot.slane %v2729, 5
      %v2732 = vsel %vm1138, %v2727, %v2731
      %v2733 = vshrl.u32 %v2342, 16
      %v2735 = vrot.slane %v2733, 4
      %v2736 = vor.u32 %v2735, %v2731
      %v2737 = vrot.slane %v2736, 4
      %v2739 = vshll.u32 %v2358, 16
      %v2741 = vrot.slane %v2739, 5
      %v2742 = vsel %vm1138, %v2737, %v2741
      %v2743 = vld [vmem:[%s2310] sm:$0xe]
      %v2744 = vld [vmem:[%s2310 + $0xc] sm:$0xe]
      %v2745 = vld [vmem:[%s2310 + $0x18] sm:$0xe]
      %v2746 = vld [vmem:[%s2310 + $0x24] sm:$0xe]
      %v2747 = vld [vmem:[%s2310 + $0x30] sm:$0xe]
      %v2748 = vld [vmem:[%s2310 + $0x3c] sm:$0xe]
      %v2749 = vld [vmem:[%s2310 + $0x48] sm:$0xe]
      %v2750 = vld [vmem:[%s2310 + $0x54] sm:$0xe]
      %v2751 = vld [vmem:[%s2310 + $0x60] sm:$0xe]
      %v2752 = vld [vmem:[%s2310 + $0x6c] sm:$0xe]
      %v2753 = vld [vmem:[%s2310 + $0x78] sm:$0xe]
      %v2754 = vld [vmem:[%s2310 + $0x84] sm:$0xe]
      %v2755 = vld [vmem:[%s2310 + $0x90] sm:$0xe]
      %v2756 = vld [vmem:[%s2310 + $0x9c] sm:$0xe]
      %v2757 = vld [vmem:[%s2310 + $0xa8] sm:$0xe]
      %v2758 = vld [vmem:[%s2310 + $0xb4] sm:$0xe]
      %v2807 = vrot.slane %v2743, 5
      %v2808 = vrot.slane %v2807, 4
      %v2809 = vrot.slane %v2312, 5
      %v2810 = vsel %vm1589, %v2808, %v2809
      %v2811 = vrot.slane %v2809, 4
      %v2812 = vrot.slane %v2343, 5
      %v2813 = vsel %vm1589, %v2811, %v2812
      %v2814 = vrot.slane %v2744, 5
      %v2815 = vrot.slane %v2814, 4
      %v2816 = vrot.slane %v2314, 5
      %v2817 = vsel %vm1589, %v2815, %v2816
      %v2818 = vrot.slane %v2816, 4
      %v2819 = vrot.slane %v2344, 5
      %v2820 = vsel %vm1589, %v2818, %v2819
      %v2821 = vrot.slane %v2745, 5
      %v2822 = vrot.slane %v2821, 4
      %v2823 = vrot.slane %v2316, 5
      %v2824 = vsel %vm1589, %v2822, %v2823
      %v2825 = vrot.slane %v2823, 4
      %v2826 = vrot.slane %v2345, 5
      %v2827 = vsel %vm1589, %v2825, %v2826
      %v2828 = vrot.slane %v2746, 5
      %v2829 = vrot.slane %v2828, 4
      %v2830 = vrot.slane %v2318, 5
      %v2831 = vsel %vm1589, %v2829, %v2830
      %v2832 = vrot.slane %v2830, 4
      %v2833 = vrot.slane %v2346, 5
      %v2834 = vsel %vm1589, %v2832, %v2833
      %v2835 = vrot.slane %v2747, 5
      %v2836 = vrot.slane %v2835, 4
      %v2837 = vrot.slane %v2320, 5
      %v2838 = vsel %vm1589, %v2836, %v2837
      %v2839 = vrot.slane %v2837, 4
      %v2840 = vrot.slane %v2347, 5
      %v2841 = vsel %vm1589, %v2839, %v2840
      %v2842 = vrot.slane %v2748, 5
      %v2843 = vrot.slane %v2842, 4
      %v2844 = vrot.slane %v2322, 5
      %v2845 = vsel %vm1589, %v2843, %v2844
      %v2846 = vrot.slane %v2844, 4
      %v2847 = vrot.slane %v2348, 5
      %v2848 = vsel %vm1589, %v2846, %v2847
      %v2849 = vrot.slane %v2749, 5
      %v2850 = vrot.slane %v2849, 4
      %v2851 = vrot.slane %v2324, 5
      %v2852 = vsel %vm1589, %v2850, %v2851
      %v2853 = vrot.slane %v2851, 4
      %v2854 = vrot.slane %v2349, 5
      %v2855 = vsel %vm1589, %v2853, %v2854
      %v2856 = vrot.slane %v2750, 5
      %v2857 = vrot.slane %v2856, 4
      %v2858 = vrot.slane %v2326, 5
      %v2859 = vsel %vm1589, %v2857, %v2858
      %v2860 = vrot.slane %v2858, 4
      %v2861 = vrot.slane %v2350, 5
      %v2862 = vsel %vm1589, %v2860, %v2861
      %v2863 = vrot.slane %v2751, 5
      %v2864 = vrot.slane %v2863, 4
      %v2865 = vrot.slane %v2328, 5
      %v2866 = vsel %vm1589, %v2864, %v2865
      %v2867 = vrot.slane %v2865, 4
      %v2868 = vrot.slane %v2351, 5
      %v2869 = vsel %vm1589, %v2867, %v2868
      %v2870 = vrot.slane %v2752, 5
      %v2871 = vrot.slane %v2870, 4
      %v2872 = vrot.slane %v2330, 5
      %v2873 = vsel %vm1589, %v2871, %v2872
      %v2874 = vrot.slane %v2872, 4
      %v2875 = vrot.slane %v2352, 5
      %v2876 = vsel %vm1589, %v2874, %v2875
      %v2877 = vrot.slane %v2753, 5
      %v2878 = vrot.slane %v2877, 4
      %v2879 = vrot.slane %v2332, 5
      %v2880 = vsel %vm1589, %v2878, %v2879
      %v2881 = vrot.slane %v2879, 4
      %v2882 = vrot.slane %v2353, 5
      %v2883 = vsel %vm1589, %v2881, %v2882
      %v2884 = vrot.slane %v2754, 5
      %v2885 = vrot.slane %v2884, 4
      %v2886 = vrot.slane %v2334, 5
      %v2887 = vsel %vm1589, %v2885, %v2886
      %v2888 = vrot.slane %v2886, 4
      %v2889 = vrot.slane %v2354, 5
      %v2890 = vsel %vm1589, %v2888, %v2889
      %v2891 = vrot.slane %v2755, 5
      %v2892 = vrot.slane %v2891, 4
      %v2893 = vrot.slane %v2336, 5
      %v2894 = vsel %vm1589, %v2892, %v2893
      %v2895 = vrot.slane %v2893, 4
      %v2896 = vrot.slane %v2355, 5
      %v2897 = vsel %vm1589, %v2895, %v2896
      %v2898 = vrot.slane %v2756, 5
      %v2899 = vrot.slane %v2898, 4
      %v2900 = vrot.slane %v2338, 5
      %v2901 = vsel %vm1589, %v2899, %v2900
      %v2902 = vrot.slane %v2900, 4
      %v2903 = vrot.slane %v2356, 5
      %v2904 = vsel %vm1589, %v2902, %v2903
      %v2905 = vrot.slane %v2757, 5
      %v2906 = vrot.slane %v2905, 4
      %v2907 = vrot.slane %v2340, 5
      %v2908 = vsel %vm1589, %v2906, %v2907
      %v2909 = vrot.slane %v2907, 4
      %v2910 = vrot.slane %v2357, 5
      %v2911 = vsel %vm1589, %v2909, %v2910
      %v2912 = vrot.slane %v2758, 5
      %v2913 = vrot.slane %v2912, 4
      %v2914 = vrot.slane %v2342, 5
      %v2915 = vsel %vm1589, %v2913, %v2914
      %v2916 = vrot.slane %v2914, 4
      %v2917 = vrot.slane %v2358, 5
      %v2918 = vsel %vm1589, %v2916, %v2917
      %v2935 = vunpack.c.l.b16 %v1088
      %v2936 = vunpack.c.l.b16 %v1089
      %v2937 = vunpack.c.l.b16 %v1090
      %v2938 = vunpack.c.l.b16 %v1091
      %v2939 = vunpack.c.l.b16 %v1092
      %v2940 = vunpack.c.l.b16 %v1093
      %v2941 = vunpack.c.l.b16 %v1094
      %v2942 = vunpack.c.l.b16 %v1095
      %v2943 = vunpack.c.l.b16 %v1096
      %v2944 = vunpack.c.l.b16 %v1097
      %v2945 = vunpack.c.l.b16 %v1098
      %v2946 = vunpack.c.l.b16 %v1099
      %v2947 = vunpack.c.l.b16 %v1100
      %v2948 = vunpack.c.l.b16 %v1101
      %v2949 = vunpack.c.l.b16 %v1102
      %v2950 = vunpack.c.l.b16 %v1103
      %v2951 = vunpack.c.l.b16 %v1104
      %v2952 = vunpack.c.l.b16 %v1105
      %v2953 = vunpack.c.l.b16 %v1106
      %v2954 = vunpack.c.l.b16 %v1107
      %v2955 = vunpack.c.l.b16 %v1108
      %v2956 = vunpack.c.l.b16 %v1109
      %v2957 = vunpack.c.l.b16 %v1110
      %v2958 = vunpack.c.l.b16 %v1111
      %v2959 = vunpack.c.l.b16 %v1112
      %v2960 = vunpack.c.l.b16 %v1113
      %v2961 = vunpack.c.l.b16 %v1114
      %v2962 = vunpack.c.l.b16 %v1115
      %v2963 = vunpack.c.l.b16 %v1116
      %v2964 = vunpack.c.l.b16 %v1117
      %v2965 = vunpack.c.l.b16 %v1118
      %v2966 = vunpack.c.l.b16 %v1119
      %v2967 = vpack.c.b16 %v2936, %v2935
      %v2968 = vpack.c.b16 %v2938, %v2937
      %v2969 = vpack.c.b16 %v2940, %v2939
      %v2970 = vpack.c.b16 %v2942, %v2941
      %v2971 = vpack.c.b16 %v2944, %v2943
      %v2972 = vpack.c.b16 %v2946, %v2945
      %v2973 = vpack.c.b16 %v2948, %v2947
      %v2974 = vpack.c.b16 %v2950, %v2949
      %v2975 = vpack.c.b16 %v2952, %v2951
      %v2976 = vpack.c.b16 %v2954, %v2953
      %v2977 = vpack.c.b16 %v2956, %v2955
      %v2978 = vpack.c.b16 %v2958, %v2957
      %v2979 = vpack.c.b16 %v2960, %v2959
      %v2980 = vpack.c.b16 %v2962, %v2961
      %v2981 = vpack.c.b16 %v2964, %v2963
      %v2982 = vpack.c.b16 %v2966, %v2965
      %v2999 = vunpack.c.l.b16 %v1152
      %v3000 = vunpack.c.l.b16 %v1162
      %v3001 = vunpack.c.l.b16 %v1176
      %v3002 = vunpack.c.l.b16 %v1186
      %v3003 = vunpack.c.l.b16 %v1200
      %v3004 = vunpack.c.l.b16 %v1210
      %v3005 = vunpack.c.l.b16 %v1224
      %v3006 = vunpack.c.l.b16 %v1234
      %v3007 = vunpack.c.l.b16 %v1248
      %v3008 = vunpack.c.l.b16 %v1258
      %v3009 = vunpack.c.l.b16 %v1272
      %v3010 = vunpack.c.l.b16 %v1282
      %v3011 = vunpack.c.l.b16 %v1296
      %v3012 = vunpack.c.l.b16 %v1306
      %v3013 = vunpack.c.l.b16 %v1320
      %v3014 = vunpack.c.l.b16 %v1330
      %v3015 = vunpack.c.l.b16 %v1344
      %v3016 = vunpack.c.l.b16 %v1354
      %v3017 = vunpack.c.l.b16 %v1368
      %v3018 = vunpack.c.l.b16 %v1378
      %v3019 = vunpack.c.l.b16 %v1392
      %v3020 = vunpack.c.l.b16 %v1402
      %v3021 = vunpack.c.l.b16 %v1416
      %v3022 = vunpack.c.l.b16 %v1426
      %v3023 = vunpack.c.l.b16 %v1440
      %v3024 = vunpack.c.l.b16 %v1450
      %v3025 = vunpack.c.l.b16 %v1464
      %v3026 = vunpack.c.l.b16 %v1474
      %v3027 = vunpack.c.l.b16 %v1488
      %v3028 = vunpack.c.l.b16 %v1498
      %v3029 = vunpack.c.l.b16 %v1512
      %v3030 = vunpack.c.l.b16 %v1522
      %v3031 = vpack.c.b16 %v3000, %v2999
      %v3032 = vpack.c.b16 %v3002, %v3001
      %v3033 = vpack.c.b16 %v3004, %v3003
      %v3034 = vpack.c.b16 %v3006, %v3005
      %v3035 = vpack.c.b16 %v3008, %v3007
      %v3036 = vpack.c.b16 %v3010, %v3009
      %v3037 = vpack.c.b16 %v3012, %v3011
      %v3038 = vpack.c.b16 %v3014, %v3013
      %v3039 = vpack.c.b16 %v3016, %v3015
      %v3040 = vpack.c.b16 %v3018, %v3017
      %v3041 = vpack.c.b16 %v3020, %v3019
      %v3042 = vpack.c.b16 %v3022, %v3021
      %v3043 = vpack.c.b16 %v3024, %v3023
      %v3044 = vpack.c.b16 %v3026, %v3025
      %v3045 = vpack.c.b16 %v3028, %v3027
      %v3046 = vpack.c.b16 %v3030, %v3029
      %v3063 = vunpack.c.l.b16 %v1593
      %v3064 = vunpack.c.l.b16 %v1596
      %v3065 = vunpack.c.l.b16 %v1600
      %v3066 = vunpack.c.l.b16 %v1603
      %v3067 = vunpack.c.l.b16 %v1607
      %v3068 = vunpack.c.l.b16 %v1610
      %v3069 = vunpack.c.l.b16 %v1614
      %v3070 = vunpack.c.l.b16 %v1617
      %v3071 = vunpack.c.l.b16 %v1621
      %v3072 = vunpack.c.l.b16 %v1624
      %v3073 = vunpack.c.l.b16 %v1628
      %v3074 = vunpack.c.l.b16 %v1631
      %v3075 = vunpack.c.l.b16 %v1635
      %v3076 = vunpack.c.l.b16 %v1638
      %v3077 = vunpack.c.l.b16 %v1642
      %v3078 = vunpack.c.l.b16 %v1645
      %v3079 = vunpack.c.l.b16 %v1649
      %v3080 = vunpack.c.l.b16 %v1652
      %v3081 = vunpack.c.l.b16 %v1656
      %v3082 = vunpack.c.l.b16 %v1659
      %v3083 = vunpack.c.l.b16 %v1663
      %v3084 = vunpack.c.l.b16 %v1666
      %v3085 = vunpack.c.l.b16 %v1670
      %v3086 = vunpack.c.l.b16 %v1673
      %v3087 = vunpack.c.l.b16 %v1677
      %v3088 = vunpack.c.l.b16 %v1680
      %v3089 = vunpack.c.l.b16 %v1684
      %v3090 = vunpack.c.l.b16 %v1687
      %v3091 = vunpack.c.l.b16 %v1691
      %v3092 = vunpack.c.l.b16 %v1694
      %v3093 = vunpack.c.l.b16 %v1698
      %v3094 = vunpack.c.l.b16 %v1701
      %v3095 = vpack.c.b16 %v3064, %v3063
      %v3096 = vpack.c.b16 %v3066, %v3065
      %v3097 = vpack.c.b16 %v3068, %v3067
      %v3098 = vpack.c.b16 %v3070, %v3069
      %v3099 = vpack.c.b16 %v3072, %v3071
      %v3100 = vpack.c.b16 %v3074, %v3073
      %v3101 = vpack.c.b16 %v3076, %v3075
      %v3102 = vpack.c.b16 %v3078, %v3077
      %v3103 = vpack.c.b16 %v3080, %v3079
      %v3104 = vpack.c.b16 %v3082, %v3081
      %v3105 = vpack.c.b16 %v3084, %v3083
      %v3106 = vpack.c.b16 %v3086, %v3085
      %v3107 = vpack.c.b16 %v3088, %v3087
      %v3108 = vpack.c.b16 %v3090, %v3089
      %v3109 = vpack.c.b16 %v3092, %v3091
      %v3110 = vpack.c.b16 %v3094, %v3093
      %v3143 = vunpack.c.l.b16 %v1702
      %v3144 = vunpack.c.l.b16 %v1703
      %v3145 = vunpack.c.l.b16 %v1704
      %v3146 = vunpack.c.l.b16 %v1705
      %v3147 = vunpack.c.l.b16 %v1706
      %v3148 = vunpack.c.l.b16 %v1707
      %v3149 = vunpack.c.l.b16 %v1708
      %v3150 = vunpack.c.l.b16 %v1709
      %v3151 = vunpack.c.l.b16 %v1710
      %v3152 = vunpack.c.l.b16 %v1711
      %v3153 = vunpack.c.l.b16 %v1712
      %v3154 = vunpack.c.l.b16 %v1713
      %v3155 = vunpack.c.l.b16 %v1714
      %v3156 = vunpack.c.l.b16 %v1715
      %v3157 = vunpack.c.l.b16 %v1716
      %v3158 = vunpack.c.l.b16 %v1717
      %v3159 = vunpack.c.l.b16 %v1718
      %v3160 = vunpack.c.l.b16 %v1719
      %v3161 = vunpack.c.l.b16 %v1720
      %v3162 = vunpack.c.l.b16 %v1721
      %v3163 = vunpack.c.l.b16 %v1722
      %v3164 = vunpack.c.l.b16 %v1723
      %v3165 = vunpack.c.l.b16 %v1724
      %v3166 = vunpack.c.l.b16 %v1725
      %v3167 = vunpack.c.l.b16 %v1726
      %v3168 = vunpack.c.l.b16 %v1727
      %v3169 = vunpack.c.l.b16 %v1728
      %v3170 = vunpack.c.l.b16 %v1729
      %v3171 = vunpack.c.l.b16 %v1730
      %v3172 = vunpack.c.l.b16 %v1731
      %v3173 = vunpack.c.l.b16 %v1732
      %v3174 = vunpack.c.l.b16 %v1733
      %v3175 = vpack.c.b16 %v3144, %v3143
      %v3176 = vpack.c.b16 %v3146, %v3145
      %v3177 = vpack.c.b16 %v3148, %v3147
      %v3178 = vpack.c.b16 %v3150, %v3149
      %v3179 = vpack.c.b16 %v3152, %v3151
      %v3180 = vpack.c.b16 %v3154, %v3153
      %v3181 = vpack.c.b16 %v3156, %v3155
      %v3182 = vpack.c.b16 %v3158, %v3157
      %v3183 = vpack.c.b16 %v3160, %v3159
      %v3184 = vpack.c.b16 %v3162, %v3161
      %v3185 = vpack.c.b16 %v3164, %v3163
      %v3186 = vpack.c.b16 %v3166, %v3165
      %v3187 = vpack.c.b16 %v3168, %v3167
      %v3188 = vpack.c.b16 %v3170, %v3169
      %v3189 = vpack.c.b16 %v3172, %v3171
      %v3190 = vpack.c.b16 %v3174, %v3173
      %v3207 = vunpack.c.l.b16 %v1763
      %v3208 = vunpack.c.l.b16 %v1773
      %v3209 = vunpack.c.l.b16 %v1787
      %v3210 = vunpack.c.l.b16 %v1797
      %v3211 = vunpack.c.l.b16 %v1811
      %v3212 = vunpack.c.l.b16 %v1821
      %v3213 = vunpack.c.l.b16 %v1835
      %v3214 = vunpack.c.l.b16 %v1845
      %v3215 = vunpack.c.l.b16 %v1859
      %v3216 = vunpack.c.l.b16 %v1869
      %v3217 = vunpack.c.l.b16 %v1883
      %v3218 = vunpack.c.l.b16 %v1893
      %v3219 = vunpack.c.l.b16 %v1907
      %v3220 = vunpack.c.l.b16 %v1917
      %v3221 = vunpack.c.l.b16 %v1931
      %v3222 = vunpack.c.l.b16 %v1941
      %v3223 = vunpack.c.l.b16 %v1955
      %v3224 = vunpack.c.l.b16 %v1965
      %v3225 = vunpack.c.l.b16 %v1979
      %v3226 = vunpack.c.l.b16 %v1989
      %v3227 = vunpack.c.l.b16 %v2003
      %v3228 = vunpack.c.l.b16 %v2013
      %v3229 = vunpack.c.l.b16 %v2027
      %v3230 = vunpack.c.l.b16 %v2037
      %v3231 = vunpack.c.l.b16 %v2051
      %v3232 = vunpack.c.l.b16 %v2061
      %v3233 = vunpack.c.l.b16 %v2075
      %v3234 = vunpack.c.l.b16 %v2085
      %v3235 = vunpack.c.l.b16 %v2099
      %v3236 = vunpack.c.l.b16 %v2109
      %v3237 = vunpack.c.l.b16 %v2123
      %v3238 = vunpack.c.l.b16 %v2133
      %v3239 = vpack.c.b16 %v3208, %v3207
      %v3240 = vpack.c.b16 %v3210, %v3209
      %v3241 = vpack.c.b16 %v3212, %v3211
      %v3242 = vpack.c.b16 %v3214, %v3213
      %v3243 = vpack.c.b16 %v3216, %v3215
      %v3244 = vpack.c.b16 %v3218, %v3217
      %v3245 = vpack.c.b16 %v3220, %v3219
      %v3246 = vpack.c.b16 %v3222, %v3221
      %v3247 = vpack.c.b16 %v3224, %v3223
      %v3248 = vpack.c.b16 %v3226, %v3225
      %v3249 = vpack.c.b16 %v3228, %v3227
      %v3250 = vpack.c.b16 %v3230, %v3229
      %v3251 = vpack.c.b16 %v3232, %v3231
      %v3252 = vpack.c.b16 %v3234, %v3233
      %v3253 = vpack.c.b16 %v3236, %v3235
      %v3254 = vpack.c.b16 %v3238, %v3237
      %v3271 = vunpack.c.l.b16 %v2201
      %v3272 = vunpack.c.l.b16 %v2204
      %v3273 = vunpack.c.l.b16 %v2208
      %v3274 = vunpack.c.l.b16 %v2211
      %v3275 = vunpack.c.l.b16 %v2215
      %v3276 = vunpack.c.l.b16 %v2218
      %v3277 = vunpack.c.l.b16 %v2222
      %v3278 = vunpack.c.l.b16 %v2225
      %v3279 = vunpack.c.l.b16 %v2229
      %v3280 = vunpack.c.l.b16 %v2232
      %v3281 = vunpack.c.l.b16 %v2236
      %v3282 = vunpack.c.l.b16 %v2239
      %v3283 = vunpack.c.l.b16 %v2243
      %v3284 = vunpack.c.l.b16 %v2246
      %v3285 = vunpack.c.l.b16 %v2250
      %v3286 = vunpack.c.l.b16 %v2253
      %v3287 = vunpack.c.l.b16 %v2257
      %v3288 = vunpack.c.l.b16 %v2260
      %v3289 = vunpack.c.l.b16 %v2264
      %v3290 = vunpack.c.l.b16 %v2267
      %v3291 = vunpack.c.l.b16 %v2271
      %v3292 = vunpack.c.l.b16 %v2274
      %v3293 = vunpack.c.l.b16 %v2278
      %v3294 = vunpack.c.l.b16 %v2281
      %v3295 = vunpack.c.l.b16 %v2285
      %v3296 = vunpack.c.l.b16 %v2288
      %v3297 = vunpack.c.l.b16 %v2292
      %v3298 = vunpack.c.l.b16 %v2295
      %v3299 = vunpack.c.l.b16 %v2299
      %v3300 = vunpack.c.l.b16 %v2302
      %v3301 = vunpack.c.l.b16 %v2306
      %v3302 = vunpack.c.l.b16 %v2309
      %v3303 = vpack.c.b16 %v3272, %v3271
      %v3304 = vpack.c.b16 %v3274, %v3273
      %v3305 = vpack.c.b16 %v3276, %v3275
      %v3306 = vpack.c.b16 %v3278, %v3277
      %v3307 = vpack.c.b16 %v3280, %v3279
      %v3308 = vpack.c.b16 %v3282, %v3281
      %v3309 = vpack.c.b16 %v3284, %v3283
      %v3310 = vpack.c.b16 %v3286, %v3285
      %v3311 = vpack.c.b16 %v3288, %v3287
      %v3312 = vpack.c.b16 %v3290, %v3289
      %v3313 = vpack.c.b16 %v3292, %v3291
      %v3314 = vpack.c.b16 %v3294, %v3293
      %v3315 = vpack.c.b16 %v3296, %v3295
      %v3316 = vpack.c.b16 %v3298, %v3297
      %v3317 = vpack.c.b16 %v3300, %v3299
      %v3318 = vpack.c.b16 %v3302, %v3301
      %v3351 = vunpack.c.l.b16 %v2311
      %v3352 = vunpack.c.l.b16 %v2312
      %v3353 = vunpack.c.l.b16 %v2313
      %v3354 = vunpack.c.l.b16 %v2314
      %v3355 = vunpack.c.l.b16 %v2315
      %v3356 = vunpack.c.l.b16 %v2316
      %v3357 = vunpack.c.l.b16 %v2317
      %v3358 = vunpack.c.l.b16 %v2318
      %v3359 = vunpack.c.l.b16 %v2319
      %v3360 = vunpack.c.l.b16 %v2320
      %v3361 = vunpack.c.l.b16 %v2321
      %v3362 = vunpack.c.l.b16 %v2322
      %v3363 = vunpack.c.l.b16 %v2323
      %v3364 = vunpack.c.l.b16 %v2324
      %v3365 = vunpack.c.l.b16 %v2325
      %v3366 = vunpack.c.l.b16 %v2326
      %v3367 = vunpack.c.l.b16 %v2327
      %v3368 = vunpack.c.l.b16 %v2328
      %v3369 = vunpack.c.l.b16 %v2329
      %v3370 = vunpack.c.l.b16 %v2330
      %v3371 = vunpack.c.l.b16 %v2331
      %v3372 = vunpack.c.l.b16 %v2332
      %v3373 = vunpack.c.l.b16 %v2333
      %v3374 = vunpack.c.l.b16 %v2334
      %v3375 = vunpack.c.l.b16 %v2335
      %v3376 = vunpack.c.l.b16 %v2336
      %v3377 = vunpack.c.l.b16 %v2337
      %v3378 = vunpack.c.l.b16 %v2338
      %v3379 = vunpack.c.l.b16 %v2339
      %v3380 = vunpack.c.l.b16 %v2340
      %v3381 = vunpack.c.l.b16 %v2341
      %v3382 = vunpack.c.l.b16 %v2342
      %v3383 = vpack.c.b16 %v3352, %v3351
      %v3384 = vpack.c.b16 %v3354, %v3353
      %v3385 = vpack.c.b16 %v3356, %v3355
      %v3386 = vpack.c.b16 %v3358, %v3357
      %v3387 = vpack.c.b16 %v3360, %v3359
      %v3388 = vpack.c.b16 %v3362, %v3361
      %v3389 = vpack.c.b16 %v3364, %v3363
      %v3390 = vpack.c.b16 %v3366, %v3365
      %v3391 = vpack.c.b16 %v3368, %v3367
      %v3392 = vpack.c.b16 %v3370, %v3369
      %v3393 = vpack.c.b16 %v3372, %v3371
      %v3394 = vpack.c.b16 %v3374, %v3373
      %v3395 = vpack.c.b16 %v3376, %v3375
      %v3396 = vpack.c.b16 %v3378, %v3377
      %v3397 = vpack.c.b16 %v3380, %v3379
      %v3398 = vpack.c.b16 %v3382, %v3381
      %v3415 = vunpack.c.l.b16 %v2372
      %v3416 = vunpack.c.l.b16 %v2382
      %v3417 = vunpack.c.l.b16 %v2396
      %v3418 = vunpack.c.l.b16 %v2406
      %v3419 = vunpack.c.l.b16 %v2420
      %v3420 = vunpack.c.l.b16 %v2430
      %v3421 = vunpack.c.l.b16 %v2444
      %v3422 = vunpack.c.l.b16 %v2454
      %v3423 = vunpack.c.l.b16 %v2468
      %v3424 = vunpack.c.l.b16 %v2478
      %v3425 = vunpack.c.l.b16 %v2492
      %v3426 = vunpack.c.l.b16 %v2502
      %v3427 = vunpack.c.l.b16 %v2516
      %v3428 = vunpack.c.l.b16 %v2526
      %v3429 = vunpack.c.l.b16 %v2540
      %v3430 = vunpack.c.l.b16 %v2550
      %v3431 = vunpack.c.l.b16 %v2564
      %v3432 = vunpack.c.l.b16 %v2574
      %v3433 = vunpack.c.l.b16 %v2588
      %v3434 = vunpack.c.l.b16 %v2598
      %v3435 = vunpack.c.l.b16 %v2612
      %v3436 = vunpack.c.l.b16 %v2622
      %v3437 = vunpack.c.l.b16 %v2636
      %v3438 = vunpack.c.l.b16 %v2646
      %v3439 = vunpack.c.l.b16 %v2660
      %v3440 = vunpack.c.l.b16 %v2670
      %v3441 = vunpack.c.l.b16 %v2684
      %v3442 = vunpack.c.l.b16 %v2694
      %v3443 = vunpack.c.l.b16 %v2708
      %v3444 = vunpack.c.l.b16 %v2718
      %v3445 = vunpack.c.l.b16 %v2732
      %v3446 = vunpack.c.l.b16 %v2742
      %v3447 = vpack.c.b16 %v3416, %v3415
      %v3448 = vpack.c.b16 %v3418, %v3417
      %v3449 = vpack.c.b16 %v3420, %v3419
      %v3450 = vpack.c.b16 %v3422, %v3421
      %v3451 = vpack.c.b16 %v3424, %v3423
      %v3452 = vpack.c.b16 %v3426, %v3425
      %v3453 = vpack.c.b16 %v3428, %v3427
      %v3454 = vpack.c.b16 %v3430, %v3429
      %v3455 = vpack.c.b16 %v3432, %v3431
      %v3456 = vpack.c.b16 %v3434, %v3433
      %v3457 = vpack.c.b16 %v3436, %v3435
      %v3458 = vpack.c.b16 %v3438, %v3437
      %v3459 = vpack.c.b16 %v3440, %v3439
      %v3460 = vpack.c.b16 %v3442, %v3441
      %v3461 = vpack.c.b16 %v3444, %v3443
      %v3462 = vpack.c.b16 %v3446, %v3445
      %v3479 = vunpack.c.l.b16 %v2810
      %v3480 = vunpack.c.l.b16 %v2813
      %v3481 = vunpack.c.l.b16 %v2817
      %v3482 = vunpack.c.l.b16 %v2820
      %v3483 = vunpack.c.l.b16 %v2824
      %v3484 = vunpack.c.l.b16 %v2827
      %v3485 = vunpack.c.l.b16 %v2831
      %v3486 = vunpack.c.l.b16 %v2834
      %v3487 = vunpack.c.l.b16 %v2838
      %v3488 = vunpack.c.l.b16 %v2841
      %v3489 = vunpack.c.l.b16 %v2845
      %v3490 = vunpack.c.l.b16 %v2848
      %v3491 = vunpack.c.l.b16 %v2852
      %v3492 = vunpack.c.l.b16 %v2855
      %v3493 = vunpack.c.l.b16 %v2859
      %v3494 = vunpack.c.l.b16 %v2862
      %v3495 = vunpack.c.l.b16 %v2866
      %v3496 = vunpack.c.l.b16 %v2869
      %v3497 = vunpack.c.l.b16 %v2873
      %v3498 = vunpack.c.l.b16 %v2876
      %v3499 = vunpack.c.l.b16 %v2880
      %v3500 = vunpack.c.l.b16 %v2883
      %v3501 = vunpack.c.l.b16 %v2887
      %v3502 = vunpack.c.l.b16 %v2890
      %v3503 = vunpack.c.l.b16 %v2894
      %v3504 = vunpack.c.l.b16 %v2897
      %v3505 = vunpack.c.l.b16 %v2901
      %v3506 = vunpack.c.l.b16 %v2904
      %v3507 = vunpack.c.l.b16 %v2908
      %v3508 = vunpack.c.l.b16 %v2911
      %v3509 = vunpack.c.l.b16 %v2915
      %v3510 = vunpack.c.l.b16 %v2918
      %v3511 = vpack.c.b16 %v3480, %v3479
      %v3512 = vpack.c.b16 %v3482, %v3481
      %v3513 = vpack.c.b16 %v3484, %v3483
      %v3514 = vpack.c.b16 %v3486, %v3485
      %v3515 = vpack.c.b16 %v3488, %v3487
      %v3516 = vpack.c.b16 %v3490, %v3489
      %v3517 = vpack.c.b16 %v3492, %v3491
      %v3518 = vpack.c.b16 %v3494, %v3493
      %v3519 = vpack.c.b16 %v3496, %v3495
      %v3520 = vpack.c.b16 %v3498, %v3497
      %v3521 = vpack.c.b16 %v3500, %v3499
      %v3522 = vpack.c.b16 %v3502, %v3501
      %v3523 = vpack.c.b16 %v3504, %v3503
      %v3524 = vpack.c.b16 %v3506, %v3505
      %v3525 = vpack.c.b16 %v3508, %v3507
      %v3526 = vpack.c.b16 %v3510, %v3509
      %v3543 = vld [vmem:[%s301] sm:$0xf]
      %v3544 = vld [vmem:[%s301 + $0x4] sm:$0xf]
      %v3545 = vld [vmem:[%s301 + $0x8] sm:$0xf]
      %v3546 = vld [vmem:[%s301 + $0xc] sm:$0xf]
      %v3547 = vld [vmem:[%s301 + $0x10] sm:$0xf]
      %v3548 = vld [vmem:[%s301 + $0x14] sm:$0xf]
      %v3549 = vld [vmem:[%s301 + $0x18] sm:$0xf]
      %v3550 = vld [vmem:[%s301 + $0x1c] sm:$0xf]
      %v3551 = vld [vmem:[%s301 + $0x20] sm:$0xf]
      %v3552 = vld [vmem:[%s301 + $0x24] sm:$0xf]
      %v3553 = vld [vmem:[%s301 + $0x28] sm:$0xf]
      %v3554 = vld [vmem:[%s301 + $0x2c] sm:$0xf]
      %v3555 = vld [vmem:[%s301 + $0x30] sm:$0xf]
      %v3556 = vld [vmem:[%s301 + $0x34] sm:$0xf]
      %v3557 = vld [vmem:[%s301 + $0x38] sm:$0xf]
      %v3558 = vld [vmem:[%s301 + $0x3c] sm:$0xf]
      %v3559 = vld [vmem:[%s301 + $0x40] sm:$0xf]
      %v3560 = vld [vmem:[%s301 + $0x44] sm:$0xf]
      %v3561 = vld [vmem:[%s301 + $0x48] sm:$0xf]
      %v3562 = vld [vmem:[%s301 + $0x4c] sm:$0xf]
      %v3563 = vld [vmem:[%s301 + $0x50] sm:$0xf]
      %v3564 = vld [vmem:[%s301 + $0x54] sm:$0xf]
      %v3565 = vld [vmem:[%s301 + $0x58] sm:$0xf]
      %v3566 = vld [vmem:[%s301 + $0x5c] sm:$0xf]
      %v3567 = vld [vmem:[%s301 + $0x60] sm:$0xf]
      %v3568 = vld [vmem:[%s301 + $0x64] sm:$0xf]
      %v3569 = vld [vmem:[%s301 + $0x68] sm:$0xf]
      %v3570 = vld [vmem:[%s301 + $0x6c] sm:$0xf]
      %v3571 = vld [vmem:[%s301 + $0x70] sm:$0xf]
      %v3572 = vld [vmem:[%s301 + $0x74] sm:$0xf]
      %v3573 = vld [vmem:[%s301 + $0x78] sm:$0xf]
      %v3574 = vld [vmem:[%s301 + $0x7c] sm:$0xf]
      %v3575 = vld [vmem:[%s301 + $0x80] sm:$0xf]
      %v3576 = vld [vmem:[%s301 + $0x84] sm:$0xf]
      %v3577 = vld [vmem:[%s301 + $0x88] sm:$0xf]
      %v3578 = vld [vmem:[%s301 + $0x8c] sm:$0xf]
      %v3579 = vld [vmem:[%s301 + $0x90] sm:$0xf]
      %v3580 = vld [vmem:[%s301 + $0x94] sm:$0xf]
      %v3581 = vld [vmem:[%s301 + $0x98] sm:$0xf]
      %v3582 = vld [vmem:[%s301 + $0x9c] sm:$0xf]
      %v3583 = vld [vmem:[%s301 + $0xa0] sm:$0xf]
      %v3584 = vld [vmem:[%s301 + $0xa4] sm:$0xf]
      %v3585 = vld [vmem:[%s301 + $0xa8] sm:$0xf]
      %v3586 = vld [vmem:[%s301 + $0xac] sm:$0xf]
      %v3587 = vld [vmem:[%s301 + $0xb0] sm:$0xf]
      %v3588 = vld [vmem:[%s301 + $0xb4] sm:$0xf]
      %v3589 = vld [vmem:[%s301 + $0xb8] sm:$0xf]
      %v3590 = vld [vmem:[%s301 + $0xbc] sm:$0xf]
      %v3591 = vld [vmem:[%s301 + $0xc0] sm:$0xf]
      %v3592 = vld [vmem:[%s301 + $0xc4] sm:$0xf]
      %v3593 = vld [vmem:[%s301 + $0xc8] sm:$0xf]
      %v3594 = vld [vmem:[%s301 + $0xcc] sm:$0xf]
      %v3595 = vld [vmem:[%s301 + $0xd0] sm:$0xf]
      %v3596 = vld [vmem:[%s301 + $0xd4] sm:$0xf]
      %v3597 = vld [vmem:[%s301 + $0xd8] sm:$0xf]
      %v3598 = vld [vmem:[%s301 + $0xdc] sm:$0xf]
      %v3599 = vld [vmem:[%s301 + $0xe0] sm:$0xf]
      %v3600 = vld [vmem:[%s301 + $0xe4] sm:$0xf]
      %v3601 = vld [vmem:[%s301 + $0xe8] sm:$0xf]
      %v3602 = vld [vmem:[%s301 + $0xec] sm:$0xf]
      %v3603 = vld [vmem:[%s301 + $0xf0] sm:$0xf]
      %v3604 = vld [vmem:[%s301 + $0xf4] sm:$0xf]
      %v3605 = vld [vmem:[%s301 + $0xf8] sm:$0xf]
      %v3606 = vld [vmem:[%s301 + $0xfc] sm:$0xf]
      %v3607 = vld [vmem:[%s301 + $0x100] sm:$0xf]
      %v3608 = vld [vmem:[%s301 + $0x104] sm:$0xf]
      %v3609 = vld [vmem:[%s301 + $0x108] sm:$0xf]
      %v3610 = vld [vmem:[%s301 + $0x10c] sm:$0xf]
      %v3611 = vld [vmem:[%s301 + $0x110] sm:$0xf]
      %v3612 = vld [vmem:[%s301 + $0x114] sm:$0xf]
      %v3613 = vld [vmem:[%s301 + $0x118] sm:$0xf]
      %v3614 = vld [vmem:[%s301 + $0x11c] sm:$0xf]
      %v3615 = vld [vmem:[%s301 + $0x120] sm:$0xf]
      %v3616 = vld [vmem:[%s301 + $0x124] sm:$0xf]
      %v3617 = vld [vmem:[%s301 + $0x128] sm:$0xf]
      %v3618 = vld [vmem:[%s301 + $0x12c] sm:$0xf]
      %v3619 = vld [vmem:[%s301 + $0x130] sm:$0xf]
      %v3620 = vld [vmem:[%s301 + $0x134] sm:$0xf]
      %v3621 = vld [vmem:[%s301 + $0x138] sm:$0xf]
      %v3622 = vld [vmem:[%s301 + $0x13c] sm:$0xf]
      %v3623 = vld [vmem:[%s301 + $0x140] sm:$0xf]
      %v3624 = vld [vmem:[%s301 + $0x144] sm:$0xf]
      %v3625 = vld [vmem:[%s301 + $0x148] sm:$0xf]
      %v3626 = vld [vmem:[%s301 + $0x14c] sm:$0xf]
      %v3627 = vld [vmem:[%s301 + $0x150] sm:$0xf]
      %v3628 = vld [vmem:[%s301 + $0x154] sm:$0xf]
      %v3629 = vld [vmem:[%s301 + $0x158] sm:$0xf]
      %v3630 = vld [vmem:[%s301 + $0x15c] sm:$0xf]
      %v3631 = vld [vmem:[%s301 + $0x160] sm:$0xf]
      %v3632 = vld [vmem:[%s301 + $0x164] sm:$0xf]
      %v3633 = vld [vmem:[%s301 + $0x168] sm:$0xf]
      %v3634 = vld [vmem:[%s301 + $0x16c] sm:$0xf]
      %v3635 = vld [vmem:[%s301 + $0x170] sm:$0xf]
      %v3636 = vld [vmem:[%s301 + $0x174] sm:$0xf]
      %v3637 = vld [vmem:[%s301 + $0x178] sm:$0xf]
      %v3638 = vld [vmem:[%s301 + $0x17c] sm:$0xf]
      %v3639 = vld [vmem:[%s301 + $0x180] sm:$0xf]
      %v3640 = vld [vmem:[%s301 + $0x184] sm:$0xf]
      %v3641 = vld [vmem:[%s301 + $0x188] sm:$0xf]
      %v3642 = vld [vmem:[%s301 + $0x18c] sm:$0xf]
      %v3643 = vld [vmem:[%s301 + $0x190] sm:$0xf]
      %v3644 = vld [vmem:[%s301 + $0x194] sm:$0xf]
      %v3645 = vld [vmem:[%s301 + $0x198] sm:$0xf]
      %v3646 = vld [vmem:[%s301 + $0x19c] sm:$0xf]
      %v3647 = vld [vmem:[%s301 + $0x1a0] sm:$0xf]
      %v3648 = vld [vmem:[%s301 + $0x1a4] sm:$0xf]
      %v3649 = vld [vmem:[%s301 + $0x1a8] sm:$0xf]
      %v3650 = vld [vmem:[%s301 + $0x1ac] sm:$0xf]
      %v3651 = vld [vmem:[%s301 + $0x1b0] sm:$0xf]
      %v3652 = vld [vmem:[%s301 + $0x1b4] sm:$0xf]
      %v3653 = vld [vmem:[%s301 + $0x1b8] sm:$0xf]
      %v3654 = vld [vmem:[%s301 + $0x1bc] sm:$0xf]
      %v3655 = vld [vmem:[%s301 + $0x1c0] sm:$0xf]
      %v3656 = vld [vmem:[%s301 + $0x1c4] sm:$0xf]
      %v3657 = vld [vmem:[%s301 + $0x1c8] sm:$0xf]
      %v3658 = vld [vmem:[%s301 + $0x1cc] sm:$0xf]
      %v3659 = vld [vmem:[%s301 + $0x1d0] sm:$0xf]
      %v3660 = vld [vmem:[%s301 + $0x1d4] sm:$0xf]
      %v3661 = vld [vmem:[%s301 + $0x1d8] sm:$0xf]
      %v3662 = vld [vmem:[%s301 + $0x1dc] sm:$0xf]
      %v3663 = vld [vmem:[%s301 + $0x1e0] sm:$0xf]
      %v3664 = vld [vmem:[%s301 + $0x1e4] sm:$0xf]
      %v3665 = vld [vmem:[%s301 + $0x1e8] sm:$0xf]
      %v3666 = vld [vmem:[%s301 + $0x1ec] sm:$0xf]
      %v3667 = vld [vmem:[%s301 + $0x1f0] sm:$0xf]
      %v3668 = vld [vmem:[%s301 + $0x1f4] sm:$0xf]
      %v3669 = vld [vmem:[%s301 + $0x1f8] sm:$0xf]
      %v3670 = vld [vmem:[%s301 + $0x1fc] sm:$0xf]
      %v3671 = vld [vmem:[%s301 + $0x200] sm:$0xf]
      %v3672 = vld [vmem:[%s301 + $0x204] sm:$0xf]
      %v3673 = vld [vmem:[%s301 + $0x208] sm:$0xf]
      %v3674 = vld [vmem:[%s301 + $0x20c] sm:$0xf]
      %v3675 = vld [vmem:[%s301 + $0x210] sm:$0xf]
      %v3676 = vld [vmem:[%s301 + $0x214] sm:$0xf]
      %v3677 = vld [vmem:[%s301 + $0x218] sm:$0xf]
      %v3678 = vld [vmem:[%s301 + $0x21c] sm:$0xf]
      %v3679 = vld [vmem:[%s301 + $0x220] sm:$0xf]
      %v3680 = vld [vmem:[%s301 + $0x224] sm:$0xf]
      %v3681 = vld [vmem:[%s301 + $0x228] sm:$0xf]
      %v3682 = vld [vmem:[%s301 + $0x22c] sm:$0xf]
      %v3683 = vld [vmem:[%s301 + $0x230] sm:$0xf]
      %v3684 = vld [vmem:[%s301 + $0x234] sm:$0xf]
      %v3685 = vld [vmem:[%s301 + $0x238] sm:$0xf]
      %v3686 = vld [vmem:[%s301 + $0x23c] sm:$0xf]
      %v3831 = vunpack.c.l.b16 %v3543
      %v3832 = vunpack.c.l.b16 %v3544
      %v3833 = vunpack.c.l.b16 %v3545
      %v3834 = vunpack.c.l.b16 %v3546
      %v3835 = vunpack.c.l.b16 %v3547
      %v3836 = vunpack.c.l.b16 %v3548
      %v3837 = vunpack.c.l.b16 %v3549
      %v3838 = vunpack.c.l.b16 %v3550
      %v3839 = vunpack.c.l.b16 %v3551
      %v3840 = vunpack.c.l.b16 %v3552
      %v3841 = vunpack.c.l.b16 %v3553
      %v3842 = vunpack.c.l.b16 %v3554
      %v3843 = vunpack.c.l.b16 %v3555
      %v3844 = vunpack.c.l.b16 %v3556
      %v3845 = vunpack.c.l.b16 %v3557
      %v3846 = vunpack.c.l.b16 %v3558
      %v3847 = vunpack.c.l.b16 %v3559
      %v3848 = vunpack.c.l.b16 %v3560
      %v3849 = vunpack.c.l.b16 %v3561
      %v3850 = vunpack.c.l.b16 %v3562
      %v3851 = vunpack.c.l.b16 %v3563
      %v3852 = vunpack.c.l.b16 %v3564
      %v3853 = vunpack.c.l.b16 %v3565
      %v3854 = vunpack.c.l.b16 %v3566
      %v3855 = vunpack.c.l.b16 %v3567
      %v3856 = vunpack.c.l.b16 %v3568
      %v3857 = vunpack.c.l.b16 %v3569
      %v3858 = vunpack.c.l.b16 %v3570
      %v3859 = vunpack.c.l.b16 %v3571
      %v3860 = vunpack.c.l.b16 %v3572
      %v3861 = vunpack.c.l.b16 %v3573
      %v3862 = vunpack.c.l.b16 %v3574
      %v3863 = vunpack.c.l.b16 %v3575
      %v3864 = vunpack.c.l.b16 %v3576
      %v3865 = vunpack.c.l.b16 %v3577
      %v3866 = vunpack.c.l.b16 %v3578
      %v3867 = vunpack.c.l.b16 %v3579
      %v3868 = vunpack.c.l.b16 %v3580
      %v3869 = vunpack.c.l.b16 %v3581
      %v3870 = vunpack.c.l.b16 %v3582
      %v3871 = vunpack.c.l.b16 %v3583
      %v3872 = vunpack.c.l.b16 %v3584
      %v3873 = vunpack.c.l.b16 %v3585
      %v3874 = vunpack.c.l.b16 %v3586
      %v3875 = vunpack.c.l.b16 %v3587
      %v3876 = vunpack.c.l.b16 %v3588
      %v3877 = vunpack.c.l.b16 %v3589
      %v3878 = vunpack.c.l.b16 %v3590
      %v3879 = vunpack.c.l.b16 %v3591
      %v3880 = vunpack.c.l.b16 %v3592
      %v3881 = vunpack.c.l.b16 %v3593
      %v3882 = vunpack.c.l.b16 %v3594
      %v3883 = vunpack.c.l.b16 %v3595
      %v3884 = vunpack.c.l.b16 %v3596
      %v3885 = vunpack.c.l.b16 %v3597
      %v3886 = vunpack.c.l.b16 %v3598
      %v3887 = vunpack.c.l.b16 %v3599
      %v3888 = vunpack.c.l.b16 %v3600
      %v3889 = vunpack.c.l.b16 %v3601
      %v3890 = vunpack.c.l.b16 %v3602
      %v3891 = vunpack.c.l.b16 %v3603
      %v3892 = vunpack.c.l.b16 %v3604
      %v3893 = vunpack.c.l.b16 %v3605
      %v3894 = vunpack.c.l.b16 %v3606
      %v3895 = vunpack.c.l.b16 %v3607
      %v3896 = vunpack.c.l.b16 %v3608
      %v3897 = vunpack.c.l.b16 %v3609
      %v3898 = vunpack.c.l.b16 %v3610
      %v3899 = vunpack.c.l.b16 %v3611
      %v3900 = vunpack.c.l.b16 %v3612
      %v3901 = vunpack.c.l.b16 %v3613
      %v3902 = vunpack.c.l.b16 %v3614
      %v3903 = vunpack.c.l.b16 %v3615
      %v3904 = vunpack.c.l.b16 %v3616
      %v3905 = vunpack.c.l.b16 %v3617
      %v3906 = vunpack.c.l.b16 %v3618
      %v3907 = vunpack.c.l.b16 %v3619
      %v3908 = vunpack.c.l.b16 %v3620
      %v3909 = vunpack.c.l.b16 %v3621
      %v3910 = vunpack.c.l.b16 %v3622
      %v3911 = vunpack.c.l.b16 %v3623
      %v3912 = vunpack.c.l.b16 %v3624
      %v3913 = vunpack.c.l.b16 %v3625
      %v3914 = vunpack.c.l.b16 %v3626
      %v3915 = vunpack.c.l.b16 %v3627
      %v3916 = vunpack.c.l.b16 %v3628
      %v3917 = vunpack.c.l.b16 %v3629
      %v3918 = vunpack.c.l.b16 %v3630
      %v3919 = vunpack.c.l.b16 %v3631
      %v3920 = vunpack.c.l.b16 %v3632
      %v3921 = vunpack.c.l.b16 %v3633
      %v3922 = vunpack.c.l.b16 %v3634
      %v3923 = vunpack.c.l.b16 %v3635
      %v3924 = vunpack.c.l.b16 %v3636
      %v3925 = vunpack.c.l.b16 %v3637
      %v3926 = vunpack.c.l.b16 %v3638
      %v3927 = vunpack.c.l.b16 %v3639
      %v3928 = vunpack.c.l.b16 %v3640
      %v3929 = vunpack.c.l.b16 %v3641
      %v3930 = vunpack.c.l.b16 %v3642
      %v3931 = vunpack.c.l.b16 %v3643
      %v3932 = vunpack.c.l.b16 %v3644
      %v3933 = vunpack.c.l.b16 %v3645
      %v3934 = vunpack.c.l.b16 %v3646
      %v3935 = vunpack.c.l.b16 %v3647
      %v3936 = vunpack.c.l.b16 %v3648
      %v3937 = vunpack.c.l.b16 %v3649
      %v3938 = vunpack.c.l.b16 %v3650
      %v3939 = vunpack.c.l.b16 %v3651
      %v3940 = vunpack.c.l.b16 %v3652
      %v3941 = vunpack.c.l.b16 %v3653
      %v3942 = vunpack.c.l.b16 %v3654
      %v3943 = vunpack.c.l.b16 %v3655
      %v3944 = vunpack.c.l.b16 %v3656
      %v3945 = vunpack.c.l.b16 %v3657
      %v3946 = vunpack.c.l.b16 %v3658
      %v3947 = vunpack.c.l.b16 %v3659
      %v3948 = vunpack.c.l.b16 %v3660
      %v3949 = vunpack.c.l.b16 %v3661
      %v3950 = vunpack.c.l.b16 %v3662
      %v3951 = vunpack.c.l.b16 %v3663
      %v3952 = vunpack.c.l.b16 %v3664
      %v3953 = vunpack.c.l.b16 %v3665
      %v3954 = vunpack.c.l.b16 %v3666
      %v3955 = vunpack.c.l.b16 %v3667
      %v3956 = vunpack.c.l.b16 %v3668
      %v3957 = vunpack.c.l.b16 %v3669
      %v3958 = vunpack.c.l.b16 %v3670
      %v3959 = vunpack.c.l.b16 %v3671
      %v3960 = vunpack.c.l.b16 %v3672
      %v3961 = vunpack.c.l.b16 %v3673
      %v3962 = vunpack.c.l.b16 %v3674
      %v3963 = vunpack.c.l.b16 %v3675
      %v3964 = vunpack.c.l.b16 %v3676
      %v3965 = vunpack.c.l.b16 %v3677
      %v3966 = vunpack.c.l.b16 %v3678
      %v3967 = vunpack.c.l.b16 %v3679
      %v3968 = vunpack.c.l.b16 %v3680
      %v3969 = vunpack.c.l.b16 %v3681
      %v3970 = vunpack.c.l.b16 %v3682
      %v3971 = vunpack.c.l.b16 %v3683
      %v3972 = vunpack.c.l.b16 %v3684
      %v3973 = vunpack.c.l.b16 %v3685
      %v3974 = vunpack.c.l.b16 %v3686
      %v3975 = vpack.c.b16 %v3832, %v3831
      %v3976 = vpack.c.b16 %v3834, %v3833
      %v3977 = vpack.c.b16 %v3836, %v3835
      %v3978 = vpack.c.b16 %v3838, %v3837
      %v3979 = vpack.c.b16 %v3840, %v3839
      %v3980 = vpack.c.b16 %v3842, %v3841
      %v3981 = vpack.c.b16 %v3844, %v3843
      %v3982 = vpack.c.b16 %v3846, %v3845
      %v3983 = vpack.c.b16 %v3848, %v3847
      %v3984 = vpack.c.b16 %v3850, %v3849
      %v3985 = vpack.c.b16 %v3852, %v3851
      %v3986 = vpack.c.b16 %v3854, %v3853
      %v3987 = vpack.c.b16 %v3856, %v3855
      %v3988 = vpack.c.b16 %v3858, %v3857
      %v3989 = vpack.c.b16 %v3860, %v3859
      %v3990 = vpack.c.b16 %v3862, %v3861
      %v3991 = vpack.c.b16 %v3864, %v3863
      %v3992 = vpack.c.b16 %v3866, %v3865
      %v3993 = vpack.c.b16 %v3868, %v3867
      %v3994 = vpack.c.b16 %v3870, %v3869
      %v3995 = vpack.c.b16 %v3872, %v3871
      %v3996 = vpack.c.b16 %v3874, %v3873
      %v3997 = vpack.c.b16 %v3876, %v3875
      %v3998 = vpack.c.b16 %v3878, %v3877
      %v3999 = vpack.c.b16 %v3880, %v3879
      %v4000 = vpack.c.b16 %v3882, %v3881
      %v4001 = vpack.c.b16 %v3884, %v3883
      %v4002 = vpack.c.b16 %v3886, %v3885
      %v4003 = vpack.c.b16 %v3888, %v3887
      %v4004 = vpack.c.b16 %v3890, %v3889
      %v4005 = vpack.c.b16 %v3892, %v3891
      %v4006 = vpack.c.b16 %v3894, %v3893
      %v4007 = vpack.c.b16 %v3896, %v3895
      %v4008 = vpack.c.b16 %v3898, %v3897
      %v4009 = vpack.c.b16 %v3900, %v3899
      %v4010 = vpack.c.b16 %v3902, %v3901
      %v4011 = vpack.c.b16 %v3904, %v3903
      %v4012 = vpack.c.b16 %v3906, %v3905
      %v4013 = vpack.c.b16 %v3908, %v3907
      %v4014 = vpack.c.b16 %v3910, %v3909
      %v4015 = vpack.c.b16 %v3912, %v3911
      %v4016 = vpack.c.b16 %v3914, %v3913
      %v4017 = vpack.c.b16 %v3916, %v3915
      %v4018 = vpack.c.b16 %v3918, %v3917
      %v4019 = vpack.c.b16 %v3920, %v3919
      %v4020 = vpack.c.b16 %v3922, %v3921
      %v4021 = vpack.c.b16 %v3924, %v3923
      %v4022 = vpack.c.b16 %v3926, %v3925
      %v4023 = vpack.c.b16 %v3928, %v3927
      %v4024 = vpack.c.b16 %v3930, %v3929
      %v4025 = vpack.c.b16 %v3932, %v3931
      %v4026 = vpack.c.b16 %v3934, %v3933
      %v4027 = vpack.c.b16 %v3936, %v3935
      %v4028 = vpack.c.b16 %v3938, %v3937
      %v4029 = vpack.c.b16 %v3940, %v3939
      %v4030 = vpack.c.b16 %v3942, %v3941
      %v4031 = vpack.c.b16 %v3944, %v3943
      %v4032 = vpack.c.b16 %v3946, %v3945
      %v4033 = vpack.c.b16 %v3948, %v3947
      %v4034 = vpack.c.b16 %v3950, %v3949
      %v4035 = vpack.c.b16 %v3952, %v3951
      %v4036 = vpack.c.b16 %v3954, %v3953
      %v4037 = vpack.c.b16 %v3956, %v3955
      %v4038 = vpack.c.b16 %v3958, %v3957
      %v4039 = vpack.c.b16 %v3960, %v3959
      %v4040 = vpack.c.b16 %v3962, %v3961
      %v4041 = vpack.c.b16 %v3964, %v3963
      %v4042 = vpack.c.b16 %v3966, %v3965
      %v4043 = vpack.c.b16 %v3968, %v3967
      %v4044 = vpack.c.b16 %v3970, %v3969
      %v4045 = vpack.c.b16 %v3972, %v3971
      %v4046 = vpack.c.b16 %v3974, %v3973
      %4119 = vmatprep.subr.bf16.mxu0 0
      %4120 = vmatpush1.bf16.msra.mxu0 %v3975
      %4121 = vmatprep.subr.bf16.mxu0 0
      %4122 = vmatpush1.bf16.msra.mxu0 %v3976
      %4123 = vmatprep.subr.bf16.mxu0 0
      %4124 = vmatpush1.bf16.msra.mxu0 %v3977
      %4125 = vmatprep.subr.bf16.mxu0 0
      %4126 = vmatpush1.bf16.msra.mxu0 %v3978
      %4127 = vmatprep.subr.bf16.mxu0 0
      %4128 = vmatpush1.bf16.msra.mxu0 %v3979
      %4129 = vmatprep.subr.bf16.mxu0 0
      %4130 = vmatpush1.bf16.msra.mxu0 %v3980
      %4131 = vmatprep.subr.bf16.mxu0 0
      %4132 = vmatpush1.bf16.msra.mxu0 %v3981
      %4133 = vmatprep.subr.bf16.mxu0 0
      %4134 = vmatpush1.bf16.msra.mxu0 %v3982
      %4135 = vmatprep.subr.bf16.mxu0 0
      %4136 = vmatpush1.bf16.msra.mxu0 %v3983
      %4137 = vmatprep.subr.bf16.mxu0 0
      %4138 = vmatpush1.bf16.msra.mxu0 %v3984
      %4139 = vmatprep.subr.bf16.mxu0 0
      %4140 = vmatpush1.bf16.msra.mxu0 %v3985
      %4141 = vmatprep.subr.bf16.mxu0 0
      %4142 = vmatpush1.bf16.msra.mxu0 %v3986
      %4143 = vmatprep.subr.bf16.mxu0 0
      %4144 = vmatpush1.bf16.msra.mxu0 %v3987
      %4145 = vmatprep.subr.bf16.mxu0 0
      %4146 = vmatpush1.bf16.msra.mxu0 %v3988
      %4147 = vmatprep.subr.bf16.mxu0 0
      %4148 = vmatpush1.bf16.msra.mxu0 %v3989
      %4149 = vmatprep.subr.bf16.mxu0 0
      %4150 = vmatpush1.bf16.msra.mxu0 %v3990
      %4151 = vmatprep.mubr.bf16.mxu0 %v3031
      %4152 = vmatmul.mubr.bf16.gmra.mrb[0].mxu0 %v2967
      %v4153 = vpop.f32.mrb[0].mxu0
      %v4154 = vadd.f32 0.0, %v4153
      %v4155 = vpop.f32.mrb[0].mxu0
      %v4156 = vpop.f32.mrb[0].mxu0
      %v4157 = vadd.f32 0.0, %v4156
      %v4158 = vpop.f32.mrb[0].mxu0
      %4159 = vmatprep.mubr.bf16.mxu0 %v3032
      %4160 = vmatmul.mubr.bf16.gmra.mrb[0].mxu0 %v2968
      %v4161 = vpop.f32.mrb[0].mxu0
      %v4162 = vadd.f32 0.0, %v4161
      %v4163 = vpop.f32.mrb[0].mxu0
      %v4164 = vpop.f32.mrb[0].mxu0
      %v4165 = vadd.f32 0.0, %v4164
      %v4166 = vpop.f32.mrb[0].mxu0
      %4167 = vmatprep.mubr.bf16.mxu0 %v3033
      %4168 = vmatmul.mubr.bf16.gmra.mrb[0].mxu0 %v2969
      %v4169 = vpop.f32.mrb[0].mxu0
      %v4170 = vadd.f32 0.0, %v4169
      %v4171 = vpop.f32.mrb[0].mxu0
      %v4172 = vpop.f32.mrb[0].mxu0
      %v4173 = vadd.f32 0.0, %v4172
      %v4174 = vpop.f32.mrb[0].mxu0
      %4175 = vmatprep.mubr.bf16.mxu0 %v3034
      %4176 = vmatmul.mubr.bf16.gmra.mrb[0].mxu0 %v2970
      %v4177 = vpop.f32.mrb[0].mxu0
      %v4178 = vadd.f32 0.0, %v4177
      %v4179 = vpop.f32.mrb[0].mxu0
      %v4180 = vpop.f32.mrb[0].mxu0
      %v4181 = vadd.f32 0.0, %v4180
      %v4182 = vpop.f32.mrb[0].mxu0
      %4183 = vmatprep.mubr.bf16.mxu0 %v3035
      %4184 = vmatmul.mubr.bf16.gmra.mrb[0].mxu0 %v2971
      %v4185 = vpop.f32.mrb[0].mxu0
      %v4186 = vadd.f32 0.0, %v4185
      %v4187 = vpop.f32.mrb[0].mxu0
      %v4188 = vpop.f32.mrb[0].mxu0
      %v4189 = vadd.f32 0.0, %v4188
      %v4190 = vpop.f32.mrb[0].mxu0
      %4191 = vmatprep.mubr.bf16.mxu0 %v3036
      %4192 = vmatmul.mubr.bf16.gmra.mrb[0].mxu0 %v2972
      %v4193 = vpop.f32.mrb[0].mxu0
      %v4194 = vadd.f32 0.0, %v4193
      %v4195 = vpop.f32.mrb[0].mxu0
      %v4196 = vpop.f32.mrb[0].mxu0
      %v4197 = vadd.f32 0.0, %v4196
      %v4198 = vpop.f32.mrb[0].mxu0
      %4199 = vmatprep.mubr.bf16.mxu0 %v3037
      %4200 = vmatmul.mubr.bf16.gmra.mrb[0].mxu0 %v2973
      %v4201 = vpop.f32.mrb[0].mxu0
      %v4202 = vadd.f32 0.0, %v4201
      %v4203 = vpop.f32.mrb[0].mxu0
      %v4204 = vpop.f32.mrb[0].mxu0
      %v4205 = vadd.f32 0.0, %v4204
      %v4206 = vpop.f32.mrb[0].mxu0
      %4207 = vmatprep.mubr.bf16.mxu0 %v3038
      %4208 = vmatmul.mubr.bf16.gmra.mrb[0].mxu0 %v2974
      %v4209 = vpop.f32.mrb[0].mxu0
      %v4210 = vadd.f32 0.0, %v4209
      %v4211 = vpop.f32.mrb[0].mxu0
      %v4212 = vpop.f32.mrb[0].mxu0
      %v4213 = vadd.f32 0.0, %v4212
      %v4214 = vpop.f32.mrb[0].mxu0
      %4215 = vmatprep.mubr.bf16.mxu0 %v3039
      %4216 = vmatmul.mubr.bf16.gmra.mrb[0].mxu0 %v2975
      %v4217 = vpop.f32.mrb[0].mxu0
      %v4218 = vadd.f32 0.0, %v4217
      %v4219 = vpop.f32.mrb[0].mxu0
      %v4220 = vpop.f32.mrb[0].mxu0
      %v4221 = vadd.f32 0.0, %v4220
      %v4222 = vpop.f32.mrb[0].mxu0
      %4223 = vmatprep.mubr.bf16.mxu0 %v3040
      %4224 = vmatmul.mubr.bf16.gmra.mrb[0].mxu0 %v2976
      %v4225 = vpop.f32.mrb[0].mxu0
      %v4226 = vadd.f32 0.0, %v4225
      %v4227 = vpop.f32.mrb[0].mxu0
      %v4228 = vpop.f32.mrb[0].mxu0
      %v4229 = vadd.f32 0.0, %v4228
      %v4230 = vpop.f32.mrb[0].mxu0
      %4231 = vmatprep.mubr.bf16.mxu0 %v3041
      %4232 = vmatmul.mubr.bf16.gmra.mrb[0].mxu0 %v2977
      %v4233 = vpop.f32.mrb[0].mxu0
      %v4234 = vadd.f32 0.0, %v4233
      %v4235 = vpop.f32.mrb[0].mxu0
      %v4236 = vpop.f32.mrb[0].mxu0
      %v4237 = vadd.f32 0.0, %v4236
      %v4238 = vpop.f32.mrb[0].mxu0
      %4239 = vmatprep.mubr.bf16.mxu0 %v3042
      %4240 = vmatmul.mubr.bf16.gmra.mrb[0].mxu0 %v2978
      %v4241 = vpop.f32.mrb[0].mxu0
      %v4242 = vadd.f32 0.0, %v4241
      %v4243 = vpop.f32.mrb[0].mxu0
      %v4244 = vpop.f32.mrb[0].mxu0
      %v4245 = vadd.f32 0.0, %v4244
      %v4246 = vpop.f32.mrb[0].mxu0
      %4247 = vmatprep.mubr.bf16.mxu0 %v3043
      %4248 = vmatmul.mubr.bf16.gmra.mrb[0].mxu0 %v2979
      %v4249 = vpop.f32.mrb[0].mxu0
      %v4250 = vadd.f32 0.0, %v4249
      %v4251 = vpop.f32.mrb[0].mxu0
      %v4252 = vpop.f32.mrb[0].mxu0
      %v4253 = vadd.f32 0.0, %v4252
      %v4254 = vpop.f32.mrb[0].mxu0
      %4255 = vmatprep.mubr.bf16.mxu0 %v3044
      %4256 = vmatmul.mubr.bf16.gmra.mrb[0].mxu0 %v2980
      %v4257 = vpop.f32.mrb[0].mxu0
      %v4258 = vadd.f32 0.0, %v4257
      %v4259 = vpop.f32.mrb[0].mxu0
      %v4260 = vpop.f32.mrb[0].mxu0
      %v4261 = vadd.f32 0.0, %v4260
      %v4262 = vpop.f32.mrb[0].mxu0
      %4263 = vmatprep.mubr.bf16.mxu0 %v3045
      %4264 = vmatmul.mubr.bf16.gmra.mrb[0].mxu0 %v2981
      %v4265 = vpop.f32.mrb[0].mxu0
      %v4266 = vadd.f32 0.0, %v4265
      %v4267 = vpop.f32.mrb[0].mxu0
      %v4268 = vpop.f32.mrb[0].mxu0
      %v4269 = vadd.f32 0.0, %v4268
      %v4270 = vpop.f32.mrb[0].mxu0
      %4271 = vmatprep.mubr.bf16.mxu0 %v3046
      %4272 = vmatmul.mubr.bf16.gmra.mrb[0].mxu0 %v2982
      %v4273 = vpop.f32.mrb[0].mxu0
      %v4274 = vadd.f32 0.0, %v4273
      %v4275 = vpop.f32.mrb[0].mxu0
      %v4276 = vpop.f32.mrb[0].mxu0
      %v4277 = vadd.f32 0.0, %v4276
      %v4278 = vpop.f32.mrb[0].mxu0
      %4279 = vdwg.mxu0
      %4280 = vmatprep.subr.bf16.mxu0 0
      %4281 = vmatpush1.bf16.msra.mxu0 %v3991
      %4282 = vmatprep.subr.bf16.mxu0 0
      %4283 = vmatpush1.bf16.msra.mxu0 %v3992
      %4284 = vmatprep.subr.bf16.mxu0 0
      %4285 = vmatpush1.bf16.msra.mxu0 %v3993
      %4286 = vmatprep.subr.bf16.mxu0 0
      %4287 = vmatpush1.bf16.msra.mxu0 %v3994
      %4288 = vmatprep.subr.bf16.mxu0 0
      %4289 = vmatpush1.bf16.msra.mxu0 %v3995
      %4290 = vmatprep.subr.bf16.mxu0 0
      %4291 = vmatpush1.bf16.msra.mxu0 %v3996
      %4292 = vmatprep.subr.bf16.mxu0 0
      %4293 = vmatpush1.bf16.msra.mxu0 %v3997
      %4294 = vmatprep.subr.bf16.mxu0 0
      %4295 = vmatpush1.bf16.msra.mxu0 %v3998
      %4296 = vmatprep.subr.bf16.mxu0 0
      %4297 = vmatpush1.bf16.msra.mxu0 %v3999
      %4298 = vmatprep.subr.bf16.mxu0 0
      %4299 = vmatpush1.bf16.msra.mxu0 %v4000
      %4300 = vmatprep.subr.bf16.mxu0 0
      %4301 = vmatpush1.bf16.msra.mxu0 %v4001
      %4302 = vmatprep.subr.bf16.mxu0 0
      %4303 = vmatpush1.bf16.msra.mxu0 %v4002
      %4304 = vmatprep.subr.bf16.mxu0 0
      %4305 = vmatpush1.bf16.msra.mxu0 %v4003
      %4306 = vmatprep.subr.bf16.mxu0 0
      %4307 = vmatpush1.bf16.msra.mxu0 %v4004
      %4308 = vmatprep.subr.bf16.mxu0 0
      %4309 = vmatpush1.bf16.msra.mxu0 %v4005
      %4310 = vmatprep.subr.bf16.mxu0 0
      %4311 = vmatpush1.bf16.msra.mxu0 %v4006
      %4312 = vmatprep.mubr.bf16.mxu0 %v3175
      %4313 = vmatmul.mubr.bf16.gmra.mrb[0].mxu0 %v3095
      %v4314 = vpop.f32.mrb[0].mxu0
      %v4315 = vadd.f32 %v4154, %v4314
      %v4316 = vpop.f32.mrb[0].mxu0
      %v4317 = vpop.f32.mrb[0].mxu0
      %v4318 = vadd.f32 %v4157, %v4317
      %v4319 = vpop.f32.mrb[0].mxu0
      %4320 = vmatprep.mubr.bf16.mxu0 %v3176
      %4321 = vmatmul.mubr.bf16.gmra.mrb[0].mxu0 %v3096
      %v4322 = vpop.f32.mrb[0].mxu0
      %v4323 = vadd.f32 %v4162, %v4322
      %v4324 = vpop.f32.mrb[0].mxu0
      %v4325 = vpop.f32.mrb[0].mxu0
      %v4326 = vadd.f32 %v4165, %v4325
      %v4327 = vpop.f32.mrb[0].mxu0
      %4328 = vmatprep.mubr.bf16.mxu0 %v3177
      %4329 = vmatmul.mubr.bf16.gmra.mrb[0].mxu0 %v3097
      %v4330 = vpop.f32.mrb[0].mxu0
      %v4331 = vadd.f32 %v4170, %v4330
      %v4332 = vpop.f32.mrb[0].mxu0
      %v4333 = vpop.f32.mrb[0].mxu0
      %v4334 = vadd.f32 %v4173, %v4333
      %v4335 = vpop.f32.mrb[0].mxu0
      %4336 = vmatprep.mubr.bf16.mxu0 %v3178
      %4337 = vmatmul.mubr.bf16.gmra.mrb[0].mxu0 %v3098
      %v4338 = vpop.f32.mrb[0].mxu0
      %v4339 = vadd.f32 %v4178, %v4338
      %v4340 = vpop.f32.mrb[0].mxu0
      %v4341 = vpop.f32.mrb[0].mxu0
      %v4342 = vadd.f32 %v4181, %v4341
      %v4343 = vpop.f32.mrb[0].mxu0
      %4344 = vmatprep.mubr.bf16.mxu0 %v3179
      %4345 = vmatmul.mubr.bf16.gmra.mrb[0].mxu0 %v3099
      %v4346 = vpop.f32.mrb[0].mxu0
      %v4347 = vadd.f32 %v4186, %v4346
      %v4348 = vpop.f32.mrb[0].mxu0
      %v4349 = vpop.f32.mrb[0].mxu0
      %v4350 = vadd.f32 %v4189, %v4349
      %v4351 = vpop.f32.mrb[0].mxu0
      %4352 = vmatprep.mubr.bf16.mxu0 %v3180
      %4353 = vmatmul.mubr.bf16.gmra.mrb[0].mxu0 %v3100
      %v4354 = vpop.f32.mrb[0].mxu0
      %v4355 = vadd.f32 %v4194, %v4354
      %v4356 = vpop.f32.mrb[0].mxu0
      %v4357 = vpop.f32.mrb[0].mxu0
      %v4358 = vadd.f32 %v4197, %v4357
      %v4359 = vpop.f32.mrb[0].mxu0
      %4360 = vmatprep.mubr.bf16.mxu0 %v3181
      %4361 = vmatmul.mubr.bf16.gmra.mrb[0].mxu0 %v3101
      %v4362 = vpop.f32.mrb[0].mxu0
      %v4363 = vadd.f32 %v4202, %v4362
      %v4364 = vpop.f32.mrb[0].mxu0
      %v4365 = vpop.f32.mrb[0].mxu0
      %v4366 = vadd.f32 %v4205, %v4365
      %v4367 = vpop.f32.mrb[0].mxu0
      %4368 = vmatprep.mubr.bf16.mxu0 %v3182
      %4369 = vmatmul.mubr.bf16.gmra.mrb[0].mxu0 %v3102
      %v4370 = vpop.f32.mrb[0].mxu0
      %v4371 = vadd.f32 %v4210, %v4370
      %v4372 = vpop.f32.mrb[0].mxu0
      %v4373 = vpop.f32.mrb[0].mxu0
      %v4374 = vadd.f32 %v4213, %v4373
      %v4375 = vpop.f32.mrb[0].mxu0
      %4376 = vmatprep.mubr.bf16.mxu0 %v3183
      %4377 = vmatmul.mubr.bf16.gmra.mrb[0].mxu0 %v3103
      %v4378 = vpop.f32.mrb[0].mxu0
      %v4379 = vadd.f32 %v4218, %v4378
      %v4380 = vpop.f32.mrb[0].mxu0
      %v4381 = vpop.f32.mrb[0].mxu0
      %v4382 = vadd.f32 %v4221, %v4381
      %v4383 = vpop.f32.mrb[0].mxu0
      %4384 = vmatprep.mubr.bf16.mxu0 %v3184
      %4385 = vmatmul.mubr.bf16.gmra.mrb[0].mxu0 %v3104
      %v4386 = vpop.f32.mrb[0].mxu0
      %v4387 = vadd.f32 %v4226, %v4386
      %v4388 = vpop.f32.mrb[0].mxu0
      %v4389 = vpop.f32.mrb[0].mxu0
      %v4390 = vadd.f32 %v4229, %v4389
      %v4391 = vpop.f32.mrb[0].mxu0
      %4392 = vmatprep.mubr.bf16.mxu0 %v3185
      %4393 = vmatmul.mubr.bf16.gmra.mrb[0].mxu0 %v3105
      %v4394 = vpop.f32.mrb[0].mxu0
      %v4395 = vadd.f32 %v4234, %v4394
      %v4396 = vpop.f32.mrb[0].mxu0
      %v4397 = vpop.f32.mrb[0].mxu0
      %v4398 = vadd.f32 %v4237, %v4397
      %v4399 = vpop.f32.mrb[0].mxu0
      %4400 = vmatprep.mubr.bf16.mxu0 %v3186
      %4401 = vmatmul.mubr.bf16.gmra.mrb[0].mxu0 %v3106
      %v4402 = vpop.f32.mrb[0].mxu0
      %v4403 = vadd.f32 %v4242, %v4402
      %v4404 = vpop.f32.mrb[0].mxu0
      %v4405 = vpop.f32.mrb[0].mxu0
      %v4406 = vadd.f32 %v4245, %v4405
      %v4407 = vpop.f32.mrb[0].mxu0
      %4408 = vmatprep.mubr.bf16.mxu0 %v3187
      %4409 = vmatmul.mubr.bf16.gmra.mrb[0].mxu0 %v3107
      %v4410 = vpop.f32.mrb[0].mxu0
      %v4411 = vadd.f32 %v4250, %v4410
      %v4412 = vpop.f32.mrb[0].mxu0
      %v4413 = vpop.f32.mrb[0].mxu0
      %v4414 = vadd.f32 %v4253, %v4413
      %v4415 = vpop.f32.mrb[0].mxu0
      %4416 = vmatprep.mubr.bf16.mxu0 %v3188
      %4417 = vmatmul.mubr.bf16.gmra.mrb[0].mxu0 %v3108
      %v4418 = vpop.f32.mrb[0].mxu0
      %v4419 = vadd.f32 %v4258, %v4418
      %v4420 = vpop.f32.mrb[0].mxu0
      %v4421 = vpop.f32.mrb[0].mxu0
      %v4422 = vadd.f32 %v4261, %v4421
      %v4423 = vpop.f32.mrb[0].mxu0
      %4424 = vmatprep.mubr.bf16.mxu0 %v3189
      %4425 = vmatmul.mubr.bf16.gmra.mrb[0].mxu0 %v3109
      %v4426 = vpop.f32.mrb[0].mxu0
      %v4427 = vadd.f32 %v4266, %v4426
      %v4428 = vpop.f32.mrb[0].mxu0
      %v4429 = vpop.f32.mrb[0].mxu0
      %v4430 = vadd.f32 %v4269, %v4429
      %v4431 = vpop.f32.mrb[0].mxu0
      %4432 = vmatprep.mubr.bf16.mxu0 %v3190
      %4433 = vmatmul.mubr.bf16.gmra.mrb[0].mxu0 %v3110
      %v4434 = vpop.f32.mrb[0].mxu0
      %v4435 = vadd.f32 %v4274, %v4434
      %v4436 = vpop.f32.mrb[0].mxu0
      %v4437 = vpop.f32.mrb[0].mxu0
      %v4438 = vadd.f32 %v4277, %v4437
      %v4439 = vpop.f32.mrb[0].mxu0
      %4440 = vdwg.mxu0
      %4441 = vmatprep.subr.bf16.mxu0 0
      %4442 = vmatpush1.bf16.msra.mxu0 %v4007
      %4443 = vmatprep.subr.bf16.mxu0 0
      %4444 = vmatpush1.bf16.msra.mxu0 %v4008
      %4445 = vmatprep.subr.bf16.mxu0 0
      %4446 = vmatpush1.bf16.msra.mxu0 %v4009
      %4447 = vmatprep.subr.bf16.mxu0 0
      %4448 = vmatpush1.bf16.msra.mxu0 %v4010
      %4449 = vmatprep.subr.bf16.mxu0 0
      %4450 = vmatpush1.bf16.msra.mxu0 %v4011
      %4451 = vmatprep.subr.bf16.mxu0 0
      %4452 = vmatpush1.bf16.msra.mxu0 %v4012
      %4453 = vmatprep.subr.bf16.mxu0 0
      %4454 = vmatpush1.bf16.msra.mxu0 %v4013
      %4455 = vmatprep.subr.bf16.mxu0 0
      %4456 = vmatpush1.bf16.msra.mxu0 %v4014
      %4457 = vmatprep.subr.bf16.mxu0 0
      %4458 = vmatpush1.bf16.msra.mxu0 %v4015
      %4459 = vmatprep.subr.bf16.mxu0 0
      %4460 = vmatpush1.bf16.msra.mxu0 %v4016
      %4461 = vmatprep.subr.bf16.mxu0 0
      %4462 = vmatpush1.bf16.msra.mxu0 %v4017
      %4463 = vmatprep.subr.bf16.mxu0 0
      %4464 = vmatpush1.bf16.msra.mxu0 %v4018
      %4465 = vmatprep.subr.bf16.mxu0 0
      %4466 = vmatpush1.bf16.msra.mxu0 %v4019
      %4467 = vmatprep.subr.bf16.mxu0 0
      %4468 = vmatpush1.bf16.msra.mxu0 %v4020
      %4469 = vmatprep.subr.bf16.mxu0 0
      %4470 = vmatpush1.bf16.msra.mxu0 %v4021
      %4471 = vmatprep.subr.bf16.mxu0 0
      %4472 = vmatpush1.bf16.msra.mxu0 %v4022
      %4473 = vmatprep.mubr.bf16.mxu0 %v3303
      %4474 = vmatmul.mubr.bf16.gmra.mrb[0].mxu0 %v3239
      %v4475 = vpop.f32.mrb[0].mxu0
      %v4476 = vadd.f32 %v4315, %v4475
      %v4477 = vpop.f32.mrb[0].mxu0
      %v4478 = vpop.f32.mrb[0].mxu0
      %v4479 = vadd.f32 %v4318, %v4478
      %v4480 = vpop.f32.mrb[0].mxu0
      %4481 = vmatprep.mubr.bf16.mxu0 %v3304
      %4482 = vmatmul.mubr.bf16.gmra.mrb[0].mxu0 %v3240
      %v4483 = vpop.f32.mrb[0].mxu0
      %v4484 = vadd.f32 %v4323, %v4483
      %v4485 = vpop.f32.mrb[0].mxu0
      %v4486 = vpop.f32.mrb[0].mxu0
      %v4487 = vadd.f32 %v4326, %v4486
      %v4488 = vpop.f32.mrb[0].mxu0
      %4489 = vmatprep.mubr.bf16.mxu0 %v3305
      %4490 = vmatmul.mubr.bf16.gmra.mrb[0].mxu0 %v3241
      %v4491 = vpop.f32.mrb[0].mxu0
      %v4492 = vadd.f32 %v4331, %v4491
      %v4493 = vpop.f32.mrb[0].mxu0
      %v4494 = vpop.f32.mrb[0].mxu0
      %v4495 = vadd.f32 %v4334, %v4494
      %v4496 = vpop.f32.mrb[0].mxu0
      %4497 = vmatprep.mubr.bf16.mxu0 %v3306
      %4498 = vmatmul.mubr.bf16.gmra.mrb[0].mxu0 %v3242
      %v4499 = vpop.f32.mrb[0].mxu0
      %v4500 = vadd.f32 %v4339, %v4499
      %v4501 = vpop.f32.mrb[0].mxu0
      %v4502 = vpop.f32.mrb[0].mxu0
      %v4503 = vadd.f32 %v4342, %v4502
      %v4504 = vpop.f32.mrb[0].mxu0
      %4505 = vmatprep.mubr.bf16.mxu0 %v3307
      %4506 = vmatmul.mubr.bf16.gmra.mrb[0].mxu0 %v3243
      %v4507 = vpop.f32.mrb[0].mxu0
      %v4508 = vadd.f32 %v4347, %v4507
      %v4509 = vpop.f32.mrb[0].mxu0
      %v4510 = vpop.f32.mrb[0].mxu0
      %v4511 = vadd.f32 %v4350, %v4510
      %v4512 = vpop.f32.mrb[0].mxu0
      %4513 = vmatprep.mubr.bf16.mxu0 %v3308
      %4514 = vmatmul.mubr.bf16.gmra.mrb[0].mxu0 %v3244
      %v4515 = vpop.f32.mrb[0].mxu0
      %v4516 = vadd.f32 %v4355, %v4515
      %v4517 = vpop.f32.mrb[0].mxu0
      %v4518 = vpop.f32.mrb[0].mxu0
      %v4519 = vadd.f32 %v4358, %v4518
      %v4520 = vpop.f32.mrb[0].mxu0
      %4521 = vmatprep.mubr.bf16.mxu0 %v3309
      %4522 = vmatmul.mubr.bf16.gmra.mrb[0].mxu0 %v3245
      %v4523 = vpop.f32.mrb[0].mxu0
      %v4524 = vadd.f32 %v4363, %v4523
      %v4525 = vpop.f32.mrb[0].mxu0
      %v4526 = vpop.f32.mrb[0].mxu0
      %v4527 = vadd.f32 %v4366, %v4526
      %v4528 = vpop.f32.mrb[0].mxu0
      %4529 = vmatprep.mubr.bf16.mxu0 %v3310
      %4530 = vmatmul.mubr.bf16.gmra.mrb[0].mxu0 %v3246
      %v4531 = vpop.f32.mrb[0].mxu0
      %v4532 = vadd.f32 %v4371, %v4531
      %v4533 = vpop.f32.mrb[0].mxu0
      %v4534 = vpop.f32.mrb[0].mxu0
      %v4535 = vadd.f32 %v4374, %v4534
      %v4536 = vpop.f32.mrb[0].mxu0
      %4537 = vmatprep.mubr.bf16.mxu0 %v3311
      %4538 = vmatmul.mubr.bf16.gmra.mrb[0].mxu0 %v3247
      %v4539 = vpop.f32.mrb[0].mxu0
      %v4540 = vadd.f32 %v4379, %v4539
      %v4541 = vpop.f32.mrb[0].mxu0
      %v4542 = vpop.f32.mrb[0].mxu0
      %v4543 = vadd.f32 %v4382, %v4542
      %v4544 = vpop.f32.mrb[0].mxu0
      %4545 = vmatprep.mubr.bf16.mxu0 %v3312
      %4546 = vmatmul.mubr.bf16.gmra.mrb[0].mxu0 %v3248
      %v4547 = vpop.f32.mrb[0].mxu0
      %v4548 = vadd.f32 %v4387, %v4547
      %v4549 = vpop.f32.mrb[0].mxu0
      %v4550 = vpop.f32.mrb[0].mxu0
      %v4551 = vadd.f32 %v4390, %v4550
      %v4552 = vpop.f32.mrb[0].mxu0
      %4553 = vmatprep.mubr.bf16.mxu0 %v3313
      %4554 = vmatmul.mubr.bf16.gmra.mrb[0].mxu0 %v3249
      %v4555 = vpop.f32.mrb[0].mxu0
      %v4556 = vadd.f32 %v4395, %v4555
      %v4557 = vpop.f32.mrb[0].mxu0
      %v4558 = vpop.f32.mrb[0].mxu0
      %v4559 = vadd.f32 %v4398, %v4558
      %v4560 = vpop.f32.mrb[0].mxu0
      %4561 = vmatprep.mubr.bf16.mxu0 %v3314
      %4562 = vmatmul.mubr.bf16.gmra.mrb[0].mxu0 %v3250
      %v4563 = vpop.f32.mrb[0].mxu0
      %v4564 = vadd.f32 %v4403, %v4563
      %v4565 = vpop.f32.mrb[0].mxu0
      %v4566 = vpop.f32.mrb[0].mxu0
      %v4567 = vadd.f32 %v4406, %v4566
      %v4568 = vpop.f32.mrb[0].mxu0
      %4569 = vmatprep.mubr.bf16.mxu0 %v3315
      %4570 = vmatmul.mubr.bf16.gmra.mrb[0].mxu0 %v3251
      %v4571 = vpop.f32.mrb[0].mxu0
      %v4572 = vadd.f32 %v4411, %v4571
      %v4573 = vpop.f32.mrb[0].mxu0
      %v4574 = vpop.f32.mrb[0].mxu0
      %v4575 = vadd.f32 %v4414, %v4574
      %v4576 = vpop.f32.mrb[0].mxu0
      %4577 = vmatprep.mubr.bf16.mxu0 %v3316
      %4578 = vmatmul.mubr.bf16.gmra.mrb[0].mxu0 %v3252
      %v4579 = vpop.f32.mrb[0].mxu0
      %v4580 = vadd.f32 %v4419, %v4579
      %v4581 = vpop.f32.mrb[0].mxu0
      %v4582 = vpop.f32.mrb[0].mxu0
      %v4583 = vadd.f32 %v4422, %v4582
      %v4584 = vpop.f32.mrb[0].mxu0
      %4585 = vmatprep.mubr.bf16.mxu0 %v3317
      %4586 = vmatmul.mubr.bf16.gmra.mrb[0].mxu0 %v3253
      %v4587 = vpop.f32.mrb[0].mxu0
      %v4588 = vadd.f32 %v4427, %v4587
      %v4589 = vpop.f32.mrb[0].mxu0
      %v4590 = vpop.f32.mrb[0].mxu0
      %v4591 = vadd.f32 %v4430, %v4590
      %v4592 = vpop.f32.mrb[0].mxu0
      %4593 = vmatprep.mubr.bf16.mxu0 %v3318
      %4594 = vmatmul.mubr.bf16.gmra.mrb[0].mxu0 %v3254
      %v4595 = vpop.f32.mrb[0].mxu0
      %v4596 = vadd.f32 %v4435, %v4595
      %v4597 = vpop.f32.mrb[0].mxu0
      %v4598 = vpop.f32.mrb[0].mxu0
      %v4599 = vadd.f32 %v4438, %v4598
      %v4600 = vpop.f32.mrb[0].mxu0
      %4601 = vdwg.mxu0
      %4602 = vmatprep.subr.bf16.mxu0 0
      %4603 = vmatpush1.bf16.msra.mxu0 %v4023
      %4604 = vmatprep.subr.bf16.mxu0 0
      %4605 = vmatpush1.bf16.msra.mxu0 %v4024
      %4606 = vmatprep.subr.bf16.mxu0 0
      %4607 = vmatpush1.bf16.msra.mxu0 %v4025
      %4608 = vmatprep.subr.bf16.mxu0 0
      %4609 = vmatpush1.bf16.msra.mxu0 %v4026
      %4610 = vmatprep.subr.bf16.mxu0 0
      %4611 = vmatpush1.bf16.msra.mxu0 %v4027
      %4612 = vmatprep.subr.bf16.mxu0 0
      %4613 = vmatpush1.bf16.msra.mxu0 %v4028
      %4614 = vmatprep.subr.bf16.mxu0 0
      %4615 = vmatpush1.bf16.msra.mxu0 %v4029
      %4616 = vmatprep.subr.bf16.mxu0 0
      %4617 = vmatpush1.bf16.msra.mxu0 %v4030
      %4618 = vmatprep.subr.bf16.mxu0 0
      %4619 = vmatpush1.bf16.msra.mxu0 %v4031
      %4620 = vmatprep.subr.bf16.mxu0 0
      %4621 = vmatpush1.bf16.msra.mxu0 %v4032
      %4622 = vmatprep.subr.bf16.mxu0 0
      %4623 = vmatpush1.bf16.msra.mxu0 %v4033
      %4624 = vmatprep.subr.bf16.mxu0 0
      %4625 = vmatpush1.bf16.msra.mxu0 %v4034
      %4626 = vmatprep.subr.bf16.mxu0 0
      %4627 = vmatpush1.bf16.msra.mxu0 %v4035
      %4628 = vmatprep.subr.bf16.mxu0 0
      %4629 = vmatpush1.bf16.msra.mxu0 %v4036
      %4630 = vmatprep.subr.bf16.mxu0 0
      %4631 = vmatpush1.bf16.msra.mxu0 %v4037
      %4632 = vmatprep.subr.bf16.mxu0 0
      %4633 = vmatpush1.bf16.msra.mxu0 %v4038
      %4634 = vmatprep.mubr.bf16.mxu0 %v3447
      %4635 = vmatmul.mubr.bf16.gmra.mrb[0].mxu0 %v3383
      %v4636 = vpop.f32.mrb[0].mxu0
      %v4637 = vadd.f32 %v4476, %v4636
      %v4638 = vpop.f32.mrb[0].mxu0
      %v4639 = vpop.f32.mrb[0].mxu0
      %v4640 = vadd.f32 %v4479, %v4639
      %v4641 = vpop.f32.mrb[0].mxu0
      %4642 = vmatprep.mubr.bf16.mxu0 %v3448
      %4643 = vmatmul.mubr.bf16.gmra.mrb[0].mxu0 %v3384
      %v4644 = vpop.f32.mrb[0].mxu0
      %v4645 = vadd.f32 %v4484, %v4644
      %v4646 = vpop.f32.mrb[0].mxu0
      %v4647 = vpop.f32.mrb[0].mxu0
      %v4648 = vadd.f32 %v4487, %v4647
      %v4649 = vpop.f32.mrb[0].mxu0
      %4650 = vmatprep.mubr.bf16.mxu0 %v3449
      %4651 = vmatmul.mubr.bf16.gmra.mrb[0].mxu0 %v3385
      %v4652 = vpop.f32.mrb[0].mxu0
      %v4653 = vadd.f32 %v4492, %v4652
      %v4654 = vpop.f32.mrb[0].mxu0
      %v4655 = vpop.f32.mrb[0].mxu0
      %v4656 = vadd.f32 %v4495, %v4655
      %v4657 = vpop.f32.mrb[0].mxu0
      %4658 = vmatprep.mubr.bf16.mxu0 %v3450
      %4659 = vmatmul.mubr.bf16.gmra.mrb[0].mxu0 %v3386
      %v4660 = vpop.f32.mrb[0].mxu0
      %v4661 = vadd.f32 %v4500, %v4660
      %v4662 = vpop.f32.mrb[0].mxu0
      %v4663 = vpop.f32.mrb[0].mxu0
      %v4664 = vadd.f32 %v4503, %v4663
      %v4665 = vpop.f32.mrb[0].mxu0
      %4666 = vmatprep.mubr.bf16.mxu0 %v3451
      %4667 = vmatmul.mubr.bf16.gmra.mrb[0].mxu0 %v3387
      %v4668 = vpop.f32.mrb[0].mxu0
      %v4669 = vadd.f32 %v4508, %v4668
      %v4670 = vpop.f32.mrb[0].mxu0
      %v4671 = vpop.f32.mrb[0].mxu0
      %v4672 = vadd.f32 %v4511, %v4671
      %v4673 = vpop.f32.mrb[0].mxu0
      %4674 = vmatprep.mubr.bf16.mxu0 %v3452
      %4675 = vmatmul.mubr.bf16.gmra.mrb[0].mxu0 %v3388
      %v4676 = vpop.f32.mrb[0].mxu0
      %v4677 = vadd.f32 %v4516, %v4676
      %v4678 = vpop.f32.mrb[0].mxu0
      %v4679 = vpop.f32.mrb[0].mxu0
      %v4680 = vadd.f32 %v4519, %v4679
      %v4681 = vpop.f32.mrb[0].mxu0
      %4682 = vmatprep.mubr.bf16.mxu0 %v3453
      %4683 = vmatmul.mubr.bf16.gmra.mrb[0].mxu0 %v3389
      %v4684 = vpop.f32.mrb[0].mxu0
      %v4685 = vadd.f32 %v4524, %v4684
      %v4686 = vpop.f32.mrb[0].mxu0
      %v4687 = vpop.f32.mrb[0].mxu0
      %v4688 = vadd.f32 %v4527, %v4687
      %v4689 = vpop.f32.mrb[0].mxu0
      %4690 = vmatprep.mubr.bf16.mxu0 %v3454
      %4691 = vmatmul.mubr.bf16.gmra.mrb[0].mxu0 %v3390
      %v4692 = vpop.f32.mrb[0].mxu0
      %v4693 = vadd.f32 %v4532, %v4692
      %v4694 = vpop.f32.mrb[0].mxu0
      %v4695 = vpop.f32.mrb[0].mxu0
      %v4696 = vadd.f32 %v4535, %v4695
      %v4697 = vpop.f32.mrb[0].mxu0
      %4698 = vmatprep.mubr.bf16.mxu0 %v3455
      %4699 = vmatmul.mubr.bf16.gmra.mrb[0].mxu0 %v3391
      %v4700 = vpop.f32.mrb[0].mxu0
      %v4701 = vadd.f32 %v4540, %v4700
      %v4702 = vpop.f32.mrb[0].mxu0
      %v4703 = vpop.f32.mrb[0].mxu0
      %v4704 = vadd.f32 %v4543, %v4703
      %v4705 = vpop.f32.mrb[0].mxu0
      %4706 = vmatprep.mubr.bf16.mxu0 %v3456
      %4707 = vmatmul.mubr.bf16.gmra.mrb[0].mxu0 %v3392
      %v4708 = vpop.f32.mrb[0].mxu0
      %v4709 = vadd.f32 %v4548, %v4708
      %v4710 = vpop.f32.mrb[0].mxu0
      %v4711 = vpop.f32.mrb[0].mxu0
      %v4712 = vadd.f32 %v4551, %v4711
      %v4713 = vpop.f32.mrb[0].mxu0
      %4714 = vmatprep.mubr.bf16.mxu0 %v3457
      %4715 = vmatmul.mubr.bf16.gmra.mrb[0].mxu0 %v3393
      %v4716 = vpop.f32.mrb[0].mxu0
      %v4717 = vadd.f32 %v4556, %v4716
      %v4718 = vpop.f32.mrb[0].mxu0
      %v4719 = vpop.f32.mrb[0].mxu0
      %v4720 = vadd.f32 %v4559, %v4719
      %v4721 = vpop.f32.mrb[0].mxu0
      %4722 = vmatprep.mubr.bf16.mxu0 %v3458
      %4723 = vmatmul.mubr.bf16.gmra.mrb[0].mxu0 %v3394
      %v4724 = vpop.f32.mrb[0].mxu0
      %v4725 = vadd.f32 %v4564, %v4724
      %v4726 = vpop.f32.mrb[0].mxu0
      %v4727 = vpop.f32.mrb[0].mxu0
      %v4728 = vadd.f32 %v4567, %v4727
      %v4729 = vpop.f32.mrb[0].mxu0
      %4730 = vmatprep.mubr.bf16.mxu0 %v3459
      %4731 = vmatmul.mubr.bf16.gmra.mrb[0].mxu0 %v3395
      %v4732 = vpop.f32.mrb[0].mxu0
      %v4733 = vadd.f32 %v4572, %v4732
      %v4734 = vpop.f32.mrb[0].mxu0
      %v4735 = vpop.f32.mrb[0].mxu0
      %v4736 = vadd.f32 %v4575, %v4735
      %v4737 = vpop.f32.mrb[0].mxu0
      %4738 = vmatprep.mubr.bf16.mxu0 %v3460
      %4739 = vmatmul.mubr.bf16.gmra.mrb[0].mxu0 %v3396
      %v4740 = vpop.f32.mrb[0].mxu0
      %v4741 = vadd.f32 %v4580, %v4740
      %v4742 = vpop.f32.mrb[0].mxu0
      %v4743 = vpop.f32.mrb[0].mxu0
      %v4744 = vadd.f32 %v4583, %v4743
      %v4745 = vpop.f32.mrb[0].mxu0
      %4746 = vmatprep.mubr.bf16.mxu0 %v3461
      %4747 = vmatmul.mubr.bf16.gmra.mrb[0].mxu0 %v3397
      %v4748 = vpop.f32.mrb[0].mxu0
      %v4749 = vadd.f32 %v4588, %v4748
      %v4750 = vpop.f32.mrb[0].mxu0
      %v4751 = vpop.f32.mrb[0].mxu0
      %v4752 = vadd.f32 %v4591, %v4751
      %v4753 = vpop.f32.mrb[0].mxu0
      %4754 = vmatprep.mubr.bf16.mxu0 %v3462
      %4755 = vmatmul.mubr.bf16.gmra.mrb[0].mxu0 %v3398
      %v4756 = vpop.f32.mrb[0].mxu0
      %v4757 = vadd.f32 %v4596, %v4756
      %v4758 = vpop.f32.mrb[0].mxu0
      %v4759 = vpop.f32.mrb[0].mxu0
      %v4760 = vadd.f32 %v4599, %v4759
      %v4761 = vpop.f32.mrb[0].mxu0
      %4762 = vdwg.mxu0
      %4763 = vmatprep.subr.bf16.mxu0 0
      %4764 = vmatpush1.bf16.msra.mxu0 %v4039
      %4765 = vmatprep.subr.bf16.mxu0 0
      %4766 = vmatpush1.bf16.msra.mxu0 %v4040
      %4767 = vmatprep.subr.bf16.mxu0 0
      %4768 = vmatpush1.bf16.msra.mxu0 %v4041
      %4769 = vmatprep.subr.bf16.mxu0 0
      %4770 = vmatpush1.bf16.msra.mxu0 %v4042
      %4771 = vmatprep.subr.bf16.mxu0 0
      %4772 = vmatpush1.bf16.msra.mxu0 %v4043
      %4773 = vmatprep.subr.bf16.mxu0 0
      %4774 = vmatpush1.bf16.msra.mxu0 %v4044
      %4775 = vmatprep.subr.bf16.mxu0 0
      %4776 = vmatpush1.bf16.msra.mxu0 %v4045
      %4777 = vmatprep.subr.bf16.mxu0 0
      %4778 = vmatpush1.bf16.msra.mxu0 %v4046
      %4779 = vmatprep.subr.bf16.mxu0 0
      %4780 = vmatpush1.bf16.msra.mxu0 0
      %4781 = vmatprep.subr.bf16.mxu0 0
      %4782 = vmatpush1.bf16.msra.mxu0 0
      %4783 = vmatprep.subr.bf16.mxu0 0
      %4784 = vmatpush1.bf16.msra.mxu0 0
      %4785 = vmatprep.subr.bf16.mxu0 0
      %4786 = vmatpush1.bf16.msra.mxu0 0
      %4787 = vmatprep.subr.bf16.mxu0 0
      %4788 = vmatpush1.bf16.msra.mxu0 0
      %4789 = vmatprep.subr.bf16.mxu0 0
      %4790 = vmatpush1.bf16.msra.mxu0 0
      %4791 = vmatprep.subr.bf16.mxu0 0
      %4792 = vmatpush1.bf16.msra.mxu0 0
      %4793 = vmatprep.subr.bf16.mxu0 0
      %4794 = vmatpush1.bf16.msra.mxu0 0
      %4795 = vmatprep.mubr.bf16.mxu0 0
      %4796 = vmatmul.mubr.bf16.gmra.mrb[0].mxu0 %v3511
      %v4797 = vpop.f32.mrb[0].mxu0
      %v4798 = vadd.f32 %v4637, %v4797
      %v4799 = vpop.f32.mrb[0].mxu0
      %v4800 = vpop.f32.mrb[0].mxu0
      %v4801 = vadd.f32 %v4640, %v4800
      %v4802 = vpop.f32.mrb[0].mxu0
      %4803 = vmatprep.mubr.bf16.mxu0 0
      %4804 = vmatmul.mubr.bf16.gmra.mrb[0].mxu0 %v3512
      %v4805 = vpop.f32.mrb[0].mxu0
      %v4806 = vadd.f32 %v4645, %v4805
      %v4807 = vpop.f32.mrb[0].mxu0
      %v4808 = vpop.f32.mrb[0].mxu0
      %v4809 = vadd.f32 %v4648, %v4808
      %v4810 = vpop.f32.mrb[0].mxu0
      %4811 = vmatprep.mubr.bf16.mxu0 0
      %4812 = vmatmul.mubr.bf16.gmra.mrb[0].mxu0 %v3513
      %v4813 = vpop.f32.mrb[0].mxu0
      %v4814 = vadd.f32 %v4653, %v4813
      %v4815 = vpop.f32.mrb[0].mxu0
      %v4816 = vpop.f32.mrb[0].mxu0
      %v4817 = vadd.f32 %v4656, %v4816
      %v4818 = vpop.f32.mrb[0].mxu0
      %4819 = vmatprep.mubr.bf16.mxu0 0
      %4820 = vmatmul.mubr.bf16.gmra.mrb[0].mxu0 %v3514
      %v4821 = vpop.f32.mrb[0].mxu0
      %v4822 = vadd.f32 %v4661, %v4821
      %v4823 = vpop.f32.mrb[0].mxu0
      %v4824 = vpop.f32.mrb[0].mxu0
      %v4825 = vadd.f32 %v4664, %v4824
      %v4826 = vpop.f32.mrb[0].mxu0
      %4827 = vmatprep.mubr.bf16.mxu0 0
      %4828 = vmatmul.mubr.bf16.gmra.mrb[0].mxu0 %v3515
      %v4829 = vpop.f32.mrb[0].mxu0
      %v4830 = vadd.f32 %v4669, %v4829
      %v4831 = vpop.f32.mrb[0].mxu0
      %v4832 = vpop.f32.mrb[0].mxu0
      %v4833 = vadd.f32 %v4672, %v4832
      %v4834 = vpop.f32.mrb[0].mxu0
      %4835 = vmatprep.mubr.bf16.mxu0 0
      %4836 = vmatmul.mubr.bf16.gmra.mrb[0].mxu0 %v3516
      %v4837 = vpop.f32.mrb[0].mxu0
      %v4838 = vadd.f32 %v4677, %v4837
      %v4839 = vpop.f32.mrb[0].mxu0
      %v4840 = vpop.f32.mrb[0].mxu0
      %v4841 = vadd.f32 %v4680, %v4840
      %v4842 = vpop.f32.mrb[0].mxu0
      %4843 = vmatprep.mubr.bf16.mxu0 0
      %4844 = vmatmul.mubr.bf16.gmra.mrb[0].mxu0 %v3517
      %v4845 = vpop.f32.mrb[0].mxu0
      %v4846 = vadd.f32 %v4685, %v4845
      %v4847 = vpop.f32.mrb[0].mxu0
      %v4848 = vpop.f32.mrb[0].mxu0
      %v4849 = vadd.f32 %v4688, %v4848
      %v4850 = vpop.f32.mrb[0].mxu0
      %4851 = vmatprep.mubr.bf16.mxu0 0
      %4852 = vmatmul.mubr.bf16.gmra.mrb[0].mxu0 %v3518
      %v4853 = vpop.f32.mrb[0].mxu0
      %v4854 = vadd.f32 %v4693, %v4853
      %v4855 = vpop.f32.mrb[0].mxu0
      %v4856 = vpop.f32.mrb[0].mxu0
      %v4857 = vadd.f32 %v4696, %v4856
      %v4858 = vpop.f32.mrb[0].mxu0
      %4859 = vmatprep.mubr.bf16.mxu0 0
      %4860 = vmatmul.mubr.bf16.gmra.mrb[0].mxu0 %v3519
      %v4861 = vpop.f32.mrb[0].mxu0
      %v4862 = vadd.f32 %v4701, %v4861
      %v4863 = vpop.f32.mrb[0].mxu0
      %v4864 = vpop.f32.mrb[0].mxu0
      %v4865 = vadd.f32 %v4704, %v4864
      %v4866 = vpop.f32.mrb[0].mxu0
      %4867 = vmatprep.mubr.bf16.mxu0 0
      %4868 = vmatmul.mubr.bf16.gmra.mrb[0].mxu0 %v3520
      %v4869 = vpop.f32.mrb[0].mxu0
      %v4870 = vadd.f32 %v4709, %v4869
      %v4871 = vpop.f32.mrb[0].mxu0
      %v4872 = vpop.f32.mrb[0].mxu0
      %v4873 = vadd.f32 %v4712, %v4872
      %v4874 = vpop.f32.mrb[0].mxu0
      %4875 = vmatprep.mubr.bf16.mxu0 0
      %4876 = vmatmul.mubr.bf16.gmra.mrb[0].mxu0 %v3521
      %v4877 = vpop.f32.mrb[0].mxu0
      %v4878 = vadd.f32 %v4717, %v4877
      %v4879 = vpop.f32.mrb[0].mxu0
      %v4880 = vpop.f32.mrb[0].mxu0
      %v4881 = vadd.f32 %v4720, %v4880
      %v4882 = vpop.f32.mrb[0].mxu0
      %4883 = vmatprep.mubr.bf16.mxu0 0
      %4884 = vmatmul.mubr.bf16.gmra.mrb[0].mxu0 %v3522
      %v4885 = vpop.f32.mrb[0].mxu0
      %v4886 = vadd.f32 %v4725, %v4885
      %v4887 = vpop.f32.mrb[0].mxu0
      %v4888 = vpop.f32.mrb[0].mxu0
      %v4889 = vadd.f32 %v4728, %v4888
      %v4890 = vpop.f32.mrb[0].mxu0
      %4891 = vmatprep.mubr.bf16.mxu0 0
      %4892 = vmatmul.mubr.bf16.gmra.mrb[0].mxu0 %v3523
      %v4893 = vpop.f32.mrb[0].mxu0
      %v4894 = vadd.f32 %v4733, %v4893
      %v4895 = vpop.f32.mrb[0].mxu0
      %v4896 = vpop.f32.mrb[0].mxu0
      %v4897 = vadd.f32 %v4736, %v4896
      %v4898 = vpop.f32.mrb[0].mxu0
      %4899 = vmatprep.mubr.bf16.mxu0 0
      %4900 = vmatmul.mubr.bf16.gmra.mrb[0].mxu0 %v3524
      %v4901 = vpop.f32.mrb[0].mxu0
      %v4902 = vadd.f32 %v4741, %v4901
      %v4903 = vpop.f32.mrb[0].mxu0
      %v4904 = vpop.f32.mrb[0].mxu0
      %v4905 = vadd.f32 %v4744, %v4904
      %v4906 = vpop.f32.mrb[0].mxu0
      %4907 = vmatprep.mubr.bf16.mxu0 0
      %4908 = vmatmul.mubr.bf16.gmra.mrb[0].mxu0 %v3525
      %v4909 = vpop.f32.mrb[0].mxu0
      %v4910 = vadd.f32 %v4749, %v4909
      %v4911 = vpop.f32.mrb[0].mxu0
      %v4912 = vpop.f32.mrb[0].mxu0
      %v4913 = vadd.f32 %v4752, %v4912
      %v4914 = vpop.f32.mrb[0].mxu0
      %4915 = vmatprep.mubr.bf16.mxu0 0
      %4916 = vmatmul.mubr.bf16.gmra.mrb[0].mxu0 %v3526
      %v4917 = vpop.f32.mrb[0].mxu0
      %v4918 = vadd.f32 %v4757, %v4917
      %v4919 = vpop.f32.mrb[0].mxu0
      %v4920 = vpop.f32.mrb[0].mxu0
      %v4921 = vadd.f32 %v4760, %v4920
      %v4922 = vpop.f32.mrb[0].mxu0
      %4923 = vdwg.mxu0
      %v4924 = vpack.c.bf16 %v4801, %v4798
      %v4925 = vpack.c.bf16 %v4809, %v4806
      %v4926 = vpack.c.bf16 %v4817, %v4814
      %v4927 = vpack.c.bf16 %v4825, %v4822
      %v4928 = vpack.c.bf16 %v4833, %v4830
      %v4929 = vpack.c.bf16 %v4841, %v4838
      %v4930 = vpack.c.bf16 %v4849, %v4846
      %v4931 = vpack.c.bf16 %v4857, %v4854
      %v4932 = vpack.c.bf16 %v4865, %v4862
      %v4933 = vpack.c.bf16 %v4873, %v4870
      %v4934 = vpack.c.bf16 %v4881, %v4878
      %v4935 = vpack.c.bf16 %v4889, %v4886
      %v4936 = vpack.c.bf16 %v4897, %v4894
      %v4937 = vpack.c.bf16 %v4905, %v4902
      %v4938 = vpack.c.bf16 %v4913, %v4910
      %v4939 = vpack.c.bf16 %v4921, %v4918
      %v4956 = vunpack.c.l.b16 %v4924
      %v4957 = vunpack.c.h.b16 %v4924
      %v4958 = vunpack.c.l.b16 %v4925
      %v4959 = vunpack.c.h.b16 %v4925
      %v4960 = vunpack.c.l.b16 %v4926
      %v4961 = vunpack.c.h.b16 %v4926
      %v4962 = vunpack.c.l.b16 %v4927
      %v4963 = vunpack.c.h.b16 %v4927
      %v4964 = vunpack.c.l.b16 %v4928
      %v4965 = vunpack.c.h.b16 %v4928
      %v4966 = vunpack.c.l.b16 %v4929
      %v4967 = vunpack.c.h.b16 %v4929
      %v4968 = vunpack.c.l.b16 %v4930
      %v4969 = vunpack.c.h.b16 %v4930
      %v4970 = vunpack.c.l.b16 %v4931
      %v4971 = vunpack.c.h.b16 %v4931
      %v4972 = vunpack.c.l.b16 %v4932
      %v4973 = vunpack.c.h.b16 %v4932
      %v4974 = vunpack.c.l.b16 %v4933
      %v4975 = vunpack.c.h.b16 %v4933
      %v4976 = vunpack.c.l.b16 %v4934
      %v4977 = vunpack.c.h.b16 %v4934
      %v4978 = vunpack.c.l.b16 %v4935
      %v4979 = vunpack.c.h.b16 %v4935
      %v4980 = vunpack.c.l.b16 %v4936
      %v4981 = vunpack.c.h.b16 %v4936
      %v4982 = vunpack.c.l.b16 %v4937
      %v4983 = vunpack.c.h.b16 %v4937
      %v4984 = vunpack.c.l.b16 %v4938
      %v4985 = vunpack.c.h.b16 %v4938
      %v4986 = vunpack.c.l.b16 %v4939
      %v4987 = vunpack.c.h.b16 %v4939
      %v4988 = vpack.c.b16 %v4956, %v4956
      %v4989 = vpack.c.b16 %v4957, %v4957
      %v4990 = vpack.c.b16 %v4958, %v4958
      %v4991 = vpack.c.b16 %v4959, %v4959
      %v4992 = vpack.c.b16 %v4960, %v4960
      %v4993 = vpack.c.b16 %v4961, %v4961
      %v4994 = vpack.c.b16 %v4962, %v4962
      %v4995 = vpack.c.b16 %v4963, %v4963
      %v4996 = vpack.c.b16 %v4964, %v4964
      %v4997 = vpack.c.b16 %v4965, %v4965
      %v4998 = vpack.c.b16 %v4966, %v4966
      %v4999 = vpack.c.b16 %v4967, %v4967
      %v5000 = vpack.c.b16 %v4968, %v4968
      %v5001 = vpack.c.b16 %v4969, %v4969
      %v5002 = vpack.c.b16 %v4970, %v4970
      %v5003 = vpack.c.b16 %v4971, %v4971
      %v5004 = vpack.c.b16 %v4972, %v4972
      %v5005 = vpack.c.b16 %v4973, %v4973
      %v5006 = vpack.c.b16 %v4974, %v4974
      %v5007 = vpack.c.b16 %v4975, %v4975
      %v5008 = vpack.c.b16 %v4976, %v4976
      %v5009 = vpack.c.b16 %v4977, %v4977
      %v5010 = vpack.c.b16 %v4978, %v4978
      %v5011 = vpack.c.b16 %v4979, %v4979
      %v5012 = vpack.c.b16 %v4980, %v4980
      %v5013 = vpack.c.b16 %v4981, %v4981
      %v5014 = vpack.c.b16 %v4982, %v4982
      %v5015 = vpack.c.b16 %v4983, %v4983
      %v5016 = vpack.c.b16 %v4984, %v4984
      %v5017 = vpack.c.b16 %v4985, %v4985
      %v5018 = vpack.c.b16 %v4986, %v4986
      %v5019 = vpack.c.b16 %v4987, %v4987
      %5052 = vst [vmem:[%s309] sm:$0xf] %v4988
      %5053 = vst [vmem:[%s309 + $0x4] sm:$0xf] %v4989
      %5054 = vst [vmem:[%s309 + $0x8] sm:$0xf] %v4990
      %5055 = vst [vmem:[%s309 + $0xc] sm:$0xf] %v4991
      %5056 = vst [vmem:[%s309 + $0x10] sm:$0xf] %v4992
      %5057 = vst [vmem:[%s309 + $0x14] sm:$0xf] %v4993
      %5058 = vst [vmem:[%s309 + $0x18] sm:$0xf] %v4994
      %5059 = vst [vmem:[%s309 + $0x1c] sm:$0xf] %v4995
      %5060 = vst [vmem:[%s309 + $0x20] sm:$0xf] %v4996
      %5061 = vst [vmem:[%s309 + $0x24] sm:$0xf] %v4997
      %5062 = vst [vmem:[%s309 + $0x28] sm:$0xf] %v4998
      %5063 = vst [vmem:[%s309 + $0x2c] sm:$0xf] %v4999
      %5064 = vst [vmem:[%s309 + $0x30] sm:$0xf] %v5000
      %5065 = vst [vmem:[%s309 + $0x34] sm:$0xf] %v5001
      %5066 = vst [vmem:[%s309 + $0x38] sm:$0xf] %v5002
      %5067 = vst [vmem:[%s309 + $0x3c] sm:$0xf] %v5003
      %5068 = vst [vmem:[%s309 + $0x40] sm:$0xf] %v5004
      %5069 = vst [vmem:[%s309 + $0x44] sm:$0xf] %v5005
      %5070 = vst [vmem:[%s309 + $0x48] sm:$0xf] %v5006
      %5071 = vst [vmem:[%s309 + $0x4c] sm:$0xf] %v5007
      %5072 = vst [vmem:[%s309 + $0x50] sm:$0xf] %v5008
      %5073 = vst [vmem:[%s309 + $0x54] sm:$0xf] %v5009
      %5074 = vst [vmem:[%s309 + $0x58] sm:$0xf] %v5010
      %5075 = vst [vmem:[%s309 + $0x5c] sm:$0xf] %v5011
      %5076 = vst [vmem:[%s309 + $0x60] sm:$0xf] %v5012
      %5077 = vst [vmem:[%s309 + $0x64] sm:$0xf] %v5013
      %5078 = vst [vmem:[%s309 + $0x68] sm:$0xf] %v5014
      %5079 = vst [vmem:[%s309 + $0x6c] sm:$0xf] %v5015
      %5080 = vst [vmem:[%s309 + $0x70] sm:$0xf] %v5016
      %5081 = vst [vmem:[%s309 + $0x74] sm:$0xf] %v5017
      %5082 = vst [vmem:[%s309 + $0x78] sm:$0xf] %v5018
      %5083 = vst [vmem:[%s309 + $0x7c] sm:$0xf] %v5019
      %v5084 = vadd.f32 %v4798, %v4801
      %v5085 = vadd.f32 %v5084, %v4806
      %v5086 = vadd.f32 %v5085, %v4809
      %v5087 = vadd.f32 %v5086, %v4814
      %v5088 = vadd.f32 %v5087, %v4817
      %v5089 = vadd.f32 %v5088, %v4822
      %v5090 = vadd.f32 %v5089, %v4825
      %v5091 = vadd.f32 %v5090, %v4830
      %v5092 = vadd.f32 %v5091, %v4833
      %v5093 = vadd.f32 %v5092, %v4838
      %v5094 = vadd.f32 %v5093, %v4841
      %v5095 = vadd.f32 %v5094, %v4846
      %v5096 = vadd.f32 %v5095, %v4849
      %v5097 = vadd.f32 %v5096, %v4854
      %v5098 = vadd.f32 %v5097, %v4857
      %v5099 = vadd.f32 %v5098, %v4862
      %v5100 = vadd.f32 %v5099, %v4865
      %v5101 = vadd.f32 %v5100, %v4870
      %v5102 = vadd.f32 %v5101, %v4873
      %v5103 = vadd.f32 %v5102, %v4878
      %v5104 = vadd.f32 %v5103, %v4881
      %v5105 = vadd.f32 %v5104, %v4886
      %v5106 = vadd.f32 %v5105, %v4889
      %v5107 = vadd.f32 %v5106, %v4894
      %v5108 = vadd.f32 %v5107, %v4897
      %v5109 = vadd.f32 %v5108, %v4902
      %v5110 = vadd.f32 %v5109, %v4905
      %v5111 = vadd.f32 %v5110, %v4910
      %v5112 = vadd.f32 %v5111, %v4913
      %v5113 = vadd.f32 %v5112, %v4918
      %v5114 = vadd.f32 %v5113, %v4921
      %v5115 = vrot.slane %v5114, 4
      %v5116 = vadd.f32 %v5114, %v5115
      %v5117 = vrot.slane %v5116, 2
      %v5118 = vadd.f32 %v5116, %v5117
      %v5119 = vrot.slane %v5118, 1
      %v5120 = vadd.f32 %v5118, %v5119
      %5121 = vst [vmem:[%s315] sm:$0x1] %v5120
      %v5122 = vmul.f32 %v4798, %v4798
      %v5123 = vmul.f32 %v4801, %v4801
      %v5124 = vmul.f32 %v4806, %v4806
      %v5125 = vmul.f32 %v4809, %v4809
      %v5126 = vmul.f32 %v4814, %v4814
      %v5127 = vmul.f32 %v4817, %v4817
      %v5128 = vmul.f32 %v4822, %v4822
      %v5129 = vmul.f32 %v4825, %v4825
      %v5130 = vmul.f32 %v4830, %v4830
      %v5131 = vmul.f32 %v4833, %v4833
      %v5132 = vmul.f32 %v4838, %v4838
      %v5133 = vmul.f32 %v4841, %v4841
      %v5134 = vmul.f32 %v4846, %v4846
      %v5135 = vmul.f32 %v4849, %v4849
      %v5136 = vmul.f32 %v4854, %v4854
      %v5137 = vmul.f32 %v4857, %v4857
      %v5138 = vmul.f32 %v4862, %v4862
      %v5139 = vmul.f32 %v4865, %v4865
      %v5140 = vmul.f32 %v4870, %v4870
      %v5141 = vmul.f32 %v4873, %v4873
      %v5142 = vmul.f32 %v4878, %v4878
      %v5143 = vmul.f32 %v4881, %v4881
      %v5144 = vmul.f32 %v4886, %v4886
      %v5145 = vmul.f32 %v4889, %v4889
      %v5146 = vmul.f32 %v4894, %v4894
      %v5147 = vmul.f32 %v4897, %v4897
      %v5148 = vmul.f32 %v4902, %v4902
      %v5149 = vmul.f32 %v4905, %v4905
      %v5150 = vmul.f32 %v4910, %v4910
      %v5151 = vmul.f32 %v4913, %v4913
      %v5152 = vmul.f32 %v4918, %v4918
      %v5153 = vmul.f32 %v4921, %v4921
      %v5154 = vadd.f32 %v5122, %v5123
      %v5155 = vadd.f32 %v5154, %v5124
      %v5156 = vadd.f32 %v5155, %v5125
      %v5157 = vadd.f32 %v5156, %v5126
      %v5158 = vadd.f32 %v5157, %v5127
      %v5159 = vadd.f32 %v5158, %v5128
      %v5160 = vadd.f32 %v5159, %v5129
      %v5161 = vadd.f32 %v5160, %v5130
      %v5162 = vadd.f32 %v5161, %v5131
      %v5163 = vadd.f32 %v5162, %v5132
      %v5164 = vadd.f32 %v5163, %v5133
      %v5165 = vadd.f32 %v5164, %v5134
      %v5166 = vadd.f32 %v5165, %v5135
      %v5167 = vadd.f32 %v5166, %v5136
      %v5168 = vadd.f32 %v5167, %v5137
      %v5169 = vadd.f32 %v5168, %v5138
      %v5170 = vadd.f32 %v5169, %v5139
      %v5171 = vadd.f32 %v5170, %v5140
      %v5172 = vadd.f32 %v5171, %v5141
      %v5173 = vadd.f32 %v5172, %v5142
      %v5174 = vadd.f32 %v5173, %v5143
      %v5175 = vadd.f32 %v5174, %v5144
      %v5176 = vadd.f32 %v5175, %v5145
      %v5177 = vadd.f32 %v5176, %v5146
      %v5178 = vadd.f32 %v5177, %v5147
      %v5179 = vadd.f32 %v5178, %v5148
      %v5180 = vadd.f32 %v5179, %v5149
      %v5181 = vadd.f32 %v5180, %v5150
      %v5182 = vadd.f32 %v5181, %v5151
      %v5183 = vadd.f32 %v5182, %v5152
      %v5184 = vadd.f32 %v5183, %v5153
      %v5185 = vrot.slane %v5184, 4
      %v5186 = vadd.f32 %v5184, %v5185
      %v5187 = vrot.slane %v5186, 2
      %v5188 = vadd.f32 %v5186, %v5187
      %v5189 = vrot.slane %v5188, 1
      %v5190 = vadd.f32 %v5188, %v5189
      %5191 = vst [vmem:[%s321] sm:$0x1] %v5190
      %p5192 = scmp.lt.s32.totalorder %s23, 1
      %s5193 = scalar_select %p5192, %s23, 1
      %p5194 = scmp.lt.s32.totalorder %s22, 0
      %s5195 = scalar_select %p5194, %s22, 0
      %s5196 = smul.addr %s5193, 32
      %s5197 = sadd.s32 %s5195, %s5196
      %s5198 = smul.addr %s5197, 4
      %s5199 = scalar_lea.vmem %s4, %s5198
      %p5200 = scmp.lt.s32.totalorder %s23, 1
      %s5201 = scalar_select %p5200, %s23, 1
      %p5202 = scmp.lt.s32.totalorder %s22, 0
      %s5203 = scalar_select %p5202, %s22, 0
      %s5204 = sadd.s32 %s5203, %s5201
      %s5205 = scalar_lea.vmem %s5, %s5204
      %p5206 = scmp.lt.s32.totalorder %s23, 1
      %s5207 = scalar_select %p5206, %s23, 1
      %p5208 = scmp.lt.s32.totalorder %s22, 0
      %s5209 = scalar_select %p5208, %s22, 0
      %s5210 = sadd.s32 %s5209, %s5207
      %s5211 = scalar_lea.vmem %s6, %s5210
      // Predicated region
      $region37: #{double_conv_forward.4} parent=35 // pred_check
        %p5212 = pneg %p144
      $region38: #{double_conv_forward.4} parent=35 // pred_check_branch
        %5214 = sbr.rel (%p5212) target = $region40
      $region39: #{double_conv_forward.4} parent=35 // pred_region
        _
      $region40: #{double_conv_forward.4} parent=35 // pred_fallthru
        _
      // Predicated region
      $region41: #{double_conv_forward.4} parent=35 // pred_check
        %p5215 = pneg %p172
      $region42: #{double_conv_forward.4} parent=35 // pred_check_branch
        %5217 = sbr.rel (%p5215) target = $region44
      $region43: #{double_conv_forward.4} parent=35 // pred_region
        _
      $region44: #{double_conv_forward.4} parent=35 // pred_fallthru
        _
      // Predicated region
      $region45: #{double_conv_forward.4} parent=35 // pred_check
        %p5218 = pneg %p200
      $region46: #{double_conv_forward.4} parent=35 // pred_check_branch
        %5220 = sbr.rel (%p5218) target = $region48
      $region47: #{double_conv_forward.4} parent=35 // pred_region
        _
      $region48: #{double_conv_forward.4} parent=35 // pred_fallthru
        _
    $region36: #{double_conv_forward.4} parent=5 // pred_fallthru
      _
    %p5221 = scmp.le.s32.totalorder 2, %s13
    // Predicated region
    $region49: #{double_conv_forward.4} parent=5 // pred_check
      %p5222 = pneg %p5221
    $region50: #{double_conv_forward.4} parent=5 // pred_check_branch
      %5224 = sbr.rel (%p5222) target = $region52
    $region51: #{double_conv_forward.4} parent=5 // pred_region
      %s5225 = ssub.s32 %s13, 2
      // Predicated region
      $region53: #{double_conv_forward.4} parent=51 // pred_check
        %p5226 = pneg %p150
      $region54: #{double_conv_forward.4} parent=51 // pred_check_branch
        %5228 = sbr.rel (%p5226) target = $region56
      $region55: #{double_conv_forward.4} parent=51 // pred_region
        %p5229 = scmp.lt.s32.totalorder %s25, 1
        %s5230 = scalar_select %p5229, %s25, 1
        %p5231 = scmp.lt.s32.totalorder %s24, 0
        %s5232 = scalar_select %p5231, %s24, 0
        %s5233 = smul.addr %s5230, 32
        %s5234 = sadd.s32 %s5232, %s5233
        %s5235 = smul.addr %s5234, 4
        %s5236 = scalar_lea.vmem %s4, %s5235
      $region56: #{double_conv_forward.4} parent=51 // pred_fallthru
        _
      // Predicated region
      $region57: #{double_conv_forward.4} parent=51 // pred_check
        %p5237 = pneg %p178
      $region58: #{double_conv_forward.4} parent=51 // pred_check_branch
        %5239 = sbr.rel (%p5237) target = $region60
      $region59: #{double_conv_forward.4} parent=51 // pred_region
        %p5240 = scmp.lt.s32.totalorder %s25, 1
        %s5241 = scalar_select %p5240, %s25, 1
        %p5242 = scmp.lt.s32.totalorder %s24, 0
        %s5243 = scalar_select %p5242, %s24, 0
        %s5244 = sadd.s32 %s5243, %s5241
        %s5245 = scalar_lea.vmem %s5, %s5244
      $region60: #{double_conv_forward.4} parent=51 // pred_fallthru
        _
      // Predicated region
      $region61: #{double_conv_forward.4} parent=51 // pred_check
        %p5246 = pneg %p206
      $region62: #{double_conv_forward.4} parent=51 // pred_check_branch
        %5248 = sbr.rel (%p5246) target = $region64
      $region63: #{double_conv_forward.4} parent=51 // pred_region
        %p5249 = scmp.lt.s32.totalorder %s25, 1
        %s5250 = scalar_select %p5249, %s25, 1
        %p5251 = scmp.lt.s32.totalorder %s24, 0
        %s5252 = scalar_select %p5251, %s24, 0
        %s5253 = sadd.s32 %s5252, %s5250
        %s5254 = scalar_lea.vmem %s6, %s5253
      $region64: #{double_conv_forward.4} parent=51 // pred_fallthru
        _
    $region52: #{double_conv_forward.4} parent=5 // pred_fallthru
      _
  $region6: #{double_conv_forward.4} parent=0 // loop_footer
    %s17 = sadd.s32 1, %s13
  $region7: #{double_conv_forward.4} parent=0 // loop_footer_branch
    %12 = sbr.rel target = $region3
  $region8: #{double_conv_forward.4} parent=0 // loop_exit
    _

// kernel: double_conv_forward.3
$region0: #{double_conv_forward.3}
  #allocation0 [shape = 'u32[]', space=smem, size = 0x4, offset = 0x4, fixed_abs, tag = 'smem constant byte address 0x4 - core index']
  #allocation1 [shape = 'u32[144,128]{1,0:T(1,128)}', space=vmem, size = 0x12000, scoped, tag = 'internal scratch']
  #allocation2 [shape = 'bf16[18,18,4]{2,1,0:T(8,128)(2,1)}', space=vmem, size = 0x1b000, scoped, tag = 'scratch operand']
  %s0 = inlined_call_operand.vmem [shape: bf16[2,16,16,4], index: 0, kind: input, shape index: {}]
  %s1 = inlined_call_operand.vmem [shape: bf16[9,4,128], index: 1, kind: input, shape index: {}]
  %s2 = inlined_call_operand.vmem [shape: f32[1,4], index: 2, kind: input, shape index: {}]
  %s3 = inlined_call_operand.vmem [shape: f32[1,4], index: 3, kind: input, shape index: {}]
  %s4 = inlined_call_operand.vmem [shape: bf16[2,16,16,128], index: 4, kind: output, shape index: {0}]
  %s5 = inlined_call_operand.vmem [shape: f32[2,1,128], index: 5, kind: output, shape index: {1}]
  %s6 = inlined_call_operand.vmem [shape: f32[2,1,128], index: 6, kind: output, shape index: {2}]
  %7 = xla_tuple %s4, %s5, %s6
  %s8 = sld [smem:[#allocation0]]
  $region65: #{double_conv_forward.3} parent=0
    _
  %s10 = ssub.s32 1, %s8
  %s11 = scalar_select 0, %s10, %s8
  loop: start=0, step=1, limit=4
  $region2: #{double_conv_forward.3} parent=0 // loop_pre_header
    _
  $region3: #{double_conv_forward.3} parent=0 // loop_header
    %s13 = sphi 0, %s17
    %p14 = scmp.ge.s32.totalorder %s13, 4
    %s20 = sphi 0, %s32
    %s21 = sphi 0, %s28
    %s22 = sphi 0, %s20
    %s23 = sphi 0, %s21
    %s24 = sphi 0, %s22
    %s25 = sphi 0, %s23
    %s35 = sphi 0, %s37
    %s38 = sphi 0, %s35
    %s39 = sphi 0, %s38
    %s55 = sphi 0, %s39
    %s61 = sphi 0, %s63
    %s64 = sphi 0, %s61
    %s65 = sphi 0, %s64
    %s81 = sphi 0, %s65
    %s85 = sphi 0, %s85
    %s87 = sphi 0, %s85
    %s88 = sphi 0, %s87
    %s102 = sphi 0, %s88
    %s106 = sphi 0, %s106
    %s108 = sphi 0, %s106
    %s109 = sphi 0, %s108
    %s123 = sphi 0, %s109
    %s131 = sphi 0, %s133
    %s134 = sphi 0, %s131
    %s135 = sphi 0, %s134
    %s151 = sphi 0, %s135
    %s159 = sphi 0, %s161
    %s162 = sphi 0, %s159
    %s163 = sphi 0, %s162
    %s179 = sphi 0, %s163
    %s187 = sphi 0, %s189
    %s190 = sphi 0, %s187
    %s191 = sphi 0, %s190
    %s207 = sphi 0, %s191
  $region4: #{double_conv_forward.3} parent=0 // loop_header_branch
    %16 = sbr.rel (%p14) target = $region8
  $region5: #{double_conv_forward.3} parent=0 // loop_body
    %s18 = ssub.s32 %s13, 1
    %s19 = ssub.s32 %s13, 2
    %s26 = sadd.s32 1, %s21
    %p27 = scmp.ge.s32.totalorder %s26, 2
    %s28 = scalar_select %p27, 0, %s26
    %s29 = sadd.s32 1, %s20
    %s30 = scalar_select %p27, %s29, %s20
    %p31 = scmp.ge.s32.totalorder %s30, 1
    %s32 = scalar_select %p31, 0, %s30
    %s33 = ssub.s32 %s21, %s28
    %p34 = scmp.eq.s32.totalorder %s33, 0
    %s36 = sadd.s32 %s35, 1
    %s37 = scalar_select %p34, %s35, %s36
    %p40 = pneg %p34
    %p41 = scmp.eq.s32.totalorder %s13, 1
    %p42 = por %p40, %p41
    %p43 = scmp.ne.s32.totalorder %s35, %s38
    %p44 = scmp.eq.s32.totalorder %s13, 0
    %p45 = por %p43, %p44
    %p46 = scmp.ne.s32.totalorder %s35, %s38
    %p47 = scmp.eq.s32.totalorder %s18, 1
    %p48 = por %p46, %p47
    %p49 = scmp.ne.s32.totalorder %s38, %s39
    %p50 = scmp.eq.s32.totalorder %s18, 0
    %p51 = por %p49, %p50
    %p52 = scmp.ne.s32.totalorder %s38, %s39
    %p53 = scmp.eq.s32.totalorder %s19, 1
    %p54 = por %p52, %p53
    %p56 = scmp.ne.s32.totalorder %s39, %s55
    %p57 = scmp.eq.s32.totalorder %s19, 0
    %p58 = por %p56, %p57
    %s59 = ssub.s32 %s20, %s32
    %p60 = scmp.eq.s32.totalorder %s59, 0
    %s62 = sadd.s32 %s61, 1
    %s63 = scalar_select %p60, %s61, %s62
    %p66 = pneg %p60
    %p67 = scmp.eq.s32.totalorder %s13, 1
    %p68 = por %p66, %p67
    %p69 = scmp.ne.s32.totalorder %s61, %s64
    %p70 = scmp.eq.s32.totalorder %s13, 0
    %p71 = por %p69, %p70
    %p72 = scmp.ne.s32.totalorder %s61, %s64
    %p73 = scmp.eq.s32.totalorder %s18, 1
    %p74 = por %p72, %p73
    %p75 = scmp.ne.s32.totalorder %s64, %s65
    %p76 = scmp.eq.s32.totalorder %s18, 0
    %p77 = por %p75, %p76
    %p78 = scmp.ne.s32.totalorder %s64, %s65
    %p79 = scmp.eq.s32.totalorder %s19, 1
    %p80 = por %p78, %p79
    %p82 = scmp.ne.s32.totalorder %s65, %s81
    %p83 = scmp.eq.s32.totalorder %s19, 0
    %p84 = por %p82, %p83
    %s86 = sadd.s32 %s85, 1
    %p89 = scmp.eq.s32.totalorder %s13, 1
    %p90 = scmp.ne.s32.totalorder %s85, %s87
    %p91 = scmp.eq.s32.totalorder %s13, 0
    %p92 = por %p90, %p91
    %p93 = scmp.ne.s32.totalorder %s85, %s87
    %p94 = scmp.eq.s32.totalorder %s18, 1
    %p95 = por %p93, %p94
    %p96 = scmp.ne.s32.totalorder %s87, %s88
    %p97 = scmp.eq.s32.totalorder %s18, 0
    %p98 = por %p96, %p97
    %p99 = scmp.ne.s32.totalorder %s87, %s88
    %p100 = scmp.eq.s32.totalorder %s19, 1
    %p101 = por %p99, %p100
    %p103 = scmp.ne.s32.totalorder %s88, %s102
    %p104 = scmp.eq.s32.totalorder %s19, 0
    %p105 = por %p103, %p104
    %s107 = sadd.s32 %s106, 1
    %p110 = scmp.eq.s32.totalorder %s13, 1
    %p111 = scmp.ne.s32.totalorder %s106, %s108
    %p112 = scmp.eq.s32.totalorder %s13, 0
    %p113 = por %p111, %p112
    %p114 = scmp.ne.s32.totalorder %s106, %s108
    %p115 = scmp.eq.s32.totalorder %s18, 1
    %p116 = por %p114, %p115
    %p117 = scmp.ne.s32.totalorder %s108, %s109
    %p118 = scmp.eq.s32.totalorder %s18, 0
    %p119 = por %p117, %p118
    %p120 = scmp.ne.s32.totalorder %s108, %s109
    %p121 = scmp.eq.s32.totalorder %s19, 1
    %p122 = por %p120, %p121
    %p124 = scmp.ne.s32.totalorder %s109, %s123
    %p125 = scmp.eq.s32.totalorder %s19, 0
    %p126 = por %p124, %p125
    %s127 = ssub.s32 %s21, %s28
    %s128 = ssub.s32 %s20, %s32
    %s129 = sor.u32 %s127, %s128
    %p130 = scmp.eq.s32.totalorder %s129, 0
    %s132 = sadd.s32 %s131, 1
    %s133 = scalar_select %p130, %s131, %s132
    %p136 = pneg %p130
    %p137 = scmp.eq.s32.totalorder %s13, 1
    %p138 = por %p136, %p137
    %p139 = scmp.ne.s32.totalorder %s131, %s134
    %p140 = scmp.eq.s32.totalorder %s13, 0
    %p141 = por %p139, %p140
    %p142 = scmp.ne.s32.totalorder %s131, %s134
    %p143 = scmp.eq.s32.totalorder %s18, 1
    %p144 = por %p142, %p143
    %p145 = scmp.ne.s32.totalorder %s134, %s135
    %p146 = scmp.eq.s32.totalorder %s18, 0
    %p147 = por %p145, %p146
    %p148 = scmp.ne.s32.totalorder %s134, %s135
    %p149 = scmp.eq.s32.totalorder %s19, 1
    %p150 = por %p148, %p149
    %p152 = scmp.ne.s32.totalorder %s135, %s151
    %p153 = scmp.eq.s32.totalorder %s19, 0
    %p154 = por %p152, %p153
    %s155 = ssub.s32 %s21, %s28
    %s156 = ssub.s32 %s20, %s32
    %s157 = sor.u32 %s155, %s156
    %p158 = scmp.eq.s32.totalorder %s157, 0
    %s160 = sadd.s32 %s159, 1
    %s161 = scalar_select %p158, %s159, %s160
    %p164 = pneg %p158
    %p165 = scmp.eq.s32.totalorder %s13, 1
    %p166 = por %p164, %p165
    %p167 = scmp.ne.s32.totalorder %s159, %s162
    %p168 = scmp.eq.s32.totalorder %s13, 0
    %p169 = por %p167, %p168
    %p170 = scmp.ne.s32.totalorder %s159, %s162
    %p171 = scmp.eq.s32.totalorder %s18, 1
    %p172 = por %p170, %p171
    %p173 = scmp.ne.s32.totalorder %s162, %s163
    %p174 = scmp.eq.s32.totalorder %s18, 0
    %p175 = por %p173, %p174
    %p176 = scmp.ne.s32.totalorder %s162, %s163
    %p177 = scmp.eq.s32.totalorder %s19, 1
    %p178 = por %p176, %p177
    %p180 = scmp.ne.s32.totalorder %s163, %s179
    %p181 = scmp.eq.s32.totalorder %s19, 0
    %p182 = por %p180, %p181
    %s183 = ssub.s32 %s21, %s28
    %s184 = ssub.s32 %s20, %s32
    %s185 = sor.u32 %s183, %s184
    %p186 = scmp.eq.s32.totalorder %s185, 0
    %s188 = sadd.s32 %s187, 1
    %s189 = scalar_select %p186, %s187, %s188
    %p192 = pneg %p186
    %p193 = scmp.eq.s32.totalorder %s13, 1
    %p194 = por %p192, %p193
    %p195 = scmp.ne.s32.totalorder %s187, %s190
    %p196 = scmp.eq.s32.totalorder %s13, 0
    %p197 = por %p195, %p196
    %p198 = scmp.ne.s32.totalorder %s187, %s190
    %p199 = scmp.eq.s32.totalorder %s18, 1
    %p200 = por %p198, %p199
    %p201 = scmp.ne.s32.totalorder %s190, %s191
    %p202 = scmp.eq.s32.totalorder %s18, 0
    %p203 = por %p201, %p202
    %p204 = scmp.ne.s32.totalorder %s190, %s191
    %p205 = scmp.eq.s32.totalorder %s19, 1
    %p206 = por %p204, %p205
    %p208 = scmp.ne.s32.totalorder %s191, %s207
    %p209 = scmp.eq.s32.totalorder %s19, 0
    %p210 = por %p208, %p209
    %p211 = scmp.le.s32.totalorder 1, %s13
    %p212 = scmp.lt.s32.totalorder %s13, 3
    %p213 = pnand %p211, %p212
    %p214 = pneg %p213
    // Predicated region
    $region9: #{double_conv_forward.3} parent=5 // pred_check
      _
    $region10: #{double_conv_forward.3} parent=5 // pred_check_branch
      %216 = sbr.rel (%p213) target = $region12
    $region11: #{double_conv_forward.3} parent=5 // pred_region
      %s217 = ssub.s32 %s13, 1
      // Predicated region
      $region13: #{double_conv_forward.3} parent=11 // pred_check
        %p218 = pneg %p77
      $region14: #{double_conv_forward.3} parent=11 // pred_check_branch
        %220 = sbr.rel (%p218) target = $region16
      $region15: #{double_conv_forward.3} parent=11 // pred_region
        %p221 = scmp.lt.s32.totalorder %s22, 0
        %s222 = scalar_select %p221, %s22, 0
        %s223 = smul.addr %s222, 2
        %s224 = scalar_lea.vmem %s1, %s223
      $region16: #{double_conv_forward.3} parent=11 // pred_fallthru
        _
      // Predicated region
      $region17: #{double_conv_forward.3} parent=11 // pred_check
        %p225 = pneg %p98
      $region18: #{double_conv_forward.3} parent=11 // pred_check_branch
        %227 = sbr.rel (%p225) target = $region20
      $region19: #{double_conv_forward.3} parent=11 // pred_region
        _
      $region20: #{double_conv_forward.3} parent=11 // pred_fallthru
        _
      // Predicated region
      $region21: #{double_conv_forward.3} parent=11 // pred_check
        %p228 = pneg %p119
      $region22: #{double_conv_forward.3} parent=11 // pred_check_branch
        %230 = sbr.rel (%p228) target = $region24
      $region23: #{double_conv_forward.3} parent=11 // pred_region
        _
      $region24: #{double_conv_forward.3} parent=11 // pred_fallthru
        _
    $region12: #{double_conv_forward.3} parent=5 // pred_fallthru
      _
    %p231 = scmp.lt.s32.totalorder %s13, 2
    // Predicated region
    $region25: #{double_conv_forward.3} parent=5 // pred_check
      %p232 = pneg %p231
    $region26: #{double_conv_forward.3} parent=5 // pred_check_branch
      %234 = sbr.rel (%p232) target = $region28
    $region27: #{double_conv_forward.3} parent=5 // pred_region
      // Predicated region
      $region29: #{double_conv_forward.3} parent=27 // pred_check
        %p235 = pneg %p45
      $region30: #{double_conv_forward.3} parent=27 // pred_check_branch
        %237 = sbr.rel (%p235) target = $region32
      $region31: #{double_conv_forward.3} parent=27 // pred_region
        %p238 = scmp.lt.s32.totalorder %s21, 1
        %s239 = scalar_select %p238, %s21, 1
        %s240 = smul.addr %s239, 32
        %s241 = smul.addr %s240, 4
        %s242 = scalar_lea.vmem %s0, %s241
      $region32: #{double_conv_forward.3} parent=27 // pred_fallthru
        _
    $region28: #{double_conv_forward.3} parent=5 // pred_fallthru
      _
    %p243 = scmp.le.s32.totalorder 1, %s13
    %p244 = scmp.lt.s32.totalorder %s13, 3
    %p245 = pnand %p243, %p244
    %p246 = pneg %p245
    // Predicated region
    $region33: #{double_conv_forward.3} parent=5 // pred_check
      _
    $region34: #{double_conv_forward.3} parent=5 // pred_check_branch
      %248 = sbr.rel (%p245) target = $region36
    $region35: #{double_conv_forward.3} parent=5 // pred_region
      %s249 = ssub.s32 %s13, 1
      %p250 = scmp.lt.s32.totalorder %s23, 1
      %s251 = scalar_select %p250, %s23, 1
      %s252 = smul.addr %s251, 32
      %s253 = smul.addr %s252, 4
      %s254 = scalar_lea.vmem %s0, %s253
      %p255 = pneg %p51
      %p256 = pneg %p48
      %p257 = scmp.lt.s32.totalorder %s22, 0
      %s258 = scalar_select %p257, %s22, 0
      %s259 = smul.addr %s258, 2
      %s260 = scalar_lea.vmem %s1, %s259
      %p261 = pneg %p77
      %p262 = pneg %p74
      %p263 = pneg %p98
      %p264 = pneg %p95
      %p265 = pneg %p119
      %p266 = pneg %p116
      %p267 = pneg %p147
      %p268 = pneg %p144
      %p269 = scmp.lt.s32.totalorder %s23, 1
      %s270 = scalar_select %p269, %s23, 1
      %p271 = scmp.lt.s32.totalorder %s22, 0
      %s272 = scalar_select %p271, %s22, 0
      %s273 = smul.addr %s270, 32
      %s274 = sadd.s32 %s272, %s273
      %s275 = smul.addr %s274, 4
      %s276 = scalar_lea.vmem %s4, %s275
      %p277 = pneg %p175
      %p278 = pneg %p172
      %p279 = scmp.lt.s32.totalorder %s23, 1
      %s280 = scalar_select %p279, %s23, 1
      %p281 = scmp.lt.s32.totalorder %s22, 0
      %s282 = scalar_select %p281, %s22, 0
      %s283 = sadd.s32 %s282, %s280
      %s284 = scalar_lea.vmem %s5, %s283
      %p285 = pneg %p203
      %p286 = pneg %p200
      %p287 = scmp.lt.s32.totalorder %s23, 1
      %s288 = scalar_select %p287, %s23, 1
      %p289 = scmp.lt.s32.totalorder %s22, 0
      %s290 = scalar_select %p289, %s22, 0
      %s291 = sadd.s32 %s290, %s288
      %s292 = scalar_lea.vmem %s6, %s291
      %p293 = scmp.lt.s32.totalorder %s23, 1
      %s294 = scalar_select %p293, %s23, 1
      %s295 = smul.addr %s294, 32
      %s296 = smul.addr %s295, 4
      %s297 = scalar_lea.vmem %s0, %s296
      %p298 = scmp.lt.s32.totalorder %s22, 0
      %s299 = scalar_select %p298, %s22, 0
      %s300 = smul.addr %s299, 2
      %s301 = scalar_lea.vmem %s1, %s300
      %p302 = scmp.lt.s32.totalorder %s23, 1
      %s303 = scalar_select %p302, %s23, 1
      %p304 = scmp.lt.s32.totalorder %s22, 0
      %s305 = scalar_select %p304, %s22, 0
      %s306 = smul.addr %s303, 32
      %s307 = sadd.s32 %s305, %s306
      %s308 = smul.addr %s307, 4
      %s309 = scalar_lea.vmem %s4, %s308
      %p310 = scmp.lt.s32.totalorder %s23, 1
      %s311 = scalar_select %p310, %s23, 1
      %p312 = scmp.lt.s32.totalorder %s22, 0
      %s313 = scalar_select %p312, %s22, 0
      %s314 = sadd.s32 %s313, %s311
      %s315 = scalar_lea.vmem %s5, %s314
      %p316 = scmp.lt.s32.totalorder %s23, 1
      %s317 = scalar_select %p316, %s23, 1
      %p318 = scmp.lt.s32.totalorder %s22, 0
      %s319 = scalar_select %p318, %s22, 0
      %s320 = sadd.s32 %s319, %s317
      %s321 = scalar_lea.vmem %s6, %s320
      %v323 = vld [vmem:[%s297] sm:$0xf]
      %v324 = vld [vmem:[%s297 + $0x4] sm:$0xf]
      %v325 = vld [vmem:[%s297 + $0x8] sm:$0xf]
      %v326 = vld [vmem:[%s297 + $0xc] sm:$0xf]
      %v327 = vld [vmem:[%s297 + $0x10] sm:$0xf]
      %v328 = vld [vmem:[%s297 + $0x14] sm:$0xf]
      %v329 = vld [vmem:[%s297 + $0x18] sm:$0xf]
      %v330 = vld [vmem:[%s297 + $0x1c] sm:$0xf]
      %v331 = vld [vmem:[%s297 + $0x20] sm:$0xf]
      %v332 = vld [vmem:[%s297 + $0x24] sm:$0xf]
      %v333 = vld [vmem:[%s297 + $0x28] sm:$0xf]
      %v334 = vld [vmem:[%s297 + $0x2c] sm:$0xf]
      %v335 = vld [vmem:[%s297 + $0x30] sm:$0xf]
      %v336 = vld [vmem:[%s297 + $0x34] sm:$0xf]
      %v337 = vld [vmem:[%s297 + $0x38] sm:$0xf]
      %v338 = vld [vmem:[%s297 + $0x3c] sm:$0xf]
      %v339 = vld [vmem:[%s297 + $0x40] sm:$0xf]
      %v340 = vld [vmem:[%s297 + $0x44] sm:$0xf]
      %v341 = vld [vmem:[%s297 + $0x48] sm:$0xf]
      %v342 = vld [vmem:[%s297 + $0x4c] sm:$0xf]
      %v343 = vld [vmem:[%s297 + $0x50] sm:$0xf]
      %v344 = vld [vmem:[%s297 + $0x54] sm:$0xf]
      %v345 = vld [vmem:[%s297 + $0x58] sm:$0xf]
      %v346 = vld [vmem:[%s297 + $0x5c] sm:$0xf]
      %v347 = vld [vmem:[%s297 + $0x60] sm:$0xf]
      %v348 = vld [vmem:[%s297 + $0x64] sm:$0xf]
      %v349 = vld [vmem:[%s297 + $0x68] sm:$0xf]
      %v350 = vld [vmem:[%s297 + $0x6c] sm:$0xf]
      %v351 = vld [vmem:[%s297 + $0x70] sm:$0xf]
      %v352 = vld [vmem:[%s297 + $0x74] sm:$0xf]
      %v353 = vld [vmem:[%s297 + $0x78] sm:$0xf]
      %v354 = vld [vmem:[%s297 + $0x7c] sm:$0xf]
      %vm355 = vcmask 27648
      %356 = vst.msk [vmem:[#allocation2] sm:$0xf] %vm355, 0
      %357 = vst.msk [vmem:[#allocation2 + $0x4] sm:$0xf] %vm355, 0
      %vm358 = vcmask 24576
      %359 = vst.msk [vmem:[#allocation2 + $0x8] sm:$0x1] %vm358, 0
      %360 = vst.msk [vmem:[#allocation2 + $0xc] sm:$0xf] %vm355, 0
      %361 = vst.msk [vmem:[#allocation2 + $0x10] sm:$0xf] %vm355, 0
      %362 = vst.msk [vmem:[#allocation2 + $0x14] sm:$0x1] %vm358, 0
      %363 = vst.msk [vmem:[#allocation2 + $0x18] sm:$0xf] %vm355, 0
      %364 = vst.msk [vmem:[#allocation2 + $0x1c] sm:$0xf] %vm355, 0
      %365 = vst.msk [vmem:[#allocation2 + $0x20] sm:$0x1] %vm358, 0
      %366 = vst.msk [vmem:[#allocation2 + $0x24] sm:$0xf] %vm355, 0
      %367 = vst.msk [vmem:[#allocation2 + $0x28] sm:$0xf] %vm355, 0
      %368 = vst.msk [vmem:[#allocation2 + $0x2c] sm:$0x1] %vm358, 0
      %369 = vst.msk [vmem:[#allocation2 + $0x30] sm:$0xf] %vm355, 0
      %370 = vst.msk [vmem:[#allocation2 + $0x34] sm:$0xf] %vm355, 0
      %371 = vst.msk [vmem:[#allocation2 + $0x38] sm:$0x1] %vm358, 0
      %372 = vst.msk [vmem:[#allocation2 + $0x3c] sm:$0xf] %vm355, 0
      %373 = vst.msk [vmem:[#allocation2 + $0x40] sm:$0xf] %vm355, 0
      %374 = vst.msk [vmem:[#allocation2 + $0x44] sm:$0x1] %vm358, 0
      %375 = vst.msk [vmem:[#allocation2 + $0x48] sm:$0xf] %vm355, 0
      %376 = vst.msk [vmem:[#allocation2 + $0x4c] sm:$0xf] %vm355, 0
      %377 = vst.msk [vmem:[#allocation2 + $0x50] sm:$0x1] %vm358, 0
      %378 = vst.msk [vmem:[#allocation2 + $0x54] sm:$0xf] %vm355, 0
      %379 = vst.msk [vmem:[#allocation2 + $0x58] sm:$0xf] %vm355, 0
      %380 = vst.msk [vmem:[#allocation2 + $0x5c] sm:$0x1] %vm358, 0
      %381 = vst.msk [vmem:[#allocation2 + $0x60] sm:$0xf] %vm355, 0
      %382 = vst.msk [vmem:[#allocation2 + $0x64] sm:$0xf] %vm355, 0
      %383 = vst.msk [vmem:[#allocation2 + $0x68] sm:$0x1] %vm358, 0
      %384 = vst.msk [vmem:[#allocation2 + $0x6c] sm:$0xf] %vm355, 0
      %385 = vst.msk [vmem:[#allocation2 + $0x70] sm:$0xf] %vm355, 0
      %386 = vst.msk [vmem:[#allocation2 + $0x74] sm:$0x1] %vm358, 0
      %387 = vst.msk [vmem:[#allocation2 + $0x78] sm:$0xf] %vm355, 0
      %388 = vst.msk [vmem:[#allocation2 + $0x7c] sm:$0xf] %vm355, 0
      %389 = vst.msk [vmem:[#allocation2 + $0x80] sm:$0x1] %vm358, 0
      %390 = vst.msk [vmem:[#allocation2 + $0x84] sm:$0xf] %vm355, 0
      %391 = vst.msk [vmem:[#allocation2 + $0x88] sm:$0xf] %vm355, 0
      %392 = vst.msk [vmem:[#allocation2 + $0x8c] sm:$0x1] %vm358, 0
      %393 = vst.msk [vmem:[#allocation2 + $0x90] sm:$0xf] %vm355, 0
      %394 = vst.msk [vmem:[#allocation2 + $0x94] sm:$0xf] %vm355, 0
      %395 = vst.msk [vmem:[#allocation2 + $0x98] sm:$0x1] %vm358, 0
      %396 = vst.msk [vmem:[#allocation2 + $0x9c] sm:$0xf] %vm355, 0
      %397 = vst.msk [vmem:[#allocation2 + $0xa0] sm:$0xf] %vm355, 0
      %398 = vst.msk [vmem:[#allocation2 + $0xa4] sm:$0x1] %vm358, 0
      %399 = vst.msk [vmem:[#allocation2 + $0xa8] sm:$0xf] %vm355, 0
      %400 = vst.msk [vmem:[#allocation2 + $0xac] sm:$0xf] %vm355, 0
      %401 = vst.msk [vmem:[#allocation2 + $0xb0] sm:$0x1] %vm358, 0
      %402 = vst.msk [vmem:[#allocation2 + $0xb4] sm:$0xf] %vm355, 0
      %403 = vst.msk [vmem:[#allocation2 + $0xb8] sm:$0xf] %vm355, 0
      %404 = vst.msk [vmem:[#allocation2 + $0xbc] sm:$0x1] %vm358, 0
      %405 = vst.msk [vmem:[#allocation2 + $0xc0] sm:$0xf] %vm355, 0
      %406 = vst.msk [vmem:[#allocation2 + $0xc4] sm:$0xf] %vm355, 0
      %407 = vst.msk [vmem:[#allocation2 + $0xc8] sm:$0x1] %vm358, 0
      %408 = vst.msk [vmem:[#allocation2 + $0xcc] sm:$0xf] %vm355, 0
      %409 = vst.msk [vmem:[#allocation2 + $0xd0] sm:$0xf] %vm355, 0
      %410 = vst.msk [vmem:[#allocation2 + $0xd4] sm:$0x1] %vm358, 0
      %vm411 = vsmask.f32 256
      %vm412 = vsmask.f32 4368
      %vm413 = vmor %vm411, %vm412
      %v415 = vshrl.u32 %v323, 16
      %v417 = vrot.slane %v415, 7
      %v418 = vshll.u32 %v323, 16
      %v420 = vor.u32 %v417, %v418
      %v421 = vrot.slane %v417, 4
      %v423 = vshrl.u32 %v324, 16
      %v425 = vrot.slane %v423, 7
      %v426 = vshll.u32 %v324, 16
      %v428 = vor.u32 %v425, %v426
      %v429 = vsel %vm413, %v421, %v428
      %v430 = vrot.slane %v425, 4
      %v432 = vshrl.u32 %v325, 16
      %v434 = vrot.slane %v432, 7
      %v435 = vshll.u32 %v325, 16
      %v437 = vor.u32 %v434, %v435
      %v438 = vrot.slane %v434, 4
      %v440 = vshrl.u32 %v326, 16
      %v442 = vrot.slane %v440, 7
      %v443 = vshll.u32 %v326, 16
      %v445 = vor.u32 %v442, %v443
      %v446 = vsel %vm413, %v438, %v445
      %v447 = vrot.slane %v442, 4
      %v449 = vshrl.u32 %v327, 16
      %v451 = vrot.slane %v449, 7
      %v452 = vshll.u32 %v327, 16
      %v454 = vor.u32 %v451, %v452
      %v455 = vrot.slane %v451, 4
      %v457 = vshrl.u32 %v328, 16
      %v459 = vrot.slane %v457, 7
      %v460 = vshll.u32 %v328, 16
      %v462 = vor.u32 %v459, %v460
      %v463 = vsel %vm413, %v455, %v462
      %v464 = vrot.slane %v459, 4
      %v466 = vshrl.u32 %v329, 16
      %v468 = vrot.slane %v466, 7
      %v469 = vshll.u32 %v329, 16
      %v471 = vor.u32 %v468, %v469
      %v472 = vrot.slane %v468, 4
      %v474 = vshrl.u32 %v330, 16
      %v476 = vrot.slane %v474, 7
      %v477 = vshll.u32 %v330, 16
      %v479 = vor.u32 %v476, %v477
      %v480 = vsel %vm413, %v472, %v479
      %v481 = vrot.slane %v476, 4
      %v483 = vshrl.u32 %v331, 16
      %v485 = vrot.slane %v483, 7
      %v486 = vshll.u32 %v331, 16
      %v488 = vor.u32 %v485, %v486
      %v489 = vrot.slane %v485, 4
      %v491 = vshrl.u32 %v332, 16
      %v493 = vrot.slane %v491, 7
      %v494 = vshll.u32 %v332, 16
      %v496 = vor.u32 %v493, %v494
      %v497 = vsel %vm413, %v489, %v496
      %v498 = vrot.slane %v493, 4
      %v500 = vshrl.u32 %v333, 16
      %v502 = vrot.slane %v500, 7
      %v503 = vshll.u32 %v333, 16
      %v505 = vor.u32 %v502, %v503
      %v506 = vrot.slane %v502, 4
      %v508 = vshrl.u32 %v334, 16
      %v510 = vrot.slane %v508, 7
      %v511 = vshll.u32 %v334, 16
      %v513 = vor.u32 %v510, %v511
      %v514 = vsel %vm413, %v506, %v513
      %v515 = vrot.slane %v510, 4
      %v517 = vshrl.u32 %v335, 16
      %v519 = vrot.slane %v517, 7
      %v520 = vshll.u32 %v335, 16
      %v522 = vor.u32 %v519, %v520
      %v523 = vrot.slane %v519, 4
      %v525 = vshrl.u32 %v336, 16
      %v527 = vrot.slane %v525, 7
      %v528 = vshll.u32 %v336, 16
      %v530 = vor.u32 %v527, %v528
      %v531 = vsel %vm413, %v523, %v530
      %v532 = vrot.slane %v527, 4
      %v534 = vshrl.u32 %v337, 16
      %v536 = vrot.slane %v534, 7
      %v537 = vshll.u32 %v337, 16
      %v539 = vor.u32 %v536, %v537
      %v540 = vrot.slane %v536, 4
      %v542 = vshrl.u32 %v338, 16
      %v544 = vrot.slane %v542, 7
      %v545 = vshll.u32 %v338, 16
      %v547 = vor.u32 %v544, %v545
      %v548 = vsel %vm413, %v540, %v547
      %v549 = vrot.slane %v544, 4
      %v551 = vshrl.u32 %v339, 16
      %v553 = vrot.slane %v551, 7
      %v554 = vshll.u32 %v339, 16
      %v556 = vor.u32 %v553, %v554
      %v557 = vrot.slane %v553, 4
      %v559 = vshrl.u32 %v340, 16
      %v561 = vrot.slane %v559, 7
      %v562 = vshll.u32 %v340, 16
      %v564 = vor.u32 %v561, %v562
      %v565 = vsel %vm413, %v557, %v564
      %v566 = vrot.slane %v561, 4
      %v568 = vshrl.u32 %v341, 16
      %v570 = vrot.slane %v568, 7
      %v571 = vshll.u32 %v341, 16
      %v573 = vor.u32 %v570, %v571
      %v574 = vrot.slane %v570, 4
      %v576 = vshrl.u32 %v342, 16
      %v578 = vrot.slane %v576, 7
      %v579 = vshll.u32 %v342, 16
      %v581 = vor.u32 %v578, %v579
      %v582 = vsel %vm413, %v574, %v581
      %v583 = vrot.slane %v578, 4
      %v585 = vshrl.u32 %v343, 16
      %v587 = vrot.slane %v585, 7
      %v588 = vshll.u32 %v343, 16
      %v590 = vor.u32 %v587, %v588
      %v591 = vrot.slane %v587, 4
      %v593 = vshrl.u32 %v344, 16
      %v595 = vrot.slane %v593, 7
      %v596 = vshll.u32 %v344, 16
      %v598 = vor.u32 %v595, %v596
      %v599 = vsel %vm413, %v591, %v598
      %v600 = vrot.slane %v595, 4
      %v602 = vshrl.u32 %v345, 16
      %v604 = vrot.slane %v602, 7
      %v605 = vshll.u32 %v345, 16
      %v607 = vor.u32 %v604, %v605
      %v608 = vrot.slane %v604, 4
      %v610 = vshrl.u32 %v346, 16
      %v612 = vrot.slane %v610, 7
      %v613 = vshll.u32 %v346, 16
      %v615 = vor.u32 %v612, %v613
      %v616 = vsel %vm413, %v608, %v615
      %v617 = vrot.slane %v612, 4
      %v619 = vshrl.u32 %v347, 16
      %v621 = vrot.slane %v619, 7
      %v622 = vshll.u32 %v347, 16
      %v624 = vor.u32 %v621, %v622
      %v625 = vrot.slane %v621, 4
      %v627 = vshrl.u32 %v348, 16
      %v629 = vrot.slane %v627, 7
      %v630 = vshll.u32 %v348, 16
      %v632 = vor.u32 %v629, %v630
      %v633 = vsel %vm413, %v625, %v632
      %v634 = vrot.slane %v629, 4
      %v636 = vshrl.u32 %v349, 16
      %v638 = vrot.slane %v636, 7
      %v639 = vshll.u32 %v349, 16
      %v641 = vor.u32 %v638, %v639
      %v642 = vrot.slane %v638, 4
      %v644 = vshrl.u32 %v350, 16
      %v646 = vrot.slane %v644, 7
      %v647 = vshll.u32 %v350, 16
      %v649 = vor.u32 %v646, %v647
      %v650 = vsel %vm413, %v642, %v649
      %v651 = vrot.slane %v646, 4
      %v653 = vshrl.u32 %v351, 16
      %v655 = vrot.slane %v653, 7
      %v656 = vshll.u32 %v351, 16
      %v658 = vor.u32 %v655, %v656
      %v659 = vrot.slane %v655, 4
      %v661 = vshrl.u32 %v352, 16
      %v663 = vrot.slane %v661, 7
      %v664 = vshll.u32 %v352, 16
      %v666 = vor.u32 %v663, %v664
      %v667 = vsel %vm413, %v659, %v666
      %v668 = vrot.slane %v663, 4
      %v670 = vshrl.u32 %v353, 16
      %v672 = vrot.slane %v670, 7
      %v673 = vshll.u32 %v353, 16
      %v675 = vor.u32 %v672, %v673
      %v676 = vrot.slane %v672, 4
      %v678 = vshrl.u32 %v354, 16
      %v680 = vrot.slane %v678, 7
      %v681 = vshll.u32 %v354, 16
      %v683 = vor.u32 %v680, %v681
      %v684 = vsel %vm413, %v676, %v683
      %v685 = vrot.slane %v680, 4
      %s734 = scalar_lea.vmem [#allocation2], 12
      %vm735 = vcmask 27648
      %vm736 = vsmask.f32 7938
      %vm737 = vmand %vm735, %vm736
      %v738 = vld [vmem:[%s734] sm:$0xf]
      %v739 = vsel %vm737, %v420, %v738
      %740 = vst [vmem:[%s734] sm:$0xf] %v739
      %741 = vst.msk [vmem:[%s734 + $0x4] sm:$0xf] %vm355, %v429
      %vm742 = vcmask 24576
      %vm743 = vmand %vm742, %vm411
      %v744 = vld [vmem:[%s734 + $0x8] sm:$0x1]
      %v745 = vsel %vm743, %v430, %v744
      %746 = vst [vmem:[%s734 + $0x8] sm:$0x1] %v745
      %v747 = vld [vmem:[%s734 + $0xc] sm:$0xf]
      %v748 = vsel %vm737, %v437, %v747
      %749 = vst [vmem:[%s734 + $0xc] sm:$0xf] %v748
      %750 = vst.msk [vmem:[%s734 + $0x10] sm:$0xf] %vm355, %v446
      %v751 = vld [vmem:[%s734 + $0x14] sm:$0x1]
      %v752 = vsel %vm743, %v447, %v751
      %753 = vst [vmem:[%s734 + $0x14] sm:$0x1] %v752
      %v754 = vld [vmem:[%s734 + $0x18] sm:$0xf]
      %v755 = vsel %vm737, %v454, %v754
      %756 = vst [vmem:[%s734 + $0x18] sm:$0xf] %v755
      %757 = vst.msk [vmem:[%s734 + $0x1c] sm:$0xf] %vm355, %v463
      %v758 = vld [vmem:[%s734 + $0x20] sm:$0x1]
      %v759 = vsel %vm743, %v464, %v758
      %760 = vst [vmem:[%s734 + $0x20] sm:$0x1] %v759
      %v761 = vld [vmem:[%s734 + $0x24] sm:$0xf]
      %v762 = vsel %vm737, %v471, %v761
      %763 = vst [vmem:[%s734 + $0x24] sm:$0xf] %v762
      %764 = vst.msk [vmem:[%s734 + $0x28] sm:$0xf] %vm355, %v480
      %v765 = vld [vmem:[%s734 + $0x2c] sm:$0x1]
      %v766 = vsel %vm743, %v481, %v765
      %767 = vst [vmem:[%s734 + $0x2c] sm:$0x1] %v766
      %v768 = vld [vmem:[%s734 + $0x30] sm:$0xf]
      %v769 = vsel %vm737, %v488, %v768
      %770 = vst [vmem:[%s734 + $0x30] sm:$0xf] %v769
      %771 = vst.msk [vmem:[%s734 + $0x34] sm:$0xf] %vm355, %v497
      %v772 = vld [vmem:[%s734 + $0x38] sm:$0x1]
      %v773 = vsel %vm743, %v498, %v772
      %774 = vst [vmem:[%s734 + $0x38] sm:$0x1] %v773
      %v775 = vld [vmem:[%s734 + $0x3c] sm:$0xf]
      %v776 = vsel %vm737, %v505, %v775
      %777 = vst [vmem:[%s734 + $0x3c] sm:$0xf] %v776
      %778 = vst.msk [vmem:[%s734 + $0x40] sm:$0xf] %vm355, %v514
      %v779 = vld [vmem:[%s734 + $0x44] sm:$0x1]
      %v780 = vsel %vm743, %v515, %v779
      %781 = vst [vmem:[%s734 + $0x44] sm:$0x1] %v780
      %v782 = vld [vmem:[%s734 + $0x48] sm:$0xf]
      %v783 = vsel %vm737, %v522, %v782
      %784 = vst [vmem:[%s734 + $0x48] sm:$0xf] %v783
      %785 = vst.msk [vmem:[%s734 + $0x4c] sm:$0xf] %vm355, %v531
      %v786 = vld [vmem:[%s734 + $0x50] sm:$0x1]
      %v787 = vsel %vm743, %v532, %v786
      %788 = vst [vmem:[%s734 + $0x50] sm:$0x1] %v787
      %v789 = vld [vmem:[%s734 + $0x54] sm:$0xf]
      %v790 = vsel %vm737, %v539, %v789
      %791 = vst [vmem:[%s734 + $0x54] sm:$0xf] %v790
      %792 = vst.msk [vmem:[%s734 + $0x58] sm:$0xf] %vm355, %v548
      %v793 = vld [vmem:[%s734 + $0x5c] sm:$0x1]
      %v794 = vsel %vm743, %v549, %v793
      %795 = vst [vmem:[%s734 + $0x5c] sm:$0x1] %v794
      %v796 = vld [vmem:[%s734 + $0x60] sm:$0xf]
      %v797 = vsel %vm737, %v556, %v796
      %798 = vst [vmem:[%s734 + $0x60] sm:$0xf] %v797
      %799 = vst.msk [vmem:[%s734 + $0x64] sm:$0xf] %vm355, %v565
      %v800 = vld [vmem:[%s734 + $0x68] sm:$0x1]
      %v801 = vsel %vm743, %v566, %v800
      %802 = vst [vmem:[%s734 + $0x68] sm:$0x1] %v801
      %v803 = vld [vmem:[%s734 + $0x6c] sm:$0xf]
      %v804 = vsel %vm737, %v573, %v803
      %805 = vst [vmem:[%s734 + $0x6c] sm:$0xf] %v804
      %806 = vst.msk [vmem:[%s734 + $0x70] sm:$0xf] %vm355, %v582
      %v807 = vld [vmem:[%s734 + $0x74] sm:$0x1]
      %v808 = vsel %vm743, %v583, %v807
      %809 = vst [vmem:[%s734 + $0x74] sm:$0x1] %v808
      %v810 = vld [vmem:[%s734 + $0x78] sm:$0xf]
      %v811 = vsel %vm737, %v590, %v810
      %812 = vst [vmem:[%s734 + $0x78] sm:$0xf] %v811
      %813 = vst.msk [vmem:[%s734 + $0x7c] sm:$0xf] %vm355, %v599
      %v814 = vld [vmem:[%s734 + $0x80] sm:$0x1]
      %v815 = vsel %vm743, %v600, %v814
      %816 = vst [vmem:[%s734 + $0x80] sm:$0x1] %v815
      %v817 = vld [vmem:[%s734 + $0x84] sm:$0xf]
      %v818 = vsel %vm737, %v607, %v817
      %819 = vst [vmem:[%s734 + $0x84] sm:$0xf] %v818
      %820 = vst.msk [vmem:[%s734 + $0x88] sm:$0xf] %vm355, %v616
      %v821 = vld [vmem:[%s734 + $0x8c] sm:$0x1]
      %v822 = vsel %vm743, %v617, %v821
      %823 = vst [vmem:[%s734 + $0x8c] sm:$0x1] %v822
      %v824 = vld [vmem:[%s734 + $0x90] sm:$0xf]
      %v825 = vsel %vm737, %v624, %v824
      %826 = vst [vmem:[%s734 + $0x90] sm:$0xf] %v825
      %827 = vst.msk [vmem:[%s734 + $0x94] sm:$0xf] %vm355, %v633
      %v828 = vld [vmem:[%s734 + $0x98] sm:$0x1]
      %v829 = vsel %vm743, %v634, %v828
      %830 = vst [vmem:[%s734 + $0x98] sm:$0x1] %v829
      %v831 = vld [vmem:[%s734 + $0x9c] sm:$0xf]
      %v832 = vsel %vm737, %v641, %v831
      %833 = vst [vmem:[%s734 + $0x9c] sm:$0xf] %v832
      %834 = vst.msk [vmem:[%s734 + $0xa0] sm:$0xf] %vm355, %v650
      %v835 = vld [vmem:[%s734 + $0xa4] sm:$0x1]
      %v836 = vsel %vm743, %v651, %v835
      %837 = vst [vmem:[%s734 + $0xa4] sm:$0x1] %v836
      %v838 = vld [vmem:[%s734 + $0xa8] sm:$0xf]
      %v839 = vsel %vm737, %v658, %v838
      %840 = vst [vmem:[%s734 + $0xa8] sm:$0xf] %v839
      %841 = vst.msk [vmem:[%s734 + $0xac] sm:$0xf] %vm355, %v667
      %v842 = vld [vmem:[%s734 + $0xb0] sm:$0x1]
      %v843 = vsel %vm743, %v668, %v842
      %844 = vst [vmem:[%s734 + $0xb0] sm:$0x1] %v843
      %v845 = vld [vmem:[%s734 + $0xb4] sm:$0xf]
      %v846 = vsel %vm737, %v675, %v845
      %847 = vst [vmem:[%s734 + $0xb4] sm:$0xf] %v846
      %848 = vst.msk [vmem:[%s734 + $0xb8] sm:$0xf] %vm355, %v684
      %v849 = vld [vmem:[%s734 + $0xbc] sm:$0x1]
      %v850 = vsel %vm743, %v685, %v849
      %851 = vst [vmem:[%s734 + $0xbc] sm:$0x1] %v850
      %v852 = vld [vmem:[#allocation2] sm:$0xf]
      %v853 = vld [vmem:[#allocation2 + $0x4] sm:$0xf]
      %v854 = vld [vmem:[#allocation2 + $0xc] sm:$0xf]
      %v855 = vld [vmem:[#allocation2 + $0x10] sm:$0xf]
      %v856 = vld [vmem:[#allocation2 + $0x18] sm:$0xf]
      %v857 = vld [vmem:[#allocation2 + $0x1c] sm:$0xf]
      %v858 = vld [vmem:[#allocation2 + $0x24] sm:$0xf]
      %v859 = vld [vmem:[#allocation2 + $0x28] sm:$0xf]
      %v860 = vld [vmem:[#allocation2 + $0x30] sm:$0xf]
      %v861 = vld [vmem:[#allocation2 + $0x34] sm:$0xf]
      %v862 = vld [vmem:[#allocation2 + $0x3c] sm:$0xf]
      %v863 = vld [vmem:[#allocation2 + $0x40] sm:$0xf]
      %v864 = vld [vmem:[#allocation2 + $0x48] sm:$0xf]
      %v865 = vld [vmem:[#allocation2 + $0x4c] sm:$0xf]
      %v866 = vld [vmem:[#allocation2 + $0x54] sm:$0xf]
      %v867 = vld [vmem:[#allocation2 + $0x58] sm:$0xf]
      %v868 = vld [vmem:[#allocation2 + $0x60] sm:$0xf]
      %v869 = vld [vmem:[#allocation2 + $0x64] sm:$0xf]
      %v870 = vld [vmem:[#allocation2 + $0x6c] sm:$0xf]
      %v871 = vld [vmem:[#allocation2 + $0x70] sm:$0xf]
      %v872 = vld [vmem:[#allocation2 + $0x78] sm:$0xf]
      %v873 = vld [vmem:[#allocation2 + $0x7c] sm:$0xf]
      %v874 = vld [vmem:[#allocation2 + $0x84] sm:$0xf]
      %v875 = vld [vmem:[#allocation2 + $0x88] sm:$0xf]
      %v876 = vld [vmem:[#allocation2 + $0x90] sm:$0xf]
      %v877 = vld [vmem:[#allocation2 + $0x94] sm:$0xf]
      %v878 = vld [vmem:[#allocation2 + $0x9c] sm:$0xf]
      %v879 = vld [vmem:[#allocation2 + $0xa0] sm:$0xf]
      %v880 = vld [vmem:[#allocation2 + $0xa8] sm:$0xf]
      %v881 = vld [vmem:[#allocation2 + $0xac] sm:$0xf]
      %v882 = vld [vmem:[#allocation2 + $0xb4] sm:$0xf]
      %v883 = vld [vmem:[#allocation2 + $0xb8] sm:$0xf]
      %v884 = vld [vmem:[%s301] sm:$0x3]
      %v885 = vld [vmem:[#allocation2 + $0x8] sm:$0x1]
      %v886 = vld [vmem:[#allocation2 + $0x14] sm:$0x1]
      %v887 = vld [vmem:[#allocation2 + $0x20] sm:$0x1]
      %v888 = vld [vmem:[#allocation2 + $0x2c] sm:$0x1]
      %v889 = vld [vmem:[#allocation2 + $0x38] sm:$0x1]
      %v890 = vld [vmem:[#allocation2 + $0x44] sm:$0x1]
      %v891 = vld [vmem:[#allocation2 + $0x50] sm:$0x1]
      %v892 = vld [vmem:[#allocation2 + $0x5c] sm:$0x1]
      %v893 = vld [vmem:[#allocation2 + $0x68] sm:$0x1]
      %v894 = vld [vmem:[#allocation2 + $0x74] sm:$0x1]
      %v895 = vld [vmem:[#allocation2 + $0x80] sm:$0x1]
      %v896 = vld [vmem:[#allocation2 + $0x8c] sm:$0x1]
      %v897 = vld [vmem:[#allocation2 + $0x98] sm:$0x1]
      %v898 = vld [vmem:[#allocation2 + $0xa4] sm:$0x1]
      %v899 = vld [vmem:[#allocation2 + $0xb0] sm:$0x1]
      %v900 = vld [vmem:[#allocation2 + $0xbc] sm:$0x1]
      %vm901 = vsmask.f32 3328
      %vm902 = vsmask.f32 7440
      %vm903 = vmor %vm901, %vm902
      %v905 = vshrl.u32 %v852, 16
      %v907 = vrot.slane %v905, 4
      %v908 = vshll.u32 %v852, 16
      %v910 = vrot.slane %v908, 5
      %v911 = vor.u32 %v907, %v910
      %v912 = vrot.slane %v911, 4
      %v914 = vshll.u32 %v853, 16
      %v916 = vrot.slane %v914, 5
      %v917 = vsel %vm903, %v912, %v916
      %v918 = vshrl.u32 %v853, 16
      %v920 = vrot.slane %v918, 4
      %v921 = vor.u32 %v920, %v916
      %v922 = vrot.slane %v921, 4
      %v924 = vshll.u32 %v885, 16
      %v926 = vrot.slane %v924, 5
      %v927 = vsel %vm903, %v922, %v926
      %v929 = vshrl.u32 %v854, 16
      %v931 = vrot.slane %v929, 4
      %v932 = vshll.u32 %v854, 16
      %v934 = vrot.slane %v932, 5
      %v935 = vor.u32 %v931, %v934
      %v936 = vrot.slane %v935, 4
      %v938 = vshll.u32 %v855, 16
      %v940 = vrot.slane %v938, 5
      %v941 = vsel %vm903, %v936, %v940
      %v942 = vshrl.u32 %v855, 16
      %v944 = vrot.slane %v942, 4
      %v945 = vor.u32 %v944, %v940
      %v946 = vrot.slane %v945, 4
      %v948 = vshll.u32 %v886, 16
      %v950 = vrot.slane %v948, 5
      %v951 = vsel %vm903, %v946, %v950
      %v953 = vshrl.u32 %v856, 16
      %v955 = vrot.slane %v953, 4
      %v956 = vshll.u32 %v856, 16
      %v958 = vrot.slane %v956, 5
      %v959 = vor.u32 %v955, %v958
      %v960 = vrot.slane %v959, 4
      %v962 = vshll.u32 %v857, 16
      %v964 = vrot.slane %v962, 5
      %v965 = vsel %vm903, %v960, %v964
      %v966 = vshrl.u32 %v857, 16
      %v968 = vrot.slane %v966, 4
      %v969 = vor.u32 %v968, %v964
      %v970 = vrot.slane %v969, 4
      %v972 = vshll.u32 %v887, 16
      %v974 = vrot.slane %v972, 5
      %v975 = vsel %vm903, %v970, %v974
      %v977 = vshrl.u32 %v858, 16
      %v979 = vrot.slane %v977, 4
      %v980 = vshll.u32 %v858, 16
      %v982 = vrot.slane %v980, 5
      %v983 = vor.u32 %v979, %v982
      %v984 = vrot.slane %v983, 4
      %v986 = vshll.u32 %v859, 16
      %v988 = vrot.slane %v986, 5
      %v989 = vsel %vm903, %v984, %v988
      %v990 = vshrl.u32 %v859, 16
      %v992 = vrot.slane %v990, 4
      %v993 = vor.u32 %v992, %v988
      %v994 = vrot.slane %v993, 4
      %v996 = vshll.u32 %v888, 16
      %v998 = vrot.slane %v996, 5
      %v999 = vsel %vm903, %v994, %v998
      %v1001 = vshrl.u32 %v860, 16
      %v1003 = vrot.slane %v1001, 4
      %v1004 = vshll.u32 %v860, 16
      %v1006 = vrot.slane %v1004, 5
      %v1007 = vor.u32 %v1003, %v1006
      %v1008 = vrot.slane %v1007, 4
      %v1010 = vshll.u32 %v861, 16
      %v1012 = vrot.slane %v1010, 5
      %v1013 = vsel %vm903, %v1008, %v1012
      %v1014 = vshrl.u32 %v861, 16
      %v1016 = vrot.slane %v1014, 4
      %v1017 = vor.u32 %v1016, %v1012
      %v1018 = vrot.slane %v1017, 4
      %v1020 = vshll.u32 %v889, 16
      %v1022 = vrot.slane %v1020, 5
      %v1023 = vsel %vm903, %v1018, %v1022
      %v1025 = vshrl.u32 %v862, 16
      %v1027 = vrot.slane %v1025, 4
      %v1028 = vshll.u32 %v862, 16
      %v1030 = vrot.slane %v1028, 5
      %v1031 = vor.u32 %v1027, %v1030
      %v1032 = vrot.slane %v1031, 4
      %v1034 = vshll.u32 %v863, 16
      %v1036 = vrot.slane %v1034, 5
      %v1037 = vsel %vm903, %v1032, %v1036
      %v1038 = vshrl.u32 %v863, 16
      %v1040 = vrot.slane %v1038, 4
      %v1041 = vor.u32 %v1040, %v1036
      %v1042 = vrot.slane %v1041, 4
      %v1044 = vshll.u32 %v890, 16
      %v1046 = vrot.slane %v1044, 5
      %v1047 = vsel %vm903, %v1042, %v1046
      %v1049 = vshrl.u32 %v864, 16
      %v1051 = vrot.slane %v1049, 4
      %v1052 = vshll.u32 %v864, 16
      %v1054 = vrot.slane %v1052, 5
      %v1055 = vor.u32 %v1051, %v1054
      %v1056 = vrot.slane %v1055, 4
      %v1058 = vshll.u32 %v865, 16
      %v1060 = vrot.slane %v1058, 5
      %v1061 = vsel %vm903, %v1056, %v1060
      %v1062 = vshrl.u32 %v865, 16
      %v1064 = vrot.slane %v1062, 4
      %v1065 = vor.u32 %v1064, %v1060
      %v1066 = vrot.slane %v1065, 4
      %v1068 = vshll.u32 %v891, 16
      %v1070 = vrot.slane %v1068, 5
      %v1071 = vsel %vm903, %v1066, %v1070
      %v1073 = vshrl.u32 %v866, 16
      %v1075 = vrot.slane %v1073, 4
      %v1076 = vshll.u32 %v866, 16
      %v1078 = vrot.slane %v1076, 5
      %v1079 = vor.u32 %v1075, %v1078
      %v1080 = vrot.slane %v1079, 4
      %v1082 = vshll.u32 %v867, 16
      %v1084 = vrot.slane %v1082, 5
      %v1085 = vsel %vm903, %v1080, %v1084
      %v1086 = vshrl.u32 %v867, 16
      %v1088 = vrot.slane %v1086, 4
      %v1089 = vor.u32 %v1088, %v1084
      %v1090 = vrot.slane %v1089, 4
      %v1092 = vshll.u32 %v892, 16
      %v1094 = vrot.slane %v1092, 5
      %v1095 = vsel %vm903, %v1090, %v1094
      %v1097 = vshrl.u32 %v868, 16
      %v1099 = vrot.slane %v1097, 4
      %v1100 = vshll.u32 %v868, 16
      %v1102 = vrot.slane %v1100, 5
      %v1103 = vor.u32 %v1099, %v1102
      %v1104 = vrot.slane %v1103, 4
      %v1106 = vshll.u32 %v869, 16
      %v1108 = vrot.slane %v1106, 5
      %v1109 = vsel %vm903, %v1104, %v1108
      %v1110 = vshrl.u32 %v869, 16
      %v1112 = vrot.slane %v1110, 4
      %v1113 = vor.u32 %v1112, %v1108
      %v1114 = vrot.slane %v1113, 4
      %v1116 = vshll.u32 %v893, 16
      %v1118 = vrot.slane %v1116, 5
      %v1119 = vsel %vm903, %v1114, %v1118
      %v1121 = vshrl.u32 %v870, 16
      %v1123 = vrot.slane %v1121, 4
      %v1124 = vshll.u32 %v870, 16
      %v1126 = vrot.slane %v1124, 5
      %v1127 = vor.u32 %v1123, %v1126
      %v1128 = vrot.slane %v1127, 4
      %v1130 = vshll.u32 %v871, 16
      %v1132 = vrot.slane %v1130, 5
      %v1133 = vsel %vm903, %v1128, %v1132
      %v1134 = vshrl.u32 %v871, 16
      %v1136 = vrot.slane %v1134, 4
      %v1137 = vor.u32 %v1136, %v1132
      %v1138 = vrot.slane %v1137, 4
      %v1140 = vshll.u32 %v894, 16
      %v1142 = vrot.slane %v1140, 5
      %v1143 = vsel %vm903, %v1138, %v1142
      %v1145 = vshrl.u32 %v872, 16
      %v1147 = vrot.slane %v1145, 4
      %v1148 = vshll.u32 %v872, 16
      %v1150 = vrot.slane %v1148, 5
      %v1151 = vor.u32 %v1147, %v1150
      %v1152 = vrot.slane %v1151, 4
      %v1154 = vshll.u32 %v873, 16
      %v1156 = vrot.slane %v1154, 5
      %v1157 = vsel %vm903, %v1152, %v1156
      %v1158 = vshrl.u32 %v873, 16
      %v1160 = vrot.slane %v1158, 4
      %v1161 = vor.u32 %v1160, %v1156
      %v1162 = vrot.slane %v1161, 4
      %v1164 = vshll.u32 %v895, 16
      %v1166 = vrot.slane %v1164, 5
      %v1167 = vsel %vm903, %v1162, %v1166
      %v1169 = vshrl.u32 %v874, 16
      %v1171 = vrot.slane %v1169, 4
      %v1172 = vshll.u32 %v874, 16
      %v1174 = vrot.slane %v1172, 5
      %v1175 = vor.u32 %v1171, %v1174
      %v1176 = vrot.slane %v1175, 4
      %v1178 = vshll.u32 %v875, 16
      %v1180 = vrot.slane %v1178, 5
      %v1181 = vsel %vm903, %v1176, %v1180
      %v1182 = vshrl.u32 %v875, 16
      %v1184 = vrot.slane %v1182, 4
      %v1185 = vor.u32 %v1184, %v1180
      %v1186 = vrot.slane %v1185, 4
      %v1188 = vshll.u32 %v896, 16
      %v1190 = vrot.slane %v1188, 5
      %v1191 = vsel %vm903, %v1186, %v1190
      %v1193 = vshrl.u32 %v876, 16
      %v1195 = vrot.slane %v1193, 4
      %v1196 = vshll.u32 %v876, 16
      %v1198 = vrot.slane %v1196, 5
      %v1199 = vor.u32 %v1195, %v1198
      %v1200 = vrot.slane %v1199, 4
      %v1202 = vshll.u32 %v877, 16
      %v1204 = vrot.slane %v1202, 5
      %v1205 = vsel %vm903, %v1200, %v1204
      %v1206 = vshrl.u32 %v877, 16
      %v1208 = vrot.slane %v1206, 4
      %v1209 = vor.u32 %v1208, %v1204
      %v1210 = vrot.slane %v1209, 4
      %v1212 = vshll.u32 %v897, 16
      %v1214 = vrot.slane %v1212, 5
      %v1215 = vsel %vm903, %v1210, %v1214
      %v1217 = vshrl.u32 %v878, 16
      %v1219 = vrot.slane %v1217, 4
      %v1220 = vshll.u32 %v878, 16
      %v1222 = vrot.slane %v1220, 5
      %v1223 = vor.u32 %v1219, %v1222
      %v1224 = vrot.slane %v1223, 4
      %v1226 = vshll.u32 %v879, 16
      %v1228 = vrot.slane %v1226, 5
      %v1229 = vsel %vm903, %v1224, %v1228
      %v1230 = vshrl.u32 %v879, 16
      %v1232 = vrot.slane %v1230, 4
      %v1233 = vor.u32 %v1232, %v1228
      %v1234 = vrot.slane %v1233, 4
      %v1236 = vshll.u32 %v898, 16
      %v1238 = vrot.slane %v1236, 5
      %v1239 = vsel %vm903, %v1234, %v1238
      %v1241 = vshrl.u32 %v880, 16
      %v1243 = vrot.slane %v1241, 4
      %v1244 = vshll.u32 %v880, 16
      %v1246 = vrot.slane %v1244, 5
      %v1247 = vor.u32 %v1243, %v1246
      %v1248 = vrot.slane %v1247, 4
      %v1250 = vshll.u32 %v881, 16
      %v1252 = vrot.slane %v1250, 5
      %v1253 = vsel %vm903, %v1248, %v1252
      %v1254 = vshrl.u32 %v881, 16
      %v1256 = vrot.slane %v1254, 4
      %v1257 = vor.u32 %v1256, %v1252
      %v1258 = vrot.slane %v1257, 4
      %v1260 = vshll.u32 %v899, 16
      %v1262 = vrot.slane %v1260, 5
      %v1263 = vsel %vm903, %v1258, %v1262
      %v1265 = vshrl.u32 %v882, 16
      %v1267 = vrot.slane %v1265, 4
      %v1268 = vshll.u32 %v882, 16
      %v1270 = vrot.slane %v1268, 5
      %v1271 = vor.u32 %v1267, %v1270
      %v1272 = vrot.slane %v1271, 4
      %v1274 = vshll.u32 %v883, 16
      %v1276 = vrot.slane %v1274, 5
      %v1277 = vsel %vm903, %v1272, %v1276
      %v1278 = vshrl.u32 %v883, 16
      %v1280 = vrot.slane %v1278, 4
      %v1281 = vor.u32 %v1280, %v1276
      %v1282 = vrot.slane %v1281, 4
      %v1284 = vshll.u32 %v900, 16
      %v1286 = vrot.slane %v1284, 5
      %v1287 = vsel %vm903, %v1282, %v1286
      %s1288 = scalar_lea.vmem %s301, 2
      %v1289 = vld [vmem:[%s1288] sm:$0x3]
      %v1290 = vunpack.c.l.b16 %v917
      %v1291 = vunpack.c.l.b16 %v927
      %v1292 = vunpack.c.l.b16 %v941
      %v1293 = vunpack.c.l.b16 %v951
      %v1294 = vunpack.c.l.b16 %v965
      %v1295 = vunpack.c.l.b16 %v975
      %v1296 = vunpack.c.l.b16 %v989
      %v1297 = vunpack.c.l.b16 %v999
      %v1298 = vunpack.c.l.b16 %v1013
      %v1299 = vunpack.c.l.b16 %v1023
      %v1300 = vunpack.c.l.b16 %v1037
      %v1301 = vunpack.c.l.b16 %v1047
      %v1302 = vunpack.c.l.b16 %v1061
      %v1303 = vunpack.c.l.b16 %v1071
      %v1304 = vunpack.c.l.b16 %v1085
      %v1305 = vunpack.c.l.b16 %v1095
      %v1306 = vunpack.c.l.b16 %v1109
      %v1307 = vunpack.c.l.b16 %v1119
      %v1308 = vunpack.c.l.b16 %v1133
      %v1309 = vunpack.c.l.b16 %v1143
      %v1310 = vunpack.c.l.b16 %v1157
      %v1311 = vunpack.c.l.b16 %v1167
      %v1312 = vunpack.c.l.b16 %v1181
      %v1313 = vunpack.c.l.b16 %v1191
      %v1314 = vunpack.c.l.b16 %v1205
      %v1315 = vunpack.c.l.b16 %v1215
      %v1316 = vunpack.c.l.b16 %v1229
      %v1317 = vunpack.c.l.b16 %v1239
      %v1318 = vunpack.c.l.b16 %v1253
      %v1319 = vunpack.c.l.b16 %v1263
      %v1320 = vunpack.c.l.b16 %v1277
      %v1321 = vunpack.c.l.b16 %v1287
      %v1322 = vpack.c.b16 %v1291, %v1290
      %v1323 = vpack.c.b16 %v1293, %v1292
      %v1324 = vpack.c.b16 %v1295, %v1294
      %v1325 = vpack.c.b16 %v1297, %v1296
      %v1326 = vpack.c.b16 %v1299, %v1298
      %v1327 = vpack.c.b16 %v1301, %v1300
      %v1328 = vpack.c.b16 %v1303, %v1302
      %v1329 = vpack.c.b16 %v1305, %v1304
      %v1330 = vpack.c.b16 %v1307, %v1306
      %v1331 = vpack.c.b16 %v1309, %v1308
      %v1332 = vpack.c.b16 %v1311, %v1310
      %v1333 = vpack.c.b16 %v1313, %v1312
      %v1334 = vpack.c.b16 %v1315, %v1314
      %v1335 = vpack.c.b16 %v1317, %v1316
      %v1336 = vpack.c.b16 %v1319, %v1318
      %v1337 = vpack.c.b16 %v1321, %v1320
      %vm1338 = vcmask 31744
      %v1340 = vsel %vm1338, %v1322, 0
      %v1343 = vsel %vm1338, %v1323, 0
      %v1346 = vsel %vm1338, %v1324, 0
      %v1349 = vsel %vm1338, %v1325, 0
      %v1352 = vsel %vm1338, %v1326, 0
      %v1355 = vsel %vm1338, %v1327, 0
      %v1358 = vsel %vm1338, %v1328, 0
      %v1361 = vsel %vm1338, %v1329, 0
      %v1364 = vsel %vm1338, %v1330, 0
      %v1367 = vsel %vm1338, %v1331, 0
      %v1370 = vsel %vm1338, %v1332, 0
      %v1373 = vsel %vm1338, %v1333, 0
      %v1376 = vsel %vm1338, %v1334, 0
      %v1379 = vsel %vm1338, %v1335, 0
      %v1382 = vsel %vm1338, %v1336, 0
      %v1385 = vsel %vm1338, %v1337, 0
      %vm1387 = vcmask 1041408
      %v1389 = vsel %vm1387, %v1289, 0
      %1391 = vmatprep.subr.bf16.mxu0 0
      %1392 = vmatpush1.bf16.msra.mxu0 %v1389
      %1393 = vmatprep.subr.bf16.mxu0 0
      %1394 = vmatpush1.bf16.msra.mxu0 0
      %1395 = vmatprep.subr.bf16.mxu0 0
      %1396 = vmatpush1.bf16.msra.mxu0 0
      %1397 = vmatprep.subr.bf16.mxu0 0
      %1398 = vmatpush1.bf16.msra.mxu0 0
      %1399 = vmatprep.subr.bf16.mxu0 0
      %1400 = vmatpush1.bf16.msra.mxu0 0
      %1401 = vmatprep.subr.bf16.mxu0 0
      %1402 = vmatpush1.bf16.msra.mxu0 0
      %1403 = vmatprep.subr.bf16.mxu0 0
      %1404 = vmatpush1.bf16.msra.mxu0 0
      %1405 = vmatprep.subr.bf16.mxu0 0
      %1406 = vmatpush1.bf16.msra.mxu0 0
      %1407 = vmatprep.subr.bf16.mxu0 0
      %1408 = vmatpush1.bf16.msra.mxu0 0
      %1409 = vmatprep.subr.bf16.mxu0 0
      %1410 = vmatpush1.bf16.msra.mxu0 0
      %1411 = vmatprep.subr.bf16.mxu0 0
      %1412 = vmatpush1.bf16.msra.mxu0 0
      %1413 = vmatprep.subr.bf16.mxu0 0
      %1414 = vmatpush1.bf16.msra.mxu0 0
      %1415 = vmatprep.subr.bf16.mxu0 0
      %1416 = vmatpush1.bf16.msra.mxu0 0
      %1417 = vmatprep.subr.bf16.mxu0 0
      %1418 = vmatpush1.bf16.msra.mxu0 0
      %1419 = vmatprep.subr.bf16.mxu0 0
      %1420 = vmatpush1.bf16.msra.mxu0 0
      %1421 = vmatprep.subr.bf16.mxu0 0
      %1422 = vmatpush1.bf16.msra.mxu0 0
      %1423 = vmatprep.mubr.bf16.mxu0 0
      %1424 = vmatmul.mubr.bf16.gmra.mrb[0].mxu0 %v1340
      %v1425 = vpop.f32.mrb[0].mxu0
      %v1426 = vadd.f32 0.0, %v1425
      %v1427 = vpop.f32.mrb[0].mxu0
      %v1428 = vpop.f32.mrb[0].mxu0
      %v1429 = vadd.f32 0.0, %v1428
      %v1430 = vpop.f32.mrb[0].mxu0
      %1431 = vmatprep.mubr.bf16.mxu0 0
      %1432 = vmatmul.mubr.bf16.gmra.mrb[0].mxu0 %v1343
      %v1433 = vpop.f32.mrb[0].mxu0
      %v1434 = vadd.f32 0.0, %v1433
      %v1435 = vpop.f32.mrb[0].mxu0
      %v1436 = vpop.f32.mrb[0].mxu0
      %v1437 = vadd.f32 0.0, %v1436
      %v1438 = vpop.f32.mrb[0].mxu0
      %1439 = vmatprep.mubr.bf16.mxu0 0
      %1440 = vmatmul.mubr.bf16.gmra.mrb[0].mxu0 %v1346
      %v1441 = vpop.f32.mrb[0].mxu0
      %v1442 = vadd.f32 0.0, %v1441
      %v1443 = vpop.f32.mrb[0].mxu0
      %v1444 = vpop.f32.mrb[0].mxu0
      %v1445 = vadd.f32 0.0, %v1444
      %v1446 = vpop.f32.mrb[0].mxu0
      %1447 = vmatprep.mubr.bf16.mxu0 0
      %1448 = vmatmul.mubr.bf16.gmra.mrb[0].mxu0 %v1349
      %v1449 = vpop.f32.mrb[0].mxu0
      %v1450 = vadd.f32 0.0, %v1449
      %v1451 = vpop.f32.mrb[0].mxu0
      %v1452 = vpop.f32.mrb[0].mxu0
      %v1453 = vadd.f32 0.0, %v1452
      %v1454 = vpop.f32.mrb[0].mxu0
      %1455 = vmatprep.mubr.bf16.mxu0 0
      %1456 = vmatmul.mubr.bf16.gmra.mrb[0].mxu0 %v1352
      %v1457 = vpop.f32.mrb[0].mxu0
      %v1458 = vadd.f32 0.0, %v1457
      %v1459 = vpop.f32.mrb[0].mxu0
      %v1460 = vpop.f32.mrb[0].mxu0
      %v1461 = vadd.f32 0.0, %v1460
      %v1462 = vpop.f32.mrb[0].mxu0
      %1463 = vmatprep.mubr.bf16.mxu0 0
      %1464 = vmatmul.mubr.bf16.gmra.mrb[0].mxu0 %v1355
      %v1465 = vpop.f32.mrb[0].mxu0
      %v1466 = vadd.f32 0.0, %v1465
      %v1467 = vpop.f32.mrb[0].mxu0
      %v1468 = vpop.f32.mrb[0].mxu0
      %v1469 = vadd.f32 0.0, %v1468
      %v1470 = vpop.f32.mrb[0].mxu0
      %1471 = vmatprep.mubr.bf16.mxu0 0
      %1472 = vmatmul.mubr.bf16.gmra.mrb[0].mxu0 %v1358
      %v1473 = vpop.f32.mrb[0].mxu0
      %v1474 = vadd.f32 0.0, %v1473
      %v1475 = vpop.f32.mrb[0].mxu0
      %v1476 = vpop.f32.mrb[0].mxu0
      %v1477 = vadd.f32 0.0, %v1476
      %v1478 = vpop.f32.mrb[0].mxu0
      %1479 = vmatprep.mubr.bf16.mxu0 0
      %1480 = vmatmul.mubr.bf16.gmra.mrb[0].mxu0 %v1361
      %v1481 = vpop.f32.mrb[0].mxu0
      %v1482 = vadd.f32 0.0, %v1481
      %v1483 = vpop.f32.mrb[0].mxu0
      %v1484 = vpop.f32.mrb[0].mxu0
      %v1485 = vadd.f32 0.0, %v1484
      %v1486 = vpop.f32.mrb[0].mxu0
      %1487 = vmatprep.mubr.bf16.mxu0 0
      %1488 = vmatmul.mubr.bf16.gmra.mrb[0].mxu0 %v1364
      %v1489 = vpop.f32.mrb[0].mxu0
      %v1490 = vadd.f32 0.0, %v1489
      %v1491 = vpop.f32.mrb[0].mxu0
      %v1492 = vpop.f32.mrb[0].mxu0
      %v1493 = vadd.f32 0.0, %v1492
      %v1494 = vpop.f32.mrb[0].mxu0
      %1495 = vmatprep.mubr.bf16.mxu0 0
      %1496 = vmatmul.mubr.bf16.gmra.mrb[0].mxu0 %v1367
      %v1497 = vpop.f32.mrb[0].mxu0
      %v1498 = vadd.f32 0.0, %v1497
      %v1499 = vpop.f32.mrb[0].mxu0
      %v1500 = vpop.f32.mrb[0].mxu0
      %v1501 = vadd.f32 0.0, %v1500
      %v1502 = vpop.f32.mrb[0].mxu0
      %1503 = vmatprep.mubr.bf16.mxu0 0
      %1504 = vmatmul.mubr.bf16.gmra.mrb[0].mxu0 %v1370
      %v1505 = vpop.f32.mrb[0].mxu0
      %v1506 = vadd.f32 0.0, %v1505
      %v1507 = vpop.f32.mrb[0].mxu0
      %v1508 = vpop.f32.mrb[0].mxu0
      %v1509 = vadd.f32 0.0, %v1508
      %v1510 = vpop.f32.mrb[0].mxu0
      %1511 = vmatprep.mubr.bf16.mxu0 0
      %1512 = vmatmul.mubr.bf16.gmra.mrb[0].mxu0 %v1373
      %v1513 = vpop.f32.mrb[0].mxu0
      %v1514 = vadd.f32 0.0, %v1513
      %v1515 = vpop.f32.mrb[0].mxu0
      %v1516 = vpop.f32.mrb[0].mxu0
      %v1517 = vadd.f32 0.0, %v1516
      %v1518 = vpop.f32.mrb[0].mxu0
      %1519 = vmatprep.mubr.bf16.mxu0 0
      %1520 = vmatmul.mubr.bf16.gmra.mrb[0].mxu0 %v1376
      %v1521 = vpop.f32.mrb[0].mxu0
      %v1522 = vadd.f32 0.0, %v1521
      %v1523 = vpop.f32.mrb[0].mxu0
      %v1524 = vpop.f32.mrb[0].mxu0
      %v1525 = vadd.f32 0.0, %v1524
      %v1526 = vpop.f32.mrb[0].mxu0
      %1527 = vmatprep.mubr.bf16.mxu0 0
      %1528 = vmatmul.mubr.bf16.gmra.mrb[0].mxu0 %v1379
      %v1529 = vpop.f32.mrb[0].mxu0
      %v1530 = vadd.f32 0.0, %v1529
      %v1531 = vpop.f32.mrb[0].mxu0
      %v1532 = vpop.f32.mrb[0].mxu0
      %v1533 = vadd.f32 0.0, %v1532
      %v1534 = vpop.f32.mrb[0].mxu0
      %1535 = vmatprep.mubr.bf16.mxu0 0
      %1536 = vmatmul.mubr.bf16.gmra.mrb[0].mxu0 %v1382
      %v1537 = vpop.f32.mrb[0].mxu0
      %v1538 = vadd.f32 0.0, %v1537
      %v1539 = vpop.f32.mrb[0].mxu0
      %v1540 = vpop.f32.mrb[0].mxu0
      %v1541 = vadd.f32 0.0, %v1540
      %v1542 = vpop.f32.mrb[0].mxu0
      %1543 = vmatprep.mubr.bf16.mxu0 0
      %1544 = vmatmul.mubr.bf16.gmra.mrb[0].mxu0 %v1385
      %v1545 = vpop.f32.mrb[0].mxu0
      %v1546 = vadd.f32 0.0, %v1545
      %v1547 = vpop.f32.mrb[0].mxu0
      %v1548 = vpop.f32.mrb[0].mxu0
      %v1549 = vadd.f32 0.0, %v1548
      %v1550 = vpop.f32.mrb[0].mxu0
      %1551 = vdwg.mxu0
      %v1584 = vunpack.c.l.b16 %v852
      %v1585 = vunpack.c.l.b16 %v853
      %v1586 = vunpack.c.l.b16 %v854
      %v1587 = vunpack.c.l.b16 %v855
      %v1588 = vunpack.c.l.b16 %v856
      %v1589 = vunpack.c.l.b16 %v857
      %v1590 = vunpack.c.l.b16 %v858
      %v1591 = vunpack.c.l.b16 %v859
      %v1592 = vunpack.c.l.b16 %v860
      %v1593 = vunpack.c.l.b16 %v861
      %v1594 = vunpack.c.l.b16 %v862
      %v1595 = vunpack.c.l.b16 %v863
      %v1596 = vunpack.c.l.b16 %v864
      %v1597 = vunpack.c.l.b16 %v865
      %v1598 = vunpack.c.l.b16 %v866
      %v1599 = vunpack.c.l.b16 %v867
      %v1600 = vunpack.c.l.b16 %v868
      %v1601 = vunpack.c.l.b16 %v869
      %v1602 = vunpack.c.l.b16 %v870
      %v1603 = vunpack.c.l.b16 %v871
      %v1604 = vunpack.c.l.b16 %v872
      %v1605 = vunpack.c.l.b16 %v873
      %v1606 = vunpack.c.l.b16 %v874
      %v1607 = vunpack.c.l.b16 %v875
      %v1608 = vunpack.c.l.b16 %v876
      %v1609 = vunpack.c.l.b16 %v877
      %v1610 = vunpack.c.l.b16 %v878
      %v1611 = vunpack.c.l.b16 %v879
      %v1612 = vunpack.c.l.b16 %v880
      %v1613 = vunpack.c.l.b16 %v881
      %v1614 = vunpack.c.l.b16 %v882
      %v1615 = vunpack.c.l.b16 %v883
      %v1616 = vpack.c.b16 %v1585, %v1584
      %v1617 = vpack.c.b16 %v1587, %v1586
      %v1618 = vpack.c.b16 %v1589, %v1588
      %v1619 = vpack.c.b16 %v1591, %v1590
      %v1620 = vpack.c.b16 %v1593, %v1592
      %v1621 = vpack.c.b16 %v1595, %v1594
      %v1622 = vpack.c.b16 %v1597, %v1596
      %v1623 = vpack.c.b16 %v1599, %v1598
      %v1624 = vpack.c.b16 %v1601, %v1600
      %v1625 = vpack.c.b16 %v1603, %v1602
      %v1626 = vpack.c.b16 %v1605, %v1604
      %v1627 = vpack.c.b16 %v1607, %v1606
      %v1628 = vpack.c.b16 %v1609, %v1608
      %v1629 = vpack.c.b16 %v1611, %v1610
      %v1630 = vpack.c.b16 %v1613, %v1612
      %v1631 = vpack.c.b16 %v1615, %v1614
      %v1633 = vsel %vm1338, %v1616, 0
      %v1636 = vsel %vm1338, %v1617, 0
      %v1639 = vsel %vm1338, %v1618, 0
      %v1642 = vsel %vm1338, %v1619, 0
      %v1645 = vsel %vm1338, %v1620, 0
      %v1648 = vsel %vm1338, %v1621, 0
      %v1651 = vsel %vm1338, %v1622, 0
      %v1654 = vsel %vm1338, %v1623, 0
      %v1657 = vsel %vm1338, %v1624, 0
      %v1660 = vsel %vm1338, %v1625, 0
      %v1663 = vsel %vm1338, %v1626, 0
      %v1666 = vsel %vm1338, %v1627, 0
      %v1669 = vsel %vm1338, %v1628, 0
      %v1672 = vsel %vm1338, %v1629, 0
      %v1675 = vsel %vm1338, %v1630, 0
      %v1678 = vsel %vm1338, %v1631, 0
      %v1681 = vsel %vm1387, %v884, 0
      %1683 = vmatprep.subr.bf16.mxu0 0
      %1684 = vmatpush1.bf16.msra.mxu0 %v1681
      %1685 = vmatprep.subr.bf16.mxu0 0
      %1686 = vmatpush1.bf16.msra.mxu0 0
      %1687 = vmatprep.subr.bf16.mxu0 0
      %1688 = vmatpush1.bf16.msra.mxu0 0
      %1689 = vmatprep.subr.bf16.mxu0 0
      %1690 = vmatpush1.bf16.msra.mxu0 0
      %1691 = vmatprep.subr.bf16.mxu0 0
      %1692 = vmatpush1.bf16.msra.mxu0 0
      %1693 = vmatprep.subr.bf16.mxu0 0
      %1694 = vmatpush1.bf16.msra.mxu0 0
      %1695 = vmatprep.subr.bf16.mxu0 0
      %1696 = vmatpush1.bf16.msra.mxu0 0
      %1697 = vmatprep.subr.bf16.mxu0 0
      %1698 = vmatpush1.bf16.msra.mxu0 0
      %1699 = vmatprep.subr.bf16.mxu0 0
      %1700 = vmatpush1.bf16.msra.mxu0 0
      %1701 = vmatprep.subr.bf16.mxu0 0
      %1702 = vmatpush1.bf16.msra.mxu0 0
      %1703 = vmatprep.subr.bf16.mxu0 0
      %1704 = vmatpush1.bf16.msra.mxu0 0
      %1705 = vmatprep.subr.bf16.mxu0 0
      %1706 = vmatpush1.bf16.msra.mxu0 0
      %1707 = vmatprep.subr.bf16.mxu0 0
      %1708 = vmatpush1.bf16.msra.mxu0 0
      %1709 = vmatprep.subr.bf16.mxu0 0
      %1710 = vmatpush1.bf16.msra.mxu0 0
      %1711 = vmatprep.subr.bf16.mxu0 0
      %1712 = vmatpush1.bf16.msra.mxu0 0
      %1713 = vmatprep.subr.bf16.mxu0 0
      %1714 = vmatpush1.bf16.msra.mxu0 0
      %1715 = vmatprep.mubr.bf16.mxu0 0
      %1716 = vmatmul.mubr.bf16.gmra.mrb[0].mxu0 %v1633
      %v1717 = vpop.f32.mrb[0].mxu0
      %v1718 = vadd.f32 %v1426, %v1717
      %v1719 = vpop.f32.mrb[0].mxu0
      %v1720 = vpop.f32.mrb[0].mxu0
      %v1721 = vadd.f32 %v1429, %v1720
      %v1722 = vpop.f32.mrb[0].mxu0
      %1723 = vmatprep.mubr.bf16.mxu0 0
      %1724 = vmatmul.mubr.bf16.gmra.mrb[0].mxu0 %v1636
      %v1725 = vpop.f32.mrb[0].mxu0
      %v1726 = vadd.f32 %v1434, %v1725
      %v1727 = vpop.f32.mrb[0].mxu0
      %v1728 = vpop.f32.mrb[0].mxu0
      %v1729 = vadd.f32 %v1437, %v1728
      %v1730 = vpop.f32.mrb[0].mxu0
      %1731 = vmatprep.mubr.bf16.mxu0 0
      %1732 = vmatmul.mubr.bf16.gmra.mrb[0].mxu0 %v1639
      %v1733 = vpop.f32.mrb[0].mxu0
      %v1734 = vadd.f32 %v1442, %v1733
      %v1735 = vpop.f32.mrb[0].mxu0
      %v1736 = vpop.f32.mrb[0].mxu0
      %v1737 = vadd.f32 %v1445, %v1736
      %v1738 = vpop.f32.mrb[0].mxu0
      %1739 = vmatprep.mubr.bf16.mxu0 0
      %1740 = vmatmul.mubr.bf16.gmra.mrb[0].mxu0 %v1642
      %v1741 = vpop.f32.mrb[0].mxu0
      %v1742 = vadd.f32 %v1450, %v1741
      %v1743 = vpop.f32.mrb[0].mxu0
      %v1744 = vpop.f32.mrb[0].mxu0
      %v1745 = vadd.f32 %v1453, %v1744
      %v1746 = vpop.f32.mrb[0].mxu0
      %1747 = vmatprep.mubr.bf16.mxu0 0
      %1748 = vmatmul.mubr.bf16.gmra.mrb[0].mxu0 %v1645
      %v1749 = vpop.f32.mrb[0].mxu0
      %v1750 = vadd.f32 %v1458, %v1749
      %v1751 = vpop.f32.mrb[0].mxu0
      %v1752 = vpop.f32.mrb[0].mxu0
      %v1753 = vadd.f32 %v1461, %v1752
      %v1754 = vpop.f32.mrb[0].mxu0
      %1755 = vmatprep.mubr.bf16.mxu0 0
      %1756 = vmatmul.mubr.bf16.gmra.mrb[0].mxu0 %v1648
      %v1757 = vpop.f32.mrb[0].mxu0
      %v1758 = vadd.f32 %v1466, %v1757
      %v1759 = vpop.f32.mrb[0].mxu0
      %v1760 = vpop.f32.mrb[0].mxu0
      %v1761 = vadd.f32 %v1469, %v1760
      %v1762 = vpop.f32.mrb[0].mxu0
      %1763 = vmatprep.mubr.bf16.mxu0 0
      %1764 = vmatmul.mubr.bf16.gmra.mrb[0].mxu0 %v1651
      %v1765 = vpop.f32.mrb[0].mxu0
      %v1766 = vadd.f32 %v1474, %v1765
      %v1767 = vpop.f32.mrb[0].mxu0
      %v1768 = vpop.f32.mrb[0].mxu0
      %v1769 = vadd.f32 %v1477, %v1768
      %v1770 = vpop.f32.mrb[0].mxu0
      %1771 = vmatprep.mubr.bf16.mxu0 0
      %1772 = vmatmul.mubr.bf16.gmra.mrb[0].mxu0 %v1654
      %v1773 = vpop.f32.mrb[0].mxu0
      %v1774 = vadd.f32 %v1482, %v1773
      %v1775 = vpop.f32.mrb[0].mxu0
      %v1776 = vpop.f32.mrb[0].mxu0
      %v1777 = vadd.f32 %v1485, %v1776
      %v1778 = vpop.f32.mrb[0].mxu0
      %1779 = vmatprep.mubr.bf16.mxu0 0
      %1780 = vmatmul.mubr.bf16.gmra.mrb[0].mxu0 %v1657
      %v1781 = vpop.f32.mrb[0].mxu0
      %v1782 = vadd.f32 %v1490, %v1781
      %v1783 = vpop.f32.mrb[0].mxu0
      %v1784 = vpop.f32.mrb[0].mxu0
      %v1785 = vadd.f32 %v1493, %v1784
      %v1786 = vpop.f32.mrb[0].mxu0
      %1787 = vmatprep.mubr.bf16.mxu0 0
      %1788 = vmatmul.mubr.bf16.gmra.mrb[0].mxu0 %v1660
      %v1789 = vpop.f32.mrb[0].mxu0
      %v1790 = vadd.f32 %v1498, %v1789
      %v1791 = vpop.f32.mrb[0].mxu0
      %v1792 = vpop.f32.mrb[0].mxu0
      %v1793 = vadd.f32 %v1501, %v1792
      %v1794 = vpop.f32.mrb[0].mxu0
      %1795 = vmatprep.mubr.bf16.mxu0 0
      %1796 = vmatmul.mubr.bf16.gmra.mrb[0].mxu0 %v1663
      %v1797 = vpop.f32.mrb[0].mxu0
      %v1798 = vadd.f32 %v1506, %v1797
      %v1799 = vpop.f32.mrb[0].mxu0
      %v1800 = vpop.f32.mrb[0].mxu0
      %v1801 = vadd.f32 %v1509, %v1800
      %v1802 = vpop.f32.mrb[0].mxu0
      %1803 = vmatprep.mubr.bf16.mxu0 0
      %1804 = vmatmul.mubr.bf16.gmra.mrb[0].mxu0 %v1666
      %v1805 = vpop.f32.mrb[0].mxu0
      %v1806 = vadd.f32 %v1514, %v1805
      %v1807 = vpop.f32.mrb[0].mxu0
      %v1808 = vpop.f32.mrb[0].mxu0
      %v1809 = vadd.f32 %v1517, %v1808
      %v1810 = vpop.f32.mrb[0].mxu0
      %1811 = vmatprep.mubr.bf16.mxu0 0
      %1812 = vmatmul.mubr.bf16.gmra.mrb[0].mxu0 %v1669
      %v1813 = vpop.f32.mrb[0].mxu0
      %v1814 = vadd.f32 %v1522, %v1813
      %v1815 = vpop.f32.mrb[0].mxu0
      %v1816 = vpop.f32.mrb[0].mxu0
      %v1817 = vadd.f32 %v1525, %v1816
      %v1818 = vpop.f32.mrb[0].mxu0
      %1819 = vmatprep.mubr.bf16.mxu0 0
      %1820 = vmatmul.mubr.bf16.gmra.mrb[0].mxu0 %v1672
      %v1821 = vpop.f32.mrb[0].mxu0
      %v1822 = vadd.f32 %v1530, %v1821
      %v1823 = vpop.f32.mrb[0].mxu0
      %v1824 = vpop.f32.mrb[0].mxu0
      %v1825 = vadd.f32 %v1533, %v1824
      %v1826 = vpop.f32.mrb[0].mxu0
      %1827 = vmatprep.mubr.bf16.mxu0 0
      %1828 = vmatmul.mubr.bf16.gmra.mrb[0].mxu0 %v1675
      %v1829 = vpop.f32.mrb[0].mxu0
      %v1830 = vadd.f32 %v1538, %v1829
      %v1831 = vpop.f32.mrb[0].mxu0
      %v1832 = vpop.f32.mrb[0].mxu0
      %v1833 = vadd.f32 %v1541, %v1832
      %v1834 = vpop.f32.mrb[0].mxu0
      %1835 = vmatprep.mubr.bf16.mxu0 0
      %1836 = vmatmul.mubr.bf16.gmra.mrb[0].mxu0 %v1678
      %v1837 = vpop.f32.mrb[0].mxu0
      %v1838 = vadd.f32 %v1546, %v1837
      %v1839 = vpop.f32.mrb[0].mxu0
      %v1840 = vpop.f32.mrb[0].mxu0
      %v1841 = vadd.f32 %v1549, %v1840
      %v1842 = vpop.f32.mrb[0].mxu0
      %1843 = vdwg.mxu0
      %v1844 = vld [vmem:[#allocation2] sm:$0xe]
      %v1845 = vld [vmem:[#allocation2 + $0xc] sm:$0xe]
      %v1846 = vld [vmem:[#allocation2 + $0x18] sm:$0xe]
      %v1847 = vld [vmem:[#allocation2 + $0x24] sm:$0xe]
      %v1848 = vld [vmem:[#allocation2 + $0x30] sm:$0xe]
      %v1849 = vld [vmem:[#allocation2 + $0x3c] sm:$0xe]
      %v1850 = vld [vmem:[#allocation2 + $0x48] sm:$0xe]
      %v1851 = vld [vmem:[#allocation2 + $0x54] sm:$0xe]
      %v1852 = vld [vmem:[#allocation2 + $0x60] sm:$0xe]
      %v1853 = vld [vmem:[#allocation2 + $0x6c] sm:$0xe]
      %v1854 = vld [vmem:[#allocation2 + $0x78] sm:$0xe]
      %v1855 = vld [vmem:[#allocation2 + $0x84] sm:$0xe]
      %v1856 = vld [vmem:[#allocation2 + $0x90] sm:$0xe]
      %v1857 = vld [vmem:[#allocation2 + $0x9c] sm:$0xe]
      %v1858 = vld [vmem:[#allocation2 + $0xa8] sm:$0xe]
      %v1859 = vld [vmem:[#allocation2 + $0xb4] sm:$0xe]
      %vm1892 = vcmask 1042432
      %vm1893 = vcmask 1046532
      %vm1894 = vmor %vm1892, %vm1893
      %v1895 = vrot.slane %v1844, 5
      %v1896 = vrot.slane %v1895, 4
      %v1897 = vrot.slane %v853, 5
      %v1898 = vsel %vm1894, %v1896, %v1897
      %v1899 = vrot.slane %v1897, 4
      %v1900 = vrot.slane %v885, 5
      %v1901 = vsel %vm1894, %v1899, %v1900
      %v1902 = vrot.slane %v1845, 5
      %v1903 = vrot.slane %v1902, 4
      %v1904 = vrot.slane %v855, 5
      %v1905 = vsel %vm1894, %v1903, %v1904
      %v1906 = vrot.slane %v1904, 4
      %v1907 = vrot.slane %v886, 5
      %v1908 = vsel %vm1894, %v1906, %v1907
      %v1909 = vrot.slane %v1846, 5
      %v1910 = vrot.slane %v1909, 4
      %v1911 = vrot.slane %v857, 5
      %v1912 = vsel %vm1894, %v1910, %v1911
      %v1913 = vrot.slane %v1911, 4
      %v1914 = vrot.slane %v887, 5
      %v1915 = vsel %vm1894, %v1913, %v1914
      %v1916 = vrot.slane %v1847, 5
      %v1917 = vrot.slane %v1916, 4
      %v1918 = vrot.slane %v859, 5
      %v1919 = vsel %vm1894, %v1917, %v1918
      %v1920 = vrot.slane %v1918, 4
      %v1921 = vrot.slane %v888, 5
      %v1922 = vsel %vm1894, %v1920, %v1921
      %v1923 = vrot.slane %v1848, 5
      %v1924 = vrot.slane %v1923, 4
      %v1925 = vrot.slane %v861, 5
      %v1926 = vsel %vm1894, %v1924, %v1925
      %v1927 = vrot.slane %v1925, 4
      %v1928 = vrot.slane %v889, 5
      %v1929 = vsel %vm1894, %v1927, %v1928
      %v1930 = vrot.slane %v1849, 5
      %v1931 = vrot.slane %v1930, 4
      %v1932 = vrot.slane %v863, 5
      %v1933 = vsel %vm1894, %v1931, %v1932
      %v1934 = vrot.slane %v1932, 4
      %v1935 = vrot.slane %v890, 5
      %v1936 = vsel %vm1894, %v1934, %v1935
      %v1937 = vrot.slane %v1850, 5
      %v1938 = vrot.slane %v1937, 4
      %v1939 = vrot.slane %v865, 5
      %v1940 = vsel %vm1894, %v1938, %v1939
      %v1941 = vrot.slane %v1939, 4
      %v1942 = vrot.slane %v891, 5
      %v1943 = vsel %vm1894, %v1941, %v1942
      %v1944 = vrot.slane %v1851, 5
      %v1945 = vrot.slane %v1944, 4
      %v1946 = vrot.slane %v867, 5
      %v1947 = vsel %vm1894, %v1945, %v1946
      %v1948 = vrot.slane %v1946, 4
      %v1949 = vrot.slane %v892, 5
      %v1950 = vsel %vm1894, %v1948, %v1949
      %v1951 = vrot.slane %v1852, 5
      %v1952 = vrot.slane %v1951, 4
      %v1953 = vrot.slane %v869, 5
      %v1954 = vsel %vm1894, %v1952, %v1953
      %v1955 = vrot.slane %v1953, 4
      %v1956 = vrot.slane %v893, 5
      %v1957 = vsel %vm1894, %v1955, %v1956
      %v1958 = vrot.slane %v1853, 5
      %v1959 = vrot.slane %v1958, 4
      %v1960 = vrot.slane %v871, 5
      %v1961 = vsel %vm1894, %v1959, %v1960
      %v1962 = vrot.slane %v1960, 4
      %v1963 = vrot.slane %v894, 5
      %v1964 = vsel %vm1894, %v1962, %v1963
      %v1965 = vrot.slane %v1854, 5
      %v1966 = vrot.slane %v1965, 4
      %v1967 = vrot.slane %v873, 5
      %v1968 = vsel %vm1894, %v1966, %v1967
      %v1969 = vrot.slane %v1967, 4
      %v1970 = vrot.slane %v895, 5
      %v1971 = vsel %vm1894, %v1969, %v1970
      %v1972 = vrot.slane %v1855, 5
      %v1973 = vrot.slane %v1972, 4
      %v1974 = vrot.slane %v875, 5
      %v1975 = vsel %vm1894, %v1973, %v1974
      %v1976 = vrot.slane %v1974, 4
      %v1977 = vrot.slane %v896, 5
      %v1978 = vsel %vm1894, %v1976, %v1977
      %v1979 = vrot.slane %v1856, 5
      %v1980 = vrot.slane %v1979, 4
      %v1981 = vrot.slane %v877, 5
      %v1982 = vsel %vm1894, %v1980, %v1981
      %v1983 = vrot.slane %v1981, 4
      %v1984 = vrot.slane %v897, 5
      %v1985 = vsel %vm1894, %v1983, %v1984
      %v1986 = vrot.slane %v1857, 5
      %v1987 = vrot.slane %v1986, 4
      %v1988 = vrot.slane %v879, 5
      %v1989 = vsel %vm1894, %v1987, %v1988
      %v1990 = vrot.slane %v1988, 4
      %v1991 = vrot.slane %v898, 5
      %v1992 = vsel %vm1894, %v1990, %v1991
      %v1993 = vrot.slane %v1858, 5
      %v1994 = vrot.slane %v1993, 4
      %v1995 = vrot.slane %v881, 5
      %v1996 = vsel %vm1894, %v1994, %v1995
      %v1997 = vrot.slane %v1995, 4
      %v1998 = vrot.slane %v899, 5
      %v1999 = vsel %vm1894, %v1997, %v1998
      %v2000 = vrot.slane %v1859, 5
      %v2001 = vrot.slane %v2000, 4
      %v2002 = vrot.slane %v883, 5
      %v2003 = vsel %vm1894, %v2001, %v2002
      %v2004 = vrot.slane %v2002, 4
      %v2005 = vrot.slane %v900, 5
      %v2006 = vsel %vm1894, %v2004, %v2005
      %s2007 = scalar_lea.vmem %s301, 4
      %v2008 = vld [vmem:[%s2007] sm:$0x3]
      %v2009 = vunpack.c.l.b16 %v1898
      %v2010 = vunpack.c.l.b16 %v1901
      %v2011 = vunpack.c.l.b16 %v1905
      %v2012 = vunpack.c.l.b16 %v1908
      %v2013 = vunpack.c.l.b16 %v1912
      %v2014 = vunpack.c.l.b16 %v1915
      %v2015 = vunpack.c.l.b16 %v1919
      %v2016 = vunpack.c.l.b16 %v1922
      %v2017 = vunpack.c.l.b16 %v1926
      %v2018 = vunpack.c.l.b16 %v1929
      %v2019 = vunpack.c.l.b16 %v1933
      %v2020 = vunpack.c.l.b16 %v1936
      %v2021 = vunpack.c.l.b16 %v1940
      %v2022 = vunpack.c.l.b16 %v1943
      %v2023 = vunpack.c.l.b16 %v1947
      %v2024 = vunpack.c.l.b16 %v1950
      %v2025 = vunpack.c.l.b16 %v1954
      %v2026 = vunpack.c.l.b16 %v1957
      %v2027 = vunpack.c.l.b16 %v1961
      %v2028 = vunpack.c.l.b16 %v1964
      %v2029 = vunpack.c.l.b16 %v1968
      %v2030 = vunpack.c.l.b16 %v1971
      %v2031 = vunpack.c.l.b16 %v1975
      %v2032 = vunpack.c.l.b16 %v1978
      %v2033 = vunpack.c.l.b16 %v1982
      %v2034 = vunpack.c.l.b16 %v1985
      %v2035 = vunpack.c.l.b16 %v1989
      %v2036 = vunpack.c.l.b16 %v1992
      %v2037 = vunpack.c.l.b16 %v1996
      %v2038 = vunpack.c.l.b16 %v1999
      %v2039 = vunpack.c.l.b16 %v2003
      %v2040 = vunpack.c.l.b16 %v2006
      %v2041 = vpack.c.b16 %v2010, %v2009
      %v2042 = vpack.c.b16 %v2012, %v2011
      %v2043 = vpack.c.b16 %v2014, %v2013
      %v2044 = vpack.c.b16 %v2016, %v2015
      %v2045 = vpack.c.b16 %v2018, %v2017
      %v2046 = vpack.c.b16 %v2020, %v2019
      %v2047 = vpack.c.b16 %v2022, %v2021
      %v2048 = vpack.c.b16 %v2024, %v2023
      %v2049 = vpack.c.b16 %v2026, %v2025
      %v2050 = vpack.c.b16 %v2028, %v2027
      %v2051 = vpack.c.b16 %v2030, %v2029
      %v2052 = vpack.c.b16 %v2032, %v2031
      %v2053 = vpack.c.b16 %v2034, %v2033
      %v2054 = vpack.c.b16 %v2036, %v2035
      %v2055 = vpack.c.b16 %v2038, %v2037
      %v2056 = vpack.c.b16 %v2040, %v2039
      %v2058 = vsel %vm1338, %v2041, 0
      %v2061 = vsel %vm1338, %v2042, 0
      %v2064 = vsel %vm1338, %v2043, 0
      %v2067 = vsel %vm1338, %v2044, 0
      %v2070 = vsel %vm1338, %v2045, 0
      %v2073 = vsel %vm1338, %v2046, 0
      %v2076 = vsel %vm1338, %v2047, 0
      %v2079 = vsel %vm1338, %v2048, 0
      %v2082 = vsel %vm1338, %v2049, 0
      %v2085 = vsel %vm1338, %v2050, 0
      %v2088 = vsel %vm1338, %v2051, 0
      %v2091 = vsel %vm1338, %v2052, 0
      %v2094 = vsel %vm1338, %v2053, 0
      %v2097 = vsel %vm1338, %v2054, 0
      %v2100 = vsel %vm1338, %v2055, 0
      %v2103 = vsel %vm1338, %v2056, 0
      %v2106 = vsel %vm1387, %v2008, 0
      %2108 = vmatprep.subr.bf16.mxu0 0
      %2109 = vmatpush1.bf16.msra.mxu0 %v2106
      %2110 = vmatprep.subr.bf16.mxu0 0
      %2111 = vmatpush1.bf16.msra.mxu0 0
      %2112 = vmatprep.subr.bf16.mxu0 0
      %2113 = vmatpush1.bf16.msra.mxu0 0
      %2114 = vmatprep.subr.bf16.mxu0 0
      %2115 = vmatpush1.bf16.msra.mxu0 0
      %2116 = vmatprep.subr.bf16.mxu0 0
      %2117 = vmatpush1.bf16.msra.mxu0 0
      %2118 = vmatprep.subr.bf16.mxu0 0
      %2119 = vmatpush1.bf16.msra.mxu0 0
      %2120 = vmatprep.subr.bf16.mxu0 0
      %2121 = vmatpush1.bf16.msra.mxu0 0
      %2122 = vmatprep.subr.bf16.mxu0 0
      %2123 = vmatpush1.bf16.msra.mxu0 0
      %2124 = vmatprep.subr.bf16.mxu0 0
      %2125 = vmatpush1.bf16.msra.mxu0 0
      %2126 = vmatprep.subr.bf16.mxu0 0
      %2127 = vmatpush1.bf16.msra.mxu0 0
      %2128 = vmatprep.subr.bf16.mxu0 0
      %2129 = vmatpush1.bf16.msra.mxu0 0
      %2130 = vmatprep.subr.bf16.mxu0 0
      %2131 = vmatpush1.bf16.msra.mxu0 0
      %2132 = vmatprep.subr.bf16.mxu0 0
      %2133 = vmatpush1.bf16.msra.mxu0 0
      %2134 = vmatprep.subr.bf16.mxu0 0
      %2135 = vmatpush1.bf16.msra.mxu0 0
      %2136 = vmatprep.subr.bf16.mxu0 0
      %2137 = vmatpush1.bf16.msra.mxu0 0
      %2138 = vmatprep.subr.bf16.mxu0 0
      %2139 = vmatpush1.bf16.msra.mxu0 0
      %2140 = vmatprep.mubr.bf16.mxu0 0
      %2141 = vmatmul.mubr.bf16.gmra.mrb[0].mxu0 %v2058
      %v2142 = vpop.f32.mrb[0].mxu0
      %v2143 = vadd.f32 0.0, %v2142
      %v2144 = vpop.f32.mrb[0].mxu0
      %v2145 = vpop.f32.mrb[0].mxu0
      %v2146 = vadd.f32 0.0, %v2145
      %v2147 = vpop.f32.mrb[0].mxu0
      %2148 = vmatprep.mubr.bf16.mxu0 0
      %2149 = vmatmul.mubr.bf16.gmra.mrb[0].mxu0 %v2061
      %v2150 = vpop.f32.mrb[0].mxu0
      %v2151 = vadd.f32 0.0, %v2150
      %v2152 = vpop.f32.mrb[0].mxu0
      %v2153 = vpop.f32.mrb[0].mxu0
      %v2154 = vadd.f32 0.0, %v2153
      %v2155 = vpop.f32.mrb[0].mxu0
      %2156 = vmatprep.mubr.bf16.mxu0 0
      %2157 = vmatmul.mubr.bf16.gmra.mrb[0].mxu0 %v2064
      %v2158 = vpop.f32.mrb[0].mxu0
      %v2159 = vadd.f32 0.0, %v2158
      %v2160 = vpop.f32.mrb[0].mxu0
      %v2161 = vpop.f32.mrb[0].mxu0
      %v2162 = vadd.f32 0.0, %v2161
      %v2163 = vpop.f32.mrb[0].mxu0
      %2164 = vmatprep.mubr.bf16.mxu0 0
      %2165 = vmatmul.mubr.bf16.gmra.mrb[0].mxu0 %v2067
      %v2166 = vpop.f32.mrb[0].mxu0
      %v2167 = vadd.f32 0.0, %v2166
      %v2168 = vpop.f32.mrb[0].mxu0
      %v2169 = vpop.f32.mrb[0].mxu0
      %v2170 = vadd.f32 0.0, %v2169
      %v2171 = vpop.f32.mrb[0].mxu0
      %2172 = vmatprep.mubr.bf16.mxu0 0
      %2173 = vmatmul.mubr.bf16.gmra.mrb[0].mxu0 %v2070
      %v2174 = vpop.f32.mrb[0].mxu0
      %v2175 = vadd.f32 0.0, %v2174
      %v2176 = vpop.f32.mrb[0].mxu0
      %v2177 = vpop.f32.mrb[0].mxu0
      %v2178 = vadd.f32 0.0, %v2177
      %v2179 = vpop.f32.mrb[0].mxu0
      %2180 = vmatprep.mubr.bf16.mxu0 0
      %2181 = vmatmul.mubr.bf16.gmra.mrb[0].mxu0 %v2073
      %v2182 = vpop.f32.mrb[0].mxu0
      %v2183 = vadd.f32 0.0, %v2182
      %v2184 = vpop.f32.mrb[0].mxu0
      %v2185 = vpop.f32.mrb[0].mxu0
      %v2186 = vadd.f32 0.0, %v2185
      %v2187 = vpop.f32.mrb[0].mxu0
      %2188 = vmatprep.mubr.bf16.mxu0 0
      %2189 = vmatmul.mubr.bf16.gmra.mrb[0].mxu0 %v2076
      %v2190 = vpop.f32.mrb[0].mxu0
      %v2191 = vadd.f32 0.0, %v2190
      %v2192 = vpop.f32.mrb[0].mxu0
      %v2193 = vpop.f32.mrb[0].mxu0
      %v2194 = vadd.f32 0.0, %v2193
      %v2195 = vpop.f32.mrb[0].mxu0
      %2196 = vmatprep.mubr.bf16.mxu0 0
      %2197 = vmatmul.mubr.bf16.gmra.mrb[0].mxu0 %v2079
      %v2198 = vpop.f32.mrb[0].mxu0
      %v2199 = vadd.f32 0.0, %v2198
      %v2200 = vpop.f32.mrb[0].mxu0
      %v2201 = vpop.f32.mrb[0].mxu0
      %v2202 = vadd.f32 0.0, %v2201
      %v2203 = vpop.f32.mrb[0].mxu0
      %2204 = vmatprep.mubr.bf16.mxu0 0
      %2205 = vmatmul.mubr.bf16.gmra.mrb[0].mxu0 %v2082
      %v2206 = vpop.f32.mrb[0].mxu0
      %v2207 = vadd.f32 0.0, %v2206
      %v2208 = vpop.f32.mrb[0].mxu0
      %v2209 = vpop.f32.mrb[0].mxu0
      %v2210 = vadd.f32 0.0, %v2209
      %v2211 = vpop.f32.mrb[0].mxu0
      %2212 = vmatprep.mubr.bf16.mxu0 0
      %2213 = vmatmul.mubr.bf16.gmra.mrb[0].mxu0 %v2085
      %v2214 = vpop.f32.mrb[0].mxu0
      %v2215 = vadd.f32 0.0, %v2214
      %v2216 = vpop.f32.mrb[0].mxu0
      %v2217 = vpop.f32.mrb[0].mxu0
      %v2218 = vadd.f32 0.0, %v2217
      %v2219 = vpop.f32.mrb[0].mxu0
      %2220 = vmatprep.mubr.bf16.mxu0 0
      %2221 = vmatmul.mubr.bf16.gmra.mrb[0].mxu0 %v2088
      %v2222 = vpop.f32.mrb[0].mxu0
      %v2223 = vadd.f32 0.0, %v2222
      %v2224 = vpop.f32.mrb[0].mxu0
      %v2225 = vpop.f32.mrb[0].mxu0
      %v2226 = vadd.f32 0.0, %v2225
      %v2227 = vpop.f32.mrb[0].mxu0
      %2228 = vmatprep.mubr.bf16.mxu0 0
      %2229 = vmatmul.mubr.bf16.gmra.mrb[0].mxu0 %v2091
      %v2230 = vpop.f32.mrb[0].mxu0
      %v2231 = vadd.f32 0.0, %v2230
      %v2232 = vpop.f32.mrb[0].mxu0
      %v2233 = vpop.f32.mrb[0].mxu0
      %v2234 = vadd.f32 0.0, %v2233
      %v2235 = vpop.f32.mrb[0].mxu0
      %2236 = vmatprep.mubr.bf16.mxu0 0
      %2237 = vmatmul.mubr.bf16.gmra.mrb[0].mxu0 %v2094
      %v2238 = vpop.f32.mrb[0].mxu0
      %v2239 = vadd.f32 0.0, %v2238
      %v2240 = vpop.f32.mrb[0].mxu0
      %v2241 = vpop.f32.mrb[0].mxu0
      %v2242 = vadd.f32 0.0, %v2241
      %v2243 = vpop.f32.mrb[0].mxu0
      %2244 = vmatprep.mubr.bf16.mxu0 0
      %2245 = vmatmul.mubr.bf16.gmra.mrb[0].mxu0 %v2097
      %v2246 = vpop.f32.mrb[0].mxu0
      %v2247 = vadd.f32 0.0, %v2246
      %v2248 = vpop.f32.mrb[0].mxu0
      %v2249 = vpop.f32.mrb[0].mxu0
      %v2250 = vadd.f32 0.0, %v2249
      %v2251 = vpop.f32.mrb[0].mxu0
      %2252 = vmatprep.mubr.bf16.mxu0 0
      %2253 = vmatmul.mubr.bf16.gmra.mrb[0].mxu0 %v2100
      %v2254 = vpop.f32.mrb[0].mxu0
      %v2255 = vadd.f32 0.0, %v2254
      %v2256 = vpop.f32.mrb[0].mxu0
      %v2257 = vpop.f32.mrb[0].mxu0
      %v2258 = vadd.f32 0.0, %v2257
      %v2259 = vpop.f32.mrb[0].mxu0
      %2260 = vmatprep.mubr.bf16.mxu0 0
      %2261 = vmatmul.mubr.bf16.gmra.mrb[0].mxu0 %v2103
      %v2262 = vpop.f32.mrb[0].mxu0
      %v2263 = vadd.f32 0.0, %v2262
      %v2264 = vpop.f32.mrb[0].mxu0
      %v2265 = vpop.f32.mrb[0].mxu0
      %v2266 = vadd.f32 0.0, %v2265
      %v2267 = vpop.f32.mrb[0].mxu0
      %2268 = vdwg.mxu0
      %v2269 = vadd.f32 %v1718, %v2143
      %v2270 = vadd.f32 %v1721, %v2146
      %v2271 = vadd.f32 %v1726, %v2151
      %v2272 = vadd.f32 %v1729, %v2154
      %v2273 = vadd.f32 %v1734, %v2159
      %v2274 = vadd.f32 %v1737, %v2162
      %v2275 = vadd.f32 %v1742, %v2167
      %v2276 = vadd.f32 %v1745, %v2170
      %v2277 = vadd.f32 %v1750, %v2175
      %v2278 = vadd.f32 %v1753, %v2178
      %v2279 = vadd.f32 %v1758, %v2183
      %v2280 = vadd.f32 %v1761, %v2186
      %v2281 = vadd.f32 %v1766, %v2191
      %v2282 = vadd.f32 %v1769, %v2194
      %v2283 = vadd.f32 %v1774, %v2199
      %v2284 = vadd.f32 %v1777, %v2202
      %v2285 = vadd.f32 %v1782, %v2207
      %v2286 = vadd.f32 %v1785, %v2210
      %v2287 = vadd.f32 %v1790, %v2215
      %v2288 = vadd.f32 %v1793, %v2218
      %v2289 = vadd.f32 %v1798, %v2223
      %v2290 = vadd.f32 %v1801, %v2226
      %v2291 = vadd.f32 %v1806, %v2231
      %v2292 = vadd.f32 %v1809, %v2234
      %v2293 = vadd.f32 %v1814, %v2239
      %v2294 = vadd.f32 %v1817, %v2242
      %v2295 = vadd.f32 %v1822, %v2247
      %v2296 = vadd.f32 %v1825, %v2250
      %v2297 = vadd.f32 %v1830, %v2255
      %v2298 = vadd.f32 %v1833, %v2258
      %v2299 = vadd.f32 %v1838, %v2263
      %v2300 = vadd.f32 %v1841, %v2266
      %v2301 = vld [vmem:[%s734] sm:$0xf]
      %v2302 = vld [vmem:[%s734 + $0x4] sm:$0xf]
      %v2303 = vld [vmem:[%s734 + $0xc] sm:$0xf]
      %v2304 = vld [vmem:[%s734 + $0x10] sm:$0xf]
      %v2305 = vld [vmem:[%s734 + $0x18] sm:$0xf]
      %v2306 = vld [vmem:[%s734 + $0x1c] sm:$0xf]
      %v2307 = vld [vmem:[%s734 + $0x24] sm:$0xf]
      %v2308 = vld [vmem:[%s734 + $0x28] sm:$0xf]
      %v2309 = vld [vmem:[%s734 + $0x30] sm:$0xf]
      %v2310 = vld [vmem:[%s734 + $0x34] sm:$0xf]
      %v2311 = vld [vmem:[%s734 + $0x3c] sm:$0xf]
      %v2312 = vld [vmem:[%s734 + $0x40] sm:$0xf]
      %v2313 = vld [vmem:[%s734 + $0x48] sm:$0xf]
      %v2314 = vld [vmem:[%s734 + $0x4c] sm:$0xf]
      %v2315 = vld [vmem:[%s734 + $0x54] sm:$0xf]
      %v2316 = vld [vmem:[%s734 + $0x58] sm:$0xf]
      %v2317 = vld [vmem:[%s734 + $0x60] sm:$0xf]
      %v2318 = vld [vmem:[%s734 + $0x64] sm:$0xf]
      %v2319 = vld [vmem:[%s734 + $0x6c] sm:$0xf]
      %v2320 = vld [vmem:[%s734 + $0x70] sm:$0xf]
      %v2321 = vld [vmem:[%s734 + $0x78] sm:$0xf]
      %v2322 = vld [vmem:[%s734 + $0x7c] sm:$0xf]
      %v2323 = vld [vmem:[%s734 + $0x84] sm:$0xf]
      %v2324 = vld [vmem:[%s734 + $0x88] sm:$0xf]
      %v2325 = vld [vmem:[%s734 + $0x90] sm:$0xf]
      %v2326 = vld [vmem:[%s734 + $0x94] sm:$0xf]
      %v2327 = vld [vmem:[%s734 + $0x9c] sm:$0xf]
      %v2328 = vld [vmem:[%s734 + $0xa0] sm:$0xf]
      %v2329 = vld [vmem:[%s734 + $0xa8] sm:$0xf]
      %v2330 = vld [vmem:[%s734 + $0xac] sm:$0xf]
      %v2331 = vld [vmem:[%s734 + $0xb4] sm:$0xf]
      %v2332 = vld [vmem:[%s734 + $0xb8] sm:$0xf]
      %s2333 = scalar_lea.vmem %s301, 6
      %v2334 = vld [vmem:[%s2333] sm:$0x3]
      %v2367 = vunpack.c.l.b16 %v2301
      %v2368 = vunpack.c.l.b16 %v2302
      %v2369 = vunpack.c.l.b16 %v2303
      %v2370 = vunpack.c.l.b16 %v2304
      %v2371 = vunpack.c.l.b16 %v2305
      %v2372 = vunpack.c.l.b16 %v2306
      %v2373 = vunpack.c.l.b16 %v2307
      %v2374 = vunpack.c.l.b16 %v2308
      %v2375 = vunpack.c.l.b16 %v2309
      %v2376 = vunpack.c.l.b16 %v2310
      %v2377 = vunpack.c.l.b16 %v2311
      %v2378 = vunpack.c.l.b16 %v2312
      %v2379 = vunpack.c.l.b16 %v2313
      %v2380 = vunpack.c.l.b16 %v2314
      %v2381 = vunpack.c.l.b16 %v2315
      %v2382 = vunpack.c.l.b16 %v2316
      %v2383 = vunpack.c.l.b16 %v2317
      %v2384 = vunpack.c.l.b16 %v2318
      %v2385 = vunpack.c.l.b16 %v2319
      %v2386 = vunpack.c.l.b16 %v2320
      %v2387 = vunpack.c.l.b16 %v2321
      %v2388 = vunpack.c.l.b16 %v2322
      %v2389 = vunpack.c.l.b16 %v2323
      %v2390 = vunpack.c.l.b16 %v2324
      %v2391 = vunpack.c.l.b16 %v2325
      %v2392 = vunpack.c.l.b16 %v2326
      %v2393 = vunpack.c.l.b16 %v2327
      %v2394 = vunpack.c.l.b16 %v2328
      %v2395 = vunpack.c.l.b16 %v2329
      %v2396 = vunpack.c.l.b16 %v2330
      %v2397 = vunpack.c.l.b16 %v2331
      %v2398 = vunpack.c.l.b16 %v2332
      %v2399 = vpack.c.b16 %v2368, %v2367
      %v2400 = vpack.c.b16 %v2370, %v2369
      %v2401 = vpack.c.b16 %v2372, %v2371
      %v2402 = vpack.c.b16 %v2374, %v2373
      %v2403 = vpack.c.b16 %v2376, %v2375
      %v2404 = vpack.c.b16 %v2378, %v2377
      %v2405 = vpack.c.b16 %v2380, %v2379
      %v2406 = vpack.c.b16 %v2382, %v2381
      %v2407 = vpack.c.b16 %v2384, %v2383
      %v2408 = vpack.c.b16 %v2386, %v2385
      %v2409 = vpack.c.b16 %v2388, %v2387
      %v2410 = vpack.c.b16 %v2390, %v2389
      %v2411 = vpack.c.b16 %v2392, %v2391
      %v2412 = vpack.c.b16 %v2394, %v2393
      %v2413 = vpack.c.b16 %v2396, %v2395
      %v2414 = vpack.c.b16 %v2398, %v2397
      %v2416 = vsel %vm1338, %v2399, 0
      %v2419 = vsel %vm1338, %v2400, 0
      %v2422 = vsel %vm1338, %v2401, 0
      %v2425 = vsel %vm1338, %v2402, 0
      %v2428 = vsel %vm1338, %v2403, 0
      %v2431 = vsel %vm1338, %v2404, 0
      %v2434 = vsel %vm1338, %v2405, 0
      %v2437 = vsel %vm1338, %v2406, 0
      %v2440 = vsel %vm1338, %v2407, 0
      %v2443 = vsel %vm1338, %v2408, 0
      %v2446 = vsel %vm1338, %v2409, 0
      %v2449 = vsel %vm1338, %v2410, 0
      %v2452 = vsel %vm1338, %v2411, 0
      %v2455 = vsel %vm1338, %v2412, 0
      %v2458 = vsel %vm1338, %v2413, 0
      %v2461 = vsel %vm1338, %v2414, 0
      %v2464 = vsel %vm1387, %v2334, 0
      %2466 = vmatprep.subr.bf16.mxu0 0
      %2467 = vmatpush1.bf16.msra.mxu0 %v2464
      %2468 = vmatprep.subr.bf16.mxu0 0
      %2469 = vmatpush1.bf16.msra.mxu0 0
      %2470 = vmatprep.subr.bf16.mxu0 0
      %2471 = vmatpush1.bf16.msra.mxu0 0
      %2472 = vmatprep.subr.bf16.mxu0 0
      %2473 = vmatpush1.bf16.msra.mxu0 0
      %2474 = vmatprep.subr.bf16.mxu0 0
      %2475 = vmatpush1.bf16.msra.mxu0 0
      %2476 = vmatprep.subr.bf16.mxu0 0
      %2477 = vmatpush1.bf16.msra.mxu0 0
      %2478 = vmatprep.subr.bf16.mxu0 0
      %2479 = vmatpush1.bf16.msra.mxu0 0
      %2480 = vmatprep.subr.bf16.mxu0 0
      %2481 = vmatpush1.bf16.msra.mxu0 0
      %2482 = vmatprep.subr.bf16.mxu0 0
      %2483 = vmatpush1.bf16.msra.mxu0 0
      %2484 = vmatprep.subr.bf16.mxu0 0
      %2485 = vmatpush1.bf16.msra.mxu0 0
      %2486 = vmatprep.subr.bf16.mxu0 0
      %2487 = vmatpush1.bf16.msra.mxu0 0
      %2488 = vmatprep.subr.bf16.mxu0 0
      %2489 = vmatpush1.bf16.msra.mxu0 0
      %2490 = vmatprep.subr.bf16.mxu0 0
      %2491 = vmatpush1.bf16.msra.mxu0 0
      %2492 = vmatprep.subr.bf16.mxu0 0
      %2493 = vmatpush1.bf16.msra.mxu0 0
      %2494 = vmatprep.subr.bf16.mxu0 0
      %2495 = vmatpush1.bf16.msra.mxu0 0
      %2496 = vmatprep.subr.bf16.mxu0 0
      %2497 = vmatpush1.bf16.msra.mxu0 0
      %2498 = vmatprep.mubr.bf16.mxu0 0
      %2499 = vmatmul.mubr.bf16.gmra.mrb[0].mxu0 %v2416
      %v2500 = vpop.f32.mrb[0].mxu0
      %v2501 = vadd.f32 0.0, %v2500
      %v2502 = vpop.f32.mrb[0].mxu0
      %v2503 = vpop.f32.mrb[0].mxu0
      %v2504 = vadd.f32 0.0, %v2503
      %v2505 = vpop.f32.mrb[0].mxu0
      %2506 = vmatprep.mubr.bf16.mxu0 0
      %2507 = vmatmul.mubr.bf16.gmra.mrb[0].mxu0 %v2419
      %v2508 = vpop.f32.mrb[0].mxu0
      %v2509 = vadd.f32 0.0, %v2508
      %v2510 = vpop.f32.mrb[0].mxu0
      %v2511 = vpop.f32.mrb[0].mxu0
      %v2512 = vadd.f32 0.0, %v2511
      %v2513 = vpop.f32.mrb[0].mxu0
      %2514 = vmatprep.mubr.bf16.mxu0 0
      %2515 = vmatmul.mubr.bf16.gmra.mrb[0].mxu0 %v2422
      %v2516 = vpop.f32.mrb[0].mxu0
      %v2517 = vadd.f32 0.0, %v2516
      %v2518 = vpop.f32.mrb[0].mxu0
      %v2519 = vpop.f32.mrb[0].mxu0
      %v2520 = vadd.f32 0.0, %v2519
      %v2521 = vpop.f32.mrb[0].mxu0
      %2522 = vmatprep.mubr.bf16.mxu0 0
      %2523 = vmatmul.mubr.bf16.gmra.mrb[0].mxu0 %v2425
      %v2524 = vpop.f32.mrb[0].mxu0
      %v2525 = vadd.f32 0.0, %v2524
      %v2526 = vpop.f32.mrb[0].mxu0
      %v2527 = vpop.f32.mrb[0].mxu0
      %v2528 = vadd.f32 0.0, %v2527
      %v2529 = vpop.f32.mrb[0].mxu0
      %2530 = vmatprep.mubr.bf16.mxu0 0
      %2531 = vmatmul.mubr.bf16.gmra.mrb[0].mxu0 %v2428
      %v2532 = vpop.f32.mrb[0].mxu0
      %v2533 = vadd.f32 0.0, %v2532
      %v2534 = vpop.f32.mrb[0].mxu0
      %v2535 = vpop.f32.mrb[0].mxu0
      %v2536 = vadd.f32 0.0, %v2535
      %v2537 = vpop.f32.mrb[0].mxu0
      %2538 = vmatprep.mubr.bf16.mxu0 0
      %2539 = vmatmul.mubr.bf16.gmra.mrb[0].mxu0 %v2431
      %v2540 = vpop.f32.mrb[0].mxu0
      %v2541 = vadd.f32 0.0, %v2540
      %v2542 = vpop.f32.mrb[0].mxu0
      %v2543 = vpop.f32.mrb[0].mxu0
      %v2544 = vadd.f32 0.0, %v2543
      %v2545 = vpop.f32.mrb[0].mxu0
      %2546 = vmatprep.mubr.bf16.mxu0 0
      %2547 = vmatmul.mubr.bf16.gmra.mrb[0].mxu0 %v2434
      %v2548 = vpop.f32.mrb[0].mxu0
      %v2549 = vadd.f32 0.0, %v2548
      %v2550 = vpop.f32.mrb[0].mxu0
      %v2551 = vpop.f32.mrb[0].mxu0
      %v2552 = vadd.f32 0.0, %v2551
      %v2553 = vpop.f32.mrb[0].mxu0
      %2554 = vmatprep.mubr.bf16.mxu0 0
      %2555 = vmatmul.mubr.bf16.gmra.mrb[0].mxu0 %v2437
      %v2556 = vpop.f32.mrb[0].mxu0
      %v2557 = vadd.f32 0.0, %v2556
      %v2558 = vpop.f32.mrb[0].mxu0
      %v2559 = vpop.f32.mrb[0].mxu0
      %v2560 = vadd.f32 0.0, %v2559
      %v2561 = vpop.f32.mrb[0].mxu0
      %2562 = vmatprep.mubr.bf16.mxu0 0
      %2563 = vmatmul.mubr.bf16.gmra.mrb[0].mxu0 %v2440
      %v2564 = vpop.f32.mrb[0].mxu0
      %v2565 = vadd.f32 0.0, %v2564
      %v2566 = vpop.f32.mrb[0].mxu0
      %v2567 = vpop.f32.mrb[0].mxu0
      %v2568 = vadd.f32 0.0, %v2567
      %v2569 = vpop.f32.mrb[0].mxu0
      %2570 = vmatprep.mubr.bf16.mxu0 0
      %2571 = vmatmul.mubr.bf16.gmra.mrb[0].mxu0 %v2443
      %v2572 = vpop.f32.mrb[0].mxu0
      %v2573 = vadd.f32 0.0, %v2572
      %v2574 = vpop.f32.mrb[0].mxu0
      %v2575 = vpop.f32.mrb[0].mxu0
      %v2576 = vadd.f32 0.0, %v2575
      %v2577 = vpop.f32.mrb[0].mxu0
      %2578 = vmatprep.mubr.bf16.mxu0 0
      %2579 = vmatmul.mubr.bf16.gmra.mrb[0].mxu0 %v2446
      %v2580 = vpop.f32.mrb[0].mxu0
      %v2581 = vadd.f32 0.0, %v2580
      %v2582 = vpop.f32.mrb[0].mxu0
      %v2583 = vpop.f32.mrb[0].mxu0
      %v2584 = vadd.f32 0.0, %v2583
      %v2585 = vpop.f32.mrb[0].mxu0
      %2586 = vmatprep.mubr.bf16.mxu0 0
      %2587 = vmatmul.mubr.bf16.gmra.mrb[0].mxu0 %v2449
      %v2588 = vpop.f32.mrb[0].mxu0
      %v2589 = vadd.f32 0.0, %v2588
      %v2590 = vpop.f32.mrb[0].mxu0
      %v2591 = vpop.f32.mrb[0].mxu0
      %v2592 = vadd.f32 0.0, %v2591
      %v2593 = vpop.f32.mrb[0].mxu0
      %2594 = vmatprep.mubr.bf16.mxu0 0
      %2595 = vmatmul.mubr.bf16.gmra.mrb[0].mxu0 %v2452
      %v2596 = vpop.f32.mrb[0].mxu0
      %v2597 = vadd.f32 0.0, %v2596
      %v2598 = vpop.f32.mrb[0].mxu0
      %v2599 = vpop.f32.mrb[0].mxu0
      %v2600 = vadd.f32 0.0, %v2599
      %v2601 = vpop.f32.mrb[0].mxu0
      %2602 = vmatprep.mubr.bf16.mxu0 0
      %2603 = vmatmul.mubr.bf16.gmra.mrb[0].mxu0 %v2455
      %v2604 = vpop.f32.mrb[0].mxu0
      %v2605 = vadd.f32 0.0, %v2604
      %v2606 = vpop.f32.mrb[0].mxu0
      %v2607 = vpop.f32.mrb[0].mxu0
      %v2608 = vadd.f32 0.0, %v2607
      %v2609 = vpop.f32.mrb[0].mxu0
      %2610 = vmatprep.mubr.bf16.mxu0 0
      %2611 = vmatmul.mubr.bf16.gmra.mrb[0].mxu0 %v2458
      %v2612 = vpop.f32.mrb[0].mxu0
      %v2613 = vadd.f32 0.0, %v2612
      %v2614 = vpop.f32.mrb[0].mxu0
      %v2615 = vpop.f32.mrb[0].mxu0
      %v2616 = vadd.f32 0.0, %v2615
      %v2617 = vpop.f32.mrb[0].mxu0
      %2618 = vmatprep.mubr.bf16.mxu0 0
      %2619 = vmatmul.mubr.bf16.gmra.mrb[0].mxu0 %v2461
      %v2620 = vpop.f32.mrb[0].mxu0
      %v2621 = vadd.f32 0.0, %v2620
      %v2622 = vpop.f32.mrb[0].mxu0
      %v2623 = vpop.f32.mrb[0].mxu0
      %v2624 = vadd.f32 0.0, %v2623
      %v2625 = vpop.f32.mrb[0].mxu0
      %2626 = vdwg.mxu0
      %v2627 = vadd.f32 %v2269, %v2501
      %v2628 = vadd.f32 %v2270, %v2504
      %v2629 = vadd.f32 %v2271, %v2509
      %v2630 = vadd.f32 %v2272, %v2512
      %v2631 = vadd.f32 %v2273, %v2517
      %v2632 = vadd.f32 %v2274, %v2520
      %v2633 = vadd.f32 %v2275, %v2525
      %v2634 = vadd.f32 %v2276, %v2528
      %v2635 = vadd.f32 %v2277, %v2533
      %v2636 = vadd.f32 %v2278, %v2536
      %v2637 = vadd.f32 %v2279, %v2541
      %v2638 = vadd.f32 %v2280, %v2544
      %v2639 = vadd.f32 %v2281, %v2549
      %v2640 = vadd.f32 %v2282, %v2552
      %v2641 = vadd.f32 %v2283, %v2557
      %v2642 = vadd.f32 %v2284, %v2560
      %v2643 = vadd.f32 %v2285, %v2565
      %v2644 = vadd.f32 %v2286, %v2568
      %v2645 = vadd.f32 %v2287, %v2573
      %v2646 = vadd.f32 %v2288, %v2576
      %v2647 = vadd.f32 %v2289, %v2581
      %v2648 = vadd.f32 %v2290, %v2584
      %v2649 = vadd.f32 %v2291, %v2589
      %v2650 = vadd.f32 %v2292, %v2592
      %v2651 = vadd.f32 %v2293, %v2597
      %v2652 = vadd.f32 %v2294, %v2600
      %v2653 = vadd.f32 %v2295, %v2605
      %v2654 = vadd.f32 %v2296, %v2608
      %v2655 = vadd.f32 %v2297, %v2613
      %v2656 = vadd.f32 %v2298, %v2616
      %v2657 = vadd.f32 %v2299, %v2621
      %v2658 = vadd.f32 %v2300, %v2624
      %v2659 = vld [vmem:[%s734] sm:$0xf]
      %v2660 = vld [vmem:[%s734 + $0x4] sm:$0xf]
      %v2661 = vld [vmem:[%s734 + $0x8] sm:$0x1]
      %v2662 = vld [vmem:[%s734 + $0xc] sm:$0xf]
      %v2663 = vld [vmem:[%s734 + $0x10] sm:$0xf]
      %v2664 = vld [vmem:[%s734 + $0x14] sm:$0x1]
      %v2665 = vld [vmem:[%s734 + $0x18] sm:$0xf]
      %v2666 = vld [vmem:[%s734 + $0x1c] sm:$0xf]
      %v2667 = vld [vmem:[%s734 + $0x20] sm:$0x1]
      %v2668 = vld [vmem:[%s734 + $0x24] sm:$0xf]
      %v2669 = vld [vmem:[%s734 + $0x28] sm:$0xf]
      %v2670 = vld [vmem:[%s734 + $0x2c] sm:$0x1]
      %v2671 = vld [vmem:[%s734 + $0x30] sm:$0xf]
      %v2672 = vld [vmem:[%s734 + $0x34] sm:$0xf]
      %v2673 = vld [vmem:[%s734 + $0x38] sm:$0x1]
      %v2674 = vld [vmem:[%s734 + $0x3c] sm:$0xf]
      %v2675 = vld [vmem:[%s734 + $0x40] sm:$0xf]
      %v2676 = vld [vmem:[%s734 + $0x44] sm:$0x1]
      %v2677 = vld [vmem:[%s734 + $0x48] sm:$0xf]
      %v2678 = vld [vmem:[%s734 + $0x4c] sm:$0xf]
      %v2679 = vld [vmem:[%s734 + $0x50] sm:$0x1]
      %v2680 = vld [vmem:[%s734 + $0x54] sm:$0xf]
      %v2681 = vld [vmem:[%s734 + $0x58] sm:$0xf]
      %v2682 = vld [vmem:[%s734 + $0x5c] sm:$0x1]
      %v2683 = vld [vmem:[%s734 + $0x60] sm:$0xf]
      %v2684 = vld [vmem:[%s734 + $0x64] sm:$0xf]
      %v2685 = vld [vmem:[%s734 + $0x68] sm:$0x1]
      %v2686 = vld [vmem:[%s734 + $0x6c] sm:$0xf]
      %v2687 = vld [vmem:[%s734 + $0x70] sm:$0xf]
      %v2688 = vld [vmem:[%s734 + $0x74] sm:$0x1]
      %v2689 = vld [vmem:[%s734 + $0x78] sm:$0xf]
      %v2690 = vld [vmem:[%s734 + $0x7c] sm:$0xf]
      %v2691 = vld [vmem:[%s734 + $0x80] sm:$0x1]
      %v2692 = vld [vmem:[%s734 + $0x84] sm:$0xf]
      %v2693 = vld [vmem:[%s734 + $0x88] sm:$0xf]
      %v2694 = vld [vmem:[%s734 + $0x8c] sm:$0x1]
      %v2695 = vld [vmem:[%s734 + $0x90] sm:$0xf]
      %v2696 = vld [vmem:[%s734 + $0x94] sm:$0xf]
      %v2697 = vld [vmem:[%s734 + $0x98] sm:$0x1]
      %v2698 = vld [vmem:[%s734 + $0x9c] sm:$0xf]
      %v2699 = vld [vmem:[%s734 + $0xa0] sm:$0xf]
      %v2700 = vld [vmem:[%s734 + $0xa4] sm:$0x1]
      %v2701 = vld [vmem:[%s734 + $0xa8] sm:$0xf]
      %v2702 = vld [vmem:[%s734 + $0xac] sm:$0xf]
      %v2703 = vld [vmem:[%s734 + $0xb0] sm:$0x1]
      %v2704 = vld [vmem:[%s734 + $0xb4] sm:$0xf]
      %v2705 = vld [vmem:[%s734 + $0xb8] sm:$0xf]
      %v2706 = vld [vmem:[%s734 + $0xbc] sm:$0x1]
      %v2708 = vshrl.u32 %v2659, 16
      %v2710 = vrot.slane %v2708, 4
      %v2711 = vshll.u32 %v2659, 16
      %v2713 = vrot.slane %v2711, 5
      %v2714 = vor.u32 %v2710, %v2713
      %v2715 = vrot.slane %v2714, 4
      %v2717 = vshll.u32 %v2660, 16
      %v2719 = vrot.slane %v2717, 5
      %v2720 = vsel %vm903, %v2715, %v2719
      %v2721 = vshrl.u32 %v2660, 16
      %v2723 = vrot.slane %v2721, 4
      %v2724 = vor.u32 %v2723, %v2719
      %v2725 = vrot.slane %v2724, 4
      %v2727 = vshll.u32 %v2661, 16
      %v2729 = vrot.slane %v2727, 5
      %v2730 = vsel %vm903, %v2725, %v2729
      %v2732 = vshrl.u32 %v2662, 16
      %v2734 = vrot.slane %v2732, 4
      %v2735 = vshll.u32 %v2662, 16
      %v2737 = vrot.slane %v2735, 5
      %v2738 = vor.u32 %v2734, %v2737
      %v2739 = vrot.slane %v2738, 4
      %v2741 = vshll.u32 %v2663, 16
      %v2743 = vrot.slane %v2741, 5
      %v2744 = vsel %vm903, %v2739, %v2743
      %v2745 = vshrl.u32 %v2663, 16
      %v2747 = vrot.slane %v2745, 4
      %v2748 = vor.u32 %v2747, %v2743
      %v2749 = vrot.slane %v2748, 4
      %v2751 = vshll.u32 %v2664, 16
      %v2753 = vrot.slane %v2751, 5
      %v2754 = vsel %vm903, %v2749, %v2753
      %v2756 = vshrl.u32 %v2665, 16
      %v2758 = vrot.slane %v2756, 4
      %v2759 = vshll.u32 %v2665, 16
      %v2761 = vrot.slane %v2759, 5
      %v2762 = vor.u32 %v2758, %v2761
      %v2763 = vrot.slane %v2762, 4
      %v2765 = vshll.u32 %v2666, 16
      %v2767 = vrot.slane %v2765, 5
      %v2768 = vsel %vm903, %v2763, %v2767
      %v2769 = vshrl.u32 %v2666, 16
      %v2771 = vrot.slane %v2769, 4
      %v2772 = vor.u32 %v2771, %v2767
      %v2773 = vrot.slane %v2772, 4
      %v2775 = vshll.u32 %v2667, 16
      %v2777 = vrot.slane %v2775, 5
      %v2778 = vsel %vm903, %v2773, %v2777
      %v2780 = vshrl.u32 %v2668, 16
      %v2782 = vrot.slane %v2780, 4
      %v2783 = vshll.u32 %v2668, 16
      %v2785 = vrot.slane %v2783, 5
      %v2786 = vor.u32 %v2782, %v2785
      %v2787 = vrot.slane %v2786, 4
      %v2789 = vshll.u32 %v2669, 16
      %v2791 = vrot.slane %v2789, 5
      %v2792 = vsel %vm903, %v2787, %v2791
      %v2793 = vshrl.u32 %v2669, 16
      %v2795 = vrot.slane %v2793, 4
      %v2796 = vor.u32 %v2795, %v2791
      %v2797 = vrot.slane %v2796, 4
      %v2799 = vshll.u32 %v2670, 16
      %v2801 = vrot.slane %v2799, 5
      %v2802 = vsel %vm903, %v2797, %v2801
      %v2804 = vshrl.u32 %v2671, 16
      %v2806 = vrot.slane %v2804, 4
      %v2807 = vshll.u32 %v2671, 16
      %v2809 = vrot.slane %v2807, 5
      %v2810 = vor.u32 %v2806, %v2809
      %v2811 = vrot.slane %v2810, 4
      %v2813 = vshll.u32 %v2672, 16
      %v2815 = vrot.slane %v2813, 5
      %v2816 = vsel %vm903, %v2811, %v2815
      %v2817 = vshrl.u32 %v2672, 16
      %v2819 = vrot.slane %v2817, 4
      %v2820 = vor.u32 %v2819, %v2815
      %v2821 = vrot.slane %v2820, 4
      %v2823 = vshll.u32 %v2673, 16
      %v2825 = vrot.slane %v2823, 5
      %v2826 = vsel %vm903, %v2821, %v2825
      %v2828 = vshrl.u32 %v2674, 16
      %v2830 = vrot.slane %v2828, 4
      %v2831 = vshll.u32 %v2674, 16
      %v2833 = vrot.slane %v2831, 5
      %v2834 = vor.u32 %v2830, %v2833
      %v2835 = vrot.slane %v2834, 4
      %v2837 = vshll.u32 %v2675, 16
      %v2839 = vrot.slane %v2837, 5
      %v2840 = vsel %vm903, %v2835, %v2839
      %v2841 = vshrl.u32 %v2675, 16
      %v2843 = vrot.slane %v2841, 4
      %v2844 = vor.u32 %v2843, %v2839
      %v2845 = vrot.slane %v2844, 4
      %v2847 = vshll.u32 %v2676, 16
      %v2849 = vrot.slane %v2847, 5
      %v2850 = vsel %vm903, %v2845, %v2849
      %v2852 = vshrl.u32 %v2677, 16
      %v2854 = vrot.slane %v2852, 4
      %v2855 = vshll.u32 %v2677, 16
      %v2857 = vrot.slane %v2855, 5
      %v2858 = vor.u32 %v2854, %v2857
      %v2859 = vrot.slane %v2858, 4
      %v2861 = vshll.u32 %v2678, 16
      %v2863 = vrot.slane %v2861, 5
      %v2864 = vsel %vm903, %v2859, %v2863
      %v2865 = vshrl.u32 %v2678, 16
      %v2867 = vrot.slane %v2865, 4
      %v2868 = vor.u32 %v2867, %v2863
      %v2869 = vrot.slane %v2868, 4
      %v2871 = vshll.u32 %v2679, 16
      %v2873 = vrot.slane %v2871, 5
      %v2874 = vsel %vm903, %v2869, %v2873
      %v2876 = vshrl.u32 %v2680, 16
      %v2878 = vrot.slane %v2876, 4
      %v2879 = vshll.u32 %v2680, 16
      %v2881 = vrot.slane %v2879, 5
      %v2882 = vor.u32 %v2878, %v2881
      %v2883 = vrot.slane %v2882, 4
      %v2885 = vshll.u32 %v2681, 16
      %v2887 = vrot.slane %v2885, 5
      %v2888 = vsel %vm903, %v2883, %v2887
      %v2889 = vshrl.u32 %v2681, 16
      %v2891 = vrot.slane %v2889, 4
      %v2892 = vor.u32 %v2891, %v2887
      %v2893 = vrot.slane %v2892, 4
      %v2895 = vshll.u32 %v2682, 16
      %v2897 = vrot.slane %v2895, 5
      %v2898 = vsel %vm903, %v2893, %v2897
      %v2900 = vshrl.u32 %v2683, 16
      %v2902 = vrot.slane %v2900, 4
      %v2903 = vshll.u32 %v2683, 16
      %v2905 = vrot.slane %v2903, 5
      %v2906 = vor.u32 %v2902, %v2905
      %v2907 = vrot.slane %v2906, 4
      %v2909 = vshll.u32 %v2684, 16
      %v2911 = vrot.slane %v2909, 5
      %v2912 = vsel %vm903, %v2907, %v2911
      %v2913 = vshrl.u32 %v2684, 16
      %v2915 = vrot.slane %v2913, 4
      %v2916 = vor.u32 %v2915, %v2911
      %v2917 = vrot.slane %v2916, 4
      %v2919 = vshll.u32 %v2685, 16
      %v2921 = vrot.slane %v2919, 5
      %v2922 = vsel %vm903, %v2917, %v2921
      %v2924 = vshrl.u32 %v2686, 16
      %v2926 = vrot.slane %v2924, 4
      %v2927 = vshll.u32 %v2686, 16
      %v2929 = vrot.slane %v2927, 5
      %v2930 = vor.u32 %v2926, %v2929
      %v2931 = vrot.slane %v2930, 4
      %v2933 = vshll.u32 %v2687, 16
      %v2935 = vrot.slane %v2933, 5
      %v2936 = vsel %vm903, %v2931, %v2935
      %v2937 = vshrl.u32 %v2687, 16
      %v2939 = vrot.slane %v2937, 4
      %v2940 = vor.u32 %v2939, %v2935
      %v2941 = vrot.slane %v2940, 4
      %v2943 = vshll.u32 %v2688, 16
      %v2945 = vrot.slane %v2943, 5
      %v2946 = vsel %vm903, %v2941, %v2945
      %v2948 = vshrl.u32 %v2689, 16
      %v2950 = vrot.slane %v2948, 4
      %v2951 = vshll.u32 %v2689, 16
      %v2953 = vrot.slane %v2951, 5
      %v2954 = vor.u32 %v2950, %v2953
      %v2955 = vrot.slane %v2954, 4
      %v2957 = vshll.u32 %v2690, 16
      %v2959 = vrot.slane %v2957, 5
      %v2960 = vsel %vm903, %v2955, %v2959
      %v2961 = vshrl.u32 %v2690, 16
      %v2963 = vrot.slane %v2961, 4
      %v2964 = vor.u32 %v2963, %v2959
      %v2965 = vrot.slane %v2964, 4
      %v2967 = vshll.u32 %v2691, 16
      %v2969 = vrot.slane %v2967, 5
      %v2970 = vsel %vm903, %v2965, %v2969
      %v2972 = vshrl.u32 %v2692, 16
      %v2974 = vrot.slane %v2972, 4
      %v2975 = vshll.u32 %v2692, 16
      %v2977 = vrot.slane %v2975, 5
      %v2978 = vor.u32 %v2974, %v2977
      %v2979 = vrot.slane %v2978, 4
      %v2981 = vshll.u32 %v2693, 16
      %v2983 = vrot.slane %v2981, 5
      %v2984 = vsel %vm903, %v2979, %v2983
      %v2985 = vshrl.u32 %v2693, 16
      %v2987 = vrot.slane %v2985, 4
      %v2988 = vor.u32 %v2987, %v2983
      %v2989 = vrot.slane %v2988, 4
      %v2991 = vshll.u32 %v2694, 16
      %v2993 = vrot.slane %v2991, 5
      %v2994 = vsel %vm903, %v2989, %v2993
      %v2996 = vshrl.u32 %v2695, 16
      %v2998 = vrot.slane %v2996, 4
      %v2999 = vshll.u32 %v2695, 16
      %v3001 = vrot.slane %v2999, 5
      %v3002 = vor.u32 %v2998, %v3001
      %v3003 = vrot.slane %v3002, 4
      %v3005 = vshll.u32 %v2696, 16
      %v3007 = vrot.slane %v3005, 5
      %v3008 = vsel %vm903, %v3003, %v3007
      %v3009 = vshrl.u32 %v2696, 16
      %v3011 = vrot.slane %v3009, 4
      %v3012 = vor.u32 %v3011, %v3007
      %v3013 = vrot.slane %v3012, 4
      %v3015 = vshll.u32 %v2697, 16
      %v3017 = vrot.slane %v3015, 5
      %v3018 = vsel %vm903, %v3013, %v3017
      %v3020 = vshrl.u32 %v2698, 16
      %v3022 = vrot.slane %v3020, 4
      %v3023 = vshll.u32 %v2698, 16
      %v3025 = vrot.slane %v3023, 5
      %v3026 = vor.u32 %v3022, %v3025
      %v3027 = vrot.slane %v3026, 4
      %v3029 = vshll.u32 %v2699, 16
      %v3031 = vrot.slane %v3029, 5
      %v3032 = vsel %vm903, %v3027, %v3031
      %v3033 = vshrl.u32 %v2699, 16
      %v3035 = vrot.slane %v3033, 4
      %v3036 = vor.u32 %v3035, %v3031
      %v3037 = vrot.slane %v3036, 4
      %v3039 = vshll.u32 %v2700, 16
      %v3041 = vrot.slane %v3039, 5
      %v3042 = vsel %vm903, %v3037, %v3041
      %v3044 = vshrl.u32 %v2701, 16
      %v3046 = vrot.slane %v3044, 4
      %v3047 = vshll.u32 %v2701, 16
      %v3049 = vrot.slane %v3047, 5
      %v3050 = vor.u32 %v3046, %v3049
      %v3051 = vrot.slane %v3050, 4
      %v3053 = vshll.u32 %v2702, 16
      %v3055 = vrot.slane %v3053, 5
      %v3056 = vsel %vm903, %v3051, %v3055
      %v3057 = vshrl.u32 %v2702, 16
      %v3059 = vrot.slane %v3057, 4
      %v3060 = vor.u32 %v3059, %v3055
      %v3061 = vrot.slane %v3060, 4
      %v3063 = vshll.u32 %v2703, 16
      %v3065 = vrot.slane %v3063, 5
      %v3066 = vsel %vm903, %v3061, %v3065
      %v3068 = vshrl.u32 %v2704, 16
      %v3070 = vrot.slane %v3068, 4
      %v3071 = vshll.u32 %v2704, 16
      %v3073 = vrot.slane %v3071, 5
      %v3074 = vor.u32 %v3070, %v3073
      %v3075 = vrot.slane %v3074, 4
      %v3077 = vshll.u32 %v2705, 16
      %v3079 = vrot.slane %v3077, 5
      %v3080 = vsel %vm903, %v3075, %v3079
      %v3081 = vshrl.u32 %v2705, 16
      %v3083 = vrot.slane %v3081, 4
      %v3084 = vor.u32 %v3083, %v3079
      %v3085 = vrot.slane %v3084, 4
      %v3087 = vshll.u32 %v2706, 16
      %v3089 = vrot.slane %v3087, 5
      %v3090 = vsel %vm903, %v3085, %v3089
      %s3091 = scalar_lea.vmem %s301, 8
      %v3092 = vld [vmem:[%s3091] sm:$0x3]
      %v3093 = vunpack.c.l.b16 %v2720
      %v3094 = vunpack.c.l.b16 %v2730
      %v3095 = vunpack.c.l.b16 %v2744
      %v3096 = vunpack.c.l.b16 %v2754
      %v3097 = vunpack.c.l.b16 %v2768
      %v3098 = vunpack.c.l.b16 %v2778
      %v3099 = vunpack.c.l.b16 %v2792
      %v3100 = vunpack.c.l.b16 %v2802
      %v3101 = vunpack.c.l.b16 %v2816
      %v3102 = vunpack.c.l.b16 %v2826
      %v3103 = vunpack.c.l.b16 %v2840
      %v3104 = vunpack.c.l.b16 %v2850
      %v3105 = vunpack.c.l.b16 %v2864
      %v3106 = vunpack.c.l.b16 %v2874
      %v3107 = vunpack.c.l.b16 %v2888
      %v3108 = vunpack.c.l.b16 %v2898
      %v3109 = vunpack.c.l.b16 %v2912
      %v3110 = vunpack.c.l.b16 %v2922
      %v3111 = vunpack.c.l.b16 %v2936
      %v3112 = vunpack.c.l.b16 %v2946
      %v3113 = vunpack.c.l.b16 %v2960
      %v3114 = vunpack.c.l.b16 %v2970
      %v3115 = vunpack.c.l.b16 %v2984
      %v3116 = vunpack.c.l.b16 %v2994
      %v3117 = vunpack.c.l.b16 %v3008
      %v3118 = vunpack.c.l.b16 %v3018
      %v3119 = vunpack.c.l.b16 %v3032
      %v3120 = vunpack.c.l.b16 %v3042
      %v3121 = vunpack.c.l.b16 %v3056
      %v3122 = vunpack.c.l.b16 %v3066
      %v3123 = vunpack.c.l.b16 %v3080
      %v3124 = vunpack.c.l.b16 %v3090
      %v3125 = vpack.c.b16 %v3094, %v3093
      %v3126 = vpack.c.b16 %v3096, %v3095
      %v3127 = vpack.c.b16 %v3098, %v3097
      %v3128 = vpack.c.b16 %v3100, %v3099
      %v3129 = vpack.c.b16 %v3102, %v3101
      %v3130 = vpack.c.b16 %v3104, %v3103
      %v3131 = vpack.c.b16 %v3106, %v3105
      %v3132 = vpack.c.b16 %v3108, %v3107
      %v3133 = vpack.c.b16 %v3110, %v3109
      %v3134 = vpack.c.b16 %v3112, %v3111
      %v3135 = vpack.c.b16 %v3114, %v3113
      %v3136 = vpack.c.b16 %v3116, %v3115
      %v3137 = vpack.c.b16 %v3118, %v3117
      %v3138 = vpack.c.b16 %v3120, %v3119
      %v3139 = vpack.c.b16 %v3122, %v3121
      %v3140 = vpack.c.b16 %v3124, %v3123
      %v3142 = vsel %vm1338, %v3125, 0
      %v3145 = vsel %vm1338, %v3126, 0
      %v3148 = vsel %vm1338, %v3127, 0
      %v3151 = vsel %vm1338, %v3128, 0
      %v3154 = vsel %vm1338, %v3129, 0
      %v3157 = vsel %vm1338, %v3130, 0
      %v3160 = vsel %vm1338, %v3131, 0
      %v3163 = vsel %vm1338, %v3132, 0
      %v3166 = vsel %vm1338, %v3133, 0
      %v3169 = vsel %vm1338, %v3134, 0
      %v3172 = vsel %vm1338, %v3135, 0
      %v3175 = vsel %vm1338, %v3136, 0
      %v3178 = vsel %vm1338, %v3137, 0
      %v3181 = vsel %vm1338, %v3138, 0
      %v3184 = vsel %vm1338, %v3139, 0
      %v3187 = vsel %vm1338, %v3140, 0
      %v3190 = vsel %vm1387, %v3092, 0
      %3192 = vmatprep.subr.bf16.mxu0 0
      %3193 = vmatpush1.bf16.msra.mxu0 %v3190
      %3194 = vmatprep.subr.bf16.mxu0 0
      %3195 = vmatpush1.bf16.msra.mxu0 0
      %3196 = vmatprep.subr.bf16.mxu0 0
      %3197 = vmatpush1.bf16.msra.mxu0 0
      %3198 = vmatprep.subr.bf16.mxu0 0
      %3199 = vmatpush1.bf16.msra.mxu0 0
      %3200 = vmatprep.subr.bf16.mxu0 0
      %3201 = vmatpush1.bf16.msra.mxu0 0
      %3202 = vmatprep.subr.bf16.mxu0 0
      %3203 = vmatpush1.bf16.msra.mxu0 0
      %3204 = vmatprep.subr.bf16.mxu0 0
      %3205 = vmatpush1.bf16.msra.mxu0 0
      %3206 = vmatprep.subr.bf16.mxu0 0
      %3207 = vmatpush1.bf16.msra.mxu0 0
      %3208 = vmatprep.subr.bf16.mxu0 0
      %3209 = vmatpush1.bf16.msra.mxu0 0
      %3210 = vmatprep.subr.bf16.mxu0 0
      %3211 = vmatpush1.bf16.msra.mxu0 0
      %3212 = vmatprep.subr.bf16.mxu0 0
      %3213 = vmatpush1.bf16.msra.mxu0 0
      %3214 = vmatprep.subr.bf16.mxu0 0
      %3215 = vmatpush1.bf16.msra.mxu0 0
      %3216 = vmatprep.subr.bf16.mxu0 0
      %3217 = vmatpush1.bf16.msra.mxu0 0
      %3218 = vmatprep.subr.bf16.mxu0 0
      %3219 = vmatpush1.bf16.msra.mxu0 0
      %3220 = vmatprep.subr.bf16.mxu0 0
      %3221 = vmatpush1.bf16.msra.mxu0 0
      %3222 = vmatprep.subr.bf16.mxu0 0
      %3223 = vmatpush1.bf16.msra.mxu0 0
      %3224 = vmatprep.mubr.bf16.mxu0 0
      %3225 = vmatmul.mubr.bf16.gmra.mrb[0].mxu0 %v3142
      %v3226 = vpop.f32.mrb[0].mxu0
      %v3227 = vadd.f32 0.0, %v3226
      %v3228 = vpop.f32.mrb[0].mxu0
      %v3229 = vpop.f32.mrb[0].mxu0
      %v3230 = vadd.f32 0.0, %v3229
      %v3231 = vpop.f32.mrb[0].mxu0
      %3232 = vmatprep.mubr.bf16.mxu0 0
      %3233 = vmatmul.mubr.bf16.gmra.mrb[0].mxu0 %v3145
      %v3234 = vpop.f32.mrb[0].mxu0
      %v3235 = vadd.f32 0.0, %v3234
      %v3236 = vpop.f32.mrb[0].mxu0
      %v3237 = vpop.f32.mrb[0].mxu0
      %v3238 = vadd.f32 0.0, %v3237
      %v3239 = vpop.f32.mrb[0].mxu0
      %3240 = vmatprep.mubr.bf16.mxu0 0
      %3241 = vmatmul.mubr.bf16.gmra.mrb[0].mxu0 %v3148
      %v3242 = vpop.f32.mrb[0].mxu0
      %v3243 = vadd.f32 0.0, %v3242
      %v3244 = vpop.f32.mrb[0].mxu0
      %v3245 = vpop.f32.mrb[0].mxu0
      %v3246 = vadd.f32 0.0, %v3245
      %v3247 = vpop.f32.mrb[0].mxu0
      %3248 = vmatprep.mubr.bf16.mxu0 0
      %3249 = vmatmul.mubr.bf16.gmra.mrb[0].mxu0 %v3151
      %v3250 = vpop.f32.mrb[0].mxu0
      %v3251 = vadd.f32 0.0, %v3250
      %v3252 = vpop.f32.mrb[0].mxu0
      %v3253 = vpop.f32.mrb[0].mxu0
      %v3254 = vadd.f32 0.0, %v3253
      %v3255 = vpop.f32.mrb[0].mxu0
      %3256 = vmatprep.mubr.bf16.mxu0 0
      %3257 = vmatmul.mubr.bf16.gmra.mrb[0].mxu0 %v3154
      %v3258 = vpop.f32.mrb[0].mxu0
      %v3259 = vadd.f32 0.0, %v3258
      %v3260 = vpop.f32.mrb[0].mxu0
      %v3261 = vpop.f32.mrb[0].mxu0
      %v3262 = vadd.f32 0.0, %v3261
      %v3263 = vpop.f32.mrb[0].mxu0
      %3264 = vmatprep.mubr.bf16.mxu0 0
      %3265 = vmatmul.mubr.bf16.gmra.mrb[0].mxu0 %v3157
      %v3266 = vpop.f32.mrb[0].mxu0
      %v3267 = vadd.f32 0.0, %v3266
      %v3268 = vpop.f32.mrb[0].mxu0
      %v3269 = vpop.f32.mrb[0].mxu0
      %v3270 = vadd.f32 0.0, %v3269
      %v3271 = vpop.f32.mrb[0].mxu0
      %3272 = vmatprep.mubr.bf16.mxu0 0
      %3273 = vmatmul.mubr.bf16.gmra.mrb[0].mxu0 %v3160
      %v3274 = vpop.f32.mrb[0].mxu0
      %v3275 = vadd.f32 0.0, %v3274
      %v3276 = vpop.f32.mrb[0].mxu0
      %v3277 = vpop.f32.mrb[0].mxu0
      %v3278 = vadd.f32 0.0, %v3277
      %v3279 = vpop.f32.mrb[0].mxu0
      %3280 = vmatprep.mubr.bf16.mxu0 0
      %3281 = vmatmul.mubr.bf16.gmra.mrb[0].mxu0 %v3163
      %v3282 = vpop.f32.mrb[0].mxu0
      %v3283 = vadd.f32 0.0, %v3282
      %v3284 = vpop.f32.mrb[0].mxu0
      %v3285 = vpop.f32.mrb[0].mxu0
      %v3286 = vadd.f32 0.0, %v3285
      %v3287 = vpop.f32.mrb[0].mxu0
      %3288 = vmatprep.mubr.bf16.mxu0 0
      %3289 = vmatmul.mubr.bf16.gmra.mrb[0].mxu0 %v3166
      %v3290 = vpop.f32.mrb[0].mxu0
      %v3291 = vadd.f32 0.0, %v3290
      %v3292 = vpop.f32.mrb[0].mxu0
      %v3293 = vpop.f32.mrb[0].mxu0
      %v3294 = vadd.f32 0.0, %v3293
      %v3295 = vpop.f32.mrb[0].mxu0
      %3296 = vmatprep.mubr.bf16.mxu0 0
      %3297 = vmatmul.mubr.bf16.gmra.mrb[0].mxu0 %v3169
      %v3298 = vpop.f32.mrb[0].mxu0
      %v3299 = vadd.f32 0.0, %v3298
      %v3300 = vpop.f32.mrb[0].mxu0
      %v3301 = vpop.f32.mrb[0].mxu0
      %v3302 = vadd.f32 0.0, %v3301
      %v3303 = vpop.f32.mrb[0].mxu0
      %3304 = vmatprep.mubr.bf16.mxu0 0
      %3305 = vmatmul.mubr.bf16.gmra.mrb[0].mxu0 %v3172
      %v3306 = vpop.f32.mrb[0].mxu0
      %v3307 = vadd.f32 0.0, %v3306
      %v3308 = vpop.f32.mrb[0].mxu0
      %v3309 = vpop.f32.mrb[0].mxu0
      %v3310 = vadd.f32 0.0, %v3309
      %v3311 = vpop.f32.mrb[0].mxu0
      %3312 = vmatprep.mubr.bf16.mxu0 0
      %3313 = vmatmul.mubr.bf16.gmra.mrb[0].mxu0 %v3175
      %v3314 = vpop.f32.mrb[0].mxu0
      %v3315 = vadd.f32 0.0, %v3314
      %v3316 = vpop.f32.mrb[0].mxu0
      %v3317 = vpop.f32.mrb[0].mxu0
      %v3318 = vadd.f32 0.0, %v3317
      %v3319 = vpop.f32.mrb[0].mxu0
      %3320 = vmatprep.mubr.bf16.mxu0 0
      %3321 = vmatmul.mubr.bf16.gmra.mrb[0].mxu0 %v3178
      %v3322 = vpop.f32.mrb[0].mxu0
      %v3323 = vadd.f32 0.0, %v3322
      %v3324 = vpop.f32.mrb[0].mxu0
      %v3325 = vpop.f32.mrb[0].mxu0
      %v3326 = vadd.f32 0.0, %v3325
      %v3327 = vpop.f32.mrb[0].mxu0
      %3328 = vmatprep.mubr.bf16.mxu0 0
      %3329 = vmatmul.mubr.bf16.gmra.mrb[0].mxu0 %v3181
      %v3330 = vpop.f32.mrb[0].mxu0
      %v3331 = vadd.f32 0.0, %v3330
      %v3332 = vpop.f32.mrb[0].mxu0
      %v3333 = vpop.f32.mrb[0].mxu0
      %v3334 = vadd.f32 0.0, %v3333
      %v3335 = vpop.f32.mrb[0].mxu0
      %3336 = vmatprep.mubr.bf16.mxu0 0
      %3337 = vmatmul.mubr.bf16.gmra.mrb[0].mxu0 %v3184
      %v3338 = vpop.f32.mrb[0].mxu0
      %v3339 = vadd.f32 0.0, %v3338
      %v3340 = vpop.f32.mrb[0].mxu0
      %v3341 = vpop.f32.mrb[0].mxu0
      %v3342 = vadd.f32 0.0, %v3341
      %v3343 = vpop.f32.mrb[0].mxu0
      %3344 = vmatprep.mubr.bf16.mxu0 0
      %3345 = vmatmul.mubr.bf16.gmra.mrb[0].mxu0 %v3187
      %v3346 = vpop.f32.mrb[0].mxu0
      %v3347 = vadd.f32 0.0, %v3346
      %v3348 = vpop.f32.mrb[0].mxu0
      %v3349 = vpop.f32.mrb[0].mxu0
      %v3350 = vadd.f32 0.0, %v3349
      %v3351 = vpop.f32.mrb[0].mxu0
      %3352 = vdwg.mxu0
      %v3353 = vadd.f32 %v2627, %v3227
      %v3354 = vadd.f32 %v2628, %v3230
      %v3355 = vadd.f32 %v2629, %v3235
      %v3356 = vadd.f32 %v2630, %v3238
      %v3357 = vadd.f32 %v2631, %v3243
      %v3358 = vadd.f32 %v2632, %v3246
      %v3359 = vadd.f32 %v2633, %v3251
      %v3360 = vadd.f32 %v2634, %v3254
      %v3361 = vadd.f32 %v2635, %v3259
      %v3362 = vadd.f32 %v2636, %v3262
      %v3363 = vadd.f32 %v2637, %v3267
      %v3364 = vadd.f32 %v2638, %v3270
      %v3365 = vadd.f32 %v2639, %v3275
      %v3366 = vadd.f32 %v2640, %v3278
      %v3367 = vadd.f32 %v2641, %v3283
      %v3368 = vadd.f32 %v2642, %v3286
      %v3369 = vadd.f32 %v2643, %v3291
      %v3370 = vadd.f32 %v2644, %v3294
      %v3371 = vadd.f32 %v2645, %v3299
      %v3372 = vadd.f32 %v2646, %v3302
      %v3373 = vadd.f32 %v2647, %v3307
      %v3374 = vadd.f32 %v2648, %v3310
      %v3375 = vadd.f32 %v2649, %v3315
      %v3376 = vadd.f32 %v2650, %v3318
      %v3377 = vadd.f32 %v2651, %v3323
      %v3378 = vadd.f32 %v2652, %v3326
      %v3379 = vadd.f32 %v2653, %v3331
      %v3380 = vadd.f32 %v2654, %v3334
      %v3381 = vadd.f32 %v2655, %v3339
      %v3382 = vadd.f32 %v2656, %v3342
      %v3383 = vadd.f32 %v2657, %v3347
      %v3384 = vadd.f32 %v2658, %v3350
      %v3385 = vld [vmem:[%s734] sm:$0xe]
      %v3386 = vld [vmem:[%s734 + $0xc] sm:$0xe]
      %v3387 = vld [vmem:[%s734 + $0x18] sm:$0xe]
      %v3388 = vld [vmem:[%s734 + $0x24] sm:$0xe]
      %v3389 = vld [vmem:[%s734 + $0x30] sm:$0xe]
      %v3390 = vld [vmem:[%s734 + $0x3c] sm:$0xe]
      %v3391 = vld [vmem:[%s734 + $0x48] sm:$0xe]
      %v3392 = vld [vmem:[%s734 + $0x54] sm:$0xe]
      %v3393 = vld [vmem:[%s734 + $0x60] sm:$0xe]
      %v3394 = vld [vmem:[%s734 + $0x6c] sm:$0xe]
      %v3395 = vld [vmem:[%s734 + $0x78] sm:$0xe]
      %v3396 = vld [vmem:[%s734 + $0x84] sm:$0xe]
      %v3397 = vld [vmem:[%s734 + $0x90] sm:$0xe]
      %v3398 = vld [vmem:[%s734 + $0x9c] sm:$0xe]
      %v3399 = vld [vmem:[%s734 + $0xa8] sm:$0xe]
      %v3400 = vld [vmem:[%s734 + $0xb4] sm:$0xe]
      %v3449 = vrot.slane %v3385, 5
      %v3450 = vrot.slane %v3449, 4
      %v3451 = vrot.slane %v2660, 5
      %v3452 = vsel %vm1894, %v3450, %v3451
      %v3453 = vrot.slane %v3451, 4
      %v3454 = vrot.slane %v2661, 5
      %v3455 = vsel %vm1894, %v3453, %v3454
      %v3456 = vrot.slane %v3386, 5
      %v3457 = vrot.slane %v3456, 4
      %v3458 = vrot.slane %v2663, 5
      %v3459 = vsel %vm1894, %v3457, %v3458
      %v3460 = vrot.slane %v3458, 4
      %v3461 = vrot.slane %v2664, 5
      %v3462 = vsel %vm1894, %v3460, %v3461
      %v3463 = vrot.slane %v3387, 5
      %v3464 = vrot.slane %v3463, 4
      %v3465 = vrot.slane %v2666, 5
      %v3466 = vsel %vm1894, %v3464, %v3465
      %v3467 = vrot.slane %v3465, 4
      %v3468 = vrot.slane %v2667, 5
      %v3469 = vsel %vm1894, %v3467, %v3468
      %v3470 = vrot.slane %v3388, 5
      %v3471 = vrot.slane %v3470, 4
      %v3472 = vrot.slane %v2669, 5
      %v3473 = vsel %vm1894, %v3471, %v3472
      %v3474 = vrot.slane %v3472, 4
      %v3475 = vrot.slane %v2670, 5
      %v3476 = vsel %vm1894, %v3474, %v3475
      %v3477 = vrot.slane %v3389, 5
      %v3478 = vrot.slane %v3477, 4
      %v3479 = vrot.slane %v2672, 5
      %v3480 = vsel %vm1894, %v3478, %v3479
      %v3481 = vrot.slane %v3479, 4
      %v3482 = vrot.slane %v2673, 5
      %v3483 = vsel %vm1894, %v3481, %v3482
      %v3484 = vrot.slane %v3390, 5
      %v3485 = vrot.slane %v3484, 4
      %v3486 = vrot.slane %v2675, 5
      %v3487 = vsel %vm1894, %v3485, %v3486
      %v3488 = vrot.slane %v3486, 4
      %v3489 = vrot.slane %v2676, 5
      %v3490 = vsel %vm1894, %v3488, %v3489
      %v3491 = vrot.slane %v3391, 5
      %v3492 = vrot.slane %v3491, 4
      %v3493 = vrot.slane %v2678, 5
      %v3494 = vsel %vm1894, %v3492, %v3493
      %v3495 = vrot.slane %v3493, 4
      %v3496 = vrot.slane %v2679, 5
      %v3497 = vsel %vm1894, %v3495, %v3496
      %v3498 = vrot.slane %v3392, 5
      %v3499 = vrot.slane %v3498, 4
      %v3500 = vrot.slane %v2681, 5
      %v3501 = vsel %vm1894, %v3499, %v3500
      %v3502 = vrot.slane %v3500, 4
      %v3503 = vrot.slane %v2682, 5
      %v3504 = vsel %vm1894, %v3502, %v3503
      %v3505 = vrot.slane %v3393, 5
      %v3506 = vrot.slane %v3505, 4
      %v3507 = vrot.slane %v2684, 5
      %v3508 = vsel %vm1894, %v3506, %v3507
      %v3509 = vrot.slane %v3507, 4
      %v3510 = vrot.slane %v2685, 5
      %v3511 = vsel %vm1894, %v3509, %v3510
      %v3512 = vrot.slane %v3394, 5
      %v3513 = vrot.slane %v3512, 4
      %v3514 = vrot.slane %v2687, 5
      %v3515 = vsel %vm1894, %v3513, %v3514
      %v3516 = vrot.slane %v3514, 4
      %v3517 = vrot.slane %v2688, 5
      %v3518 = vsel %vm1894, %v3516, %v3517
      %v3519 = vrot.slane %v3395, 5
      %v3520 = vrot.slane %v3519, 4
      %v3521 = vrot.slane %v2690, 5
      %v3522 = vsel %vm1894, %v3520, %v3521
      %v3523 = vrot.slane %v3521, 4
      %v3524 = vrot.slane %v2691, 5
      %v3525 = vsel %vm1894, %v3523, %v3524
      %v3526 = vrot.slane %v3396, 5
      %v3527 = vrot.slane %v3526, 4
      %v3528 = vrot.slane %v2693, 5
      %v3529 = vsel %vm1894, %v3527, %v3528
      %v3530 = vrot.slane %v3528, 4
      %v3531 = vrot.slane %v2694, 5
      %v3532 = vsel %vm1894, %v3530, %v3531
      %v3533 = vrot.slane %v3397, 5
      %v3534 = vrot.slane %v3533, 4
      %v3535 = vrot.slane %v2696, 5
      %v3536 = vsel %vm1894, %v3534, %v3535
      %v3537 = vrot.slane %v3535, 4
      %v3538 = vrot.slane %v2697, 5
      %v3539 = vsel %vm1894, %v3537, %v3538
      %v3540 = vrot.slane %v3398, 5
      %v3541 = vrot.slane %v3540, 4
      %v3542 = vrot.slane %v2699, 5
      %v3543 = vsel %vm1894, %v3541, %v3542
      %v3544 = vrot.slane %v3542, 4
      %v3545 = vrot.slane %v2700, 5
      %v3546 = vsel %vm1894, %v3544, %v3545
      %v3547 = vrot.slane %v3399, 5
      %v3548 = vrot.slane %v3547, 4
      %v3549 = vrot.slane %v2702, 5
      %v3550 = vsel %vm1894, %v3548, %v3549
      %v3551 = vrot.slane %v3549, 4
      %v3552 = vrot.slane %v2703, 5
      %v3553 = vsel %vm1894, %v3551, %v3552
      %v3554 = vrot.slane %v3400, 5
      %v3555 = vrot.slane %v3554, 4
      %v3556 = vrot.slane %v2705, 5
      %v3557 = vsel %vm1894, %v3555, %v3556
      %v3558 = vrot.slane %v3556, 4
      %v3559 = vrot.slane %v2706, 5
      %v3560 = vsel %vm1894, %v3558, %v3559
      %s3561 = scalar_lea.vmem %s301, 10
      %v3562 = vld [vmem:[%s3561] sm:$0x3]
      %v3563 = vunpack.c.l.b16 %v3452
      %v3564 = vunpack.c.l.b16 %v3455
      %v3565 = vunpack.c.l.b16 %v3459
      %v3566 = vunpack.c.l.b16 %v3462
      %v3567 = vunpack.c.l.b16 %v3466
      %v3568 = vunpack.c.l.b16 %v3469
      %v3569 = vunpack.c.l.b16 %v3473
      %v3570 = vunpack.c.l.b16 %v3476
      %v3571 = vunpack.c.l.b16 %v3480
      %v3572 = vunpack.c.l.b16 %v3483
      %v3573 = vunpack.c.l.b16 %v3487
      %v3574 = vunpack.c.l.b16 %v3490
      %v3575 = vunpack.c.l.b16 %v3494
      %v3576 = vunpack.c.l.b16 %v3497
      %v3577 = vunpack.c.l.b16 %v3501
      %v3578 = vunpack.c.l.b16 %v3504
      %v3579 = vunpack.c.l.b16 %v3508
      %v3580 = vunpack.c.l.b16 %v3511
      %v3581 = vunpack.c.l.b16 %v3515
      %v3582 = vunpack.c.l.b16 %v3518
      %v3583 = vunpack.c.l.b16 %v3522
      %v3584 = vunpack.c.l.b16 %v3525
      %v3585 = vunpack.c.l.b16 %v3529
      %v3586 = vunpack.c.l.b16 %v3532
      %v3587 = vunpack.c.l.b16 %v3536
      %v3588 = vunpack.c.l.b16 %v3539
      %v3589 = vunpack.c.l.b16 %v3543
      %v3590 = vunpack.c.l.b16 %v3546
      %v3591 = vunpack.c.l.b16 %v3550
      %v3592 = vunpack.c.l.b16 %v3553
      %v3593 = vunpack.c.l.b16 %v3557
      %v3594 = vunpack.c.l.b16 %v3560
      %v3595 = vpack.c.b16 %v3564, %v3563
      %v3596 = vpack.c.b16 %v3566, %v3565
      %v3597 = vpack.c.b16 %v3568, %v3567
      %v3598 = vpack.c.b16 %v3570, %v3569
      %v3599 = vpack.c.b16 %v3572, %v3571
      %v3600 = vpack.c.b16 %v3574, %v3573
      %v3601 = vpack.c.b16 %v3576, %v3575
      %v3602 = vpack.c.b16 %v3578, %v3577
      %v3603 = vpack.c.b16 %v3580, %v3579
      %v3604 = vpack.c.b16 %v3582, %v3581
      %v3605 = vpack.c.b16 %v3584, %v3583
      %v3606 = vpack.c.b16 %v3586, %v3585
      %v3607 = vpack.c.b16 %v3588, %v3587
      %v3608 = vpack.c.b16 %v3590, %v3589
      %v3609 = vpack.c.b16 %v3592, %v3591
      %v3610 = vpack.c.b16 %v3594, %v3593
      %v3612 = vsel %vm1338, %v3595, 0
      %v3615 = vsel %vm1338, %v3596, 0
      %v3618 = vsel %vm1338, %v3597, 0
      %v3621 = vsel %vm1338, %v3598, 0
      %v3624 = vsel %vm1338, %v3599, 0
      %v3627 = vsel %vm1338, %v3600, 0
      %v3630 = vsel %vm1338, %v3601, 0
      %v3633 = vsel %vm1338, %v3602, 0
      %v3636 = vsel %vm1338, %v3603, 0
      %v3639 = vsel %vm1338, %v3604, 0
      %v3642 = vsel %vm1338, %v3605, 0
      %v3645 = vsel %vm1338, %v3606, 0
      %v3648 = vsel %vm1338, %v3607, 0
      %v3651 = vsel %vm1338, %v3608, 0
      %v3654 = vsel %vm1338, %v3609, 0
      %v3657 = vsel %vm1338, %v3610, 0
      %v3660 = vsel %vm1387, %v3562, 0
      %3662 = vmatprep.subr.bf16.mxu0 0
      %3663 = vmatpush1.bf16.msra.mxu0 %v3660
      %3664 = vmatprep.subr.bf16.mxu0 0
      %3665 = vmatpush1.bf16.msra.mxu0 0
      %3666 = vmatprep.subr.bf16.mxu0 0
      %3667 = vmatpush1.bf16.msra.mxu0 0
      %3668 = vmatprep.subr.bf16.mxu0 0
      %3669 = vmatpush1.bf16.msra.mxu0 0
      %3670 = vmatprep.subr.bf16.mxu0 0
      %3671 = vmatpush1.bf16.msra.mxu0 0
      %3672 = vmatprep.subr.bf16.mxu0 0
      %3673 = vmatpush1.bf16.msra.mxu0 0
      %3674 = vmatprep.subr.bf16.mxu0 0
      %3675 = vmatpush1.bf16.msra.mxu0 0
      %3676 = vmatprep.subr.bf16.mxu0 0
      %3677 = vmatpush1.bf16.msra.mxu0 0
      %3678 = vmatprep.subr.bf16.mxu0 0
      %3679 = vmatpush1.bf16.msra.mxu0 0
      %3680 = vmatprep.subr.bf16.mxu0 0
      %3681 = vmatpush1.bf16.msra.mxu0 0
      %3682 = vmatprep.subr.bf16.mxu0 0
      %3683 = vmatpush1.bf16.msra.mxu0 0
      %3684 = vmatprep.subr.bf16.mxu0 0
      %3685 = vmatpush1.bf16.msra.mxu0 0
      %3686 = vmatprep.subr.bf16.mxu0 0
      %3687 = vmatpush1.bf16.msra.mxu0 0
      %3688 = vmatprep.subr.bf16.mxu0 0
      %3689 = vmatpush1.bf16.msra.mxu0 0
      %3690 = vmatprep.subr.bf16.mxu0 0
      %3691 = vmatpush1.bf16.msra.mxu0 0
      %3692 = vmatprep.subr.bf16.mxu0 0
      %3693 = vmatpush1.bf16.msra.mxu0 0
      %3694 = vmatprep.mubr.bf16.mxu0 0
      %3695 = vmatmul.mubr.bf16.gmra.mrb[0].mxu0 %v3612
      %v3696 = vpop.f32.mrb[0].mxu0
      %v3697 = vadd.f32 0.0, %v3696
      %v3698 = vpop.f32.mrb[0].mxu0
      %v3699 = vpop.f32.mrb[0].mxu0
      %v3700 = vadd.f32 0.0, %v3699
      %v3701 = vpop.f32.mrb[0].mxu0
      %3702 = vmatprep.mubr.bf16.mxu0 0
      %3703 = vmatmul.mubr.bf16.gmra.mrb[0].mxu0 %v3615
      %v3704 = vpop.f32.mrb[0].mxu0
      %v3705 = vadd.f32 0.0, %v3704
      %v3706 = vpop.f32.mrb[0].mxu0
      %v3707 = vpop.f32.mrb[0].mxu0
      %v3708 = vadd.f32 0.0, %v3707
      %v3709 = vpop.f32.mrb[0].mxu0
      %3710 = vmatprep.mubr.bf16.mxu0 0
      %3711 = vmatmul.mubr.bf16.gmra.mrb[0].mxu0 %v3618
      %v3712 = vpop.f32.mrb[0].mxu0
      %v3713 = vadd.f32 0.0, %v3712
      %v3714 = vpop.f32.mrb[0].mxu0
      %v3715 = vpop.f32.mrb[0].mxu0
      %v3716 = vadd.f32 0.0, %v3715
      %v3717 = vpop.f32.mrb[0].mxu0
      %3718 = vmatprep.mubr.bf16.mxu0 0
      %3719 = vmatmul.mubr.bf16.gmra.mrb[0].mxu0 %v3621
      %v3720 = vpop.f32.mrb[0].mxu0
      %v3721 = vadd.f32 0.0, %v3720
      %v3722 = vpop.f32.mrb[0].mxu0
      %v3723 = vpop.f32.mrb[0].mxu0
      %v3724 = vadd.f32 0.0, %v3723
      %v3725 = vpop.f32.mrb[0].mxu0
      %3726 = vmatprep.mubr.bf16.mxu0 0
      %3727 = vmatmul.mubr.bf16.gmra.mrb[0].mxu0 %v3624
      %v3728 = vpop.f32.mrb[0].mxu0
      %v3729 = vadd.f32 0.0, %v3728
      %v3730 = vpop.f32.mrb[0].mxu0
      %v3731 = vpop.f32.mrb[0].mxu0
      %v3732 = vadd.f32 0.0, %v3731
      %v3733 = vpop.f32.mrb[0].mxu0
      %3734 = vmatprep.mubr.bf16.mxu0 0
      %3735 = vmatmul.mubr.bf16.gmra.mrb[0].mxu0 %v3627
      %v3736 = vpop.f32.mrb[0].mxu0
      %v3737 = vadd.f32 0.0, %v3736
      %v3738 = vpop.f32.mrb[0].mxu0
      %v3739 = vpop.f32.mrb[0].mxu0
      %v3740 = vadd.f32 0.0, %v3739
      %v3741 = vpop.f32.mrb[0].mxu0
      %3742 = vmatprep.mubr.bf16.mxu0 0
      %3743 = vmatmul.mubr.bf16.gmra.mrb[0].mxu0 %v3630
      %v3744 = vpop.f32.mrb[0].mxu0
      %v3745 = vadd.f32 0.0, %v3744
      %v3746 = vpop.f32.mrb[0].mxu0
      %v3747 = vpop.f32.mrb[0].mxu0
      %v3748 = vadd.f32 0.0, %v3747
      %v3749 = vpop.f32.mrb[0].mxu0
      %3750 = vmatprep.mubr.bf16.mxu0 0
      %3751 = vmatmul.mubr.bf16.gmra.mrb[0].mxu0 %v3633
      %v3752 = vpop.f32.mrb[0].mxu0
      %v3753 = vadd.f32 0.0, %v3752
      %v3754 = vpop.f32.mrb[0].mxu0
      %v3755 = vpop.f32.mrb[0].mxu0
      %v3756 = vadd.f32 0.0, %v3755
      %v3757 = vpop.f32.mrb[0].mxu0
      %3758 = vmatprep.mubr.bf16.mxu0 0
      %3759 = vmatmul.mubr.bf16.gmra.mrb[0].mxu0 %v3636
      %v3760 = vpop.f32.mrb[0].mxu0
      %v3761 = vadd.f32 0.0, %v3760
      %v3762 = vpop.f32.mrb[0].mxu0
      %v3763 = vpop.f32.mrb[0].mxu0
      %v3764 = vadd.f32 0.0, %v3763
      %v3765 = vpop.f32.mrb[0].mxu0
      %3766 = vmatprep.mubr.bf16.mxu0 0
      %3767 = vmatmul.mubr.bf16.gmra.mrb[0].mxu0 %v3639
      %v3768 = vpop.f32.mrb[0].mxu0
      %v3769 = vadd.f32 0.0, %v3768
      %v3770 = vpop.f32.mrb[0].mxu0
      %v3771 = vpop.f32.mrb[0].mxu0
      %v3772 = vadd.f32 0.0, %v3771
      %v3773 = vpop.f32.mrb[0].mxu0
      %3774 = vmatprep.mubr.bf16.mxu0 0
      %3775 = vmatmul.mubr.bf16.gmra.mrb[0].mxu0 %v3642
      %v3776 = vpop.f32.mrb[0].mxu0
      %v3777 = vadd.f32 0.0, %v3776
      %v3778 = vpop.f32.mrb[0].mxu0
      %v3779 = vpop.f32.mrb[0].mxu0
      %v3780 = vadd.f32 0.0, %v3779
      %v3781 = vpop.f32.mrb[0].mxu0
      %3782 = vmatprep.mubr.bf16.mxu0 0
      %3783 = vmatmul.mubr.bf16.gmra.mrb[0].mxu0 %v3645
      %v3784 = vpop.f32.mrb[0].mxu0
      %v3785 = vadd.f32 0.0, %v3784
      %v3786 = vpop.f32.mrb[0].mxu0
      %v3787 = vpop.f32.mrb[0].mxu0
      %v3788 = vadd.f32 0.0, %v3787
      %v3789 = vpop.f32.mrb[0].mxu0
      %3790 = vmatprep.mubr.bf16.mxu0 0
      %3791 = vmatmul.mubr.bf16.gmra.mrb[0].mxu0 %v3648
      %v3792 = vpop.f32.mrb[0].mxu0
      %v3793 = vadd.f32 0.0, %v3792
      %v3794 = vpop.f32.mrb[0].mxu0
      %v3795 = vpop.f32.mrb[0].mxu0
      %v3796 = vadd.f32 0.0, %v3795
      %v3797 = vpop.f32.mrb[0].mxu0
      %3798 = vmatprep.mubr.bf16.mxu0 0
      %3799 = vmatmul.mubr.bf16.gmra.mrb[0].mxu0 %v3651
      %v3800 = vpop.f32.mrb[0].mxu0
      %v3801 = vadd.f32 0.0, %v3800
      %v3802 = vpop.f32.mrb[0].mxu0
      %v3803 = vpop.f32.mrb[0].mxu0
      %v3804 = vadd.f32 0.0, %v3803
      %v3805 = vpop.f32.mrb[0].mxu0
      %3806 = vmatprep.mubr.bf16.mxu0 0
      %3807 = vmatmul.mubr.bf16.gmra.mrb[0].mxu0 %v3654
      %v3808 = vpop.f32.mrb[0].mxu0
      %v3809 = vadd.f32 0.0, %v3808
      %v3810 = vpop.f32.mrb[0].mxu0
      %v3811 = vpop.f32.mrb[0].mxu0
      %v3812 = vadd.f32 0.0, %v3811
      %v3813 = vpop.f32.mrb[0].mxu0
      %3814 = vmatprep.mubr.bf16.mxu0 0
      %3815 = vmatmul.mubr.bf16.gmra.mrb[0].mxu0 %v3657
      %v3816 = vpop.f32.mrb[0].mxu0
      %v3817 = vadd.f32 0.0, %v3816
      %v3818 = vpop.f32.mrb[0].mxu0
      %v3819 = vpop.f32.mrb[0].mxu0
      %v3820 = vadd.f32 0.0, %v3819
      %v3821 = vpop.f32.mrb[0].mxu0
      %3822 = vdwg.mxu0
      %v3823 = vadd.f32 %v3353, %v3697
      %v3824 = vadd.f32 %v3354, %v3700
      %v3825 = vadd.f32 %v3355, %v3705
      %v3826 = vadd.f32 %v3356, %v3708
      %v3827 = vadd.f32 %v3357, %v3713
      %v3828 = vadd.f32 %v3358, %v3716
      %v3829 = vadd.f32 %v3359, %v3721
      %v3830 = vadd.f32 %v3360, %v3724
      %v3831 = vadd.f32 %v3361, %v3729
      %v3832 = vadd.f32 %v3362, %v3732
      %v3833 = vadd.f32 %v3363, %v3737
      %v3834 = vadd.f32 %v3364, %v3740
      %v3835 = vadd.f32 %v3365, %v3745
      %v3836 = vadd.f32 %v3366, %v3748
      %v3837 = vadd.f32 %v3367, %v3753
      %v3838 = vadd.f32 %v3368, %v3756
      %v3839 = vadd.f32 %v3369, %v3761
      %v3840 = vadd.f32 %v3370, %v3764
      %v3841 = vadd.f32 %v3371, %v3769
      %v3842 = vadd.f32 %v3372, %v3772
      %v3843 = vadd.f32 %v3373, %v3777
      %v3844 = vadd.f32 %v3374, %v3780
      %v3845 = vadd.f32 %v3375, %v3785
      %v3846 = vadd.f32 %v3376, %v3788
      %v3847 = vadd.f32 %v3377, %v3793
      %v3848 = vadd.f32 %v3378, %v3796
      %v3849 = vadd.f32 %v3379, %v3801
      %v3850 = vadd.f32 %v3380, %v3804
      %v3851 = vadd.f32 %v3381, %v3809
      %v3852 = vadd.f32 %v3382, %v3812
      %v3853 = vadd.f32 %v3383, %v3817
      %v3854 = vadd.f32 %v3384, %v3820
      %s3855 = scalar_lea.vmem [#allocation2], 24
      %v3856 = vld [vmem:[%s3855] sm:$0xf]
      %v3857 = vld [vmem:[%s3855 + $0x4] sm:$0xf]
      %v3858 = vld [vmem:[%s3855 + $0xc] sm:$0xf]
      %v3859 = vld [vmem:[%s3855 + $0x10] sm:$0xf]
      %v3860 = vld [vmem:[%s3855 + $0x18] sm:$0xf]
      %v3861 = vld [vmem:[%s3855 + $0x1c] sm:$0xf]
      %v3862 = vld [vmem:[%s3855 + $0x24] sm:$0xf]
      %v3863 = vld [vmem:[%s3855 + $0x28] sm:$0xf]
      %v3864 = vld [vmem:[%s3855 + $0x30] sm:$0xf]
      %v3865 = vld [vmem:[%s3855 + $0x34] sm:$0xf]
      %v3866 = vld [vmem:[%s3855 + $0x3c] sm:$0xf]
      %v3867 = vld [vmem:[%s3855 + $0x40] sm:$0xf]
      %v3868 = vld [vmem:[%s3855 + $0x48] sm:$0xf]
      %v3869 = vld [vmem:[%s3855 + $0x4c] sm:$0xf]
      %v3870 = vld [vmem:[%s3855 + $0x54] sm:$0xf]
      %v3871 = vld [vmem:[%s3855 + $0x58] sm:$0xf]
      %v3872 = vld [vmem:[%s3855 + $0x60] sm:$0xf]
      %v3873 = vld [vmem:[%s3855 + $0x64] sm:$0xf]
      %v3874 = vld [vmem:[%s3855 + $0x6c] sm:$0xf]
      %v3875 = vld [vmem:[%s3855 + $0x70] sm:$0xf]
      %v3876 = vld [vmem:[%s3855 + $0x78] sm:$0xf]
      %v3877 = vld [vmem:[%s3855 + $0x7c] sm:$0xf]
      %v3878 = vld [vmem:[%s3855 + $0x84] sm:$0xf]
      %v3879 = vld [vmem:[%s3855 + $0x88] sm:$0xf]
      %v3880 = vld [vmem:[%s3855 + $0x90] sm:$0xf]
      %v3881 = vld [vmem:[%s3855 + $0x94] sm:$0xf]
      %v3882 = vld [vmem:[%s3855 + $0x9c] sm:$0xf]
      %v3883 = vld [vmem:[%s3855 + $0xa0] sm:$0xf]
      %v3884 = vld [vmem:[%s3855 + $0xa8] sm:$0xf]
      %v3885 = vld [vmem:[%s3855 + $0xac] sm:$0xf]
      %v3886 = vld [vmem:[%s3855 + $0xb4] sm:$0xf]
      %v3887 = vld [vmem:[%s3855 + $0xb8] sm:$0xf]
      %s3888 = scalar_lea.vmem %s301, 12
      %v3889 = vld [vmem:[%s3888] sm:$0x3]
      %v3922 = vunpack.c.l.b16 %v3856
      %v3923 = vunpack.c.l.b16 %v3857
      %v3924 = vunpack.c.l.b16 %v3858
      %v3925 = vunpack.c.l.b16 %v3859
      %v3926 = vunpack.c.l.b16 %v3860
      %v3927 = vunpack.c.l.b16 %v3861
      %v3928 = vunpack.c.l.b16 %v3862
      %v3929 = vunpack.c.l.b16 %v3863
      %v3930 = vunpack.c.l.b16 %v3864
      %v3931 = vunpack.c.l.b16 %v3865
      %v3932 = vunpack.c.l.b16 %v3866
      %v3933 = vunpack.c.l.b16 %v3867
      %v3934 = vunpack.c.l.b16 %v3868
      %v3935 = vunpack.c.l.b16 %v3869
      %v3936 = vunpack.c.l.b16 %v3870
      %v3937 = vunpack.c.l.b16 %v3871
      %v3938 = vunpack.c.l.b16 %v3872
      %v3939 = vunpack.c.l.b16 %v3873
      %v3940 = vunpack.c.l.b16 %v3874
      %v3941 = vunpack.c.l.b16 %v3875
      %v3942 = vunpack.c.l.b16 %v3876
      %v3943 = vunpack.c.l.b16 %v3877
      %v3944 = vunpack.c.l.b16 %v3878
      %v3945 = vunpack.c.l.b16 %v3879
      %v3946 = vunpack.c.l.b16 %v3880
      %v3947 = vunpack.c.l.b16 %v3881
      %v3948 = vunpack.c.l.b16 %v3882
      %v3949 = vunpack.c.l.b16 %v3883
      %v3950 = vunpack.c.l.b16 %v3884
      %v3951 = vunpack.c.l.b16 %v3885
      %v3952 = vunpack.c.l.b16 %v3886
      %v3953 = vunpack.c.l.b16 %v3887
      %v3954 = vpack.c.b16 %v3923, %v3922
      %v3955 = vpack.c.b16 %v3925, %v3924
      %v3956 = vpack.c.b16 %v3927, %v3926
      %v3957 = vpack.c.b16 %v3929, %v3928
      %v3958 = vpack.c.b16 %v3931, %v3930
      %v3959 = vpack.c.b16 %v3933, %v3932
      %v3960 = vpack.c.b16 %v3935, %v3934
      %v3961 = vpack.c.b16 %v3937, %v3936
      %v3962 = vpack.c.b16 %v3939, %v3938
      %v3963 = vpack.c.b16 %v3941, %v3940
      %v3964 = vpack.c.b16 %v3943, %v3942
      %v3965 = vpack.c.b16 %v3945, %v3944
      %v3966 = vpack.c.b16 %v3947, %v3946
      %v3967 = vpack.c.b16 %v3949, %v3948
      %v3968 = vpack.c.b16 %v3951, %v3950
      %v3969 = vpack.c.b16 %v3953, %v3952
      %v3971 = vsel %vm1338, %v3954, 0
      %v3974 = vsel %vm1338, %v3955, 0
      %v3977 = vsel %vm1338, %v3956, 0
      %v3980 = vsel %vm1338, %v3957, 0
      %v3983 = vsel %vm1338, %v3958, 0
      %v3986 = vsel %vm1338, %v3959, 0
      %v3989 = vsel %vm1338, %v3960, 0
      %v3992 = vsel %vm1338, %v3961, 0
      %v3995 = vsel %vm1338, %v3962, 0
      %v3998 = vsel %vm1338, %v3963, 0
      %v4001 = vsel %vm1338, %v3964, 0
      %v4004 = vsel %vm1338, %v3965, 0
      %v4007 = vsel %vm1338, %v3966, 0
      %v4010 = vsel %vm1338, %v3967, 0
      %v4013 = vsel %vm1338, %v3968, 0
      %v4016 = vsel %vm1338, %v3969, 0
      %v4019 = vsel %vm1387, %v3889, 0
      %4021 = vmatprep.subr.bf16.mxu0 0
      %4022 = vmatpush1.bf16.msra.mxu0 %v4019
      %4023 = vmatprep.subr.bf16.mxu0 0
      %4024 = vmatpush1.bf16.msra.mxu0 0
      %4025 = vmatprep.subr.bf16.mxu0 0
      %4026 = vmatpush1.bf16.msra.mxu0 0
      %4027 = vmatprep.subr.bf16.mxu0 0
      %4028 = vmatpush1.bf16.msra.mxu0 0
      %4029 = vmatprep.subr.bf16.mxu0 0
      %4030 = vmatpush1.bf16.msra.mxu0 0
      %4031 = vmatprep.subr.bf16.mxu0 0
      %4032 = vmatpush1.bf16.msra.mxu0 0
      %4033 = vmatprep.subr.bf16.mxu0 0
      %4034 = vmatpush1.bf16.msra.mxu0 0
      %4035 = vmatprep.subr.bf16.mxu0 0
      %4036 = vmatpush1.bf16.msra.mxu0 0
      %4037 = vmatprep.subr.bf16.mxu0 0
      %4038 = vmatpush1.bf16.msra.mxu0 0
      %4039 = vmatprep.subr.bf16.mxu0 0
      %4040 = vmatpush1.bf16.msra.mxu0 0
      %4041 = vmatprep.subr.bf16.mxu0 0
      %4042 = vmatpush1.bf16.msra.mxu0 0
      %4043 = vmatprep.subr.bf16.mxu0 0
      %4044 = vmatpush1.bf16.msra.mxu0 0
      %4045 = vmatprep.subr.bf16.mxu0 0
      %4046 = vmatpush1.bf16.msra.mxu0 0
      %4047 = vmatprep.subr.bf16.mxu0 0
      %4048 = vmatpush1.bf16.msra.mxu0 0
      %4049 = vmatprep.subr.bf16.mxu0 0
      %4050 = vmatpush1.bf16.msra.mxu0 0
      %4051 = vmatprep.subr.bf16.mxu0 0
      %4052 = vmatpush1.bf16.msra.mxu0 0
      %4053 = vmatprep.mubr.bf16.mxu0 0
      %4054 = vmatmul.mubr.bf16.gmra.mrb[0].mxu0 %v3971
      %v4055 = vpop.f32.mrb[0].mxu0
      %v4056 = vadd.f32 0.0, %v4055
      %v4057 = vpop.f32.mrb[0].mxu0
      %v4058 = vpop.f32.mrb[0].mxu0
      %v4059 = vadd.f32 0.0, %v4058
      %v4060 = vpop.f32.mrb[0].mxu0
      %4061 = vmatprep.mubr.bf16.mxu0 0
      %4062 = vmatmul.mubr.bf16.gmra.mrb[0].mxu0 %v3974
      %v4063 = vpop.f32.mrb[0].mxu0
      %v4064 = vadd.f32 0.0, %v4063
      %v4065 = vpop.f32.mrb[0].mxu0
      %v4066 = vpop.f32.mrb[0].mxu0
      %v4067 = vadd.f32 0.0, %v4066
      %v4068 = vpop.f32.mrb[0].mxu0
      %4069 = vmatprep.mubr.bf16.mxu0 0
      %4070 = vmatmul.mubr.bf16.gmra.mrb[0].mxu0 %v3977
      %v4071 = vpop.f32.mrb[0].mxu0
      %v4072 = vadd.f32 0.0, %v4071
      %v4073 = vpop.f32.mrb[0].mxu0
      %v4074 = vpop.f32.mrb[0].mxu0
      %v4075 = vadd.f32 0.0, %v4074
      %v4076 = vpop.f32.mrb[0].mxu0
      %4077 = vmatprep.mubr.bf16.mxu0 0
      %4078 = vmatmul.mubr.bf16.gmra.mrb[0].mxu0 %v3980
      %v4079 = vpop.f32.mrb[0].mxu0
      %v4080 = vadd.f32 0.0, %v4079
      %v4081 = vpop.f32.mrb[0].mxu0
      %v4082 = vpop.f32.mrb[0].mxu0
      %v4083 = vadd.f32 0.0, %v4082
      %v4084 = vpop.f32.mrb[0].mxu0
      %4085 = vmatprep.mubr.bf16.mxu0 0
      %4086 = vmatmul.mubr.bf16.gmra.mrb[0].mxu0 %v3983
      %v4087 = vpop.f32.mrb[0].mxu0
      %v4088 = vadd.f32 0.0, %v4087
      %v4089 = vpop.f32.mrb[0].mxu0
      %v4090 = vpop.f32.mrb[0].mxu0
      %v4091 = vadd.f32 0.0, %v4090
      %v4092 = vpop.f32.mrb[0].mxu0
      %4093 = vmatprep.mubr.bf16.mxu0 0
      %4094 = vmatmul.mubr.bf16.gmra.mrb[0].mxu0 %v3986
      %v4095 = vpop.f32.mrb[0].mxu0
      %v4096 = vadd.f32 0.0, %v4095
      %v4097 = vpop.f32.mrb[0].mxu0
      %v4098 = vpop.f32.mrb[0].mxu0
      %v4099 = vadd.f32 0.0, %v4098
      %v4100 = vpop.f32.mrb[0].mxu0
      %4101 = vmatprep.mubr.bf16.mxu0 0
      %4102 = vmatmul.mubr.bf16.gmra.mrb[0].mxu0 %v3989
      %v4103 = vpop.f32.mrb[0].mxu0
      %v4104 = vadd.f32 0.0, %v4103
      %v4105 = vpop.f32.mrb[0].mxu0
      %v4106 = vpop.f32.mrb[0].mxu0
      %v4107 = vadd.f32 0.0, %v4106
      %v4108 = vpop.f32.mrb[0].mxu0
      %4109 = vmatprep.mubr.bf16.mxu0 0
      %4110 = vmatmul.mubr.bf16.gmra.mrb[0].mxu0 %v3992
      %v4111 = vpop.f32.mrb[0].mxu0
      %v4112 = vadd.f32 0.0, %v4111
      %v4113 = vpop.f32.mrb[0].mxu0
      %v4114 = vpop.f32.mrb[0].mxu0
      %v4115 = vadd.f32 0.0, %v4114
      %v4116 = vpop.f32.mrb[0].mxu0
      %4117 = vmatprep.mubr.bf16.mxu0 0
      %4118 = vmatmul.mubr.bf16.gmra.mrb[0].mxu0 %v3995
      %v4119 = vpop.f32.mrb[0].mxu0
      %v4120 = vadd.f32 0.0, %v4119
      %v4121 = vpop.f32.mrb[0].mxu0
      %v4122 = vpop.f32.mrb[0].mxu0
      %v4123 = vadd.f32 0.0, %v4122
      %v4124 = vpop.f32.mrb[0].mxu0
      %4125 = vmatprep.mubr.bf16.mxu0 0
      %4126 = vmatmul.mubr.bf16.gmra.mrb[0].mxu0 %v3998
      %v4127 = vpop.f32.mrb[0].mxu0
      %v4128 = vadd.f32 0.0, %v4127
      %v4129 = vpop.f32.mrb[0].mxu0
      %v4130 = vpop.f32.mrb[0].mxu0
      %v4131 = vadd.f32 0.0, %v4130
      %v4132 = vpop.f32.mrb[0].mxu0
      %4133 = vmatprep.mubr.bf16.mxu0 0
      %4134 = vmatmul.mubr.bf16.gmra.mrb[0].mxu0 %v4001
      %v4135 = vpop.f32.mrb[0].mxu0
      %v4136 = vadd.f32 0.0, %v4135
      %v4137 = vpop.f32.mrb[0].mxu0
      %v4138 = vpop.f32.mrb[0].mxu0
      %v4139 = vadd.f32 0.0, %v4138
      %v4140 = vpop.f32.mrb[0].mxu0
      %4141 = vmatprep.mubr.bf16.mxu0 0
      %4142 = vmatmul.mubr.bf16.gmra.mrb[0].mxu0 %v4004
      %v4143 = vpop.f32.mrb[0].mxu0
      %v4144 = vadd.f32 0.0, %v4143
      %v4145 = vpop.f32.mrb[0].mxu0
      %v4146 = vpop.f32.mrb[0].mxu0
      %v4147 = vadd.f32 0.0, %v4146
      %v4148 = vpop.f32.mrb[0].mxu0
      %4149 = vmatprep.mubr.bf16.mxu0 0
      %4150 = vmatmul.mubr.bf16.gmra.mrb[0].mxu0 %v4007
      %v4151 = vpop.f32.mrb[0].mxu0
      %v4152 = vadd.f32 0.0, %v4151
      %v4153 = vpop.f32.mrb[0].mxu0
      %v4154 = vpop.f32.mrb[0].mxu0
      %v4155 = vadd.f32 0.0, %v4154
      %v4156 = vpop.f32.mrb[0].mxu0
      %4157 = vmatprep.mubr.bf16.mxu0 0
      %4158 = vmatmul.mubr.bf16.gmra.mrb[0].mxu0 %v4010
      %v4159 = vpop.f32.mrb[0].mxu0
      %v4160 = vadd.f32 0.0, %v4159
      %v4161 = vpop.f32.mrb[0].mxu0
      %v4162 = vpop.f32.mrb[0].mxu0
      %v4163 = vadd.f32 0.0, %v4162
      %v4164 = vpop.f32.mrb[0].mxu0
      %4165 = vmatprep.mubr.bf16.mxu0 0
      %4166 = vmatmul.mubr.bf16.gmra.mrb[0].mxu0 %v4013
      %v4167 = vpop.f32.mrb[0].mxu0
      %v4168 = vadd.f32 0.0, %v4167
      %v4169 = vpop.f32.mrb[0].mxu0
      %v4170 = vpop.f32.mrb[0].mxu0
      %v4171 = vadd.f32 0.0, %v4170
      %v4172 = vpop.f32.mrb[0].mxu0
      %4173 = vmatprep.mubr.bf16.mxu0 0
      %4174 = vmatmul.mubr.bf16.gmra.mrb[0].mxu0 %v4016
      %v4175 = vpop.f32.mrb[0].mxu0
      %v4176 = vadd.f32 0.0, %v4175
      %v4177 = vpop.f32.mrb[0].mxu0
      %v4178 = vpop.f32.mrb[0].mxu0
      %v4179 = vadd.f32 0.0, %v4178
      %v4180 = vpop.f32.mrb[0].mxu0
      %4181 = vdwg.mxu0
      %v4182 = vadd.f32 %v3823, %v4056
      %v4183 = vadd.f32 %v3824, %v4059
      %v4184 = vadd.f32 %v3825, %v4064
      %v4185 = vadd.f32 %v3826, %v4067
      %v4186 = vadd.f32 %v3827, %v4072
      %v4187 = vadd.f32 %v3828, %v4075
      %v4188 = vadd.f32 %v3829, %v4080
      %v4189 = vadd.f32 %v3830, %v4083
      %v4190 = vadd.f32 %v3831, %v4088
      %v4191 = vadd.f32 %v3832, %v4091
      %v4192 = vadd.f32 %v3833, %v4096
      %v4193 = vadd.f32 %v3834, %v4099
      %v4194 = vadd.f32 %v3835, %v4104
      %v4195 = vadd.f32 %v3836, %v4107
      %v4196 = vadd.f32 %v3837, %v4112
      %v4197 = vadd.f32 %v3838, %v4115
      %v4198 = vadd.f32 %v3839, %v4120
      %v4199 = vadd.f32 %v3840, %v4123
      %v4200 = vadd.f32 %v3841, %v4128
      %v4201 = vadd.f32 %v3842, %v4131
      %v4202 = vadd.f32 %v3843, %v4136
      %v4203 = vadd.f32 %v3844, %v4139
      %v4204 = vadd.f32 %v3845, %v4144
      %v4205 = vadd.f32 %v3846, %v4147
      %v4206 = vadd.f32 %v3847, %v4152
      %v4207 = vadd.f32 %v3848, %v4155
      %v4208 = vadd.f32 %v3849, %v4160
      %v4209 = vadd.f32 %v3850, %v4163
      %v4210 = vadd.f32 %v3851, %v4168
      %v4211 = vadd.f32 %v3852, %v4171
      %v4212 = vadd.f32 %v3853, %v4176
      %v4213 = vadd.f32 %v3854, %v4179
      %v4214 = vld [vmem:[%s3855] sm:$0xf]
      %v4215 = vld [vmem:[%s3855 + $0x4] sm:$0xf]
      %v4216 = vld [vmem:[%s3855 + $0x8] sm:$0x1]
      %v4217 = vld [vmem:[%s3855 + $0xc] sm:$0xf]
      %v4218 = vld [vmem:[%s3855 + $0x10] sm:$0xf]
      %v4219 = vld [vmem:[%s3855 + $0x14] sm:$0x1]
      %v4220 = vld [vmem:[%s3855 + $0x18] sm:$0xf]
      %v4221 = vld [vmem:[%s3855 + $0x1c] sm:$0xf]
      %v4222 = vld [vmem:[%s3855 + $0x20] sm:$0x1]
      %v4223 = vld [vmem:[%s3855 + $0x24] sm:$0xf]
      %v4224 = vld [vmem:[%s3855 + $0x28] sm:$0xf]
      %v4225 = vld [vmem:[%s3855 + $0x2c] sm:$0x1]
      %v4226 = vld [vmem:[%s3855 + $0x30] sm:$0xf]
      %v4227 = vld [vmem:[%s3855 + $0x34] sm:$0xf]
      %v4228 = vld [vmem:[%s3855 + $0x38] sm:$0x1]
      %v4229 = vld [vmem:[%s3855 + $0x3c] sm:$0xf]
      %v4230 = vld [vmem:[%s3855 + $0x40] sm:$0xf]
      %v4231 = vld [vmem:[%s3855 + $0x44] sm:$0x1]
      %v4232 = vld [vmem:[%s3855 + $0x48] sm:$0xf]
      %v4233 = vld [vmem:[%s3855 + $0x4c] sm:$0xf]
      %v4234 = vld [vmem:[%s3855 + $0x50] sm:$0x1]
      %v4235 = vld [vmem:[%s3855 + $0x54] sm:$0xf]
      %v4236 = vld [vmem:[%s3855 + $0x58] sm:$0xf]
      %v4237 = vld [vmem:[%s3855 + $0x5c] sm:$0x1]
      %v4238 = vld [vmem:[%s3855 + $0x60] sm:$0xf]
      %v4239 = vld [vmem:[%s3855 + $0x64] sm:$0xf]
      %v4240 = vld [vmem:[%s3855 + $0x68] sm:$0x1]
      %v4241 = vld [vmem:[%s3855 + $0x6c] sm:$0xf]
      %v4242 = vld [vmem:[%s3855 + $0x70] sm:$0xf]
      %v4243 = vld [vmem:[%s3855 + $0x74] sm:$0x1]
      %v4244 = vld [vmem:[%s3855 + $0x78] sm:$0xf]
      %v4245 = vld [vmem:[%s3855 + $0x7c] sm:$0xf]
      %v4246 = vld [vmem:[%s3855 + $0x80] sm:$0x1]
      %v4247 = vld [vmem:[%s3855 + $0x84] sm:$0xf]
      %v4248 = vld [vmem:[%s3855 + $0x88] sm:$0xf]
      %v4249 = vld [vmem:[%s3855 + $0x8c] sm:$0x1]
      %v4250 = vld [vmem:[%s3855 + $0x90] sm:$0xf]
      %v4251 = vld [vmem:[%s3855 + $0x94] sm:$0xf]
      %v4252 = vld [vmem:[%s3855 + $0x98] sm:$0x1]
      %v4253 = vld [vmem:[%s3855 + $0x9c] sm:$0xf]
      %v4254 = vld [vmem:[%s3855 + $0xa0] sm:$0xf]
      %v4255 = vld [vmem:[%s3855 + $0xa4] sm:$0x1]
      %v4256 = vld [vmem:[%s3855 + $0xa8] sm:$0xf]
      %v4257 = vld [vmem:[%s3855 + $0xac] sm:$0xf]
      %v4258 = vld [vmem:[%s3855 + $0xb0] sm:$0x1]
      %v4259 = vld [vmem:[%s3855 + $0xb4] sm:$0xf]
      %v4260 = vld [vmem:[%s3855 + $0xb8] sm:$0xf]
      %v4261 = vld [vmem:[%s3855 + $0xbc] sm:$0x1]
      %v4263 = vshrl.u32 %v4214, 16
      %v4265 = vrot.slane %v4263, 4
      %v4266 = vshll.u32 %v4214, 16
      %v4268 = vrot.slane %v4266, 5
      %v4269 = vor.u32 %v4265, %v4268
      %v4270 = vrot.slane %v4269, 4
      %v4272 = vshll.u32 %v4215, 16
      %v4274 = vrot.slane %v4272, 5
      %v4275 = vsel %vm903, %v4270, %v4274
      %v4276 = vshrl.u32 %v4215, 16
      %v4278 = vrot.slane %v4276, 4
      %v4279 = vor.u32 %v4278, %v4274
      %v4280 = vrot.slane %v4279, 4
      %v4282 = vshll.u32 %v4216, 16
      %v4284 = vrot.slane %v4282, 5
      %v4285 = vsel %vm903, %v4280, %v4284
      %v4287 = vshrl.u32 %v4217, 16
      %v4289 = vrot.slane %v4287, 4
      %v4290 = vshll.u32 %v4217, 16
      %v4292 = vrot.slane %v4290, 5
      %v4293 = vor.u32 %v4289, %v4292
      %v4294 = vrot.slane %v4293, 4
      %v4296 = vshll.u32 %v4218, 16
      %v4298 = vrot.slane %v4296, 5
      %v4299 = vsel %vm903, %v4294, %v4298
      %v4300 = vshrl.u32 %v4218, 16
      %v4302 = vrot.slane %v4300, 4
      %v4303 = vor.u32 %v4302, %v4298
      %v4304 = vrot.slane %v4303, 4
      %v4306 = vshll.u32 %v4219, 16
      %v4308 = vrot.slane %v4306, 5
      %v4309 = vsel %vm903, %v4304, %v4308
      %v4311 = vshrl.u32 %v4220, 16
      %v4313 = vrot.slane %v4311, 4
      %v4314 = vshll.u32 %v4220, 16
      %v4316 = vrot.slane %v4314, 5
      %v4317 = vor.u32 %v4313, %v4316
      %v4318 = vrot.slane %v4317, 4
      %v4320 = vshll.u32 %v4221, 16
      %v4322 = vrot.slane %v4320, 5
      %v4323 = vsel %vm903, %v4318, %v4322
      %v4324 = vshrl.u32 %v4221, 16
      %v4326 = vrot.slane %v4324, 4
      %v4327 = vor.u32 %v4326, %v4322
      %v4328 = vrot.slane %v4327, 4
      %v4330 = vshll.u32 %v4222, 16
      %v4332 = vrot.slane %v4330, 5
      %v4333 = vsel %vm903, %v4328, %v4332
      %v4335 = vshrl.u32 %v4223, 16
      %v4337 = vrot.slane %v4335, 4
      %v4338 = vshll.u32 %v4223, 16
      %v4340 = vrot.slane %v4338, 5
      %v4341 = vor.u32 %v4337, %v4340
      %v4342 = vrot.slane %v4341, 4
      %v4344 = vshll.u32 %v4224, 16
      %v4346 = vrot.slane %v4344, 5
      %v4347 = vsel %vm903, %v4342, %v4346
      %v4348 = vshrl.u32 %v4224, 16
      %v4350 = vrot.slane %v4348, 4
      %v4351 = vor.u32 %v4350, %v4346
      %v4352 = vrot.slane %v4351, 4
      %v4354 = vshll.u32 %v4225, 16
      %v4356 = vrot.slane %v4354, 5
      %v4357 = vsel %vm903, %v4352, %v4356
      %v4359 = vshrl.u32 %v4226, 16
      %v4361 = vrot.slane %v4359, 4
      %v4362 = vshll.u32 %v4226, 16
      %v4364 = vrot.slane %v4362, 5
      %v4365 = vor.u32 %v4361, %v4364
      %v4366 = vrot.slane %v4365, 4
      %v4368 = vshll.u32 %v4227, 16
      %v4370 = vrot.slane %v4368, 5
      %v4371 = vsel %vm903, %v4366, %v4370
      %v4372 = vshrl.u32 %v4227, 16
      %v4374 = vrot.slane %v4372, 4
      %v4375 = vor.u32 %v4374, %v4370
      %v4376 = vrot.slane %v4375, 4
      %v4378 = vshll.u32 %v4228, 16
      %v4380 = vrot.slane %v4378, 5
      %v4381 = vsel %vm903, %v4376, %v4380
      %v4383 = vshrl.u32 %v4229, 16
      %v4385 = vrot.slane %v4383, 4
      %v4386 = vshll.u32 %v4229, 16
      %v4388 = vrot.slane %v4386, 5
      %v4389 = vor.u32 %v4385, %v4388
      %v4390 = vrot.slane %v4389, 4
      %v4392 = vshll.u32 %v4230, 16
      %v4394 = vrot.slane %v4392, 5
      %v4395 = vsel %vm903, %v4390, %v4394
      %v4396 = vshrl.u32 %v4230, 16
      %v4398 = vrot.slane %v4396, 4
      %v4399 = vor.u32 %v4398, %v4394
      %v4400 = vrot.slane %v4399, 4
      %v4402 = vshll.u32 %v4231, 16
      %v4404 = vrot.slane %v4402, 5
      %v4405 = vsel %vm903, %v4400, %v4404
      %v4407 = vshrl.u32 %v4232, 16
      %v4409 = vrot.slane %v4407, 4
      %v4410 = vshll.u32 %v4232, 16
      %v4412 = vrot.slane %v4410, 5
      %v4413 = vor.u32 %v4409, %v4412
      %v4414 = vrot.slane %v4413, 4
      %v4416 = vshll.u32 %v4233, 16
      %v4418 = vrot.slane %v4416, 5
      %v4419 = vsel %vm903, %v4414, %v4418
      %v4420 = vshrl.u32 %v4233, 16
      %v4422 = vrot.slane %v4420, 4
      %v4423 = vor.u32 %v4422, %v4418
      %v4424 = vrot.slane %v4423, 4
      %v4426 = vshll.u32 %v4234, 16
      %v4428 = vrot.slane %v4426, 5
      %v4429 = vsel %vm903, %v4424, %v4428
      %v4431 = vshrl.u32 %v4235, 16
      %v4433 = vrot.slane %v4431, 4
      %v4434 = vshll.u32 %v4235, 16
      %v4436 = vrot.slane %v4434, 5
      %v4437 = vor.u32 %v4433, %v4436
      %v4438 = vrot.slane %v4437, 4
      %v4440 = vshll.u32 %v4236, 16
      %v4442 = vrot.slane %v4440, 5
      %v4443 = vsel %vm903, %v4438, %v4442
      %v4444 = vshrl.u32 %v4236, 16
      %v4446 = vrot.slane %v4444, 4
      %v4447 = vor.u32 %v4446, %v4442
      %v4448 = vrot.slane %v4447, 4
      %v4450 = vshll.u32 %v4237, 16
      %v4452 = vrot.slane %v4450, 5
      %v4453 = vsel %vm903, %v4448, %v4452
      %v4455 = vshrl.u32 %v4238, 16
      %v4457 = vrot.slane %v4455, 4
      %v4458 = vshll.u32 %v4238, 16
      %v4460 = vrot.slane %v4458, 5
      %v4461 = vor.u32 %v4457, %v4460
      %v4462 = vrot.slane %v4461, 4
      %v4464 = vshll.u32 %v4239, 16
      %v4466 = vrot.slane %v4464, 5
      %v4467 = vsel %vm903, %v4462, %v4466
      %v4468 = vshrl.u32 %v4239, 16
      %v4470 = vrot.slane %v4468, 4
      %v4471 = vor.u32 %v4470, %v4466
      %v4472 = vrot.slane %v4471, 4
      %v4474 = vshll.u32 %v4240, 16
      %v4476 = vrot.slane %v4474, 5
      %v4477 = vsel %vm903, %v4472, %v4476
      %v4479 = vshrl.u32 %v4241, 16
      %v4481 = vrot.slane %v4479, 4
      %v4482 = vshll.u32 %v4241, 16
      %v4484 = vrot.slane %v4482, 5
      %v4485 = vor.u32 %v4481, %v4484
      %v4486 = vrot.slane %v4485, 4
      %v4488 = vshll.u32 %v4242, 16
      %v4490 = vrot.slane %v4488, 5
      %v4491 = vsel %vm903, %v4486, %v4490
      %v4492 = vshrl.u32 %v4242, 16
      %v4494 = vrot.slane %v4492, 4
      %v4495 = vor.u32 %v4494, %v4490
      %v4496 = vrot.slane %v4495, 4
      %v4498 = vshll.u32 %v4243, 16
      %v4500 = vrot.slane %v4498, 5
      %v4501 = vsel %vm903, %v4496, %v4500
      %v4503 = vshrl.u32 %v4244, 16
      %v4505 = vrot.slane %v4503, 4
      %v4506 = vshll.u32 %v4244, 16
      %v4508 = vrot.slane %v4506, 5
      %v4509 = vor.u32 %v4505, %v4508
      %v4510 = vrot.slane %v4509, 4
      %v4512 = vshll.u32 %v4245, 16
      %v4514 = vrot.slane %v4512, 5
      %v4515 = vsel %vm903, %v4510, %v4514
      %v4516 = vshrl.u32 %v4245, 16
      %v4518 = vrot.slane %v4516, 4
      %v4519 = vor.u32 %v4518, %v4514
      %v4520 = vrot.slane %v4519, 4
      %v4522 = vshll.u32 %v4246, 16
      %v4524 = vrot.slane %v4522, 5
      %v4525 = vsel %vm903, %v4520, %v4524
      %v4527 = vshrl.u32 %v4247, 16
      %v4529 = vrot.slane %v4527, 4
      %v4530 = vshll.u32 %v4247, 16
      %v4532 = vrot.slane %v4530, 5
      %v4533 = vor.u32 %v4529, %v4532
      %v4534 = vrot.slane %v4533, 4
      %v4536 = vshll.u32 %v4248, 16
      %v4538 = vrot.slane %v4536, 5
      %v4539 = vsel %vm903, %v4534, %v4538
      %v4540 = vshrl.u32 %v4248, 16
      %v4542 = vrot.slane %v4540, 4
      %v4543 = vor.u32 %v4542, %v4538
      %v4544 = vrot.slane %v4543, 4
      %v4546 = vshll.u32 %v4249, 16
      %v4548 = vrot.slane %v4546, 5
      %v4549 = vsel %vm903, %v4544, %v4548
      %v4551 = vshrl.u32 %v4250, 16
      %v4553 = vrot.slane %v4551, 4
      %v4554 = vshll.u32 %v4250, 16
      %v4556 = vrot.slane %v4554, 5
      %v4557 = vor.u32 %v4553, %v4556
      %v4558 = vrot.slane %v4557, 4
      %v4560 = vshll.u32 %v4251, 16
      %v4562 = vrot.slane %v4560, 5
      %v4563 = vsel %vm903, %v4558, %v4562
      %v4564 = vshrl.u32 %v4251, 16
      %v4566 = vrot.slane %v4564, 4
      %v4567 = vor.u32 %v4566, %v4562
      %v4568 = vrot.slane %v4567, 4
      %v4570 = vshll.u32 %v4252, 16
      %v4572 = vrot.slane %v4570, 5
      %v4573 = vsel %vm903, %v4568, %v4572
      %v4575 = vshrl.u32 %v4253, 16
      %v4577 = vrot.slane %v4575, 4
      %v4578 = vshll.u32 %v4253, 16
      %v4580 = vrot.slane %v4578, 5
      %v4581 = vor.u32 %v4577, %v4580
      %v4582 = vrot.slane %v4581, 4
      %v4584 = vshll.u32 %v4254, 16
      %v4586 = vrot.slane %v4584, 5
      %v4587 = vsel %vm903, %v4582, %v4586
      %v4588 = vshrl.u32 %v4254, 16
      %v4590 = vrot.slane %v4588, 4
      %v4591 = vor.u32 %v4590, %v4586
      %v4592 = vrot.slane %v4591, 4
      %v4594 = vshll.u32 %v4255, 16
      %v4596 = vrot.slane %v4594, 5
      %v4597 = vsel %vm903, %v4592, %v4596
      %v4599 = vshrl.u32 %v4256, 16
      %v4601 = vrot.slane %v4599, 4
      %v4602 = vshll.u32 %v4256, 16
      %v4604 = vrot.slane %v4602, 5
      %v4605 = vor.u32 %v4601, %v4604
      %v4606 = vrot.slane %v4605, 4
      %v4608 = vshll.u32 %v4257, 16
      %v4610 = vrot.slane %v4608, 5
      %v4611 = vsel %vm903, %v4606, %v4610
      %v4612 = vshrl.u32 %v4257, 16
      %v4614 = vrot.slane %v4612, 4
      %v4615 = vor.u32 %v4614, %v4610
      %v4616 = vrot.slane %v4615, 4
      %v4618 = vshll.u32 %v4258, 16
      %v4620 = vrot.slane %v4618, 5
      %v4621 = vsel %vm903, %v4616, %v4620
      %v4623 = vshrl.u32 %v4259, 16
      %v4625 = vrot.slane %v4623, 4
      %v4626 = vshll.u32 %v4259, 16
      %v4628 = vrot.slane %v4626, 5
      %v4629 = vor.u32 %v4625, %v4628
      %v4630 = vrot.slane %v4629, 4
      %v4632 = vshll.u32 %v4260, 16
      %v4634 = vrot.slane %v4632, 5
      %v4635 = vsel %vm903, %v4630, %v4634
      %v4636 = vshrl.u32 %v4260, 16
      %v4638 = vrot.slane %v4636, 4
      %v4639 = vor.u32 %v4638, %v4634
      %v4640 = vrot.slane %v4639, 4
      %v4642 = vshll.u32 %v4261, 16
      %v4644 = vrot.slane %v4642, 5
      %v4645 = vsel %vm903, %v4640, %v4644
      %s4646 = scalar_lea.vmem %s301, 14
      %v4647 = vld [vmem:[%s4646] sm:$0x3]
      %v4648 = vunpack.c.l.b16 %v4275
      %v4649 = vunpack.c.l.b16 %v4285
      %v4650 = vunpack.c.l.b16 %v4299
      %v4651 = vunpack.c.l.b16 %v4309
      %v4652 = vunpack.c.l.b16 %v4323
      %v4653 = vunpack.c.l.b16 %v4333
      %v4654 = vunpack.c.l.b16 %v4347
      %v4655 = vunpack.c.l.b16 %v4357
      %v4656 = vunpack.c.l.b16 %v4371
      %v4657 = vunpack.c.l.b16 %v4381
      %v4658 = vunpack.c.l.b16 %v4395
      %v4659 = vunpack.c.l.b16 %v4405
      %v4660 = vunpack.c.l.b16 %v4419
      %v4661 = vunpack.c.l.b16 %v4429
      %v4662 = vunpack.c.l.b16 %v4443
      %v4663 = vunpack.c.l.b16 %v4453
      %v4664 = vunpack.c.l.b16 %v4467
      %v4665 = vunpack.c.l.b16 %v4477
      %v4666 = vunpack.c.l.b16 %v4491
      %v4667 = vunpack.c.l.b16 %v4501
      %v4668 = vunpack.c.l.b16 %v4515
      %v4669 = vunpack.c.l.b16 %v4525
      %v4670 = vunpack.c.l.b16 %v4539
      %v4671 = vunpack.c.l.b16 %v4549
      %v4672 = vunpack.c.l.b16 %v4563
      %v4673 = vunpack.c.l.b16 %v4573
      %v4674 = vunpack.c.l.b16 %v4587
      %v4675 = vunpack.c.l.b16 %v4597
      %v4676 = vunpack.c.l.b16 %v4611
      %v4677 = vunpack.c.l.b16 %v4621
      %v4678 = vunpack.c.l.b16 %v4635
      %v4679 = vunpack.c.l.b16 %v4645
      %v4680 = vpack.c.b16 %v4649, %v4648
      %v4681 = vpack.c.b16 %v4651, %v4650
      %v4682 = vpack.c.b16 %v4653, %v4652
      %v4683 = vpack.c.b16 %v4655, %v4654
      %v4684 = vpack.c.b16 %v4657, %v4656
      %v4685 = vpack.c.b16 %v4659, %v4658
      %v4686 = vpack.c.b16 %v4661, %v4660
      %v4687 = vpack.c.b16 %v4663, %v4662
      %v4688 = vpack.c.b16 %v4665, %v4664
      %v4689 = vpack.c.b16 %v4667, %v4666
      %v4690 = vpack.c.b16 %v4669, %v4668
      %v4691 = vpack.c.b16 %v4671, %v4670
      %v4692 = vpack.c.b16 %v4673, %v4672
      %v4693 = vpack.c.b16 %v4675, %v4674
      %v4694 = vpack.c.b16 %v4677, %v4676
      %v4695 = vpack.c.b16 %v4679, %v4678
      %v4697 = vsel %vm1338, %v4680, 0
      %v4700 = vsel %vm1338, %v4681, 0
      %v4703 = vsel %vm1338, %v4682, 0
      %v4706 = vsel %vm1338, %v4683, 0
      %v4709 = vsel %vm1338, %v4684, 0
      %v4712 = vsel %vm1338, %v4685, 0
      %v4715 = vsel %vm1338, %v4686, 0
      %v4718 = vsel %vm1338, %v4687, 0
      %v4721 = vsel %vm1338, %v4688, 0
      %v4724 = vsel %vm1338, %v4689, 0
      %v4727 = vsel %vm1338, %v4690, 0
      %v4730 = vsel %vm1338, %v4691, 0
      %v4733 = vsel %vm1338, %v4692, 0
      %v4736 = vsel %vm1338, %v4693, 0
      %v4739 = vsel %vm1338, %v4694, 0
      %v4742 = vsel %vm1338, %v4695, 0
      %v4745 = vsel %vm1387, %v4647, 0
      %4747 = vmatprep.subr.bf16.mxu0 0
      %4748 = vmatpush1.bf16.msra.mxu0 %v4745
      %4749 = vmatprep.subr.bf16.mxu0 0
      %4750 = vmatpush1.bf16.msra.mxu0 0
      %4751 = vmatprep.subr.bf16.mxu0 0
      %4752 = vmatpush1.bf16.msra.mxu0 0
      %4753 = vmatprep.subr.bf16.mxu0 0
      %4754 = vmatpush1.bf16.msra.mxu0 0
      %4755 = vmatprep.subr.bf16.mxu0 0
      %4756 = vmatpush1.bf16.msra.mxu0 0
      %4757 = vmatprep.subr.bf16.mxu0 0
      %4758 = vmatpush1.bf16.msra.mxu0 0
      %4759 = vmatprep.subr.bf16.mxu0 0
      %4760 = vmatpush1.bf16.msra.mxu0 0
      %4761 = vmatprep.subr.bf16.mxu0 0
      %4762 = vmatpush1.bf16.msra.mxu0 0
      %4763 = vmatprep.subr.bf16.mxu0 0
      %4764 = vmatpush1.bf16.msra.mxu0 0
      %4765 = vmatprep.subr.bf16.mxu0 0
      %4766 = vmatpush1.bf16.msra.mxu0 0
      %4767 = vmatprep.subr.bf16.mxu0 0
      %4768 = vmatpush1.bf16.msra.mxu0 0
      %4769 = vmatprep.subr.bf16.mxu0 0
      %4770 = vmatpush1.bf16.msra.mxu0 0
      %4771 = vmatprep.subr.bf16.mxu0 0
      %4772 = vmatpush1.bf16.msra.mxu0 0
      %4773 = vmatprep.subr.bf16.mxu0 0
      %4774 = vmatpush1.bf16.msra.mxu0 0
      %4775 = vmatprep.subr.bf16.mxu0 0
      %4776 = vmatpush1.bf16.msra.mxu0 0
      %4777 = vmatprep.subr.bf16.mxu0 0
      %4778 = vmatpush1.bf16.msra.mxu0 0
      %4779 = vmatprep.mubr.bf16.mxu0 0
      %4780 = vmatmul.mubr.bf16.gmra.mrb[0].mxu0 %v4697
      %v4781 = vpop.f32.mrb[0].mxu0
      %v4782 = vadd.f32 0.0, %v4781
      %v4783 = vpop.f32.mrb[0].mxu0
      %v4784 = vpop.f32.mrb[0].mxu0
      %v4785 = vadd.f32 0.0, %v4784
      %v4786 = vpop.f32.mrb[0].mxu0
      %4787 = vmatprep.mubr.bf16.mxu0 0
      %4788 = vmatmul.mubr.bf16.gmra.mrb[0].mxu0 %v4700
      %v4789 = vpop.f32.mrb[0].mxu0
      %v4790 = vadd.f32 0.0, %v4789
      %v4791 = vpop.f32.mrb[0].mxu0
      %v4792 = vpop.f32.mrb[0].mxu0
      %v4793 = vadd.f32 0.0, %v4792
      %v4794 = vpop.f32.mrb[0].mxu0
      %4795 = vmatprep.mubr.bf16.mxu0 0
      %4796 = vmatmul.mubr.bf16.gmra.mrb[0].mxu0 %v4703
      %v4797 = vpop.f32.mrb[0].mxu0
      %v4798 = vadd.f32 0.0, %v4797
      %v4799 = vpop.f32.mrb[0].mxu0
      %v4800 = vpop.f32.mrb[0].mxu0
      %v4801 = vadd.f32 0.0, %v4800
      %v4802 = vpop.f32.mrb[0].mxu0
      %4803 = vmatprep.mubr.bf16.mxu0 0
      %4804 = vmatmul.mubr.bf16.gmra.mrb[0].mxu0 %v4706
      %v4805 = vpop.f32.mrb[0].mxu0
      %v4806 = vadd.f32 0.0, %v4805
      %v4807 = vpop.f32.mrb[0].mxu0
      %v4808 = vpop.f32.mrb[0].mxu0
      %v4809 = vadd.f32 0.0, %v4808
      %v4810 = vpop.f32.mrb[0].mxu0
      %4811 = vmatprep.mubr.bf16.mxu0 0
      %4812 = vmatmul.mubr.bf16.gmra.mrb[0].mxu0 %v4709
      %v4813 = vpop.f32.mrb[0].mxu0
      %v4814 = vadd.f32 0.0, %v4813
      %v4815 = vpop.f32.mrb[0].mxu0
      %v4816 = vpop.f32.mrb[0].mxu0
      %v4817 = vadd.f32 0.0, %v4816
      %v4818 = vpop.f32.mrb[0].mxu0
      %4819 = vmatprep.mubr.bf16.mxu0 0
      %4820 = vmatmul.mubr.bf16.gmra.mrb[0].mxu0 %v4712
      %v4821 = vpop.f32.mrb[0].mxu0
      %v4822 = vadd.f32 0.0, %v4821
      %v4823 = vpop.f32.mrb[0].mxu0
      %v4824 = vpop.f32.mrb[0].mxu0
      %v4825 = vadd.f32 0.0, %v4824
      %v4826 = vpop.f32.mrb[0].mxu0
      %4827 = vmatprep.mubr.bf16.mxu0 0
      %4828 = vmatmul.mubr.bf16.gmra.mrb[0].mxu0 %v4715
      %v4829 = vpop.f32.mrb[0].mxu0
      %v4830 = vadd.f32 0.0, %v4829
      %v4831 = vpop.f32.mrb[0].mxu0
      %v4832 = vpop.f32.mrb[0].mxu0
      %v4833 = vadd.f32 0.0, %v4832
      %v4834 = vpop.f32.mrb[0].mxu0
      %4835 = vmatprep.mubr.bf16.mxu0 0
      %4836 = vmatmul.mubr.bf16.gmra.mrb[0].mxu0 %v4718
      %v4837 = vpop.f32.mrb[0].mxu0
      %v4838 = vadd.f32 0.0, %v4837
      %v4839 = vpop.f32.mrb[0].mxu0
      %v4840 = vpop.f32.mrb[0].mxu0
      %v4841 = vadd.f32 0.0, %v4840
      %v4842 = vpop.f32.mrb[0].mxu0
      %4843 = vmatprep.mubr.bf16.mxu0 0
      %4844 = vmatmul.mubr.bf16.gmra.mrb[0].mxu0 %v4721
      %v4845 = vpop.f32.mrb[0].mxu0
      %v4846 = vadd.f32 0.0, %v4845
      %v4847 = vpop.f32.mrb[0].mxu0
      %v4848 = vpop.f32.mrb[0].mxu0
      %v4849 = vadd.f32 0.0, %v4848
      %v4850 = vpop.f32.mrb[0].mxu0
      %4851 = vmatprep.mubr.bf16.mxu0 0
      %4852 = vmatmul.mubr.bf16.gmra.mrb[0].mxu0 %v4724
      %v4853 = vpop.f32.mrb[0].mxu0
      %v4854 = vadd.f32 0.0, %v4853
      %v4855 = vpop.f32.mrb[0].mxu0
      %v4856 = vpop.f32.mrb[0].mxu0
      %v4857 = vadd.f32 0.0, %v4856
      %v4858 = vpop.f32.mrb[0].mxu0
      %4859 = vmatprep.mubr.bf16.mxu0 0
      %4860 = vmatmul.mubr.bf16.gmra.mrb[0].mxu0 %v4727
      %v4861 = vpop.f32.mrb[0].mxu0
      %v4862 = vadd.f32 0.0, %v4861
      %v4863 = vpop.f32.mrb[0].mxu0
      %v4864 = vpop.f32.mrb[0].mxu0
      %v4865 = vadd.f32 0.0, %v4864
      %v4866 = vpop.f32.mrb[0].mxu0
      %4867 = vmatprep.mubr.bf16.mxu0 0
      %4868 = vmatmul.mubr.bf16.gmra.mrb[0].mxu0 %v4730
      %v4869 = vpop.f32.mrb[0].mxu0
      %v4870 = vadd.f32 0.0, %v4869
      %v4871 = vpop.f32.mrb[0].mxu0
      %v4872 = vpop.f32.mrb[0].mxu0
      %v4873 = vadd.f32 0.0, %v4872
      %v4874 = vpop.f32.mrb[0].mxu0
      %4875 = vmatprep.mubr.bf16.mxu0 0
      %4876 = vmatmul.mubr.bf16.gmra.mrb[0].mxu0 %v4733
      %v4877 = vpop.f32.mrb[0].mxu0
      %v4878 = vadd.f32 0.0, %v4877
      %v4879 = vpop.f32.mrb[0].mxu0
      %v4880 = vpop.f32.mrb[0].mxu0
      %v4881 = vadd.f32 0.0, %v4880
      %v4882 = vpop.f32.mrb[0].mxu0
      %4883 = vmatprep.mubr.bf16.mxu0 0
      %4884 = vmatmul.mubr.bf16.gmra.mrb[0].mxu0 %v4736
      %v4885 = vpop.f32.mrb[0].mxu0
      %v4886 = vadd.f32 0.0, %v4885
      %v4887 = vpop.f32.mrb[0].mxu0
      %v4888 = vpop.f32.mrb[0].mxu0
      %v4889 = vadd.f32 0.0, %v4888
      %v4890 = vpop.f32.mrb[0].mxu0
      %4891 = vmatprep.mubr.bf16.mxu0 0
      %4892 = vmatmul.mubr.bf16.gmra.mrb[0].mxu0 %v4739
      %v4893 = vpop.f32.mrb[0].mxu0
      %v4894 = vadd.f32 0.0, %v4893
      %v4895 = vpop.f32.mrb[0].mxu0
      %v4896 = vpop.f32.mrb[0].mxu0
      %v4897 = vadd.f32 0.0, %v4896
      %v4898 = vpop.f32.mrb[0].mxu0
      %4899 = vmatprep.mubr.bf16.mxu0 0
      %4900 = vmatmul.mubr.bf16.gmra.mrb[0].mxu0 %v4742
      %v4901 = vpop.f32.mrb[0].mxu0
      %v4902 = vadd.f32 0.0, %v4901
      %v4903 = vpop.f32.mrb[0].mxu0
      %v4904 = vpop.f32.mrb[0].mxu0
      %v4905 = vadd.f32 0.0, %v4904
      %v4906 = vpop.f32.mrb[0].mxu0
      %4907 = vdwg.mxu0
      %v4908 = vadd.f32 %v4182, %v4782
      %v4909 = vadd.f32 %v4183, %v4785
      %v4910 = vadd.f32 %v4184, %v4790
      %v4911 = vadd.f32 %v4185, %v4793
      %v4912 = vadd.f32 %v4186, %v4798
      %v4913 = vadd.f32 %v4187, %v4801
      %v4914 = vadd.f32 %v4188, %v4806
      %v4915 = vadd.f32 %v4189, %v4809
      %v4916 = vadd.f32 %v4190, %v4814
      %v4917 = vadd.f32 %v4191, %v4817
      %v4918 = vadd.f32 %v4192, %v4822
      %v4919 = vadd.f32 %v4193, %v4825
      %v4920 = vadd.f32 %v4194, %v4830
      %v4921 = vadd.f32 %v4195, %v4833
      %v4922 = vadd.f32 %v4196, %v4838
      %v4923 = vadd.f32 %v4197, %v4841
      %v4924 = vadd.f32 %v4198, %v4846
      %v4925 = vadd.f32 %v4199, %v4849
      %v4926 = vadd.f32 %v4200, %v4854
      %v4927 = vadd.f32 %v4201, %v4857
      %v4928 = vadd.f32 %v4202, %v4862
      %v4929 = vadd.f32 %v4203, %v4865
      %v4930 = vadd.f32 %v4204, %v4870
      %v4931 = vadd.f32 %v4205, %v4873
      %v4932 = vadd.f32 %v4206, %v4878
      %v4933 = vadd.f32 %v4207, %v4881
      %v4934 = vadd.f32 %v4208, %v4886
      %v4935 = vadd.f32 %v4209, %v4889
      %v4936 = vadd.f32 %v4210, %v4894
      %v4937 = vadd.f32 %v4211, %v4897
      %v4938 = vadd.f32 %v4212, %v4902
      %v4939 = vadd.f32 %v4213, %v4905
      %v4940 = vld [vmem:[%s3855] sm:$0xe]
      %v4941 = vld [vmem:[%s3855 + $0xc] sm:$0xe]
      %v4942 = vld [vmem:[%s3855 + $0x18] sm:$0xe]
      %v4943 = vld [vmem:[%s3855 + $0x24] sm:$0xe]
      %v4944 = vld [vmem:[%s3855 + $0x30] sm:$0xe]
      %v4945 = vld [vmem:[%s3855 + $0x3c] sm:$0xe]
      %v4946 = vld [vmem:[%s3855 + $0x48] sm:$0xe]
      %v4947 = vld [vmem:[%s3855 + $0x54] sm:$0xe]
      %v4948 = vld [vmem:[%s3855 + $0x60] sm:$0xe]
      %v4949 = vld [vmem:[%s3855 + $0x6c] sm:$0xe]
      %v4950 = vld [vmem:[%s3855 + $0x78] sm:$0xe]
      %v4951 = vld [vmem:[%s3855 + $0x84] sm:$0xe]
      %v4952 = vld [vmem:[%s3855 + $0x90] sm:$0xe]
      %v4953 = vld [vmem:[%s3855 + $0x9c] sm:$0xe]
      %v4954 = vld [vmem:[%s3855 + $0xa8] sm:$0xe]
      %v4955 = vld [vmem:[%s3855 + $0xb4] sm:$0xe]
      %v5004 = vrot.slane %v4940, 5
      %v5005 = vrot.slane %v5004, 4
      %v5006 = vrot.slane %v4215, 5
      %v5007 = vsel %vm1894, %v5005, %v5006
      %v5008 = vrot.slane %v5006, 4
      %v5009 = vrot.slane %v4216, 5
      %v5010 = vsel %vm1894, %v5008, %v5009
      %v5011 = vrot.slane %v4941, 5
      %v5012 = vrot.slane %v5011, 4
      %v5013 = vrot.slane %v4218, 5
      %v5014 = vsel %vm1894, %v5012, %v5013
      %v5015 = vrot.slane %v5013, 4
      %v5016 = vrot.slane %v4219, 5
      %v5017 = vsel %vm1894, %v5015, %v5016
      %v5018 = vrot.slane %v4942, 5
      %v5019 = vrot.slane %v5018, 4
      %v5020 = vrot.slane %v4221, 5
      %v5021 = vsel %vm1894, %v5019, %v5020
      %v5022 = vrot.slane %v5020, 4
      %v5023 = vrot.slane %v4222, 5
      %v5024 = vsel %vm1894, %v5022, %v5023
      %v5025 = vrot.slane %v4943, 5
      %v5026 = vrot.slane %v5025, 4
      %v5027 = vrot.slane %v4224, 5
      %v5028 = vsel %vm1894, %v5026, %v5027
      %v5029 = vrot.slane %v5027, 4
      %v5030 = vrot.slane %v4225, 5
      %v5031 = vsel %vm1894, %v5029, %v5030
      %v5032 = vrot.slane %v4944, 5
      %v5033 = vrot.slane %v5032, 4
      %v5034 = vrot.slane %v4227, 5
      %v5035 = vsel %vm1894, %v5033, %v5034
      %v5036 = vrot.slane %v5034, 4
      %v5037 = vrot.slane %v4228, 5
      %v5038 = vsel %vm1894, %v5036, %v5037
      %v5039 = vrot.slane %v4945, 5
      %v5040 = vrot.slane %v5039, 4
      %v5041 = vrot.slane %v4230, 5
      %v5042 = vsel %vm1894, %v5040, %v5041
      %v5043 = vrot.slane %v5041, 4
      %v5044 = vrot.slane %v4231, 5
      %v5045 = vsel %vm1894, %v5043, %v5044
      %v5046 = vrot.slane %v4946, 5
      %v5047 = vrot.slane %v5046, 4
      %v5048 = vrot.slane %v4233, 5
      %v5049 = vsel %vm1894, %v5047, %v5048
      %v5050 = vrot.slane %v5048, 4
      %v5051 = vrot.slane %v4234, 5
      %v5052 = vsel %vm1894, %v5050, %v5051
      %v5053 = vrot.slane %v4947, 5
      %v5054 = vrot.slane %v5053, 4
      %v5055 = vrot.slane %v4236, 5
      %v5056 = vsel %vm1894, %v5054, %v5055
      %v5057 = vrot.slane %v5055, 4
      %v5058 = vrot.slane %v4237, 5
      %v5059 = vsel %vm1894, %v5057, %v5058
      %v5060 = vrot.slane %v4948, 5
      %v5061 = vrot.slane %v5060, 4
      %v5062 = vrot.slane %v4239, 5
      %v5063 = vsel %vm1894, %v5061, %v5062
      %v5064 = vrot.slane %v5062, 4
      %v5065 = vrot.slane %v4240, 5
      %v5066 = vsel %vm1894, %v5064, %v5065
      %v5067 = vrot.slane %v4949, 5
      %v5068 = vrot.slane %v5067, 4
      %v5069 = vrot.slane %v4242, 5
      %v5070 = vsel %vm1894, %v5068, %v5069
      %v5071 = vrot.slane %v5069, 4
      %v5072 = vrot.slane %v4243, 5
      %v5073 = vsel %vm1894, %v5071, %v5072
      %v5074 = vrot.slane %v4950, 5
      %v5075 = vrot.slane %v5074, 4
      %v5076 = vrot.slane %v4245, 5
      %v5077 = vsel %vm1894, %v5075, %v5076
      %v5078 = vrot.slane %v5076, 4
      %v5079 = vrot.slane %v4246, 5
      %v5080 = vsel %vm1894, %v5078, %v5079
      %v5081 = vrot.slane %v4951, 5
      %v5082 = vrot.slane %v5081, 4
      %v5083 = vrot.slane %v4248, 5
      %v5084 = vsel %vm1894, %v5082, %v5083
      %v5085 = vrot.slane %v5083, 4
      %v5086 = vrot.slane %v4249, 5
      %v5087 = vsel %vm1894, %v5085, %v5086
      %v5088 = vrot.slane %v4952, 5
      %v5089 = vrot.slane %v5088, 4
      %v5090 = vrot.slane %v4251, 5
      %v5091 = vsel %vm1894, %v5089, %v5090
      %v5092 = vrot.slane %v5090, 4
      %v5093 = vrot.slane %v4252, 5
      %v5094 = vsel %vm1894, %v5092, %v5093
      %v5095 = vrot.slane %v4953, 5
      %v5096 = vrot.slane %v5095, 4
      %v5097 = vrot.slane %v4254, 5
      %v5098 = vsel %vm1894, %v5096, %v5097
      %v5099 = vrot.slane %v5097, 4
      %v5100 = vrot.slane %v4255, 5
      %v5101 = vsel %vm1894, %v5099, %v5100
      %v5102 = vrot.slane %v4954, 5
      %v5103 = vrot.slane %v5102, 4
      %v5104 = vrot.slane %v4257, 5
      %v5105 = vsel %vm1894, %v5103, %v5104
      %v5106 = vrot.slane %v5104, 4
      %v5107 = vrot.slane %v4258, 5
      %v5108 = vsel %vm1894, %v5106, %v5107
      %v5109 = vrot.slane %v4955, 5
      %v5110 = vrot.slane %v5109, 4
      %v5111 = vrot.slane %v4260, 5
      %v5112 = vsel %vm1894, %v5110, %v5111
      %v5113 = vrot.slane %v5111, 4
      %v5114 = vrot.slane %v4261, 5
      %v5115 = vsel %vm1894, %v5113, %v5114
      %s5116 = scalar_lea.vmem %s301, 16
      %v5117 = vld [vmem:[%s5116] sm:$0x3]
      %v5118 = vunpack.c.l.b16 %v5007
      %v5119 = vunpack.c.l.b16 %v5010
      %v5120 = vunpack.c.l.b16 %v5014
      %v5121 = vunpack.c.l.b16 %v5017
      %v5122 = vunpack.c.l.b16 %v5021
      %v5123 = vunpack.c.l.b16 %v5024
      %v5124 = vunpack.c.l.b16 %v5028
      %v5125 = vunpack.c.l.b16 %v5031
      %v5126 = vunpack.c.l.b16 %v5035
      %v5127 = vunpack.c.l.b16 %v5038
      %v5128 = vunpack.c.l.b16 %v5042
      %v5129 = vunpack.c.l.b16 %v5045
      %v5130 = vunpack.c.l.b16 %v5049
      %v5131 = vunpack.c.l.b16 %v5052
      %v5132 = vunpack.c.l.b16 %v5056
      %v5133 = vunpack.c.l.b16 %v5059
      %v5134 = vunpack.c.l.b16 %v5063
      %v5135 = vunpack.c.l.b16 %v5066
      %v5136 = vunpack.c.l.b16 %v5070
      %v5137 = vunpack.c.l.b16 %v5073
      %v5138 = vunpack.c.l.b16 %v5077
      %v5139 = vunpack.c.l.b16 %v5080
      %v5140 = vunpack.c.l.b16 %v5084
      %v5141 = vunpack.c.l.b16 %v5087
      %v5142 = vunpack.c.l.b16 %v5091
      %v5143 = vunpack.c.l.b16 %v5094
      %v5144 = vunpack.c.l.b16 %v5098
      %v5145 = vunpack.c.l.b16 %v5101
      %v5146 = vunpack.c.l.b16 %v5105
      %v5147 = vunpack.c.l.b16 %v5108
      %v5148 = vunpack.c.l.b16 %v5112
      %v5149 = vunpack.c.l.b16 %v5115
      %v5150 = vpack.c.b16 %v5119, %v5118
      %v5151 = vpack.c.b16 %v5121, %v5120
      %v5152 = vpack.c.b16 %v5123, %v5122
      %v5153 = vpack.c.b16 %v5125, %v5124
      %v5154 = vpack.c.b16 %v5127, %v5126
      %v5155 = vpack.c.b16 %v5129, %v5128
      %v5156 = vpack.c.b16 %v5131, %v5130
      %v5157 = vpack.c.b16 %v5133, %v5132
      %v5158 = vpack.c.b16 %v5135, %v5134
      %v5159 = vpack.c.b16 %v5137, %v5136
      %v5160 = vpack.c.b16 %v5139, %v5138
      %v5161 = vpack.c.b16 %v5141, %v5140
      %v5162 = vpack.c.b16 %v5143, %v5142
      %v5163 = vpack.c.b16 %v5145, %v5144
      %v5164 = vpack.c.b16 %v5147, %v5146
      %v5165 = vpack.c.b16 %v5149, %v5148
      %v5167 = vsel %vm1338, %v5150, 0
      %v5170 = vsel %vm1338, %v5151, 0
      %v5173 = vsel %vm1338, %v5152, 0
      %v5176 = vsel %vm1338, %v5153, 0
      %v5179 = vsel %vm1338, %v5154, 0
      %v5182 = vsel %vm1338, %v5155, 0
      %v5185 = vsel %vm1338, %v5156, 0
      %v5188 = vsel %vm1338, %v5157, 0
      %v5191 = vsel %vm1338, %v5158, 0
      %v5194 = vsel %vm1338, %v5159, 0
      %v5197 = vsel %vm1338, %v5160, 0
      %v5200 = vsel %vm1338, %v5161, 0
      %v5203 = vsel %vm1338, %v5162, 0
      %v5206 = vsel %vm1338, %v5163, 0
      %v5209 = vsel %vm1338, %v5164, 0
      %v5212 = vsel %vm1338, %v5165, 0
      %v5215 = vsel %vm1387, %v5117, 0
      %5217 = vmatprep.subr.bf16.mxu0 0
      %5218 = vmatpush1.bf16.msra.mxu0 %v5215
      %5219 = vmatprep.subr.bf16.mxu0 0
      %5220 = vmatpush1.bf16.msra.mxu0 0
      %5221 = vmatprep.subr.bf16.mxu0 0
      %5222 = vmatpush1.bf16.msra.mxu0 0
      %5223 = vmatprep.subr.bf16.mxu0 0
      %5224 = vmatpush1.bf16.msra.mxu0 0
      %5225 = vmatprep.subr.bf16.mxu0 0
      %5226 = vmatpush1.bf16.msra.mxu0 0
      %5227 = vmatprep.subr.bf16.mxu0 0
      %5228 = vmatpush1.bf16.msra.mxu0 0
      %5229 = vmatprep.subr.bf16.mxu0 0
      %5230 = vmatpush1.bf16.msra.mxu0 0
      %5231 = vmatprep.subr.bf16.mxu0 0
      %5232 = vmatpush1.bf16.msra.mxu0 0
      %5233 = vmatprep.subr.bf16.mxu0 0
      %5234 = vmatpush1.bf16.msra.mxu0 0
      %5235 = vmatprep.subr.bf16.mxu0 0
      %5236 = vmatpush1.bf16.msra.mxu0 0
      %5237 = vmatprep.subr.bf16.mxu0 0
      %5238 = vmatpush1.bf16.msra.mxu0 0
      %5239 = vmatprep.subr.bf16.mxu0 0
      %5240 = vmatpush1.bf16.msra.mxu0 0
      %5241 = vmatprep.subr.bf16.mxu0 0
      %5242 = vmatpush1.bf16.msra.mxu0 0
      %5243 = vmatprep.subr.bf16.mxu0 0
      %5244 = vmatpush1.bf16.msra.mxu0 0
      %5245 = vmatprep.subr.bf16.mxu0 0
      %5246 = vmatpush1.bf16.msra.mxu0 0
      %5247 = vmatprep.subr.bf16.mxu0 0
      %5248 = vmatpush1.bf16.msra.mxu0 0
      %5249 = vmatprep.mubr.bf16.mxu0 0
      %5250 = vmatmul.mubr.bf16.gmra.mrb[0].mxu0 %v5167
      %v5251 = vpop.f32.mrb[0].mxu0
      %v5252 = vadd.f32 0.0, %v5251
      %v5253 = vpop.f32.mrb[0].mxu0
      %v5254 = vpop.f32.mrb[0].mxu0
      %v5255 = vadd.f32 0.0, %v5254
      %v5256 = vpop.f32.mrb[0].mxu0
      %5257 = vmatprep.mubr.bf16.mxu0 0
      %5258 = vmatmul.mubr.bf16.gmra.mrb[0].mxu0 %v5170
      %v5259 = vpop.f32.mrb[0].mxu0
      %v5260 = vadd.f32 0.0, %v5259
      %v5261 = vpop.f32.mrb[0].mxu0
      %v5262 = vpop.f32.mrb[0].mxu0
      %v5263 = vadd.f32 0.0, %v5262
      %v5264 = vpop.f32.mrb[0].mxu0
      %5265 = vmatprep.mubr.bf16.mxu0 0
      %5266 = vmatmul.mubr.bf16.gmra.mrb[0].mxu0 %v5173
      %v5267 = vpop.f32.mrb[0].mxu0
      %v5268 = vadd.f32 0.0, %v5267
      %v5269 = vpop.f32.mrb[0].mxu0
      %v5270 = vpop.f32.mrb[0].mxu0
      %v5271 = vadd.f32 0.0, %v5270
      %v5272 = vpop.f32.mrb[0].mxu0
      %5273 = vmatprep.mubr.bf16.mxu0 0
      %5274 = vmatmul.mubr.bf16.gmra.mrb[0].mxu0 %v5176
      %v5275 = vpop.f32.mrb[0].mxu0
      %v5276 = vadd.f32 0.0, %v5275
      %v5277 = vpop.f32.mrb[0].mxu0
      %v5278 = vpop.f32.mrb[0].mxu0
      %v5279 = vadd.f32 0.0, %v5278
      %v5280 = vpop.f32.mrb[0].mxu0
      %5281 = vmatprep.mubr.bf16.mxu0 0
      %5282 = vmatmul.mubr.bf16.gmra.mrb[0].mxu0 %v5179
      %v5283 = vpop.f32.mrb[0].mxu0
      %v5284 = vadd.f32 0.0, %v5283
      %v5285 = vpop.f32.mrb[0].mxu0
      %v5286 = vpop.f32.mrb[0].mxu0
      %v5287 = vadd.f32 0.0, %v5286
      %v5288 = vpop.f32.mrb[0].mxu0
      %5289 = vmatprep.mubr.bf16.mxu0 0
      %5290 = vmatmul.mubr.bf16.gmra.mrb[0].mxu0 %v5182
      %v5291 = vpop.f32.mrb[0].mxu0
      %v5292 = vadd.f32 0.0, %v5291
      %v5293 = vpop.f32.mrb[0].mxu0
      %v5294 = vpop.f32.mrb[0].mxu0
      %v5295 = vadd.f32 0.0, %v5294
      %v5296 = vpop.f32.mrb[0].mxu0
      %5297 = vmatprep.mubr.bf16.mxu0 0
      %5298 = vmatmul.mubr.bf16.gmra.mrb[0].mxu0 %v5185
      %v5299 = vpop.f32.mrb[0].mxu0
      %v5300 = vadd.f32 0.0, %v5299
      %v5301 = vpop.f32.mrb[0].mxu0
      %v5302 = vpop.f32.mrb[0].mxu0
      %v5303 = vadd.f32 0.0, %v5302
      %v5304 = vpop.f32.mrb[0].mxu0
      %5305 = vmatprep.mubr.bf16.mxu0 0
      %5306 = vmatmul.mubr.bf16.gmra.mrb[0].mxu0 %v5188
      %v5307 = vpop.f32.mrb[0].mxu0
      %v5308 = vadd.f32 0.0, %v5307
      %v5309 = vpop.f32.mrb[0].mxu0
      %v5310 = vpop.f32.mrb[0].mxu0
      %v5311 = vadd.f32 0.0, %v5310
      %v5312 = vpop.f32.mrb[0].mxu0
      %5313 = vmatprep.mubr.bf16.mxu0 0
      %5314 = vmatmul.mubr.bf16.gmra.mrb[0].mxu0 %v5191
      %v5315 = vpop.f32.mrb[0].mxu0
      %v5316 = vadd.f32 0.0, %v5315
      %v5317 = vpop.f32.mrb[0].mxu0
      %v5318 = vpop.f32.mrb[0].mxu0
      %v5319 = vadd.f32 0.0, %v5318
      %v5320 = vpop.f32.mrb[0].mxu0
      %5321 = vmatprep.mubr.bf16.mxu0 0
      %5322 = vmatmul.mubr.bf16.gmra.mrb[0].mxu0 %v5194
      %v5323 = vpop.f32.mrb[0].mxu0
      %v5324 = vadd.f32 0.0, %v5323
      %v5325 = vpop.f32.mrb[0].mxu0
      %v5326 = vpop.f32.mrb[0].mxu0
      %v5327 = vadd.f32 0.0, %v5326
      %v5328 = vpop.f32.mrb[0].mxu0
      %5329 = vmatprep.mubr.bf16.mxu0 0
      %5330 = vmatmul.mubr.bf16.gmra.mrb[0].mxu0 %v5197
      %v5331 = vpop.f32.mrb[0].mxu0
      %v5332 = vadd.f32 0.0, %v5331
      %v5333 = vpop.f32.mrb[0].mxu0
      %v5334 = vpop.f32.mrb[0].mxu0
      %v5335 = vadd.f32 0.0, %v5334
      %v5336 = vpop.f32.mrb[0].mxu0
      %5337 = vmatprep.mubr.bf16.mxu0 0
      %5338 = vmatmul.mubr.bf16.gmra.mrb[0].mxu0 %v5200
      %v5339 = vpop.f32.mrb[0].mxu0
      %v5340 = vadd.f32 0.0, %v5339
      %v5341 = vpop.f32.mrb[0].mxu0
      %v5342 = vpop.f32.mrb[0].mxu0
      %v5343 = vadd.f32 0.0, %v5342
      %v5344 = vpop.f32.mrb[0].mxu0
      %5345 = vmatprep.mubr.bf16.mxu0 0
      %5346 = vmatmul.mubr.bf16.gmra.mrb[0].mxu0 %v5203
      %v5347 = vpop.f32.mrb[0].mxu0
      %v5348 = vadd.f32 0.0, %v5347
      %v5349 = vpop.f32.mrb[0].mxu0
      %v5350 = vpop.f32.mrb[0].mxu0
      %v5351 = vadd.f32 0.0, %v5350
      %v5352 = vpop.f32.mrb[0].mxu0
      %5353 = vmatprep.mubr.bf16.mxu0 0
      %5354 = vmatmul.mubr.bf16.gmra.mrb[0].mxu0 %v5206
      %v5355 = vpop.f32.mrb[0].mxu0
      %v5356 = vadd.f32 0.0, %v5355
      %v5357 = vpop.f32.mrb[0].mxu0
      %v5358 = vpop.f32.mrb[0].mxu0
      %v5359 = vadd.f32 0.0, %v5358
      %v5360 = vpop.f32.mrb[0].mxu0
      %5361 = vmatprep.mubr.bf16.mxu0 0
      %5362 = vmatmul.mubr.bf16.gmra.mrb[0].mxu0 %v5209
      %v5363 = vpop.f32.mrb[0].mxu0
      %v5364 = vadd.f32 0.0, %v5363
      %v5365 = vpop.f32.mrb[0].mxu0
      %v5366 = vpop.f32.mrb[0].mxu0
      %v5367 = vadd.f32 0.0, %v5366
      %v5368 = vpop.f32.mrb[0].mxu0
      %5369 = vmatprep.mubr.bf16.mxu0 0
      %5370 = vmatmul.mubr.bf16.gmra.mrb[0].mxu0 %v5212
      %v5371 = vpop.f32.mrb[0].mxu0
      %v5372 = vadd.f32 0.0, %v5371
      %v5373 = vpop.f32.mrb[0].mxu0
      %v5374 = vpop.f32.mrb[0].mxu0
      %v5375 = vadd.f32 0.0, %v5374
      %v5376 = vpop.f32.mrb[0].mxu0
      %5377 = vdwg.mxu0
      %v5378 = vadd.f32 %v4908, %v5252
      %v5379 = vadd.f32 %v4909, %v5255
      %v5380 = vadd.f32 %v4910, %v5260
      %v5381 = vadd.f32 %v4911, %v5263
      %v5382 = vadd.f32 %v4912, %v5268
      %v5383 = vadd.f32 %v4913, %v5271
      %v5384 = vadd.f32 %v4914, %v5276
      %v5385 = vadd.f32 %v4915, %v5279
      %v5386 = vadd.f32 %v4916, %v5284
      %v5387 = vadd.f32 %v4917, %v5287
      %v5388 = vadd.f32 %v4918, %v5292
      %v5389 = vadd.f32 %v4919, %v5295
      %v5390 = vadd.f32 %v4920, %v5300
      %v5391 = vadd.f32 %v4921, %v5303
      %v5392 = vadd.f32 %v4922, %v5308
      %v5393 = vadd.f32 %v4923, %v5311
      %v5394 = vadd.f32 %v4924, %v5316
      %v5395 = vadd.f32 %v4925, %v5319
      %v5396 = vadd.f32 %v4926, %v5324
      %v5397 = vadd.f32 %v4927, %v5327
      %v5398 = vadd.f32 %v4928, %v5332
      %v5399 = vadd.f32 %v4929, %v5335
      %v5400 = vadd.f32 %v4930, %v5340
      %v5401 = vadd.f32 %v4931, %v5343
      %v5402 = vadd.f32 %v4932, %v5348
      %v5403 = vadd.f32 %v4933, %v5351
      %v5404 = vadd.f32 %v4934, %v5356
      %v5405 = vadd.f32 %v4935, %v5359
      %v5406 = vadd.f32 %v4936, %v5364
      %v5407 = vadd.f32 %v4937, %v5367
      %v5408 = vadd.f32 %v4938, %v5372
      %v5409 = vadd.f32 %v4939, %v5375
      %v5410 = vpack.c.bf16 %v5379, %v5378
      %v5411 = vpack.c.bf16 %v5381, %v5380
      %v5412 = vpack.c.bf16 %v5383, %v5382
      %v5413 = vpack.c.bf16 %v5385, %v5384
      %v5414 = vpack.c.bf16 %v5387, %v5386
      %v5415 = vpack.c.bf16 %v5389, %v5388
      %v5416 = vpack.c.bf16 %v5391, %v5390
      %v5417 = vpack.c.bf16 %v5393, %v5392
      %v5418 = vpack.c.bf16 %v5395, %v5394
      %v5419 = vpack.c.bf16 %v5397, %v5396
      %v5420 = vpack.c.bf16 %v5399, %v5398
      %v5421 = vpack.c.bf16 %v5401, %v5400
      %v5422 = vpack.c.bf16 %v5403, %v5402
      %v5423 = vpack.c.bf16 %v5405, %v5404
      %v5424 = vpack.c.bf16 %v5407, %v5406
      %v5425 = vpack.c.bf16 %v5409, %v5408
      %v5442 = vunpack.c.l.b16 %v5410
      %v5443 = vunpack.c.h.b16 %v5410
      %v5444 = vunpack.c.l.b16 %v5411
      %v5445 = vunpack.c.h.b16 %v5411
      %v5446 = vunpack.c.l.b16 %v5412
      %v5447 = vunpack.c.h.b16 %v5412
      %v5448 = vunpack.c.l.b16 %v5413
      %v5449 = vunpack.c.h.b16 %v5413
      %v5450 = vunpack.c.l.b16 %v5414
      %v5451 = vunpack.c.h.b16 %v5414
      %v5452 = vunpack.c.l.b16 %v5415
      %v5453 = vunpack.c.h.b16 %v5415
      %v5454 = vunpack.c.l.b16 %v5416
      %v5455 = vunpack.c.h.b16 %v5416
      %v5456 = vunpack.c.l.b16 %v5417
      %v5457 = vunpack.c.h.b16 %v5417
      %v5458 = vunpack.c.l.b16 %v5418
      %v5459 = vunpack.c.h.b16 %v5418
      %v5460 = vunpack.c.l.b16 %v5419
      %v5461 = vunpack.c.h.b16 %v5419
      %v5462 = vunpack.c.l.b16 %v5420
      %v5463 = vunpack.c.h.b16 %v5420
      %v5464 = vunpack.c.l.b16 %v5421
      %v5465 = vunpack.c.h.b16 %v5421
      %v5466 = vunpack.c.l.b16 %v5422
      %v5467 = vunpack.c.h.b16 %v5422
      %v5468 = vunpack.c.l.b16 %v5423
      %v5469 = vunpack.c.h.b16 %v5423
      %v5470 = vunpack.c.l.b16 %v5424
      %v5471 = vunpack.c.h.b16 %v5424
      %v5472 = vunpack.c.l.b16 %v5425
      %v5473 = vunpack.c.h.b16 %v5425
      %v5474 = vpack.c.b16 %v5442, %v5442
      %v5475 = vpack.c.b16 %v5443, %v5443
      %v5476 = vpack.c.b16 %v5444, %v5444
      %v5477 = vpack.c.b16 %v5445, %v5445
      %v5478 = vpack.c.b16 %v5446, %v5446
      %v5479 = vpack.c.b16 %v5447, %v5447
      %v5480 = vpack.c.b16 %v5448, %v5448
      %v5481 = vpack.c.b16 %v5449, %v5449
      %v5482 = vpack.c.b16 %v5450, %v5450
      %v5483 = vpack.c.b16 %v5451, %v5451
      %v5484 = vpack.c.b16 %v5452, %v5452
      %v5485 = vpack.c.b16 %v5453, %v5453
      %v5486 = vpack.c.b16 %v5454, %v5454
      %v5487 = vpack.c.b16 %v5455, %v5455
      %v5488 = vpack.c.b16 %v5456, %v5456
      %v5489 = vpack.c.b16 %v5457, %v5457
      %v5490 = vpack.c.b16 %v5458, %v5458
      %v5491 = vpack.c.b16 %v5459, %v5459
      %v5492 = vpack.c.b16 %v5460, %v5460
      %v5493 = vpack.c.b16 %v5461, %v5461
      %v5494 = vpack.c.b16 %v5462, %v5462
      %v5495 = vpack.c.b16 %v5463, %v5463
      %v5496 = vpack.c.b16 %v5464, %v5464
      %v5497 = vpack.c.b16 %v5465, %v5465
      %v5498 = vpack.c.b16 %v5466, %v5466
      %v5499 = vpack.c.b16 %v5467, %v5467
      %v5500 = vpack.c.b16 %v5468, %v5468
      %v5501 = vpack.c.b16 %v5469, %v5469
      %v5502 = vpack.c.b16 %v5470, %v5470
      %v5503 = vpack.c.b16 %v5471, %v5471
      %v5504 = vpack.c.b16 %v5472, %v5472
      %v5505 = vpack.c.b16 %v5473, %v5473
      %5538 = vst [vmem:[%s309] sm:$0xf] %v5474
      %5539 = vst [vmem:[%s309 + $0x4] sm:$0xf] %v5475
      %5540 = vst [vmem:[%s309 + $0x8] sm:$0xf] %v5476
      %5541 = vst [vmem:[%s309 + $0xc] sm:$0xf] %v5477
      %5542 = vst [vmem:[%s309 + $0x10] sm:$0xf] %v5478
      %5543 = vst [vmem:[%s309 + $0x14] sm:$0xf] %v5479
      %5544 = vst [vmem:[%s309 + $0x18] sm:$0xf] %v5480
      %5545 = vst [vmem:[%s309 + $0x1c] sm:$0xf] %v5481
      %5546 = vst [vmem:[%s309 + $0x20] sm:$0xf] %v5482
      %5547 = vst [vmem:[%s309 + $0x24] sm:$0xf] %v5483
      %5548 = vst [vmem:[%s309 + $0x28] sm:$0xf] %v5484
      %5549 = vst [vmem:[%s309 + $0x2c] sm:$0xf] %v5485
      %5550 = vst [vmem:[%s309 + $0x30] sm:$0xf] %v5486
      %5551 = vst [vmem:[%s309 + $0x34] sm:$0xf] %v5487
      %5552 = vst [vmem:[%s309 + $0x38] sm:$0xf] %v5488
      %5553 = vst [vmem:[%s309 + $0x3c] sm:$0xf] %v5489
      %5554 = vst [vmem:[%s309 + $0x40] sm:$0xf] %v5490
      %5555 = vst [vmem:[%s309 + $0x44] sm:$0xf] %v5491
      %5556 = vst [vmem:[%s309 + $0x48] sm:$0xf] %v5492
      %5557 = vst [vmem:[%s309 + $0x4c] sm:$0xf] %v5493
      %5558 = vst [vmem:[%s309 + $0x50] sm:$0xf] %v5494
      %5559 = vst [vmem:[%s309 + $0x54] sm:$0xf] %v5495
      %5560 = vst [vmem:[%s309 + $0x58] sm:$0xf] %v5496
      %5561 = vst [vmem:[%s309 + $0x5c] sm:$0xf] %v5497
      %5562 = vst [vmem:[%s309 + $0x60] sm:$0xf] %v5498
      %5563 = vst [vmem:[%s309 + $0x64] sm:$0xf] %v5499
      %5564 = vst [vmem:[%s309 + $0x68] sm:$0xf] %v5500
      %5565 = vst [vmem:[%s309 + $0x6c] sm:$0xf] %v5501
      %5566 = vst [vmem:[%s309 + $0x70] sm:$0xf] %v5502
      %5567 = vst [vmem:[%s309 + $0x74] sm:$0xf] %v5503
      %5568 = vst [vmem:[%s309 + $0x78] sm:$0xf] %v5504
      %5569 = vst [vmem:[%s309 + $0x7c] sm:$0xf] %v5505
      %v5570 = vadd.f32 %v5378, %v5379
      %v5571 = vadd.f32 %v5570, %v5380
      %v5572 = vadd.f32 %v5571, %v5381
      %v5573 = vadd.f32 %v5572, %v5382
      %v5574 = vadd.f32 %v5573, %v5383
      %v5575 = vadd.f32 %v5574, %v5384
      %v5576 = vadd.f32 %v5575, %v5385
      %v5577 = vadd.f32 %v5576, %v5386
      %v5578 = vadd.f32 %v5577, %v5387
      %v5579 = vadd.f32 %v5578, %v5388
      %v5580 = vadd.f32 %v5579, %v5389
      %v5581 = vadd.f32 %v5580, %v5390
      %v5582 = vadd.f32 %v5581, %v5391
      %v5583 = vadd.f32 %v5582, %v5392
      %v5584 = vadd.f32 %v5583, %v5393
      %v5585 = vadd.f32 %v5584, %v5394
      %v5586 = vadd.f32 %v5585, %v5395
      %v5587 = vadd.f32 %v5586, %v5396
      %v5588 = vadd.f32 %v5587, %v5397
      %v5589 = vadd.f32 %v5588, %v5398
      %v5590 = vadd.f32 %v5589, %v5399
      %v5591 = vadd.f32 %v5590, %v5400
      %v5592 = vadd.f32 %v5591, %v5401
      %v5593 = vadd.f32 %v5592, %v5402
      %v5594 = vadd.f32 %v5593, %v5403
      %v5595 = vadd.f32 %v5594, %v5404
      %v5596 = vadd.f32 %v5595, %v5405
      %v5597 = vadd.f32 %v5596, %v5406
      %v5598 = vadd.f32 %v5597, %v5407
      %v5599 = vadd.f32 %v5598, %v5408
      %v5600 = vadd.f32 %v5599, %v5409
      %v5601 = vrot.slane %v5600, 4
      %v5602 = vadd.f32 %v5600, %v5601
      %v5603 = vrot.slane %v5602, 2
      %v5604 = vadd.f32 %v5602, %v5603
      %v5605 = vrot.slane %v5604, 1
      %v5606 = vadd.f32 %v5604, %v5605
      %5607 = vst [vmem:[%s315] sm:$0x1] %v5606
      %v5608 = vmul.f32 %v5378, %v5378
      %v5609 = vmul.f32 %v5379, %v5379
      %v5610 = vmul.f32 %v5380, %v5380
      %v5611 = vmul.f32 %v5381, %v5381
      %v5612 = vmul.f32 %v5382, %v5382
      %v5613 = vmul.f32 %v5383, %v5383
      %v5614 = vmul.f32 %v5384, %v5384
      %v5615 = vmul.f32 %v5385, %v5385
      %v5616 = vmul.f32 %v5386, %v5386
      %v5617 = vmul.f32 %v5387, %v5387
      %v5618 = vmul.f32 %v5388, %v5388
      %v5619 = vmul.f32 %v5389, %v5389
      %v5620 = vmul.f32 %v5390, %v5390
      %v5621 = vmul.f32 %v5391, %v5391
      %v5622 = vmul.f32 %v5392, %v5392
      %v5623 = vmul.f32 %v5393, %v5393
      %v5624 = vmul.f32 %v5394, %v5394
      %v5625 = vmul.f32 %v5395, %v5395
      %v5626 = vmul.f32 %v5396, %v5396
      %v5627 = vmul.f32 %v5397, %v5397
      %v5628 = vmul.f32 %v5398, %v5398
      %v5629 = vmul.f32 %v5399, %v5399
      %v5630 = vmul.f32 %v5400, %v5400
      %v5631 = vmul.f32 %v5401, %v5401
      %v5632 = vmul.f32 %v5402, %v5402
      %v5633 = vmul.f32 %v5403, %v5403
      %v5634 = vmul.f32 %v5404, %v5404
      %v5635 = vmul.f32 %v5405, %v5405
      %v5636 = vmul.f32 %v5406, %v5406
      %v5637 = vmul.f32 %v5407, %v5407
      %v5638 = vmul.f32 %v5408, %v5408
      %v5639 = vmul.f32 %v5409, %v5409
      %v5640 = vadd.f32 %v5608, %v5609
      %v5641 = vadd.f32 %v5640, %v5610
      %v5642 = vadd.f32 %v5641, %v5611
      %v5643 = vadd.f32 %v5642, %v5612
      %v5644 = vadd.f32 %v5643, %v5613
      %v5645 = vadd.f32 %v5644, %v5614
      %v5646 = vadd.f32 %v5645, %v5615
      %v5647 = vadd.f32 %v5646, %v5616
      %v5648 = vadd.f32 %v5647, %v5617
      %v5649 = vadd.f32 %v5648, %v5618
      %v5650 = vadd.f32 %v5649, %v5619
      %v5651 = vadd.f32 %v5650, %v5620
      %v5652 = vadd.f32 %v5651, %v5621
      %v5653 = vadd.f32 %v5652, %v5622
      %v5654 = vadd.f32 %v5653, %v5623
      %v5655 = vadd.f32 %v5654, %v5624
      %v5656 = vadd.f32 %v5655, %v5625
      %v5657 = vadd.f32 %v5656, %v5626
      %v5658 = vadd.f32 %v5657, %v5627
      %v5659 = vadd.f32 %v5658, %v5628
      %v5660 = vadd.f32 %v5659, %v5629
      %v5661 = vadd.f32 %v5660, %v5630
      %v5662 = vadd.f32 %v5661, %v5631
      %v5663 = vadd.f32 %v5662, %v5632
      %v5664 = vadd.f32 %v5663, %v5633
      %v5665 = vadd.f32 %v5664, %v5634
      %v5666 = vadd.f32 %v5665, %v5635
      %v5667 = vadd.f32 %v5666, %v5636
      %v5668 = vadd.f32 %v5667, %v5637
      %v5669 = vadd.f32 %v5668, %v5638
      %v5670 = vadd.f32 %v5669, %v5639
      %v5671 = vrot.slane %v5670, 4
      %v5672 = vadd.f32 %v5670, %v5671
      %v5673 = vrot.slane %v5672, 2
      %v5674 = vadd.f32 %v5672, %v5673
      %v5675 = vrot.slane %v5674, 1
      %v5676 = vadd.f32 %v5674, %v5675
      %5677 = vst [vmem:[%s321] sm:$0x1] %v5676
      %p5678 = scmp.lt.s32.totalorder %s23, 1
      %s5679 = scalar_select %p5678, %s23, 1
      %p5680 = scmp.lt.s32.totalorder %s22, 0
      %s5681 = scalar_select %p5680, %s22, 0
      %s5682 = smul.addr %s5679, 32
      %s5683 = sadd.s32 %s5681, %s5682
      %s5684 = smul.addr %s5683, 4
      %s5685 = scalar_lea.vmem %s4, %s5684
      %p5686 = scmp.lt.s32.totalorder %s23, 1
      %s5687 = scalar_select %p5686, %s23, 1
      %p5688 = scmp.lt.s32.totalorder %s22, 0
      %s5689 = scalar_select %p5688, %s22, 0
      %s5690 = sadd.s32 %s5689, %s5687
      %s5691 = scalar_lea.vmem %s5, %s5690
      %p5692 = scmp.lt.s32.totalorder %s23, 1
      %s5693 = scalar_select %p5692, %s23, 1
      %p5694 = scmp.lt.s32.totalorder %s22, 0
      %s5695 = scalar_select %p5694, %s22, 0
      %s5696 = sadd.s32 %s5695, %s5693
      %s5697 = scalar_lea.vmem %s6, %s5696
      // Predicated region
      $region37: #{double_conv_forward.3} parent=35 // pred_check
        %p5698 = pneg %p144
      $region38: #{double_conv_forward.3} parent=35 // pred_check_branch
        %5700 = sbr.rel (%p5698) target = $region40
      $region39: #{double_conv_forward.3} parent=35 // pred_region
        _
      $region40: #{double_conv_forward.3} parent=35 // pred_fallthru
        _
      // Predicated region
      $region41: #{double_conv_forward.3} parent=35 // pred_check
        %p5701 = pneg %p172
      $region42: #{double_conv_forward.3} parent=35 // pred_check_branch
        %5703 = sbr.rel (%p5701) target = $region44
      $region43: #{double_conv_forward.3} parent=35 // pred_region
        _
      $region44: #{double_conv_forward.3} parent=35 // pred_fallthru
        _
      // Predicated region
      $region45: #{double_conv_forward.3} parent=35 // pred_check
        %p5704 = pneg %p200
      $region46: #{double_conv_forward.3} parent=35 // pred_check_branch
        %5706 = sbr.rel (%p5704) target = $region48
      $region47: #{double_conv_forward.3} parent=35 // pred_region
        _
      $region48: #{double_conv_forward.3} parent=35 // pred_fallthru
        _
    $region36: #{double_conv_forward.3} parent=5 // pred_fallthru
      _
    %p5707 = scmp.le.s32.totalorder 2, %s13
    // Predicated region
    $region49: #{double_conv_forward.3} parent=5 // pred_check
      %p5708 = pneg %p5707
    $region50: #{double_conv_forward.3} parent=5 // pred_check_branch
      %5710 = sbr.rel (%p5708) target = $region52
    $region51: #{double_conv_forward.3} parent=5 // pred_region
      %s5711 = ssub.s32 %s13, 2
      // Predicated region
      $region53: #{double_conv_forward.3} parent=51 // pred_check
        %p5712 = pneg %p150
      $region54: #{double_conv_forward.3} parent=51 // pred_check_branch
        %5714 = sbr.rel (%p5712) target = $region56
      $region55: #{double_conv_forward.3} parent=51 // pred_region
        %p5715 = scmp.lt.s32.totalorder %s25, 1
        %s5716 = scalar_select %p5715, %s25, 1
        %p5717 = scmp.lt.s32.totalorder %s24, 0
        %s5718 = scalar_select %p5717, %s24, 0
        %s5719 = smul.addr %s5716, 32
        %s5720 = sadd.s32 %s5718, %s5719
        %s5721 = smul.addr %s5720, 4
        %s5722 = scalar_lea.vmem %s4, %s5721
      $region56: #{double_conv_forward.3} parent=51 // pred_fallthru
        _
      // Predicated region
      $region57: #{double_conv_forward.3} parent=51 // pred_check
        %p5723 = pneg %p178
      $region58: #{double_conv_forward.3} parent=51 // pred_check_branch
        %5725 = sbr.rel (%p5723) target = $region60
      $region59: #{double_conv_forward.3} parent=51 // pred_region
        %p5726 = scmp.lt.s32.totalorder %s25, 1
        %s5727 = scalar_select %p5726, %s25, 1
        %p5728 = scmp.lt.s32.totalorder %s24, 0
        %s5729 = scalar_select %p5728, %s24, 0
        %s5730 = sadd.s32 %s5729, %s5727
        %s5731 = scalar_lea.vmem %s5, %s5730
      $region60: #{double_conv_forward.3} parent=51 // pred_fallthru
        _
      // Predicated region
      $region61: #{double_conv_forward.3} parent=51 // pred_check
        %p5732 = pneg %p206
      $region62: #{double_conv_forward.3} parent=51 // pred_check_branch
        %5734 = sbr.rel (%p5732) target = $region64
      $region63: #{double_conv_forward.3} parent=51 // pred_region
        %p5735 = scmp.lt.s32.totalorder %s25, 1
        %s5736 = scalar_select %p5735, %s25, 1
        %p5737 = scmp.lt.s32.totalorder %s24, 0
        %s5738 = scalar_select %p5737, %s24, 0
        %s5739 = sadd.s32 %s5738, %s5736
        %s5740 = scalar_lea.vmem %s6, %s5739
      $region64: #{double_conv_forward.3} parent=51 // pred_fallthru
        _
    $region52: #{double_conv_forward.3} parent=5 // pred_fallthru
      _
  $region6: #{double_conv_forward.3} parent=0 // loop_footer
    %s17 = sadd.s32 1, %s13
  $region7: #{double_conv_forward.3} parent=0 // loop_footer_branch
    %12 = sbr.rel target = $region3
  $region8: #{double_conv_forward.3} parent=0 // loop_exit
    _

</llo_original>
